<compile_context>
chip_gen: v6e
topology: v6e:2x2x1
jax: 0.10.0
libtpu: 0.0.40
codegen_flags: <defaults>
</compile_context>

<pallas_src>
import functools

import jax
import jax.numpy as jnp
from jax.experimental import pallas as pl
from jax.experimental.pallas import tpu as pltpu


# ----------------------------------------------------------------------------
# Fused Pallas kernel: attention + out-project + concat + 3x3 conv + BN + ReLU
# ----------------------------------------------------------------------------
def _fused_attention_conv_kernel(feats_ref, col_ref, kt_ref, vo_ref,
                                 wq1_ref, wq2_ref, wconv_ref, bias_ref,
                                 out_ref, cat_ref, *, W, C, Cout, scale):
    """One batch element, whole feature map.

    feats_ref: (1, HW, C)   bf16 query pixels (channels-last, flattened)
    col_ref:   (HW, 1)      int32 column index (x = p mod W), built in wrapper
    kt_ref:    (Tp, K)      bf16 hoisted key projection, transposed, lane-padded
    vo_ref:    (K, C)       bf16 hoisted value projection folded with out-project
    wq1_ref:   (C, Tp)      bf16 folded query conv1 (+BN), lane-padded
    wq2_ref:   (Tp, Tp)     bf16 folded query conv2 (+BN), lane-padded
    wconv_ref: (9, 2C, Cout) bf16 folded bottleneck 3x3 conv (+BN), tap-major
    bias_ref:  (4, Tp)      f32 packed biases [bq1, bq2, bo, b_bottleneck]
    out_ref:   (1, HW, Cout) f32 memory_output pixels
    cat_ref:   (HW + 4W, 2C) bf16 VMEM scratch: zero halo + [feats | ctx]
    """
    f32, bf16 = jnp.float32, jnp.bfloat16
    dot = functools.partial(jnp.dot, preferred_element_type=f32)
    relu = lambda v: jnp.maximum(v, 0.0)

    x = feats_ref[0]                                    # (HW, C) bf16
    HW = x.shape[0]
    P = 2 * W                                           # zero-halo rows (>= W+1)

    bq1 = bias_ref[0:1, :]                              # (1, Tp) f32
    bq2 = bias_ref[1:2, :]
    bo = bias_ref[2:3, :C]                              # (1, C)
    bcv = bias_ref[3:4, :Cout]                          # (1, Cout)

    # --- query_project: 2 x (1x1 conv -> BN -> ReLU); weights pre-folded.
    q = relu(dot(x, wq1_ref[...]) + bq1)                # (HW, Tp) f32
    q = relu(dot(q.astype(bf16), wq2_ref[...]) + bq2)   # (HW, Tp) f32

    # --- attention over the K memory rows (K/V hoisted to the wrapper).
    sim = dot(q.astype(bf16), kt_ref[...]) * scale      # (HW, K) f32
    sim = sim - jnp.max(sim, axis=-1, keepdims=True)
    e = jnp.exp(sim)
    p = e * pl.reciprocal(jnp.sum(e, axis=-1, keepdims=True), approx=True)
    ctx = relu(dot(p.astype(bf16), vo_ref[...]) + bo)   # (HW, C) f32

    # --- bottleneck: concat([feats, ctx]) -> 3x3 conv (pad=1) -> BN -> ReLU.
    # concat + zero padding are realized as stores into the VMEM scratch; the
    # 3x3 taps are flat row shifts of it, so no im2col / ctx ever hits HBM.
    zeros_pad = jnp.zeros((P, 2 * C), bf16)
    cat_ref[0:P, :] = zeros_pad                          # top halo
    cat_ref[P + HW:2 * P + HW, :] = zeros_pad            # bottom halo
    cat_ref[P:P + HW, 0:C] = x                           # feats channels
    cat_ref[P:P + HW, C:2 * C] = ctx.astype(bf16)        # context channels

    col = col_ref[...]                                   # (HW, 1) int32
    acc = jnp.zeros((HW, Cout), f32)
    # Per-tap accumulation (taps already live in VMEM); kept as 9 accumulated
    # dots rather than a lane-concatenated single deep dot to avoid minor-dim
    # relayouts -- MXU pass count is identical at these channel widths.
    for ky in range(3):                                  # static unroll, 3x3
        for kx in range(3):
            dy, dx = ky - 1, kx - 1
            start = P + dy * W + dx
            tap = cat_ref[start:start + HW, :]           # (HW, 2C) bf16
            if dx == -1:                                 # left column wrap
                tap = jnp.where(col >= 1, tap, jnp.zeros_like(tap))
            elif dx == 1:                                # right column wrap
                tap = jnp.where(col <= W - 2, tap, jnp.zeros_like(tap))
            acc = acc + dot(tap, wconv_ref[ky * 3 + kx])
    out_ref[0] = relu(acc + bcv).astype(out_ref.dtype)


# ----------------------------------------------------------------------------
# Wrapper: batch-invariant precompute (K/V hoist, folds, padding) + pallas_call
# ----------------------------------------------------------------------------
def _pack_operands(params, transform_channels):
    """Hoist K/V projections, fold out-project into V, lane-pad to Tp=128,
    cast matmul operands to bf16, pack biases into one array."""
    relu = lambda v: jnp.maximum(v, 0.0)
    f32, bf16 = jnp.float32, jnp.bfloat16
    T = transform_channels
    C = params['wq1'].shape[0]
    Cout = params['w_bottleneck'].shape[-1]
    K = params['memory'].shape[0]
    Tp = 128                                             # lane-padded T
    assert T <= Tp and C <= Tp and Cout <= Tp

    mem = params['memory'][:, 0, :]                                    # (K, C)
    k = relu(relu(mem @ params['wk1'] + params['bk1'])
             @ params['wk2'] + params['bk2'])                          # (K, T)
    v = relu(mem @ params['wv'] + params['bv'])                        # (K, T)
    vo = (v @ params['wo']).astype(bf16)                               # (K, C)
    kt = jnp.zeros((Tp, K), f32).at[:T, :].set(k.T).astype(bf16)       # (Tp, K)

    wq1 = jnp.zeros((C, Tp), f32).at[:, :T].set(params['wq1']).astype(bf16)
    wq2 = jnp.zeros((Tp, Tp), f32).at[:T, :T].set(params['wq2']).astype(bf16)
    wconv = params['w_bottleneck'].astype(bf16)                        # (9,2C,Cout)

    biases = jnp.zeros((4, Tp), f32)
    biases = biases.at[0, :T].set(params['bq1'][0])
    biases = biases.at[1, :T].set(params['bq2'][0])
    biases = biases.at[2, :C].set(params['bo'][0])
    biases = biases.at[3, :Cout].set(params['b_bottleneck'][0])
    return kt, vo, wq1, wq2, wconv, biases


def features_memory_forward(feats_nchw, params, transform_channels):
    B, C, H, W = feats_nchw.shape
    HW = H * W
    K = params['memory'].shape[0]
    Cout = params['w_bottleneck'].shape[-1]
    Tp = 128

    # channels-last, bf16 in HBM (halves the streamed feats bytes)
    feats_flat = jnp.transpose(feats_nchw, (0, 2, 3, 1)).reshape(B, HW, C)
    feats_flat = feats_flat.astype(jnp.bfloat16)
    col = (jnp.arange(HW, dtype=jnp.int32) % W).reshape(HW, 1)
    kt, vo, wq1, wq2, wconv, biases = _pack_operands(params, transform_channels)

    kernel = functools.partial(
        _fused_attention_conv_kernel, W=W, C=C, Cout=Cout,
        scale=float(transform_channels) ** -0.5)

    out_flat = pl.pallas_call(
        kernel,
        out_shape=jax.ShapeDtypeStruct((B, HW, Cout), jnp.float32),
        grid=(B,),
        in_specs=[
            pl.BlockSpec((1, HW, C), lambda b: (b, 0, 0)),        # feats
            pl.BlockSpec((HW, 1), lambda b: (0, 0)),              # col idx
            pl.BlockSpec((Tp, K), lambda b: (0, 0)),              # k^T
            pl.BlockSpec((K, C), lambda b: (0, 0)),               # v @ Wo
            pl.BlockSpec((C, Tp), lambda b: (0, 0)),              # wq1
            pl.BlockSpec((Tp, Tp), lambda b: (0, 0)),             # wq2
            pl.BlockSpec((9, 2 * C, Cout), lambda b: (0, 0, 0)),  # conv taps
            pl.BlockSpec((4, Tp), lambda b: (0, 0)),              # biases
        ],
        out_specs=pl.BlockSpec((1, HW, Cout), lambda b: (b, 0, 0)),
        scratch_shapes=[pltpu.VMEM((HW + 4 * W, 2 * C), jnp.bfloat16)],
        compiler_params=pltpu.CompilerParams(
            dimension_semantics=("parallel",),
            vmem_limit_bytes=32 * 1024 * 1024),
    )(feats_flat, col, kt, vo, wq1, wq2, wconv, biases)

    memory_output = jnp.transpose(out_flat.reshape(B, H, W, Cout),
                                  (0, 3, 1, 2))                    # NCHW
    return params['memory'], memory_output


# ----------------------------------------------------------------------------
# Parameter construction (deterministic, synthetic) + BN folding
# ----------------------------------------------------------------------------
def _bn_fold(w, gamma, beta, mean, var, eps=1e-5):
    scale = gamma / jnp.sqrt(var + eps)
    return w * scale[None, :], (beta - mean * scale)[None, :]


def init_features_memory_params(key, num_classes, C, T, Cout):
    keys = iter(jax.random.split(key, 64))

    def conv_w(cin, cout):
        return 0.2 * jax.random.normal(next(keys), (cin, cout), jnp.float32)

    def bn(ch):
        gamma = 1.0 + 0.1 * jax.random.normal(next(keys), (ch,), jnp.float32)
        beta = 0.1 * jax.random.normal(next(keys), (ch,), jnp.float32)
        mean = 0.1 * jax.random.normal(next(keys), (ch,), jnp.float32)
        var = jnp.abs(jax.random.normal(next(keys), (ch,), jnp.float32)) + 0.5
        return gamma, beta, mean, var

    params = {}
    # query_project (2 convs), key_project (2 convs), value_project, out_project
    for name, cin, cout in [('q1', C, T), ('q2', T, T),
                            ('k1', C, T), ('k2', T, T),
                            ('v', C, T), ('o', T, C)]:
        wf, bf = _bn_fold(conv_w(cin, cout), *bn(cout))
        params['w' + name] = wf
        params['b' + name] = bf

    # bottleneck: 3x3 conv (2C -> Cout, no bias) + BN + ReLU  (HWIO weights)
    wb = 0.1 * jax.random.normal(next(keys), (3, 3, 2 * C, Cout), jnp.float32)
    gamma, beta, mean, var = bn(Cout)
    scale = gamma / jnp.sqrt(var + 1e-5)
    params['w_bottleneck'] = (wb * scale[None, None, None, :]).reshape(
        9, 2 * C, Cout)
    params['b_bottleneck'] = (beta - mean * scale)[None, :]

    # memory parameter: (num_classes, num_feats_per_cls=1, feats_channels)
    params['memory'] = 0.5 * jax.random.normal(
        next(keys), (num_classes, 1, C), jnp.float32)
    return params


# ----------------------------------------------------------------------------
# Pure-JAX f32 reference (for correctness check)
# ----------------------------------------------------------------------------
def reference_forward(feats_nchw, p, transform_channels):
    B, C, H, W = feats_nchw.shape
    relu = lambda v: jnp.maximum(v, 0.0)
    feats_nhwc = jnp.transpose(feats_nchw, (0, 2, 3, 1))
    x = feats_nhwc.reshape(B, H * W, C)
    m = p['memory'][:, 0, :]
    q = relu(x @ p['wq1'] + p['bq1'])
    q = relu(q @ p['wq2'] + p['bq2'])
    k = relu(m @ p['wk1'] + p['bk1'])
    k = relu(k @ p['wk2'] + p['bk2'])
    v = relu(m @ p['wv'] + p['bv'])
    sim = jnp.einsum('bqt,kt->bqk', q, k) * transform_channels ** -0.5
    sm = jax.nn.softmax(sim, axis=-1)
    ctx = jnp.einsum('bqk,kt->bqt', sm, v)
    ctx = relu(ctx @ p['wo'] + p['bo']).reshape(B, H, W, C)
    cat = jnp.concatenate([feats_nhwc, ctx], axis=-1)
    w = p['w_bottleneck'].reshape(3, 3, 2 * C, -1)
    conv = jax.lax.conv_general_dilated(
        cat, w, window_strides=(1, 1), padding='SAME',
        dimension_numbers=('NHWC', 'HWIO', 'NHWC'))
    out = relu(conv + p['b_bottleneck'][0])
    return p['memory'], jnp.transpose(out, (0, 3, 1, 2))


if __name__ == "__main__":
    key = jax.random.PRNGKey(0)
    B, C, H, W = 2, 32, 16, 16          # batch, feats_channels, spatial
    T, Cout, num_classes = 16, 32, 8    # transform_channels, out_channels, K

    kp, kf = jax.random.split(key)
    params = init_features_memory_params(kp, num_classes, C, T, Cout)
    feats = jax.random.normal(kf, (B, C, H, W), jnp.float32)

    fwd = jax.jit(features_memory_forward, static_argnums=2)
    memory, memory_output = fwd(feats, params, T)
    jax.block_until_ready(memory_output)

    ref_mem, ref_out = reference_forward(feats, params, T)
    assert memory.shape == (num_classes, 1, C)
    assert memory_output.shape == (B, Cout, H, W)
    assert jnp.allclose(memory, ref_mem)
    # bf16 matmul operands with f32 accumulation vs the f32 reference:
    # relaxed (but still tight) tolerance.
    max_err = float(jnp.max(jnp.abs(memory_output - ref_out)))
    assert jnp.allclose(memory_output, ref_out, atol=1e-1, rtol=5e-2), max_err

    print("KERNEL_OK")
</pallas_src>

<mosaic_0001>
module attributes {stable_mosaic.version = 11 : i64} {
  func.func @_fused_attention_conv_kernel(%arg0: i32, %arg1: memref<1x256x32xbf16, #tpu.memory_space<vmem>>, %arg2: memref<256x1xi32, #tpu.memory_space<vmem>>, %arg3: memref<128x8xbf16, #tpu.memory_space<vmem>>, %arg4: memref<8x32xbf16, #tpu.memory_space<vmem>>, %arg5: memref<32x128xbf16, #tpu.memory_space<vmem>>, %arg6: memref<128x128xbf16, #tpu.memory_space<vmem>>, %arg7: memref<9x64x32xbf16, #tpu.memory_space<vmem>>, %arg8: memref<4x128xf32, #tpu.memory_space<vmem>>, %arg9: memref<1x256x32xf32, #tpu.memory_space<vmem>>, %arg10: memref<320x64xbf16, #tpu.memory_space<vmem>>) attributes {dimension_semantics = [#tpu.dimension_semantics<parallel>], iteration_bounds = array<i64: 2>, scalar_prefetch = 0 : i64, scratch_operands = 1 : i64, tpu.core_type = #tpu.core_type<tc>, window_params = [{transform_indices = @transform_0, window_bounds = array<i64: 1, 256, 32>}, {pipeline_mode = #tpu.pipeline_mode<synchronous>, transform_indices = @transform_1, window_bounds = array<i64: 256, 1>}, {pipeline_mode = #tpu.pipeline_mode<synchronous>, transform_indices = @transform_2, window_bounds = array<i64: 128, 8>}, {pipeline_mode = #tpu.pipeline_mode<synchronous>, transform_indices = @transform_3, window_bounds = array<i64: 8, 32>}, {pipeline_mode = #tpu.pipeline_mode<synchronous>, transform_indices = @transform_4, window_bounds = array<i64: 32, 128>}, {pipeline_mode = #tpu.pipeline_mode<synchronous>, transform_indices = @transform_5, window_bounds = array<i64: 128, 128>}, {pipeline_mode = #tpu.pipeline_mode<synchronous>, transform_indices = @transform_6, window_bounds = array<i64: 9, 64, 32>}, {pipeline_mode = #tpu.pipeline_mode<synchronous>, transform_indices = @transform_7, window_bounds = array<i64: 4, 128>}, {transform_indices = @transform_8, window_bounds = array<i64: 1, 256, 32>}]} {
    %c0 = arith.constant 0 : index
    %c0_0 = arith.constant 0 : index
    %c0_1 = arith.constant 0 : index
    %0 = vector.load %arg1[%c0, %c0_0, %c0_1] : memref<1x256x32xbf16, #tpu.memory_space<vmem>>, vector<1x256x32xbf16>
    %1 = vector.shape_cast %0 : vector<1x256x32xbf16> to vector<256x32xbf16>
    %c0_2 = arith.constant 0 : index
    %c0_3 = arith.constant 0 : index
    %2 = vector.load %arg8[%c0_2, %c0_3] : memref<4x128xf32, #tpu.memory_space<vmem>>, vector<1x128xf32>
    %c1 = arith.constant 1 : index
    %c0_4 = arith.constant 0 : index
    %3 = vector.load %arg8[%c1, %c0_4] : memref<4x128xf32, #tpu.memory_space<vmem>>, vector<1x128xf32>
    %c2 = arith.constant 2 : index
    %c0_5 = arith.constant 0 : index
    %4 = vector.load %arg8[%c2, %c0_5] : memref<4x128xf32, #tpu.memory_space<vmem>>, vector<1x32xf32>
    %c3 = arith.constant 3 : index
    %c0_6 = arith.constant 0 : index
    %5 = vector.load %arg8[%c3, %c0_6] : memref<4x128xf32, #tpu.memory_space<vmem>>, vector<1x32xf32>
    %c0_7 = arith.constant 0 : index
    %c0_8 = arith.constant 0 : index
    %6 = vector.load %arg5[%c0_7, %c0_8] : memref<32x128xbf16, #tpu.memory_space<vmem>>, vector<32x128xbf16>
    %cst = arith.constant dense<0.000000e+00> : vector<256x128xf32>
    %7 = tpu.matmul %1, %6, %cst {dimension_numbers = #tpu.dot_dimension_numbers<[1], [0], [0], [1], [0, 0, 1, 1], [], []>} : vector<256x32xbf16>, vector<32x128xbf16>, vector<256x128xf32> -> vector<256x128xf32>
    %8 = vector.broadcast %2 : vector<1x128xf32> to vector<256x128xf32>
    %9 = arith.addf %7, %8 : vector<256x128xf32>
    %cst_9 = arith.constant 0.000000e+00 : f32
    %10 = vector.broadcast %cst_9 : f32 to vector<256x128xf32>
    %11 = arith.maximumf %9, %10 : vector<256x128xf32>
    %12 = arith.truncf %11 : vector<256x128xf32> to vector<256x128xbf16>
    %c0_10 = arith.constant 0 : index
    %c0_11 = arith.constant 0 : index
    %13 = vector.load %arg6[%c0_10, %c0_11] : memref<128x128xbf16, #tpu.memory_space<vmem>>, vector<128x128xbf16>
    %cst_12 = arith.constant dense<0.000000e+00> : vector<256x128xf32>
    %14 = tpu.matmul %12, %13, %cst_12 {dimension_numbers = #tpu.dot_dimension_numbers<[1], [0], [0], [1], [0, 0, 1, 1], [], []>} : vector<256x128xbf16>, vector<128x128xbf16>, vector<256x128xf32> -> vector<256x128xf32>
    %15 = vector.broadcast %3 : vector<1x128xf32> to vector<256x128xf32>
    %16 = arith.addf %14, %15 : vector<256x128xf32>
    %cst_13 = arith.constant 0.000000e+00 : f32
    %17 = vector.broadcast %cst_13 : f32 to vector<256x128xf32>
    %18 = arith.maximumf %16, %17 : vector<256x128xf32>
    %19 = arith.truncf %18 : vector<256x128xf32> to vector<256x128xbf16>
    %c0_14 = arith.constant 0 : index
    %c0_15 = arith.constant 0 : index
    %20 = vector.load %arg3[%c0_14, %c0_15] : memref<128x8xbf16, #tpu.memory_space<vmem>>, vector<128x8xbf16>
    %cst_16 = arith.constant dense<0.000000e+00> : vector<256x8xf32>
    %21 = tpu.matmul %19, %20, %cst_16 {dimension_numbers = #tpu.dot_dimension_numbers<[1], [0], [0], [1], [0, 0, 1, 1], [], []>} : vector<256x128xbf16>, vector<128x8xbf16>, vector<256x8xf32> -> vector<256x8xf32>
    %cst_17 = arith.constant 2.500000e-01 : f32
    %22 = vector.broadcast %cst_17 : f32 to vector<256x8xf32>
    %23 = arith.mulf %21, %22 : vector<256x8xf32>
    %cst_18 = arith.constant dense<0xFF800000> : vector<256xf32>
    %24 = vector.multi_reduction <maximumf>, %23, %cst_18 [1] : vector<256x8xf32> to vector<256xf32>
    %25 = vector.shape_cast %24 : vector<256xf32> to vector<256x1xf32>
    %26 = vector.broadcast %25 : vector<256x1xf32> to vector<256x8xf32>
    %27 = arith.subf %23, %26 : vector<256x8xf32>
    %28 = math.exp %27 : vector<256x8xf32>
    %cst_19 = arith.constant dense<0.000000e+00> : vector<256xf32>
    %29 = vector.multi_reduction <add>, %28, %cst_19 [1] : vector<256x8xf32> to vector<256xf32>
    %30 = vector.shape_cast %29 : vector<256xf32> to vector<256x1xf32>
    %31 = tpu.reciprocal %30 {approx = true} : vector<256x1xf32> -> vector<256x1xf32>
    %32 = vector.broadcast %31 : vector<256x1xf32> to vector<256x8xf32>
    %33 = arith.mulf %28, %32 : vector<256x8xf32>
    %34 = arith.truncf %33 : vector<256x8xf32> to vector<256x8xbf16>
    %c0_20 = arith.constant 0 : index
    %c0_21 = arith.constant 0 : index
    %35 = vector.load %arg4[%c0_20, %c0_21] : memref<8x32xbf16, #tpu.memory_space<vmem>>, vector<8x32xbf16>
    %cst_22 = arith.constant dense<0.000000e+00> : vector<256x32xf32>
    %36 = tpu.matmul %34, %35, %cst_22 {dimension_numbers = #tpu.dot_dimension_numbers<[1], [0], [0], [1], [0, 0, 1, 1], [], []>} : vector<256x8xbf16>, vector<8x32xbf16>, vector<256x32xf32> -> vector<256x32xf32>
    %37 = vector.broadcast %4 : vector<1x32xf32> to vector<256x32xf32>
    %38 = arith.addf %36, %37 : vector<256x32xf32>
    %cst_23 = arith.constant 0.000000e+00 : f32
    %39 = vector.broadcast %cst_23 : f32 to vector<256x32xf32>
    %40 = arith.maximumf %38, %39 : vector<256x32xf32>
    %cst_24 = arith.constant 0.000000e+00 : bf16
    %41 = vector.broadcast %cst_24 : bf16 to vector<32x64xbf16>
    %c0_25 = arith.constant 0 : index
    %c0_26 = arith.constant 0 : index
    %42 = vector.load %arg10[%c0_25, %c0_26] : memref<320x64xbf16, #tpu.memory_space<vmem>>, vector<32x64xbf16>
    tpu.vector_store %arg10[%c0_25, %c0_26], %41 {strides = array<i32>} : memref<320x64xbf16, #tpu.memory_space<vmem>>, vector<32x64xbf16>,
    %c288 = arith.constant 288 : index
    %c0_27 = arith.constant 0 : index
    %43 = vector.load %arg10[%c288, %c0_27] : memref<320x64xbf16, #tpu.memory_space<vmem>>, vector<32x64xbf16>
    tpu.vector_store %arg10[%c288, %c0_27], %41 {strides = array<i32>} : memref<320x64xbf16, #tpu.memory_space<vmem>>, vector<32x64xbf16>,
    %c32 = arith.constant 32 : index
    %c0_28 = arith.constant 0 : index
    %44 = vector.load %arg10[%c32, %c0_28] : memref<320x64xbf16, #tpu.memory_space<vmem>>, vector<256x32xbf16>
    tpu.vector_store %arg10[%c32, %c0_28], %1 {strides = array<i32>} : memref<320x64xbf16, #tpu.memory_space<vmem>>, vector<256x32xbf16>,
    %45 = arith.truncf %40 : vector<256x32xf32> to vector<256x32xbf16>
    %c32_29 = arith.constant 32 : index
    %c32_30 = arith.constant 32 : index
    %46 = vector.load %arg10[%c32_29, %c32_30] : memref<320x64xbf16, #tpu.memory_space<vmem>>, vector<256x32xbf16>
    tpu.vector_store %arg10[%c32_29, %c32_30], %45 {strides = array<i32>} : memref<320x64xbf16, #tpu.memory_space<vmem>>, vector<256x32xbf16>,
    %c0_31 = arith.constant 0 : index
    %c0_32 = arith.constant 0 : index
    %47 = vector.load %arg2[%c0_31, %c0_32] : memref<256x1xi32, #tpu.memory_space<vmem>>, vector<256x1xi32>
    %cst_33 = arith.constant 0.000000e+00 : f32
    %48 = vector.broadcast %cst_33 : f32 to vector<256x32xf32>
    %c15 = arith.constant 15 : index
    %c0_34 = arith.constant 0 : index
    %49 = vector.load %arg10[%c15, %c0_34] : memref<320x64xbf16, #tpu.memory_space<vmem>>, vector<256x64xbf16>
    %c1_i32 = arith.constant 1 : i32
    %50 = vector.broadcast %c1_i32 : i32 to vector<256x1xi32>
    %51 = arith.cmpi sge, %47, %50 : vector<256x1xi32>
    %cst_35 = arith.constant 0.000000e+00 : bf16
    %52 = vector.broadcast %cst_35 : bf16 to vector<256x64xbf16>
    %53 = vector.shape_cast %51 : vector<256x1xi1> to vector<256x1xi1>
    %54 = vector.broadcast %53 : vector<256x1xi1> to vector<256x64xi1>
    %55 = arith.select %54, %49, %52 : vector<256x64xi1>, vector<256x64xbf16>
    %c0_36 = arith.constant 0 : index
    %c0_37 = arith.constant 0 : index
    %c0_38 = arith.constant 0 : index
    %56 = vector.load %arg7[%c0_36, %c0_37, %c0_38] : memref<9x64x32xbf16, #tpu.memory_space<vmem>>, vector<1x64x32xbf16>
    %57 = vector.shape_cast %56 : vector<1x64x32xbf16> to vector<64x32xbf16>
    %cst_39 = arith.constant dense<0.000000e+00> : vector<256x32xf32>
    %58 = tpu.matmul %55, %57, %cst_39 {dimension_numbers = #tpu.dot_dimension_numbers<[1], [0], [0], [1], [0, 0, 1, 1], [], []>} : vector<256x64xbf16>, vector<64x32xbf16>, vector<256x32xf32> -> vector<256x32xf32>
    %59 = arith.addf %48, %58 : vector<256x32xf32>
    %c16 = arith.constant 16 : index
    %c0_40 = arith.constant 0 : index
    %60 = vector.load %arg10[%c16, %c0_40] : memref<320x64xbf16, #tpu.memory_space<vmem>>, vector<256x64xbf16>
    %c1_41 = arith.constant 1 : index
    %c0_42 = arith.constant 0 : index
    %c0_43 = arith.constant 0 : index
    %61 = vector.load %arg7[%c1_41, %c0_42, %c0_43] : memref<9x64x32xbf16, #tpu.memory_space<vmem>>, vector<1x64x32xbf16>
    %62 = vector.shape_cast %61 : vector<1x64x32xbf16> to vector<64x32xbf16>
    %cst_44 = arith.constant dense<0.000000e+00> : vector<256x32xf32>
    %63 = tpu.matmul %60, %62, %cst_44 {dimension_numbers = #tpu.dot_dimension_numbers<[1], [0], [0], [1], [0, 0, 1, 1], [], []>} : vector<256x64xbf16>, vector<64x32xbf16>, vector<256x32xf32> -> vector<256x32xf32>
    %64 = arith.addf %59, %63 : vector<256x32xf32>
    %c17 = arith.constant 17 : index
    %c0_45 = arith.constant 0 : index
    %65 = vector.load %arg10[%c17, %c0_45] : memref<320x64xbf16, #tpu.memory_space<vmem>>, vector<256x64xbf16>
    %c14_i32 = arith.constant 14 : i32
    %66 = vector.broadcast %c14_i32 : i32 to vector<256x1xi32>
    %67 = arith.cmpi sle, %47, %66 : vector<256x1xi32>
    %cst_46 = arith.constant 0.000000e+00 : bf16
    %68 = vector.broadcast %cst_46 : bf16 to vector<256x64xbf16>
    %69 = vector.shape_cast %67 : vector<256x1xi1> to vector<256x1xi1>
    %70 = vector.broadcast %69 : vector<256x1xi1> to vector<256x64xi1>
    %71 = arith.select %70, %65, %68 : vector<256x64xi1>, vector<256x64xbf16>
    %c2_47 = arith.constant 2 : index
    %c0_48 = arith.constant 0 : index
    %c0_49 = arith.constant 0 : index
    %72 = vector.load %arg7[%c2_47, %c0_48, %c0_49] : memref<9x64x32xbf16, #tpu.memory_space<vmem>>, vector<1x64x32xbf16>
    %73 = vector.shape_cast %72 : vector<1x64x32xbf16> to vector<64x32xbf16>
    %cst_50 = arith.constant dense<0.000000e+00> : vector<256x32xf32>
    %74 = tpu.matmul %71, %73, %cst_50 {dimension_numbers = #tpu.dot_dimension_numbers<[1], [0], [0], [1], [0, 0, 1, 1], [], []>} : vector<256x64xbf16>, vector<64x32xbf16>, vector<256x32xf32> -> vector<256x32xf32>
    %75 = arith.addf %64, %74 : vector<256x32xf32>
    %c31 = arith.constant 31 : index
    %c0_51 = arith.constant 0 : index
    %76 = vector.load %arg10[%c31, %c0_51] : memref<320x64xbf16, #tpu.memory_space<vmem>>, vector<256x64xbf16>
    %c1_i32_52 = arith.constant 1 : i32
    %77 = vector.broadcast %c1_i32_52 : i32 to vector<256x1xi32>
    %78 = arith.cmpi sge, %47, %77 : vector<256x1xi32>
    %cst_53 = arith.constant 0.000000e+00 : bf16
    %79 = vector.broadcast %cst_53 : bf16 to vector<256x64xbf16>
    %80 = vector.shape_cast %78 : vector<256x1xi1> to vector<256x1xi1>
    %81 = vector.broadcast %80 : vector<256x1xi1> to vector<256x64xi1>
    %82 = arith.select %81, %76, %79 : vector<256x64xi1>, vector<256x64xbf16>
    %c3_54 = arith.constant 3 : index
    %c0_55 = arith.constant 0 : index
    %c0_56 = arith.constant 0 : index
    %83 = vector.load %arg7[%c3_54, %c0_55, %c0_56] : memref<9x64x32xbf16, #tpu.memory_space<vmem>>, vector<1x64x32xbf16>
    %84 = vector.shape_cast %83 : vector<1x64x32xbf16> to vector<64x32xbf16>
    %cst_57 = arith.constant dense<0.000000e+00> : vector<256x32xf32>
    %85 = tpu.matmul %82, %84, %cst_57 {dimension_numbers = #tpu.dot_dimension_numbers<[1], [0], [0], [1], [0, 0, 1, 1], [], []>} : vector<256x64xbf16>, vector<64x32xbf16>, vector<256x32xf32> -> vector<256x32xf32>
    %86 = arith.addf %75, %85 : vector<256x32xf32>
    %c32_58 = arith.constant 32 : index
    %c0_59 = arith.constant 0 : index
    %87 = vector.load %arg10[%c32_58, %c0_59] : memref<320x64xbf16, #tpu.memory_space<vmem>>, vector<256x64xbf16>
    %c4 = arith.constant 4 : index
    %c0_60 = arith.constant 0 : index
    %c0_61 = arith.constant 0 : index
    %88 = vector.load %arg7[%c4, %c0_60, %c0_61] : memref<9x64x32xbf16, #tpu.memory_space<vmem>>, vector<1x64x32xbf16>
    %89 = vector.shape_cast %88 : vector<1x64x32xbf16> to vector<64x32xbf16>
    %cst_62 = arith.constant dense<0.000000e+00> : vector<256x32xf32>
    %90 = tpu.matmul %87, %89, %cst_62 {dimension_numbers = #tpu.dot_dimension_numbers<[1], [0], [0], [1], [0, 0, 1, 1], [], []>} : vector<256x64xbf16>, vector<64x32xbf16>, vector<256x32xf32> -> vector<256x32xf32>
    %91 = arith.addf %86, %90 : vector<256x32xf32>
    %c33 = arith.constant 33 : index
    %c0_63 = arith.constant 0 : index
    %92 = vector.load %arg10[%c33, %c0_63] : memref<320x64xbf16, #tpu.memory_space<vmem>>, vector<256x64xbf16>
    %c14_i32_64 = arith.constant 14 : i32
    %93 = vector.broadcast %c14_i32_64 : i32 to vector<256x1xi32>
    %94 = arith.cmpi sle, %47, %93 : vector<256x1xi32>
    %cst_65 = arith.constant 0.000000e+00 : bf16
    %95 = vector.broadcast %cst_65 : bf16 to vector<256x64xbf16>
    %96 = vector.shape_cast %94 : vector<256x1xi1> to vector<256x1xi1>
    %97 = vector.broadcast %96 : vector<256x1xi1> to vector<256x64xi1>
    %98 = arith.select %97, %92, %95 : vector<256x64xi1>, vector<256x64xbf16>
    %c5 = arith.constant 5 : index
    %c0_66 = arith.constant 0 : index
    %c0_67 = arith.constant 0 : index
    %99 = vector.load %arg7[%c5, %c0_66, %c0_67] : memref<9x64x32xbf16, #tpu.memory_space<vmem>>, vector<1x64x32xbf16>
    %100 = vector.shape_cast %99 : vector<1x64x32xbf16> to vector<64x32xbf16>
    %cst_68 = arith.constant dense<0.000000e+00> : vector<256x32xf32>
    %101 = tpu.matmul %98, %100, %cst_68 {dimension_numbers = #tpu.dot_dimension_numbers<[1], [0], [0], [1], [0, 0, 1, 1], [], []>} : vector<256x64xbf16>, vector<64x32xbf16>, vector<256x32xf32> -> vector<256x32xf32>
    %102 = arith.addf %91, %101 : vector<256x32xf32>
    %c47 = arith.constant 47 : index
    %c0_69 = arith.constant 0 : index
    %103 = vector.load %arg10[%c47, %c0_69] : memref<320x64xbf16, #tpu.memory_space<vmem>>, vector<256x64xbf16>
    %c1_i32_70 = arith.constant 1 : i32
    %104 = vector.broadcast %c1_i32_70 : i32 to vector<256x1xi32>
    %105 = arith.cmpi sge, %47, %104 : vector<256x1xi32>
    %cst_71 = arith.constant 0.000000e+00 : bf16
    %106 = vector.broadcast %cst_71 : bf16 to vector<256x64xbf16>
    %107 = vector.shape_cast %105 : vector<256x1xi1> to vector<256x1xi1>
    %108 = vector.broadcast %107 : vector<256x1xi1> to vector<256x64xi1>
    %109 = arith.select %108, %103, %106 : vector<256x64xi1>, vector<256x64xbf16>
    %c6 = arith.constant 6 : index
    %c0_72 = arith.constant 0 : index
    %c0_73 = arith.constant 0 : index
    %110 = vector.load %arg7[%c6, %c0_72, %c0_73] : memref<9x64x32xbf16, #tpu.memory_space<vmem>>, vector<1x64x32xbf16>
    %111 = vector.shape_cast %110 : vector<1x64x32xbf16> to vector<64x32xbf16>
    %cst_74 = arith.constant dense<0.000000e+00> : vector<256x32xf32>
    %112 = tpu.matmul %109, %111, %cst_74 {dimension_numbers = #tpu.dot_dimension_numbers<[1], [0], [0], [1], [0, 0, 1, 1], [], []>} : vector<256x64xbf16>, vector<64x32xbf16>, vector<256x32xf32> -> vector<256x32xf32>
    %113 = arith.addf %102, %112 : vector<256x32xf32>
    %c48 = arith.constant 48 : index
    %c0_75 = arith.constant 0 : index
    %114 = vector.load %arg10[%c48, %c0_75] : memref<320x64xbf16, #tpu.memory_space<vmem>>, vector<256x64xbf16>
    %c7 = arith.constant 7 : index
    %c0_76 = arith.constant 0 : index
    %c0_77 = arith.constant 0 : index
    %115 = vector.load %arg7[%c7, %c0_76, %c0_77] : memref<9x64x32xbf16, #tpu.memory_space<vmem>>, vector<1x64x32xbf16>
    %116 = vector.shape_cast %115 : vector<1x64x32xbf16> to vector<64x32xbf16>
    %cst_78 = arith.constant dense<0.000000e+00> : vector<256x32xf32>
    %117 = tpu.matmul %114, %116, %cst_78 {dimension_numbers = #tpu.dot_dimension_numbers<[1], [0], [0], [1], [0, 0, 1, 1], [], []>} : vector<256x64xbf16>, vector<64x32xbf16>, vector<256x32xf32> -> vector<256x32xf32>
    %118 = arith.addf %113, %117 : vector<256x32xf32>
    %c49 = arith.constant 49 : index
    %c0_79 = arith.constant 0 : index
    %119 = vector.load %arg10[%c49, %c0_79] : memref<320x64xbf16, #tpu.memory_space<vmem>>, vector<256x64xbf16>
    %c14_i32_80 = arith.constant 14 : i32
    %120 = vector.broadcast %c14_i32_80 : i32 to vector<256x1xi32>
    %121 = arith.cmpi sle, %47, %120 : vector<256x1xi32>
    %cst_81 = arith.constant 0.000000e+00 : bf16
    %122 = vector.broadcast %cst_81 : bf16 to vector<256x64xbf16>
    %123 = vector.shape_cast %121 : vector<256x1xi1> to vector<256x1xi1>
    %124 = vector.broadcast %123 : vector<256x1xi1> to vector<256x64xi1>
    %125 = arith.select %124, %119, %122 : vector<256x64xi1>, vector<256x64xbf16>
    %c8 = arith.constant 8 : index
    %c0_82 = arith.constant 0 : index
    %c0_83 = arith.constant 0 : index
    %126 = vector.load %arg7[%c8, %c0_82, %c0_83] : memref<9x64x32xbf16, #tpu.memory_space<vmem>>, vector<1x64x32xbf16>
    %127 = vector.shape_cast %126 : vector<1x64x32xbf16> to vector<64x32xbf16>
    %cst_84 = arith.constant dense<0.000000e+00> : vector<256x32xf32>
    %128 = tpu.matmul %125, %127, %cst_84 {dimension_numbers = #tpu.dot_dimension_numbers<[1], [0], [0], [1], [0, 0, 1, 1], [], []>} : vector<256x64xbf16>, vector<64x32xbf16>, vector<256x32xf32> -> vector<256x32xf32>
    %129 = arith.addf %118, %128 : vector<256x32xf32>
    %130 = vector.broadcast %5 : vector<1x32xf32> to vector<256x32xf32>
    %131 = arith.addf %129, %130 : vector<256x32xf32>
    %cst_85 = arith.constant 0.000000e+00 : f32
    %132 = vector.broadcast %cst_85 : f32 to vector<256x32xf32>
    %133 = arith.maximumf %131, %132 : vector<256x32xf32>
    %c0_86 = arith.constant 0 : index
    %c0_87 = arith.constant 0 : index
    %c0_88 = arith.constant 0 : index
    %134 = vector.load %arg9[%c0_86, %c0_87, %c0_88] : memref<1x256x32xf32, #tpu.memory_space<vmem>>, vector<1x256x32xf32>
    %135 = vector.shape_cast %134 : vector<1x256x32xf32> to vector<256x32xf32>
    %136 = vector.shape_cast %133 : vector<256x32xf32> to vector<1x256x32xf32>
    tpu.vector_store %arg9[%c0_86, %c0_87, %c0_88], %136 {strides = array<i32>} : memref<1x256x32xf32, #tpu.memory_space<vmem>>, vector<1x256x32xf32>,
    return
  }
  func.func @transform_0(%arg0: i32) -> (i32, i32, i32) {
    %c0_i32 = arith.constant 0 : i32
    %c0_i32_0 = arith.constant 0 : i32
    %c0_i32_1 = arith.constant 0 : i32
    return %arg0, %c0_i32, %c0_i32_0 : i32, i32, i32
  }
  func.func @transform_1(%arg0: i32) -> (i32, i32) {
    %c0_i32 = arith.constant 0 : i32
    %c0_i32_0 = arith.constant 0 : i32
    %c0_i32_1 = arith.constant 0 : i32
    return %c0_i32, %c0_i32_0 : i32, i32
  }
  func.func @transform_2(%arg0: i32) -> (i32, i32) {
    %c0_i32 = arith.constant 0 : i32
    %c0_i32_0 = arith.constant 0 : i32
    %c0_i32_1 = arith.constant 0 : i32
    return %c0_i32, %c0_i32_0 : i32, i32
  }
  func.func @transform_3(%arg0: i32) -> (i32, i32) {
    %c0_i32 = arith.constant 0 : i32
    %c0_i32_0 = arith.constant 0 : i32
    %c0_i32_1 = arith.constant 0 : i32
    return %c0_i32, %c0_i32_0 : i32, i32
  }
  func.func @transform_4(%arg0: i32) -> (i32, i32) {
    %c0_i32 = arith.constant 0 : i32
    %c0_i32_0 = arith.constant 0 : i32
    %c0_i32_1 = arith.constant 0 : i32
    return %c0_i32, %c0_i32_0 : i32, i32
  }
  func.func @transform_5(%arg0: i32) -> (i32, i32) {
    %c0_i32 = arith.constant 0 : i32
    %c0_i32_0 = arith.constant 0 : i32
    %c0_i32_1 = arith.constant 0 : i32
    return %c0_i32, %c0_i32_0 : i32, i32
  }
  func.func @transform_6(%arg0: i32) -> (i32, i32, i32) {
    %c0_i32 = arith.constant 0 : i32
    %c0_i32_0 = arith.constant 0 : i32
    %c0_i32_1 = arith.constant 0 : i32
    %c0_i32_2 = arith.constant 0 : i32
    return %c0_i32, %c0_i32_0, %c0_i32_1 : i32, i32, i32
  }
  func.func @transform_7(%arg0: i32) -> (i32, i32) {
    %c0_i32 = arith.constant 0 : i32
    %c0_i32_0 = arith.constant 0 : i32
    %c0_i32_1 = arith.constant 0 : i32
    return %c0_i32, %c0_i32_0 : i32, i32
  }
  func.func @transform_8(%arg0: i32) -> (i32, i32, i32) {
    %c0_i32 = arith.constant 0 : i32
    %c0_i32_0 = arith.constant 0 : i32
    %c0_i32_1 = arith.constant 0 : i32
    return %arg0, %c0_i32, %c0_i32_0 : i32, i32, i32
  }
}

</mosaic_0001>

<llo_original>
// kernel: features_memory_forward.1
$region0: #{features_memory_forward.1}
  #allocation0 [shape = 'u32[]', space=smem, size = 0x4, offset = 0x4, fixed_abs, tag = 'smem constant byte address 0x4 - core index']
  #allocation1 [shape = 'u32[144,128]{1,0:T(1,128)}', space=vmem, size = 0x12000, scoped, tag = 'internal scratch']
  #allocation2 [shape = 'bf16[320,64]{1,0:T(8,128)(2,1)}', space=vmem, size = 0x14000, scoped, tag = 'scratch operand']
  %s0 = inlined_call_operand.vmem [shape: bf16[2,256,32], index: 0, kind: input, shape index: {}]
  %s1 = inlined_call_operand.vmem [shape: s32[256,1], index: 1, kind: input, shape index: {}]
  %s2 = inlined_call_operand.vmem [shape: bf16[128,8], index: 2, kind: input, shape index: {}]
  %s3 = inlined_call_operand.vmem [shape: bf16[8,32], index: 3, kind: input, shape index: {}]
  %s4 = inlined_call_operand.vmem [shape: bf16[32,128], index: 4, kind: input, shape index: {}]
  %s5 = inlined_call_operand.vmem [shape: bf16[128,128], index: 5, kind: input, shape index: {}]
  %s6 = inlined_call_operand.vmem [shape: bf16[9,64,32], index: 6, kind: input, shape index: {}]
  %s7 = inlined_call_operand.vmem [shape: f32[4,128], index: 7, kind: input, shape index: {}]
  %s8 = inlined_call_operand.hbm [shape: f32[2,256,32], index: 8, kind: output, shape index: {}]
  %s9 = sld [smem:[#allocation0]]
  $region65: #{features_memory_forward.1} parent=0
    _
  %s11 = ssub.s32 1, %s9
  %s12 = scalar_select 0, %s11, %s9
  $region1: #{features_memory_forward.1} parent=0
    #allocation3 [shape = 'u8[262144]{0}', space=vmem, size = 0x40000, scoped, tag = 'output window, operand 0']
    #allocation4 [shape = 's32[2]{0}', space=sflag, size = 0x8, scoped, tag = 'scoped memory for features_memory_forward.1']
    %13 = vsyncpa [#allocation4], 0
    %s14 = scalar_lea.sflag [#allocation4], 1
    %15 = vsyncpa %s14, 0
    loop: start=0, step=1, limit=4
    $region2: #{features_memory_forward.1} parent=1 // loop_pre_header
      _
    $region3: #{features_memory_forward.1} parent=1 // loop_header
      %s17 = sphi 0, %s21
      %p18 = scmp.ge.s32.totalorder %s17, 4
      %s27 = sphi 0, %s29
      %s30 = sphi 0, %s27
      %s31 = sphi 0, %s30
      %s47 = sphi 0, %s31
      %s51 = sphi 0, %s51
      %s53 = sphi 0, %s51
      %s54 = sphi 0, %s53
      %s68 = sphi 0, %s54
      %s72 = sphi 0, %s72
      %s74 = sphi 0, %s72
      %s75 = sphi 0, %s74
      %s89 = sphi 0, %s75
      %s93 = sphi 0, %s93
      %s95 = sphi 0, %s93
      %s96 = sphi 0, %s95
      %s110 = sphi 0, %s96
      %s114 = sphi 0, %s114
      %s116 = sphi 0, %s114
      %s117 = sphi 0, %s116
      %s131 = sphi 0, %s117
      %s135 = sphi 0, %s135
      %s137 = sphi 0, %s135
      %s138 = sphi 0, %s137
      %s152 = sphi 0, %s138
      %s156 = sphi 0, %s156
      %s158 = sphi 0, %s156
      %s159 = sphi 0, %s158
      %s173 = sphi 0, %s159
      %s177 = sphi 0, %s177
      %s179 = sphi 0, %s177
      %s180 = sphi 0, %s179
      %s194 = sphi 0, %s180
      %s200 = sphi 0, %s202
      %s203 = sphi 0, %s200
      %s204 = sphi 0, %s203
      %s220 = sphi 0, %s204
    $region4: #{features_memory_forward.1} parent=1 // loop_header_branch
      %20 = sbr.rel (%p18) target = $region8
    $region5: #{features_memory_forward.1} parent=1 // loop_body
      %s22 = ssub.s32 %s17, 1
      %s23 = ssub.s32 %s17, 2
      %s24 = sadd.s32 %s17, 1
      %s25 = ssub.s32 %s17, %s24
      %p26 = scmp.eq.s32.totalorder %s25, 0
      %s28 = sadd.s32 %s27, 1
      %s29 = scalar_select %p26, %s27, %s28
      %p32 = pneg %p26
      %p33 = scmp.eq.s32.totalorder %s17, 1
      %p34 = por %p32, %p33
      %p35 = scmp.ne.s32.totalorder %s27, %s30
      %p36 = scmp.eq.s32.totalorder %s17, 0
      %p37 = por %p35, %p36
      %p38 = scmp.ne.s32.totalorder %s27, %s30
      %p39 = scmp.eq.s32.totalorder %s22, 1
      %p40 = por %p38, %p39
      %p41 = scmp.ne.s32.totalorder %s30, %s31
      %p42 = scmp.eq.s32.totalorder %s22, 0
      %p43 = por %p41, %p42
      %p44 = scmp.ne.s32.totalorder %s30, %s31
      %p45 = scmp.eq.s32.totalorder %s23, 1
      %p46 = por %p44, %p45
      %p48 = scmp.ne.s32.totalorder %s31, %s47
      %p49 = scmp.eq.s32.totalorder %s23, 0
      %p50 = por %p48, %p49
      %s52 = sadd.s32 %s51, 1
      %p55 = scmp.eq.s32.totalorder %s17, 1
      %p56 = scmp.ne.s32.totalorder %s51, %s53
      %p57 = scmp.eq.s32.totalorder %s17, 0
      %p58 = por %p56, %p57
      %p59 = scmp.ne.s32.totalorder %s51, %s53
      %p60 = scmp.eq.s32.totalorder %s22, 1
      %p61 = por %p59, %p60
      %p62 = scmp.ne.s32.totalorder %s53, %s54
      %p63 = scmp.eq.s32.totalorder %s22, 0
      %p64 = por %p62, %p63
      %p65 = scmp.ne.s32.totalorder %s53, %s54
      %p66 = scmp.eq.s32.totalorder %s23, 1
      %p67 = por %p65, %p66
      %p69 = scmp.ne.s32.totalorder %s54, %s68
      %p70 = scmp.eq.s32.totalorder %s23, 0
      %p71 = por %p69, %p70
      %s73 = sadd.s32 %s72, 1
      %p76 = scmp.eq.s32.totalorder %s17, 1
      %p77 = scmp.ne.s32.totalorder %s72, %s74
      %p78 = scmp.eq.s32.totalorder %s17, 0
      %p79 = por %p77, %p78
      %p80 = scmp.ne.s32.totalorder %s72, %s74
      %p81 = scmp.eq.s32.totalorder %s22, 1
      %p82 = por %p80, %p81
      %p83 = scmp.ne.s32.totalorder %s74, %s75
      %p84 = scmp.eq.s32.totalorder %s22, 0
      %p85 = por %p83, %p84
      %p86 = scmp.ne.s32.totalorder %s74, %s75
      %p87 = scmp.eq.s32.totalorder %s23, 1
      %p88 = por %p86, %p87
      %p90 = scmp.ne.s32.totalorder %s75, %s89
      %p91 = scmp.eq.s32.totalorder %s23, 0
      %p92 = por %p90, %p91
      %s94 = sadd.s32 %s93, 1
      %p97 = scmp.eq.s32.totalorder %s17, 1
      %p98 = scmp.ne.s32.totalorder %s93, %s95
      %p99 = scmp.eq.s32.totalorder %s17, 0
      %p100 = por %p98, %p99
      %p101 = scmp.ne.s32.totalorder %s93, %s95
      %p102 = scmp.eq.s32.totalorder %s22, 1
      %p103 = por %p101, %p102
      %p104 = scmp.ne.s32.totalorder %s95, %s96
      %p105 = scmp.eq.s32.totalorder %s22, 0
      %p106 = por %p104, %p105
      %p107 = scmp.ne.s32.totalorder %s95, %s96
      %p108 = scmp.eq.s32.totalorder %s23, 1
      %p109 = por %p107, %p108
      %p111 = scmp.ne.s32.totalorder %s96, %s110
      %p112 = scmp.eq.s32.totalorder %s23, 0
      %p113 = por %p111, %p112
      %s115 = sadd.s32 %s114, 1
      %p118 = scmp.eq.s32.totalorder %s17, 1
      %p119 = scmp.ne.s32.totalorder %s114, %s116
      %p120 = scmp.eq.s32.totalorder %s17, 0
      %p121 = por %p119, %p120
      %p122 = scmp.ne.s32.totalorder %s114, %s116
      %p123 = scmp.eq.s32.totalorder %s22, 1
      %p124 = por %p122, %p123
      %p125 = scmp.ne.s32.totalorder %s116, %s117
      %p126 = scmp.eq.s32.totalorder %s22, 0
      %p127 = por %p125, %p126
      %p128 = scmp.ne.s32.totalorder %s116, %s117
      %p129 = scmp.eq.s32.totalorder %s23, 1
      %p130 = por %p128, %p129
      %p132 = scmp.ne.s32.totalorder %s117, %s131
      %p133 = scmp.eq.s32.totalorder %s23, 0
      %p134 = por %p132, %p133
      %s136 = sadd.s32 %s135, 1
      %p139 = scmp.eq.s32.totalorder %s17, 1
      %p140 = scmp.ne.s32.totalorder %s135, %s137
      %p141 = scmp.eq.s32.totalorder %s17, 0
      %p142 = por %p140, %p141
      %p143 = scmp.ne.s32.totalorder %s135, %s137
      %p144 = scmp.eq.s32.totalorder %s22, 1
      %p145 = por %p143, %p144
      %p146 = scmp.ne.s32.totalorder %s137, %s138
      %p147 = scmp.eq.s32.totalorder %s22, 0
      %p148 = por %p146, %p147
      %p149 = scmp.ne.s32.totalorder %s137, %s138
      %p150 = scmp.eq.s32.totalorder %s23, 1
      %p151 = por %p149, %p150
      %p153 = scmp.ne.s32.totalorder %s138, %s152
      %p154 = scmp.eq.s32.totalorder %s23, 0
      %p155 = por %p153, %p154
      %s157 = sadd.s32 %s156, 1
      %p160 = scmp.eq.s32.totalorder %s17, 1
      %p161 = scmp.ne.s32.totalorder %s156, %s158
      %p162 = scmp.eq.s32.totalorder %s17, 0
      %p163 = por %p161, %p162
      %p164 = scmp.ne.s32.totalorder %s156, %s158
      %p165 = scmp.eq.s32.totalorder %s22, 1
      %p166 = por %p164, %p165
      %p167 = scmp.ne.s32.totalorder %s158, %s159
      %p168 = scmp.eq.s32.totalorder %s22, 0
      %p169 = por %p167, %p168
      %p170 = scmp.ne.s32.totalorder %s158, %s159
      %p171 = scmp.eq.s32.totalorder %s23, 1
      %p172 = por %p170, %p171
      %p174 = scmp.ne.s32.totalorder %s159, %s173
      %p175 = scmp.eq.s32.totalorder %s23, 0
      %p176 = por %p174, %p175
      %s178 = sadd.s32 %s177, 1
      %p181 = scmp.eq.s32.totalorder %s17, 1
      %p182 = scmp.ne.s32.totalorder %s177, %s179
      %p183 = scmp.eq.s32.totalorder %s17, 0
      %p184 = por %p182, %p183
      %p185 = scmp.ne.s32.totalorder %s177, %s179
      %p186 = scmp.eq.s32.totalorder %s22, 1
      %p187 = por %p185, %p186
      %p188 = scmp.ne.s32.totalorder %s179, %s180
      %p189 = scmp.eq.s32.totalorder %s22, 0
      %p190 = por %p188, %p189
      %p191 = scmp.ne.s32.totalorder %s179, %s180
      %p192 = scmp.eq.s32.totalorder %s23, 1
      %p193 = por %p191, %p192
      %p195 = scmp.ne.s32.totalorder %s180, %s194
      %p196 = scmp.eq.s32.totalorder %s23, 0
      %p197 = por %p195, %p196
      %s198 = ssub.s32 %s17, %s24
      %p199 = scmp.eq.s32.totalorder %s198, 0
      %s201 = sadd.s32 %s200, 1
      %s202 = scalar_select %p199, %s200, %s201
      %p205 = pneg %p199
      %p206 = scmp.eq.s32.totalorder %s17, 1
      %p207 = por %p205, %p206
      %p208 = scmp.ne.s32.totalorder %s200, %s203
      %p209 = scmp.eq.s32.totalorder %s17, 0
      %p210 = por %p208, %p209
      %p211 = scmp.ne.s32.totalorder %s200, %s203
      %p212 = scmp.eq.s32.totalorder %s22, 1
      %p213 = por %p211, %p212
      %p214 = scmp.ne.s32.totalorder %s203, %s204
      %p215 = scmp.eq.s32.totalorder %s22, 0
      %p216 = por %p214, %p215
      %p217 = scmp.ne.s32.totalorder %s203, %s204
      %p218 = scmp.eq.s32.totalorder %s23, 1
      %p219 = por %p217, %p218
      %p221 = scmp.ne.s32.totalorder %s204, %s220
      %p222 = scmp.eq.s32.totalorder %s23, 0
      %p223 = por %p221, %p222
      %p224 = scmp.le.s32.totalorder 1, %s17
      %p225 = scmp.lt.s32.totalorder %s17, 3
      %p226 = pnand %p224, %p225
      %p227 = pneg %p226
      // Predicated region
      $region9: #{features_memory_forward.1} parent=5 // pred_check
        _
      $region10: #{features_memory_forward.1} parent=5 // pred_check_branch
        %229 = sbr.rel (%p226) target = $region12
      $region11: #{features_memory_forward.1} parent=5 // pred_region
        %s230 = ssub.s32 %s17, 1
        // Predicated region
        $region13: #{features_memory_forward.1} parent=11 // pred_check
          %p231 = pneg %p64
        $region14: #{features_memory_forward.1} parent=11 // pred_check_branch
          %233 = sbr.rel (%p231) target = $region16
        $region15: #{features_memory_forward.1} parent=11 // pred_region
          _
        $region16: #{features_memory_forward.1} parent=11 // pred_fallthru
          _
        // Predicated region
        $region17: #{features_memory_forward.1} parent=11 // pred_check
          %p234 = pneg %p85
        $region18: #{features_memory_forward.1} parent=11 // pred_check_branch
          %236 = sbr.rel (%p234) target = $region20
        $region19: #{features_memory_forward.1} parent=11 // pred_region
          _
        $region20: #{features_memory_forward.1} parent=11 // pred_fallthru
          _
        // Predicated region
        $region21: #{features_memory_forward.1} parent=11 // pred_check
          %p237 = pneg %p106
        $region22: #{features_memory_forward.1} parent=11 // pred_check_branch
          %239 = sbr.rel (%p237) target = $region24
        $region23: #{features_memory_forward.1} parent=11 // pred_region
          _
        $region24: #{features_memory_forward.1} parent=11 // pred_fallthru
          _
        // Predicated region
        $region25: #{features_memory_forward.1} parent=11 // pred_check
          %p240 = pneg %p127
        $region26: #{features_memory_forward.1} parent=11 // pred_check_branch
          %242 = sbr.rel (%p240) target = $region28
        $region27: #{features_memory_forward.1} parent=11 // pred_region
          _
        $region28: #{features_memory_forward.1} parent=11 // pred_fallthru
          _
        // Predicated region
        $region29: #{features_memory_forward.1} parent=11 // pred_check
          %p243 = pneg %p148
        $region30: #{features_memory_forward.1} parent=11 // pred_check_branch
          %245 = sbr.rel (%p243) target = $region32
        $region31: #{features_memory_forward.1} parent=11 // pred_region
          _
        $region32: #{features_memory_forward.1} parent=11 // pred_fallthru
          _
        // Predicated region
        $region33: #{features_memory_forward.1} parent=11 // pred_check
          %p246 = pneg %p169
        $region34: #{features_memory_forward.1} parent=11 // pred_check_branch
          %248 = sbr.rel (%p246) target = $region36
        $region35: #{features_memory_forward.1} parent=11 // pred_region
          _
        $region36: #{features_memory_forward.1} parent=11 // pred_fallthru
          _
        // Predicated region
        $region37: #{features_memory_forward.1} parent=11 // pred_check
          %p249 = pneg %p190
        $region38: #{features_memory_forward.1} parent=11 // pred_check_branch
          %251 = sbr.rel (%p249) target = $region40
        $region39: #{features_memory_forward.1} parent=11 // pred_region
          _
        $region40: #{features_memory_forward.1} parent=11 // pred_fallthru
          _
      $region12: #{features_memory_forward.1} parent=5 // pred_fallthru
        _
      %p252 = scmp.lt.s32.totalorder %s17, 2
      // Predicated region
      $region41: #{features_memory_forward.1} parent=5 // pred_check
        %p253 = pneg %p252
      $region42: #{features_memory_forward.1} parent=5 // pred_check_branch
        %255 = sbr.rel (%p253) target = $region44
      $region43: #{features_memory_forward.1} parent=5 // pred_region
        // Predicated region
        $region45: #{features_memory_forward.1} parent=43 // pred_check
          %p256 = pneg %p37
        $region46: #{features_memory_forward.1} parent=43 // pred_check_branch
          %258 = sbr.rel (%p256) target = $region48
        $region47: #{features_memory_forward.1} parent=43 // pred_region
          %p259 = scmp.lt.s32.totalorder %s17, 1
          %s260 = scalar_select %p259, %s17, 1
          %s261 = smul.addr %s260, 32
          %s262 = smul.addr %s261, 4
          %s263 = scalar_lea.vmem %s0, %s262
        $region48: #{features_memory_forward.1} parent=43 // pred_fallthru
          _
      $region44: #{features_memory_forward.1} parent=5 // pred_fallthru
        _
      %p264 = scmp.le.s32.totalorder 1, %s17
      %p265 = scmp.lt.s32.totalorder %s17, 3
      %p266 = pnand %p264, %p265
      %p267 = pneg %p266
      // Predicated region
      $region49: #{features_memory_forward.1} parent=5 // pred_check
        _
      $region50: #{features_memory_forward.1} parent=5 // pred_check_branch
        %269 = sbr.rel (%p266) target = $region52
      $region51: #{features_memory_forward.1} parent=5 // pred_region
        %s270 = ssub.s32 %s17, 1
        %p271 = scmp.lt.s32.totalorder %s22, 1
        %s272 = scalar_select %p271, %s22, 1
        %s273 = smul.addr %s272, 32
        %s274 = smul.addr %s273, 4
        %s275 = scalar_lea.vmem %s0, %s274
        %p276 = pneg %p43
        %p277 = pneg %p40
        %p278 = pneg %p64
        %p279 = pneg %p61
        %p280 = pneg %p85
        %p281 = pneg %p82
        %p282 = pneg %p106
        %p283 = pneg %p103
        %p284 = pneg %p127
        %p285 = pneg %p124
        %p286 = pneg %p148
        %p287 = pneg %p145
        %p288 = pneg %p169
        %p289 = pneg %p166
        %p290 = pneg %p190
        %p291 = pneg %p187
        %p292 = pneg %p216
        %p293 = pneg %p213
        %s294 = sand.u32 %s203, 1
        %s295 = scalar_lea.sflag [#allocation4], %s294
        %s296 = sand.u32 %s203, 1
        %s297 = smul.addr %s296, 256
        %s298 = scalar_lea.vmem [#allocation3], %s297
        %p299 = scmp.lt.s32.totalorder %s22, 1
        %s300 = scalar_select %p299, %s22, 1
        %s301 = smul.addr %s300, 32
        %s302 = smul.addr %s301, 4
        %s303 = scalar_lea.vmem %s0, %s302
        %v307 = vld [vmem:[%s303] sm:$0xf]
        %v308 = vld [vmem:[%s303 + $0x4] sm:$0xf]
        %v309 = vld [vmem:[%s303 + $0x8] sm:$0xf]
        %v310 = vld [vmem:[%s303 + $0xc] sm:$0xf]
        %v311 = vld [vmem:[%s303 + $0x10] sm:$0xf]
        %v312 = vld [vmem:[%s303 + $0x14] sm:$0xf]
        %v313 = vld [vmem:[%s303 + $0x18] sm:$0xf]
        %v314 = vld [vmem:[%s303 + $0x1c] sm:$0xf]
        %v315 = vld [vmem:[%s303 + $0x20] sm:$0xf]
        %v316 = vld [vmem:[%s303 + $0x24] sm:$0xf]
        %v317 = vld [vmem:[%s303 + $0x28] sm:$0xf]
        %v318 = vld [vmem:[%s303 + $0x2c] sm:$0xf]
        %v319 = vld [vmem:[%s303 + $0x30] sm:$0xf]
        %v320 = vld [vmem:[%s303 + $0x34] sm:$0xf]
        %v321 = vld [vmem:[%s303 + $0x38] sm:$0xf]
        %v322 = vld [vmem:[%s303 + $0x3c] sm:$0xf]
        %v323 = vld [vmem:[%s303 + $0x40] sm:$0xf]
        %v324 = vld [vmem:[%s303 + $0x44] sm:$0xf]
        %v325 = vld [vmem:[%s303 + $0x48] sm:$0xf]
        %v326 = vld [vmem:[%s303 + $0x4c] sm:$0xf]
        %v327 = vld [vmem:[%s303 + $0x50] sm:$0xf]
        %v328 = vld [vmem:[%s303 + $0x54] sm:$0xf]
        %v329 = vld [vmem:[%s303 + $0x58] sm:$0xf]
        %v330 = vld [vmem:[%s303 + $0x5c] sm:$0xf]
        %v331 = vld [vmem:[%s303 + $0x60] sm:$0xf]
        %v332 = vld [vmem:[%s303 + $0x64] sm:$0xf]
        %v333 = vld [vmem:[%s303 + $0x68] sm:$0xf]
        %v334 = vld [vmem:[%s303 + $0x6c] sm:$0xf]
        %v335 = vld [vmem:[%s303 + $0x70] sm:$0xf]
        %v336 = vld [vmem:[%s303 + $0x74] sm:$0xf]
        %v337 = vld [vmem:[%s303 + $0x78] sm:$0xf]
        %v338 = vld [vmem:[%s303 + $0x7c] sm:$0xf]
        %v339 = vld [vmem:[%s7] sm:$0x1]
        %v340 = vld [vmem:[%s7 + $0x1] sm:$0x1]
        %v341 = vld [vmem:[%s7 + $0x2] sm:$0x1]
        %v342 = vld [vmem:[%s7 + $0x3] sm:$0x1]
        %v343 = vld [vmem:[%s4] sm:$0xf]
        %v344 = vld [vmem:[%s4 + $0x4] sm:$0xf]
        %v345 = vld [vmem:[%s4 + $0x8] sm:$0xf]
        %v346 = vld [vmem:[%s4 + $0xc] sm:$0xf]
        %v347 = vlaneseq
        %v348 = vshrl.u32 %v347, 7
        %v349 = vsub.s32 0, %v348
        %v350 = vrot.slane %v339, %v349
        %v383 = vunpack.c.l.b16 %v307
        %v384 = vunpack.c.l.b16 %v308
        %v385 = vunpack.c.l.b16 %v309
        %v386 = vunpack.c.l.b16 %v310
        %v387 = vunpack.c.l.b16 %v311
        %v388 = vunpack.c.l.b16 %v312
        %v389 = vunpack.c.l.b16 %v313
        %v390 = vunpack.c.l.b16 %v314
        %v391 = vunpack.c.l.b16 %v315
        %v392 = vunpack.c.l.b16 %v316
        %v393 = vunpack.c.l.b16 %v317
        %v394 = vunpack.c.l.b16 %v318
        %v395 = vunpack.c.l.b16 %v319
        %v396 = vunpack.c.l.b16 %v320
        %v397 = vunpack.c.l.b16 %v321
        %v398 = vunpack.c.l.b16 %v322
        %v399 = vunpack.c.l.b16 %v323
        %v400 = vunpack.c.l.b16 %v324
        %v401 = vunpack.c.l.b16 %v325
        %v402 = vunpack.c.l.b16 %v326
        %v403 = vunpack.c.l.b16 %v327
        %v404 = vunpack.c.l.b16 %v328
        %v405 = vunpack.c.l.b16 %v329
        %v406 = vunpack.c.l.b16 %v330
        %v407 = vunpack.c.l.b16 %v331
        %v408 = vunpack.c.l.b16 %v332
        %v409 = vunpack.c.l.b16 %v333
        %v410 = vunpack.c.l.b16 %v334
        %v411 = vunpack.c.l.b16 %v335
        %v412 = vunpack.c.l.b16 %v336
        %v413 = vunpack.c.l.b16 %v337
        %v414 = vunpack.c.l.b16 %v338
        %v415 = vpack.c.b16 %v384, %v383
        %v416 = vpack.c.b16 %v386, %v385
        %v417 = vpack.c.b16 %v388, %v387
        %v418 = vpack.c.b16 %v390, %v389
        %v419 = vpack.c.b16 %v392, %v391
        %v420 = vpack.c.b16 %v394, %v393
        %v421 = vpack.c.b16 %v396, %v395
        %v422 = vpack.c.b16 %v398, %v397
        %v423 = vpack.c.b16 %v400, %v399
        %v424 = vpack.c.b16 %v402, %v401
        %v425 = vpack.c.b16 %v404, %v403
        %v426 = vpack.c.b16 %v406, %v405
        %v427 = vpack.c.b16 %v408, %v407
        %v428 = vpack.c.b16 %v410, %v409
        %v429 = vpack.c.b16 %v412, %v411
        %v430 = vpack.c.b16 %v414, %v413
        %v435 = vunpack.c.l.b16 %v343
        %v436 = vunpack.c.l.b16 %v344
        %v437 = vunpack.c.l.b16 %v345
        %v438 = vunpack.c.l.b16 %v346
        %v439 = vpack.c.b16 %v436, %v435
        %v440 = vpack.c.b16 %v438, %v437
        %vm443 = vcmask 261120
        %v445 = vsel %vm443, %v415, 0
        %v448 = vsel %vm443, %v416, 0
        %v451 = vsel %vm443, %v417, 0
        %v454 = vsel %vm443, %v418, 0
        %v457 = vsel %vm443, %v419, 0
        %v460 = vsel %vm443, %v420, 0
        %v463 = vsel %vm443, %v421, 0
        %v466 = vsel %vm443, %v422, 0
        %v469 = vsel %vm443, %v423, 0
        %v472 = vsel %vm443, %v424, 0
        %v475 = vsel %vm443, %v425, 0
        %v478 = vsel %vm443, %v426, 0
        %v481 = vsel %vm443, %v427, 0
        %v484 = vsel %vm443, %v428, 0
        %v487 = vsel %vm443, %v429, 0
        %v490 = vsel %vm443, %v430, 0
        %492 = vmatprep.subr.bf16.mxu0 0
        %493 = vmatpush1.bf16.msra.mxu0 0
        %494 = vmatprep.subr.bf16.mxu0 0
        %495 = vmatpush1.bf16.msra.mxu0 0
        %496 = vmatprep.subr.bf16.mxu0 0
        %497 = vmatpush1.bf16.msra.mxu0 0
        %498 = vmatprep.subr.bf16.mxu0 0
        %499 = vmatpush1.bf16.msra.mxu0 0
        %500 = vmatprep.subr.bf16.mxu0 0
        %501 = vmatpush1.bf16.msra.mxu0 0
        %502 = vmatprep.subr.bf16.mxu0 0
        %503 = vmatpush1.bf16.msra.mxu0 0
        %504 = vmatprep.subr.bf16.mxu0 0
        %505 = vmatpush1.bf16.msra.mxu0 %v440
        %506 = vmatprep.subr.bf16.mxu0 0
        %507 = vmatpush1.bf16.msra.mxu0 %v439
        %508 = vmatprep.subr.bf16.mxu0 0
        %509 = vmatpush2.bf16.msra.mxu0 0
        %510 = vmatprep.subr.bf16.mxu0 0
        %511 = vmatpush2.bf16.msra.mxu0 0
        %512 = vmatprep.subr.bf16.mxu0 0
        %513 = vmatpush2.bf16.msra.mxu0 0
        %514 = vmatprep.subr.bf16.mxu0 0
        %515 = vmatpush2.bf16.msra.mxu0 0
        %516 = vmatprep.subr.bf16.mxu0 0
        %517 = vmatpush2.bf16.msra.mxu0 0
        %518 = vmatprep.subr.bf16.mxu0 0
        %519 = vmatpush2.bf16.msra.mxu0 0
        %520 = vmatprep.subr.bf16.mxu0 0
        %521 = vmatpush2.bf16.msra.mxu0 0
        %522 = vmatprep.subr.bf16.mxu0 0
        %523 = vmatpush2.bf16.msra.mxu0 0
        %524 = vmatprep.mubr.bf16.mxu0 0
        %525 = vmatmul.mubr.bf16.gmra.mxu0 %v445
        %v526 = vpop.f32.mrf.mxu0
        %v527 = vadd.f32 %v350, %v526
        %v528 = vpop.f32.mrf.mxu0
        %v529 = vpop.f32.mrf.mxu0
        %v530 = vadd.f32 %v350, %v529
        %v531 = vpop.f32.mrf.mxu0
        %532 = vmatprep.mubr.bf16.mxu0 0
        %533 = vmatmul.mubr.bf16.gmra.mxu0 %v448
        %v534 = vpop.f32.mrf.mxu0
        %v535 = vadd.f32 %v350, %v534
        %v536 = vpop.f32.mrf.mxu0
        %v537 = vpop.f32.mrf.mxu0
        %v538 = vadd.f32 %v350, %v537
        %v539 = vpop.f32.mrf.mxu0
        %540 = vmatprep.mubr.bf16.mxu0 0
        %541 = vmatmul.mubr.bf16.gmra.mxu0 %v451
        %v542 = vpop.f32.mrf.mxu0
        %v543 = vadd.f32 %v350, %v542
        %v544 = vpop.f32.mrf.mxu0
        %v545 = vpop.f32.mrf.mxu0
        %v546 = vadd.f32 %v350, %v545
        %v547 = vpop.f32.mrf.mxu0
        %548 = vmatprep.mubr.bf16.mxu0 0
        %549 = vmatmul.mubr.bf16.gmra.mxu0 %v454
        %v550 = vpop.f32.mrf.mxu0
        %v551 = vadd.f32 %v350, %v550
        %v552 = vpop.f32.mrf.mxu0
        %v553 = vpop.f32.mrf.mxu0
        %v554 = vadd.f32 %v350, %v553
        %v555 = vpop.f32.mrf.mxu0
        %556 = vmatprep.mubr.bf16.mxu0 0
        %557 = vmatmul.mubr.bf16.gmra.mxu0 %v457
        %v558 = vpop.f32.mrf.mxu0
        %v559 = vadd.f32 %v350, %v558
        %v560 = vpop.f32.mrf.mxu0
        %v561 = vpop.f32.mrf.mxu0
        %v562 = vadd.f32 %v350, %v561
        %v563 = vpop.f32.mrf.mxu0
        %564 = vmatprep.mubr.bf16.mxu0 0
        %565 = vmatmul.mubr.bf16.gmra.mxu0 %v460
        %v566 = vpop.f32.mrf.mxu0
        %v567 = vadd.f32 %v350, %v566
        %v568 = vpop.f32.mrf.mxu0
        %v569 = vpop.f32.mrf.mxu0
        %v570 = vadd.f32 %v350, %v569
        %v571 = vpop.f32.mrf.mxu0
        %572 = vmatprep.mubr.bf16.mxu0 0
        %573 = vmatmul.mubr.bf16.gmra.mxu0 %v463
        %v574 = vpop.f32.mrf.mxu0
        %v575 = vadd.f32 %v350, %v574
        %v576 = vpop.f32.mrf.mxu0
        %v577 = vpop.f32.mrf.mxu0
        %v578 = vadd.f32 %v350, %v577
        %v579 = vpop.f32.mrf.mxu0
        %580 = vmatprep.mubr.bf16.mxu0 0
        %581 = vmatmul.mubr.bf16.gmra.mxu0 %v466
        %v582 = vpop.f32.mrf.mxu0
        %v583 = vadd.f32 %v350, %v582
        %v584 = vpop.f32.mrf.mxu0
        %v585 = vpop.f32.mrf.mxu0
        %v586 = vadd.f32 %v350, %v585
        %v587 = vpop.f32.mrf.mxu0
        %588 = vmatprep.mubr.bf16.mxu0 0
        %589 = vmatmul.mubr.bf16.gmra.mxu0 %v469
        %v590 = vpop.f32.mrf.mxu0
        %v591 = vadd.f32 %v350, %v590
        %v592 = vpop.f32.mrf.mxu0
        %v593 = vpop.f32.mrf.mxu0
        %v594 = vadd.f32 %v350, %v593
        %v595 = vpop.f32.mrf.mxu0
        %596 = vmatprep.mubr.bf16.mxu0 0
        %597 = vmatmul.mubr.bf16.gmra.mxu0 %v472
        %v598 = vpop.f32.mrf.mxu0
        %v599 = vadd.f32 %v350, %v598
        %v600 = vpop.f32.mrf.mxu0
        %v601 = vpop.f32.mrf.mxu0
        %v602 = vadd.f32 %v350, %v601
        %v603 = vpop.f32.mrf.mxu0
        %604 = vmatprep.mubr.bf16.mxu0 0
        %605 = vmatmul.mubr.bf16.gmra.mxu0 %v475
        %v606 = vpop.f32.mrf.mxu0
        %v607 = vadd.f32 %v350, %v606
        %v608 = vpop.f32.mrf.mxu0
        %v609 = vpop.f32.mrf.mxu0
        %v610 = vadd.f32 %v350, %v609
        %v611 = vpop.f32.mrf.mxu0
        %612 = vmatprep.mubr.bf16.mxu0 0
        %613 = vmatmul.mubr.bf16.gmra.mxu0 %v478
        %v614 = vpop.f32.mrf.mxu0
        %v615 = vadd.f32 %v350, %v614
        %v616 = vpop.f32.mrf.mxu0
        %v617 = vpop.f32.mrf.mxu0
        %v618 = vadd.f32 %v350, %v617
        %v619 = vpop.f32.mrf.mxu0
        %620 = vmatprep.mubr.bf16.mxu0 0
        %621 = vmatmul.mubr.bf16.gmra.mxu0 %v481
        %v622 = vpop.f32.mrf.mxu0
        %v623 = vadd.f32 %v350, %v622
        %v624 = vpop.f32.mrf.mxu0
        %v625 = vpop.f32.mrf.mxu0
        %v626 = vadd.f32 %v350, %v625
        %v627 = vpop.f32.mrf.mxu0
        %628 = vmatprep.mubr.bf16.mxu0 0
        %629 = vmatmul.mubr.bf16.gmra.mxu0 %v484
        %v630 = vpop.f32.mrf.mxu0
        %v631 = vadd.f32 %v350, %v630
        %v632 = vpop.f32.mrf.mxu0
        %v633 = vpop.f32.mrf.mxu0
        %v634 = vadd.f32 %v350, %v633
        %v635 = vpop.f32.mrf.mxu0
        %636 = vmatprep.mubr.bf16.mxu0 0
        %637 = vmatmul.mubr.bf16.gmra.mxu0 %v487
        %v638 = vpop.f32.mrf.mxu0
        %v639 = vadd.f32 %v350, %v638
        %v640 = vpop.f32.mrf.mxu0
        %v641 = vpop.f32.mrf.mxu0
        %v642 = vadd.f32 %v350, %v641
        %v643 = vpop.f32.mrf.mxu0
        %644 = vmatprep.mubr.bf16.mxu0 0
        %645 = vmatmul.mubr.bf16.gmra.mxu0 %v490
        %v646 = vpop.f32.mrf.mxu0
        %v647 = vadd.f32 %v350, %v646
        %v648 = vpop.f32.mrf.mxu0
        %v649 = vpop.f32.mrf.mxu0
        %v650 = vadd.f32 %v350, %v649
        %v651 = vpop.f32.mrf.mxu0
        %652 = vdwg.mxu0
        %v653 = vmax.f32 %v527, 0.0
        %v654 = vmax.f32 %v530, 0.0
        %v655 = vmax.f32 %v535, 0.0
        %v656 = vmax.f32 %v538, 0.0
        %v657 = vmax.f32 %v543, 0.0
        %v658 = vmax.f32 %v546, 0.0
        %v659 = vmax.f32 %v551, 0.0
        %v660 = vmax.f32 %v554, 0.0
        %v661 = vmax.f32 %v559, 0.0
        %v662 = vmax.f32 %v562, 0.0
        %v663 = vmax.f32 %v567, 0.0
        %v664 = vmax.f32 %v570, 0.0
        %v665 = vmax.f32 %v575, 0.0
        %v666 = vmax.f32 %v578, 0.0
        %v667 = vmax.f32 %v583, 0.0
        %v668 = vmax.f32 %v586, 0.0
        %v669 = vmax.f32 %v591, 0.0
        %v670 = vmax.f32 %v594, 0.0
        %v671 = vmax.f32 %v599, 0.0
        %v672 = vmax.f32 %v602, 0.0
        %v673 = vmax.f32 %v607, 0.0
        %v674 = vmax.f32 %v610, 0.0
        %v675 = vmax.f32 %v615, 0.0
        %v676 = vmax.f32 %v618, 0.0
        %v677 = vmax.f32 %v623, 0.0
        %v678 = vmax.f32 %v626, 0.0
        %v679 = vmax.f32 %v631, 0.0
        %v680 = vmax.f32 %v634, 0.0
        %v681 = vmax.f32 %v639, 0.0
        %v682 = vmax.f32 %v642, 0.0
        %v683 = vmax.f32 %v647, 0.0
        %v684 = vmax.f32 %v650, 0.0
        %v685 = vpack.c.bf16 %v654, %v653
        %v686 = vpack.c.bf16 %v656, %v655
        %v687 = vpack.c.bf16 %v658, %v657
        %v688 = vpack.c.bf16 %v660, %v659
        %v689 = vpack.c.bf16 %v662, %v661
        %v690 = vpack.c.bf16 %v664, %v663
        %v691 = vpack.c.bf16 %v666, %v665
        %v692 = vpack.c.bf16 %v668, %v667
        %v693 = vpack.c.bf16 %v670, %v669
        %v694 = vpack.c.bf16 %v672, %v671
        %v695 = vpack.c.bf16 %v674, %v673
        %v696 = vpack.c.bf16 %v676, %v675
        %v697 = vpack.c.bf16 %v678, %v677
        %v698 = vpack.c.bf16 %v680, %v679
        %v699 = vpack.c.bf16 %v682, %v681
        %v700 = vpack.c.bf16 %v684, %v683
        %v701 = vld [vmem:[%s5] sm:$0xf]
        %v702 = vld [vmem:[%s5 + $0x4] sm:$0xf]
        %v703 = vld [vmem:[%s5 + $0x8] sm:$0xf]
        %v704 = vld [vmem:[%s5 + $0xc] sm:$0xf]
        %v705 = vld [vmem:[%s5 + $0x10] sm:$0xf]
        %v706 = vld [vmem:[%s5 + $0x14] sm:$0xf]
        %v707 = vld [vmem:[%s5 + $0x18] sm:$0xf]
        %v708 = vld [vmem:[%s5 + $0x1c] sm:$0xf]
        %v709 = vld [vmem:[%s5 + $0x20] sm:$0xf]
        %v710 = vld [vmem:[%s5 + $0x24] sm:$0xf]
        %v711 = vld [vmem:[%s5 + $0x28] sm:$0xf]
        %v712 = vld [vmem:[%s5 + $0x2c] sm:$0xf]
        %v713 = vld [vmem:[%s5 + $0x30] sm:$0xf]
        %v714 = vld [vmem:[%s5 + $0x34] sm:$0xf]
        %v715 = vld [vmem:[%s5 + $0x38] sm:$0xf]
        %v716 = vld [vmem:[%s5 + $0x3c] sm:$0xf]
        %v717 = vlaneseq
        %v718 = vshrl.u32 %v717, 7
        %v719 = vsub.s32 0, %v718
        %v720 = vrot.slane %v340, %v719
        %v737 = vunpack.c.l.b16 %v701
        %v738 = vunpack.c.l.b16 %v702
        %v739 = vunpack.c.l.b16 %v703
        %v740 = vunpack.c.l.b16 %v704
        %v741 = vunpack.c.l.b16 %v705
        %v742 = vunpack.c.l.b16 %v706
        %v743 = vunpack.c.l.b16 %v707
        %v744 = vunpack.c.l.b16 %v708
        %v745 = vunpack.c.l.b16 %v709
        %v746 = vunpack.c.l.b16 %v710
        %v747 = vunpack.c.l.b16 %v711
        %v748 = vunpack.c.l.b16 %v712
        %v749 = vunpack.c.l.b16 %v713
        %v750 = vunpack.c.l.b16 %v714
        %v751 = vunpack.c.l.b16 %v715
        %v752 = vunpack.c.l.b16 %v716
        %v753 = vpack.c.b16 %v738, %v737
        %v754 = vpack.c.b16 %v740, %v739
        %v755 = vpack.c.b16 %v742, %v741
        %v756 = vpack.c.b16 %v744, %v743
        %v757 = vpack.c.b16 %v746, %v745
        %v758 = vpack.c.b16 %v748, %v747
        %v759 = vpack.c.b16 %v750, %v749
        %v760 = vpack.c.b16 %v752, %v751
        %769 = vmatprep.subr.bf16.mxu0 0
        %770 = vmatpush1.bf16.msra.mxu0 %v760
        %771 = vmatprep.subr.bf16.mxu0 0
        %772 = vmatpush1.bf16.msra.mxu0 %v759
        %773 = vmatprep.subr.bf16.mxu0 0
        %774 = vmatpush1.bf16.msra.mxu0 %v758
        %775 = vmatprep.subr.bf16.mxu0 0
        %776 = vmatpush1.bf16.msra.mxu0 %v757
        %777 = vmatprep.subr.bf16.mxu0 0
        %778 = vmatpush1.bf16.msra.mxu0 %v756
        %779 = vmatprep.subr.bf16.mxu0 0
        %780 = vmatpush1.bf16.msra.mxu0 %v755
        %781 = vmatprep.subr.bf16.mxu0 0
        %782 = vmatpush1.bf16.msra.mxu0 %v754
        %783 = vmatprep.subr.bf16.mxu0 0
        %784 = vmatpush1.bf16.msra.mxu0 %v753
        %785 = vmatprep.subr.bf16.mxu0 0
        %786 = vmatpush2.bf16.msra.mxu0 0
        %787 = vmatprep.subr.bf16.mxu0 0
        %788 = vmatpush2.bf16.msra.mxu0 0
        %789 = vmatprep.subr.bf16.mxu0 0
        %790 = vmatpush2.bf16.msra.mxu0 0
        %791 = vmatprep.subr.bf16.mxu0 0
        %792 = vmatpush2.bf16.msra.mxu0 0
        %793 = vmatprep.subr.bf16.mxu0 0
        %794 = vmatpush2.bf16.msra.mxu0 0
        %795 = vmatprep.subr.bf16.mxu0 0
        %796 = vmatpush2.bf16.msra.mxu0 0
        %797 = vmatprep.subr.bf16.mxu0 0
        %798 = vmatpush2.bf16.msra.mxu0 0
        %799 = vmatprep.subr.bf16.mxu0 0
        %800 = vmatpush2.bf16.msra.mxu0 0
        %801 = vmatprep.mubr.bf16.mxu0 0
        %802 = vmatmul.mubr.bf16.gmra.mxu0 %v685
        %v803 = vpop.f32.mrf.mxu0
        %v804 = vadd.f32 %v720, %v803
        %v805 = vpop.f32.mrf.mxu0
        %v806 = vpop.f32.mrf.mxu0
        %v807 = vadd.f32 %v720, %v806
        %v808 = vpop.f32.mrf.mxu0
        %809 = vmatprep.mubr.bf16.mxu0 0
        %810 = vmatmul.mubr.bf16.gmra.mxu0 %v686
        %v811 = vpop.f32.mrf.mxu0
        %v812 = vadd.f32 %v720, %v811
        %v813 = vpop.f32.mrf.mxu0
        %v814 = vpop.f32.mrf.mxu0
        %v815 = vadd.f32 %v720, %v814
        %v816 = vpop.f32.mrf.mxu0
        %817 = vmatprep.mubr.bf16.mxu0 0
        %818 = vmatmul.mubr.bf16.gmra.mxu0 %v687
        %v819 = vpop.f32.mrf.mxu0
        %v820 = vadd.f32 %v720, %v819
        %v821 = vpop.f32.mrf.mxu0
        %v822 = vpop.f32.mrf.mxu0
        %v823 = vadd.f32 %v720, %v822
        %v824 = vpop.f32.mrf.mxu0
        %825 = vmatprep.mubr.bf16.mxu0 0
        %826 = vmatmul.mubr.bf16.gmra.mxu0 %v688
        %v827 = vpop.f32.mrf.mxu0
        %v828 = vadd.f32 %v720, %v827
        %v829 = vpop.f32.mrf.mxu0
        %v830 = vpop.f32.mrf.mxu0
        %v831 = vadd.f32 %v720, %v830
        %v832 = vpop.f32.mrf.mxu0
        %833 = vmatprep.mubr.bf16.mxu0 0
        %834 = vmatmul.mubr.bf16.gmra.mxu0 %v689
        %v835 = vpop.f32.mrf.mxu0
        %v836 = vadd.f32 %v720, %v835
        %v837 = vpop.f32.mrf.mxu0
        %v838 = vpop.f32.mrf.mxu0
        %v839 = vadd.f32 %v720, %v838
        %v840 = vpop.f32.mrf.mxu0
        %841 = vmatprep.mubr.bf16.mxu0 0
        %842 = vmatmul.mubr.bf16.gmra.mxu0 %v690
        %v843 = vpop.f32.mrf.mxu0
        %v844 = vadd.f32 %v720, %v843
        %v845 = vpop.f32.mrf.mxu0
        %v846 = vpop.f32.mrf.mxu0
        %v847 = vadd.f32 %v720, %v846
        %v848 = vpop.f32.mrf.mxu0
        %849 = vmatprep.mubr.bf16.mxu0 0
        %850 = vmatmul.mubr.bf16.gmra.mxu0 %v691
        %v851 = vpop.f32.mrf.mxu0
        %v852 = vadd.f32 %v720, %v851
        %v853 = vpop.f32.mrf.mxu0
        %v854 = vpop.f32.mrf.mxu0
        %v855 = vadd.f32 %v720, %v854
        %v856 = vpop.f32.mrf.mxu0
        %857 = vmatprep.mubr.bf16.mxu0 0
        %858 = vmatmul.mubr.bf16.gmra.mxu0 %v692
        %v859 = vpop.f32.mrf.mxu0
        %v860 = vadd.f32 %v720, %v859
        %v861 = vpop.f32.mrf.mxu0
        %v862 = vpop.f32.mrf.mxu0
        %v863 = vadd.f32 %v720, %v862
        %v864 = vpop.f32.mrf.mxu0
        %865 = vmatprep.mubr.bf16.mxu0 0
        %866 = vmatmul.mubr.bf16.gmra.mxu0 %v693
        %v867 = vpop.f32.mrf.mxu0
        %v868 = vadd.f32 %v720, %v867
        %v869 = vpop.f32.mrf.mxu0
        %v870 = vpop.f32.mrf.mxu0
        %v871 = vadd.f32 %v720, %v870
        %v872 = vpop.f32.mrf.mxu0
        %873 = vmatprep.mubr.bf16.mxu0 0
        %874 = vmatmul.mubr.bf16.gmra.mxu0 %v694
        %v875 = vpop.f32.mrf.mxu0
        %v876 = vadd.f32 %v720, %v875
        %v877 = vpop.f32.mrf.mxu0
        %v878 = vpop.f32.mrf.mxu0
        %v879 = vadd.f32 %v720, %v878
        %v880 = vpop.f32.mrf.mxu0
        %881 = vmatprep.mubr.bf16.mxu0 0
        %882 = vmatmul.mubr.bf16.gmra.mxu0 %v695
        %v883 = vpop.f32.mrf.mxu0
        %v884 = vadd.f32 %v720, %v883
        %v885 = vpop.f32.mrf.mxu0
        %v886 = vpop.f32.mrf.mxu0
        %v887 = vadd.f32 %v720, %v886
        %v888 = vpop.f32.mrf.mxu0
        %889 = vmatprep.mubr.bf16.mxu0 0
        %890 = vmatmul.mubr.bf16.gmra.mxu0 %v696
        %v891 = vpop.f32.mrf.mxu0
        %v892 = vadd.f32 %v720, %v891
        %v893 = vpop.f32.mrf.mxu0
        %v894 = vpop.f32.mrf.mxu0
        %v895 = vadd.f32 %v720, %v894
        %v896 = vpop.f32.mrf.mxu0
        %897 = vmatprep.mubr.bf16.mxu0 0
        %898 = vmatmul.mubr.bf16.gmra.mxu0 %v697
        %v899 = vpop.f32.mrf.mxu0
        %v900 = vadd.f32 %v720, %v899
        %v901 = vpop.f32.mrf.mxu0
        %v902 = vpop.f32.mrf.mxu0
        %v903 = vadd.f32 %v720, %v902
        %v904 = vpop.f32.mrf.mxu0
        %905 = vmatprep.mubr.bf16.mxu0 0
        %906 = vmatmul.mubr.bf16.gmra.mxu0 %v698
        %v907 = vpop.f32.mrf.mxu0
        %v908 = vadd.f32 %v720, %v907
        %v909 = vpop.f32.mrf.mxu0
        %v910 = vpop.f32.mrf.mxu0
        %v911 = vadd.f32 %v720, %v910
        %v912 = vpop.f32.mrf.mxu0
        %913 = vmatprep.mubr.bf16.mxu0 0
        %914 = vmatmul.mubr.bf16.gmra.mxu0 %v699
        %v915 = vpop.f32.mrf.mxu0
        %v916 = vadd.f32 %v720, %v915
        %v917 = vpop.f32.mrf.mxu0
        %v918 = vpop.f32.mrf.mxu0
        %v919 = vadd.f32 %v720, %v918
        %v920 = vpop.f32.mrf.mxu0
        %921 = vmatprep.mubr.bf16.mxu0 0
        %922 = vmatmul.mubr.bf16.gmra.mxu0 %v700
        %v923 = vpop.f32.mrf.mxu0
        %v924 = vadd.f32 %v720, %v923
        %v925 = vpop.f32.mrf.mxu0
        %v926 = vpop.f32.mrf.mxu0
        %v927 = vadd.f32 %v720, %v926
        %v928 = vpop.f32.mrf.mxu0
        %929 = vdwg.mxu0
        %v930 = vmax.f32 %v804, 0.0
        %v931 = vmax.f32 %v807, 0.0
        %v932 = vmax.f32 %v812, 0.0
        %v933 = vmax.f32 %v815, 0.0
        %v934 = vmax.f32 %v820, 0.0
        %v935 = vmax.f32 %v823, 0.0
        %v936 = vmax.f32 %v828, 0.0
        %v937 = vmax.f32 %v831, 0.0
        %v938 = vmax.f32 %v836, 0.0
        %v939 = vmax.f32 %v839, 0.0
        %v940 = vmax.f32 %v844, 0.0
        %v941 = vmax.f32 %v847, 0.0
        %v942 = vmax.f32 %v852, 0.0
        %v943 = vmax.f32 %v855, 0.0
        %v944 = vmax.f32 %v860, 0.0
        %v945 = vmax.f32 %v863, 0.0
        %v946 = vmax.f32 %v868, 0.0
        %v947 = vmax.f32 %v871, 0.0
        %v948 = vmax.f32 %v876, 0.0
        %v949 = vmax.f32 %v879, 0.0
        %v950 = vmax.f32 %v884, 0.0
        %v951 = vmax.f32 %v887, 0.0
        %v952 = vmax.f32 %v892, 0.0
        %v953 = vmax.f32 %v895, 0.0
        %v954 = vmax.f32 %v900, 0.0
        %v955 = vmax.f32 %v903, 0.0
        %v956 = vmax.f32 %v908, 0.0
        %v957 = vmax.f32 %v911, 0.0
        %v958 = vmax.f32 %v916, 0.0
        %v959 = vmax.f32 %v919, 0.0
        %v960 = vmax.f32 %v924, 0.0
        %v961 = vmax.f32 %v927, 0.0
        %v962 = vpack.c.bf16 %v931, %v930
        %v963 = vpack.c.bf16 %v933, %v932
        %v964 = vpack.c.bf16 %v935, %v934
        %v965 = vpack.c.bf16 %v937, %v936
        %v966 = vpack.c.bf16 %v939, %v938
        %v967 = vpack.c.bf16 %v941, %v940
        %v968 = vpack.c.bf16 %v943, %v942
        %v969 = vpack.c.bf16 %v945, %v944
        %v970 = vpack.c.bf16 %v947, %v946
        %v971 = vpack.c.bf16 %v949, %v948
        %v972 = vpack.c.bf16 %v951, %v950
        %v973 = vpack.c.bf16 %v953, %v952
        %v974 = vpack.c.bf16 %v955, %v954
        %v975 = vpack.c.bf16 %v957, %v956
        %v976 = vpack.c.bf16 %v959, %v958
        %v977 = vpack.c.bf16 %v961, %v960
        %v978 = vld [vmem:[%s2] sm:$0xf]
        %v979 = vld [vmem:[%s2 + $0x4] sm:$0xf]
        %v980 = vld [vmem:[%s2 + $0x8] sm:$0xf]
        %v981 = vld [vmem:[%s2 + $0xc] sm:$0xf]
        %v982 = vld [vmem:[%s2 + $0x10] sm:$0xf]
        %v983 = vld [vmem:[%s2 + $0x14] sm:$0xf]
        %v984 = vld [vmem:[%s2 + $0x18] sm:$0xf]
        %v985 = vld [vmem:[%s2 + $0x1c] sm:$0xf]
        %v986 = vld [vmem:[%s2 + $0x20] sm:$0xf]
        %v987 = vld [vmem:[%s2 + $0x24] sm:$0xf]
        %v988 = vld [vmem:[%s2 + $0x28] sm:$0xf]
        %v989 = vld [vmem:[%s2 + $0x2c] sm:$0xf]
        %v990 = vld [vmem:[%s2 + $0x30] sm:$0xf]
        %v991 = vld [vmem:[%s2 + $0x34] sm:$0xf]
        %v992 = vld [vmem:[%s2 + $0x38] sm:$0xf]
        %v993 = vld [vmem:[%s2 + $0x3c] sm:$0xf]
        %v1010 = vunpack.c.l.b16 %v978
        %v1011 = vunpack.c.l.b16 %v979
        %v1012 = vunpack.c.l.b16 %v980
        %v1013 = vunpack.c.l.b16 %v981
        %v1014 = vunpack.c.l.b16 %v982
        %v1015 = vunpack.c.l.b16 %v983
        %v1016 = vunpack.c.l.b16 %v984
        %v1017 = vunpack.c.l.b16 %v985
        %v1018 = vunpack.c.l.b16 %v986
        %v1019 = vunpack.c.l.b16 %v987
        %v1020 = vunpack.c.l.b16 %v988
        %v1021 = vunpack.c.l.b16 %v989
        %v1022 = vunpack.c.l.b16 %v990
        %v1023 = vunpack.c.l.b16 %v991
        %v1024 = vunpack.c.l.b16 %v992
        %v1025 = vunpack.c.l.b16 %v993
        %v1026 = vpack.c.b16 %v1011, %v1010
        %v1027 = vpack.c.b16 %v1013, %v1012
        %v1028 = vpack.c.b16 %v1015, %v1014
        %v1029 = vpack.c.b16 %v1017, %v1016
        %v1030 = vpack.c.b16 %v1019, %v1018
        %v1031 = vpack.c.b16 %v1021, %v1020
        %v1032 = vpack.c.b16 %v1023, %v1022
        %v1033 = vpack.c.b16 %v1025, %v1024
        %1042 = vmatprep.subr.bf16.mxu0 0
        %1043 = vmatpush1.bf16.msra.mxu0 %v1033
        %1044 = vmatprep.subr.bf16.mxu0 0
        %1045 = vmatpush1.bf16.msra.mxu0 %v1032
        %1046 = vmatprep.subr.bf16.mxu0 0
        %1047 = vmatpush1.bf16.msra.mxu0 %v1031
        %1048 = vmatprep.subr.bf16.mxu0 0
        %1049 = vmatpush1.bf16.msra.mxu0 %v1030
        %1050 = vmatprep.subr.bf16.mxu0 0
        %1051 = vmatpush1.bf16.msra.mxu0 %v1029
        %1052 = vmatprep.subr.bf16.mxu0 0
        %1053 = vmatpush1.bf16.msra.mxu0 %v1028
        %1054 = vmatprep.subr.bf16.mxu0 0
        %1055 = vmatpush1.bf16.msra.mxu0 %v1027
        %1056 = vmatprep.subr.bf16.mxu0 0
        %1057 = vmatpush1.bf16.msra.mxu0 %v1026
        %1058 = vmatprep.subr.bf16.mxu0 0
        %1059 = vmatpush2.bf16.msra.mxu0 0
        %1060 = vmatprep.subr.bf16.mxu0 0
        %1061 = vmatpush2.bf16.msra.mxu0 0
        %1062 = vmatprep.subr.bf16.mxu0 0
        %1063 = vmatpush2.bf16.msra.mxu0 0
        %1064 = vmatprep.subr.bf16.mxu0 0
        %1065 = vmatpush2.bf16.msra.mxu0 0
        %1066 = vmatprep.subr.bf16.mxu0 0
        %1067 = vmatpush2.bf16.msra.mxu0 0
        %1068 = vmatprep.subr.bf16.mxu0 0
        %1069 = vmatpush2.bf16.msra.mxu0 0
        %1070 = vmatprep.subr.bf16.mxu0 0
        %1071 = vmatpush2.bf16.msra.mxu0 0
        %1072 = vmatprep.subr.bf16.mxu0 0
        %1073 = vmatpush2.bf16.msra.mxu0 0
        %1074 = vmatprep.mubr.bf16.mxu0 0
        %1075 = vmatmul.mubr.bf16.gmra.mxu0 %v962
        %v1076 = vpop.f32.mrf.mxu0
        %v1077 = vadd.f32 0.0, %v1076
        %v1078 = vpop.f32.mrf.mxu0
        %v1079 = vpop.f32.mrf.mxu0
        %v1080 = vadd.f32 0.0, %v1079
        %v1081 = vpop.f32.mrf.mxu0
        %1082 = vmatprep.mubr.bf16.mxu0 0
        %1083 = vmatmul.mubr.bf16.gmra.mxu0 %v963
        %v1084 = vpop.f32.mrf.mxu0
        %v1085 = vadd.f32 0.0, %v1084
        %v1086 = vpop.f32.mrf.mxu0
        %v1087 = vpop.f32.mrf.mxu0
        %v1088 = vadd.f32 0.0, %v1087
        %v1089 = vpop.f32.mrf.mxu0
        %1090 = vmatprep.mubr.bf16.mxu0 0
        %1091 = vmatmul.mubr.bf16.gmra.mxu0 %v964
        %v1092 = vpop.f32.mrf.mxu0
        %v1093 = vadd.f32 0.0, %v1092
        %v1094 = vpop.f32.mrf.mxu0
        %v1095 = vpop.f32.mrf.mxu0
        %v1096 = vadd.f32 0.0, %v1095
        %v1097 = vpop.f32.mrf.mxu0
        %1098 = vmatprep.mubr.bf16.mxu0 0
        %1099 = vmatmul.mubr.bf16.gmra.mxu0 %v965
        %v1100 = vpop.f32.mrf.mxu0
        %v1101 = vadd.f32 0.0, %v1100
        %v1102 = vpop.f32.mrf.mxu0
        %v1103 = vpop.f32.mrf.mxu0
        %v1104 = vadd.f32 0.0, %v1103
        %v1105 = vpop.f32.mrf.mxu0
        %1106 = vmatprep.mubr.bf16.mxu0 0
        %1107 = vmatmul.mubr.bf16.gmra.mxu0 %v966
        %v1108 = vpop.f32.mrf.mxu0
        %v1109 = vadd.f32 0.0, %v1108
        %v1110 = vpop.f32.mrf.mxu0
        %v1111 = vpop.f32.mrf.mxu0
        %v1112 = vadd.f32 0.0, %v1111
        %v1113 = vpop.f32.mrf.mxu0
        %1114 = vmatprep.mubr.bf16.mxu0 0
        %1115 = vmatmul.mubr.bf16.gmra.mxu0 %v967
        %v1116 = vpop.f32.mrf.mxu0
        %v1117 = vadd.f32 0.0, %v1116
        %v1118 = vpop.f32.mrf.mxu0
        %v1119 = vpop.f32.mrf.mxu0
        %v1120 = vadd.f32 0.0, %v1119
        %v1121 = vpop.f32.mrf.mxu0
        %1122 = vmatprep.mubr.bf16.mxu0 0
        %1123 = vmatmul.mubr.bf16.gmra.mxu0 %v968
        %v1124 = vpop.f32.mrf.mxu0
        %v1125 = vadd.f32 0.0, %v1124
        %v1126 = vpop.f32.mrf.mxu0
        %v1127 = vpop.f32.mrf.mxu0
        %v1128 = vadd.f32 0.0, %v1127
        %v1129 = vpop.f32.mrf.mxu0
        %1130 = vmatprep.mubr.bf16.mxu0 0
        %1131 = vmatmul.mubr.bf16.gmra.mxu0 %v969
        %v1132 = vpop.f32.mrf.mxu0
        %v1133 = vadd.f32 0.0, %v1132
        %v1134 = vpop.f32.mrf.mxu0
        %v1135 = vpop.f32.mrf.mxu0
        %v1136 = vadd.f32 0.0, %v1135
        %v1137 = vpop.f32.mrf.mxu0
        %1138 = vmatprep.mubr.bf16.mxu0 0
        %1139 = vmatmul.mubr.bf16.gmra.mxu0 %v970
        %v1140 = vpop.f32.mrf.mxu0
        %v1141 = vadd.f32 0.0, %v1140
        %v1142 = vpop.f32.mrf.mxu0
        %v1143 = vpop.f32.mrf.mxu0
        %v1144 = vadd.f32 0.0, %v1143
        %v1145 = vpop.f32.mrf.mxu0
        %1146 = vmatprep.mubr.bf16.mxu0 0
        %1147 = vmatmul.mubr.bf16.gmra.mxu0 %v971
        %v1148 = vpop.f32.mrf.mxu0
        %v1149 = vadd.f32 0.0, %v1148
        %v1150 = vpop.f32.mrf.mxu0
        %v1151 = vpop.f32.mrf.mxu0
        %v1152 = vadd.f32 0.0, %v1151
        %v1153 = vpop.f32.mrf.mxu0
        %1154 = vmatprep.mubr.bf16.mxu0 0
        %1155 = vmatmul.mubr.bf16.gmra.mxu0 %v972
        %v1156 = vpop.f32.mrf.mxu0
        %v1157 = vadd.f32 0.0, %v1156
        %v1158 = vpop.f32.mrf.mxu0
        %v1159 = vpop.f32.mrf.mxu0
        %v1160 = vadd.f32 0.0, %v1159
        %v1161 = vpop.f32.mrf.mxu0
        %1162 = vmatprep.mubr.bf16.mxu0 0
        %1163 = vmatmul.mubr.bf16.gmra.mxu0 %v973
        %v1164 = vpop.f32.mrf.mxu0
        %v1165 = vadd.f32 0.0, %v1164
        %v1166 = vpop.f32.mrf.mxu0
        %v1167 = vpop.f32.mrf.mxu0
        %v1168 = vadd.f32 0.0, %v1167
        %v1169 = vpop.f32.mrf.mxu0
        %1170 = vmatprep.mubr.bf16.mxu0 0
        %1171 = vmatmul.mubr.bf16.gmra.mxu0 %v974
        %v1172 = vpop.f32.mrf.mxu0
        %v1173 = vadd.f32 0.0, %v1172
        %v1174 = vpop.f32.mrf.mxu0
        %v1175 = vpop.f32.mrf.mxu0
        %v1176 = vadd.f32 0.0, %v1175
        %v1177 = vpop.f32.mrf.mxu0
        %1178 = vmatprep.mubr.bf16.mxu0 0
        %1179 = vmatmul.mubr.bf16.gmra.mxu0 %v975
        %v1180 = vpop.f32.mrf.mxu0
        %v1181 = vadd.f32 0.0, %v1180
        %v1182 = vpop.f32.mrf.mxu0
        %v1183 = vpop.f32.mrf.mxu0
        %v1184 = vadd.f32 0.0, %v1183
        %v1185 = vpop.f32.mrf.mxu0
        %1186 = vmatprep.mubr.bf16.mxu0 0
        %1187 = vmatmul.mubr.bf16.gmra.mxu0 %v976
        %v1188 = vpop.f32.mrf.mxu0
        %v1189 = vadd.f32 0.0, %v1188
        %v1190 = vpop.f32.mrf.mxu0
        %v1191 = vpop.f32.mrf.mxu0
        %v1192 = vadd.f32 0.0, %v1191
        %v1193 = vpop.f32.mrf.mxu0
        %1194 = vmatprep.mubr.bf16.mxu0 0
        %1195 = vmatmul.mubr.bf16.gmra.mxu0 %v977
        %v1196 = vpop.f32.mrf.mxu0
        %v1197 = vadd.f32 0.0, %v1196
        %v1198 = vpop.f32.mrf.mxu0
        %v1199 = vpop.f32.mrf.mxu0
        %v1200 = vadd.f32 0.0, %v1199
        %v1201 = vpop.f32.mrf.mxu0
        %1202 = vdwg.mxu0
        %v1203 = vmul.f32 %v1077, 0.25
        %v1204 = vmul.f32 %v1080, 0.25
        %v1205 = vmul.f32 %v1085, 0.25
        %v1206 = vmul.f32 %v1088, 0.25
        %v1207 = vmul.f32 %v1093, 0.25
        %v1208 = vmul.f32 %v1096, 0.25
        %v1209 = vmul.f32 %v1101, 0.25
        %v1210 = vmul.f32 %v1104, 0.25
        %v1211 = vmul.f32 %v1109, 0.25
        %v1212 = vmul.f32 %v1112, 0.25
        %v1213 = vmul.f32 %v1117, 0.25
        %v1214 = vmul.f32 %v1120, 0.25
        %v1215 = vmul.f32 %v1125, 0.25
        %v1216 = vmul.f32 %v1128, 0.25
        %v1217 = vmul.f32 %v1133, 0.25
        %v1218 = vmul.f32 %v1136, 0.25
        %v1219 = vmul.f32 %v1141, 0.25
        %v1220 = vmul.f32 %v1144, 0.25
        %v1221 = vmul.f32 %v1149, 0.25
        %v1222 = vmul.f32 %v1152, 0.25
        %v1223 = vmul.f32 %v1157, 0.25
        %v1224 = vmul.f32 %v1160, 0.25
        %v1225 = vmul.f32 %v1165, 0.25
        %v1226 = vmul.f32 %v1168, 0.25
        %v1227 = vmul.f32 %v1173, 0.25
        %v1228 = vmul.f32 %v1176, 0.25
        %v1229 = vmul.f32 %v1181, 0.25
        %v1230 = vmul.f32 %v1184, 0.25
        %v1231 = vmul.f32 %v1189, 0.25
        %v1232 = vmul.f32 %v1192, 0.25
        %v1233 = vmul.f32 %v1197, 0.25
        %v1234 = vmul.f32 %v1200, 0.25
        %vm1235 = vcmask 64512
        %v1236 = vsel %vm1235, %v1203, -inf
        %1237 = vmax.xlane.f32.xlu0 %v1236
        %v1238 = vpop.xlane.xlu0 %1237
        %v1239 = vsel %vm1235, %v1204, -inf
        %1240 = vmax.xlane.f32.xlu0 %v1239
        %v1241 = vpop.xlane.xlu0 %1240
        %v1242 = vsel %vm1235, %v1205, -inf
        %1243 = vmax.xlane.f32.xlu0 %v1242
        %v1244 = vpop.xlane.xlu0 %1243
        %v1245 = vsel %vm1235, %v1206, -inf
        %1246 = vmax.xlane.f32.xlu0 %v1245
        %v1247 = vpop.xlane.xlu0 %1246
        %v1248 = vsel %vm1235, %v1207, -inf
        %1249 = vmax.xlane.f32.xlu0 %v1248
        %v1250 = vpop.xlane.xlu0 %1249
        %v1251 = vsel %vm1235, %v1208, -inf
        %1252 = vmax.xlane.f32.xlu0 %v1251
        %v1253 = vpop.xlane.xlu0 %1252
        %v1254 = vsel %vm1235, %v1209, -inf
        %1255 = vmax.xlane.f32.xlu0 %v1254
        %v1256 = vpop.xlane.xlu0 %1255
        %v1257 = vsel %vm1235, %v1210, -inf
        %1258 = vmax.xlane.f32.xlu0 %v1257
        %v1259 = vpop.xlane.xlu0 %1258
        %v1260 = vsel %vm1235, %v1211, -inf
        %1261 = vmax.xlane.f32.xlu0 %v1260
        %v1262 = vpop.xlane.xlu0 %1261
        %v1263 = vsel %vm1235, %v1212, -inf
        %1264 = vmax.xlane.f32.xlu0 %v1263
        %v1265 = vpop.xlane.xlu0 %1264
        %v1266 = vsel %vm1235, %v1213, -inf
        %1267 = vmax.xlane.f32.xlu0 %v1266
        %v1268 = vpop.xlane.xlu0 %1267
        %v1269 = vsel %vm1235, %v1214, -inf
        %1270 = vmax.xlane.f32.xlu0 %v1269
        %v1271 = vpop.xlane.xlu0 %1270
        %v1272 = vsel %vm1235, %v1215, -inf
        %1273 = vmax.xlane.f32.xlu0 %v1272
        %v1274 = vpop.xlane.xlu0 %1273
        %v1275 = vsel %vm1235, %v1216, -inf
        %1276 = vmax.xlane.f32.xlu0 %v1275
        %v1277 = vpop.xlane.xlu0 %1276
        %v1278 = vsel %vm1235, %v1217, -inf
        %1279 = vmax.xlane.f32.xlu0 %v1278
        %v1280 = vpop.xlane.xlu0 %1279
        %v1281 = vsel %vm1235, %v1218, -inf
        %1282 = vmax.xlane.f32.xlu0 %v1281
        %v1283 = vpop.xlane.xlu0 %1282
        %v1284 = vsel %vm1235, %v1219, -inf
        %1285 = vmax.xlane.f32.xlu0 %v1284
        %v1286 = vpop.xlane.xlu0 %1285
        %v1287 = vsel %vm1235, %v1220, -inf
        %1288 = vmax.xlane.f32.xlu0 %v1287
        %v1289 = vpop.xlane.xlu0 %1288
        %v1290 = vsel %vm1235, %v1221, -inf
        %1291 = vmax.xlane.f32.xlu0 %v1290
        %v1292 = vpop.xlane.xlu0 %1291
        %v1293 = vsel %vm1235, %v1222, -inf
        %1294 = vmax.xlane.f32.xlu0 %v1293
        %v1295 = vpop.xlane.xlu0 %1294
        %v1296 = vsel %vm1235, %v1223, -inf
        %1297 = vmax.xlane.f32.xlu0 %v1296
        %v1298 = vpop.xlane.xlu0 %1297
        %v1299 = vsel %vm1235, %v1224, -inf
        %1300 = vmax.xlane.f32.xlu0 %v1299
        %v1301 = vpop.xlane.xlu0 %1300
        %v1302 = vsel %vm1235, %v1225, -inf
        %1303 = vmax.xlane.f32.xlu0 %v1302
        %v1304 = vpop.xlane.xlu0 %1303
        %v1305 = vsel %vm1235, %v1226, -inf
        %1306 = vmax.xlane.f32.xlu0 %v1305
        %v1307 = vpop.xlane.xlu0 %1306
        %v1308 = vsel %vm1235, %v1227, -inf
        %1309 = vmax.xlane.f32.xlu0 %v1308
        %v1310 = vpop.xlane.xlu0 %1309
        %v1311 = vsel %vm1235, %v1228, -inf
        %1312 = vmax.xlane.f32.xlu0 %v1311
        %v1313 = vpop.xlane.xlu0 %1312
        %v1314 = vsel %vm1235, %v1229, -inf
        %1315 = vmax.xlane.f32.xlu0 %v1314
        %v1316 = vpop.xlane.xlu0 %1315
        %v1317 = vsel %vm1235, %v1230, -inf
        %1318 = vmax.xlane.f32.xlu0 %v1317
        %v1319 = vpop.xlane.xlu0 %1318
        %v1320 = vsel %vm1235, %v1231, -inf
        %1321 = vmax.xlane.f32.xlu0 %v1320
        %v1322 = vpop.xlane.xlu0 %1321
        %v1323 = vsel %vm1235, %v1232, -inf
        %1324 = vmax.xlane.f32.xlu0 %v1323
        %v1325 = vpop.xlane.xlu0 %1324
        %v1326 = vsel %vm1235, %v1233, -inf
        %1327 = vmax.xlane.f32.xlu0 %v1326
        %v1328 = vpop.xlane.xlu0 %1327
        %v1329 = vsel %vm1235, %v1234, -inf
        %1330 = vmax.xlane.f32.xlu0 %v1329
        %v1331 = vpop.xlane.xlu0 %1330
        %v1332 = vsub.f32 %v1203, %v1238
        %v1333 = vsub.f32 %v1204, %v1241
        %v1334 = vsub.f32 %v1205, %v1244
        %v1335 = vsub.f32 %v1206, %v1247
        %v1336 = vsub.f32 %v1207, %v1250
        %v1337 = vsub.f32 %v1208, %v1253
        %v1338 = vsub.f32 %v1209, %v1256
        %v1339 = vsub.f32 %v1210, %v1259
        %v1340 = vsub.f32 %v1211, %v1262
        %v1341 = vsub.f32 %v1212, %v1265
        %v1342 = vsub.f32 %v1213, %v1268
        %v1343 = vsub.f32 %v1214, %v1271
        %v1344 = vsub.f32 %v1215, %v1274
        %v1345 = vsub.f32 %v1216, %v1277
        %v1346 = vsub.f32 %v1217, %v1280
        %v1347 = vsub.f32 %v1218, %v1283
        %v1348 = vsub.f32 %v1219, %v1286
        %v1349 = vsub.f32 %v1220, %v1289
        %v1350 = vsub.f32 %v1221, %v1292
        %v1351 = vsub.f32 %v1222, %v1295
        %v1352 = vsub.f32 %v1223, %v1298
        %v1353 = vsub.f32 %v1224, %v1301
        %v1354 = vsub.f32 %v1225, %v1304
        %v1355 = vsub.f32 %v1226, %v1307
        %v1356 = vsub.f32 %v1227, %v1310
        %v1357 = vsub.f32 %v1228, %v1313
        %v1358 = vsub.f32 %v1229, %v1316
        %v1359 = vsub.f32 %v1230, %v1319
        %v1360 = vsub.f32 %v1231, %v1322
        %v1361 = vsub.f32 %v1232, %v1325
        %v1362 = vsub.f32 %v1233, %v1328
        %v1363 = vsub.f32 %v1234, %v1331
        %v1364 = vmul.f32 %v1332, 1.442695
        %v1365 = vpow.pop %v1364
        %v1366 = vmul.f32 %v1333, 1.442695
        %v1367 = vpow.pop %v1366
        %v1368 = vmul.f32 %v1334, 1.442695
        %v1369 = vpow.pop %v1368
        %v1370 = vmul.f32 %v1335, 1.442695
        %v1371 = vpow.pop %v1370
        %v1372 = vmul.f32 %v1336, 1.442695
        %v1373 = vpow.pop %v1372
        %v1374 = vmul.f32 %v1337, 1.442695
        %v1375 = vpow.pop %v1374
        %v1376 = vmul.f32 %v1338, 1.442695
        %v1377 = vpow.pop %v1376
        %v1378 = vmul.f32 %v1339, 1.442695
        %v1379 = vpow.pop %v1378
        %v1380 = vmul.f32 %v1340, 1.442695
        %v1381 = vpow.pop %v1380
        %v1382 = vmul.f32 %v1341, 1.442695
        %v1383 = vpow.pop %v1382
        %v1384 = vmul.f32 %v1342, 1.442695
        %v1385 = vpow.pop %v1384
        %v1386 = vmul.f32 %v1343, 1.442695
        %v1387 = vpow.pop %v1386
        %v1388 = vmul.f32 %v1344, 1.442695
        %v1389 = vpow.pop %v1388
        %v1390 = vmul.f32 %v1345, 1.442695
        %v1391 = vpow.pop %v1390
        %v1392 = vmul.f32 %v1346, 1.442695
        %v1393 = vpow.pop %v1392
        %v1394 = vmul.f32 %v1347, 1.442695
        %v1395 = vpow.pop %v1394
        %v1396 = vmul.f32 %v1348, 1.442695
        %v1397 = vpow.pop %v1396
        %v1398 = vmul.f32 %v1349, 1.442695
        %v1399 = vpow.pop %v1398
        %v1400 = vmul.f32 %v1350, 1.442695
        %v1401 = vpow.pop %v1400
        %v1402 = vmul.f32 %v1351, 1.442695
        %v1403 = vpow.pop %v1402
        %v1404 = vmul.f32 %v1352, 1.442695
        %v1405 = vpow.pop %v1404
        %v1406 = vmul.f32 %v1353, 1.442695
        %v1407 = vpow.pop %v1406
        %v1408 = vmul.f32 %v1354, 1.442695
        %v1409 = vpow.pop %v1408
        %v1410 = vmul.f32 %v1355, 1.442695
        %v1411 = vpow.pop %v1410
        %v1412 = vmul.f32 %v1356, 1.442695
        %v1413 = vpow.pop %v1412
        %v1414 = vmul.f32 %v1357, 1.442695
        %v1415 = vpow.pop %v1414
        %v1416 = vmul.f32 %v1358, 1.442695
        %v1417 = vpow.pop %v1416
        %v1418 = vmul.f32 %v1359, 1.442695
        %v1419 = vpow.pop %v1418
        %v1420 = vmul.f32 %v1360, 1.442695
        %v1421 = vpow.pop %v1420
        %v1422 = vmul.f32 %v1361, 1.442695
        %v1423 = vpow.pop %v1422
        %v1424 = vmul.f32 %v1362, 1.442695
        %v1425 = vpow.pop %v1424
        %v1426 = vmul.f32 %v1363, 1.442695
        %v1427 = vpow.pop %v1426
        %v1428 = vsel %vm1235, %v1365, 0.0
        %1429 = vadd.xlane.f32.xlu0 %v1428
        %v1430 = vpop.xlane.xlu0 %1429
        %v1431 = vsel %vm1235, %v1367, 0.0
        %1432 = vadd.xlane.f32.xlu0 %v1431
        %v1433 = vpop.xlane.xlu0 %1432
        %v1434 = vsel %vm1235, %v1369, 0.0
        %1435 = vadd.xlane.f32.xlu0 %v1434
        %v1436 = vpop.xlane.xlu0 %1435
        %v1437 = vsel %vm1235, %v1371, 0.0
        %1438 = vadd.xlane.f32.xlu0 %v1437
        %v1439 = vpop.xlane.xlu0 %1438
        %v1440 = vsel %vm1235, %v1373, 0.0
        %1441 = vadd.xlane.f32.xlu0 %v1440
        %v1442 = vpop.xlane.xlu0 %1441
        %v1443 = vsel %vm1235, %v1375, 0.0
        %1444 = vadd.xlane.f32.xlu0 %v1443
        %v1445 = vpop.xlane.xlu0 %1444
        %v1446 = vsel %vm1235, %v1377, 0.0
        %1447 = vadd.xlane.f32.xlu0 %v1446
        %v1448 = vpop.xlane.xlu0 %1447
        %v1449 = vsel %vm1235, %v1379, 0.0
        %1450 = vadd.xlane.f32.xlu0 %v1449
        %v1451 = vpop.xlane.xlu0 %1450
        %v1452 = vsel %vm1235, %v1381, 0.0
        %1453 = vadd.xlane.f32.xlu0 %v1452
        %v1454 = vpop.xlane.xlu0 %1453
        %v1455 = vsel %vm1235, %v1383, 0.0
        %1456 = vadd.xlane.f32.xlu0 %v1455
        %v1457 = vpop.xlane.xlu0 %1456
        %v1458 = vsel %vm1235, %v1385, 0.0
        %1459 = vadd.xlane.f32.xlu0 %v1458
        %v1460 = vpop.xlane.xlu0 %1459
        %v1461 = vsel %vm1235, %v1387, 0.0
        %1462 = vadd.xlane.f32.xlu0 %v1461
        %v1463 = vpop.xlane.xlu0 %1462
        %v1464 = vsel %vm1235, %v1389, 0.0
        %1465 = vadd.xlane.f32.xlu0 %v1464
        %v1466 = vpop.xlane.xlu0 %1465
        %v1467 = vsel %vm1235, %v1391, 0.0
        %1468 = vadd.xlane.f32.xlu0 %v1467
        %v1469 = vpop.xlane.xlu0 %1468
        %v1470 = vsel %vm1235, %v1393, 0.0
        %1471 = vadd.xlane.f32.xlu0 %v1470
        %v1472 = vpop.xlane.xlu0 %1471
        %v1473 = vsel %vm1235, %v1395, 0.0
        %1474 = vadd.xlane.f32.xlu0 %v1473
        %v1475 = vpop.xlane.xlu0 %1474
        %v1476 = vsel %vm1235, %v1397, 0.0
        %1477 = vadd.xlane.f32.xlu0 %v1476
        %v1478 = vpop.xlane.xlu0 %1477
        %v1479 = vsel %vm1235, %v1399, 0.0
        %1480 = vadd.xlane.f32.xlu0 %v1479
        %v1481 = vpop.xlane.xlu0 %1480
        %v1482 = vsel %vm1235, %v1401, 0.0
        %1483 = vadd.xlane.f32.xlu0 %v1482
        %v1484 = vpop.xlane.xlu0 %1483
        %v1485 = vsel %vm1235, %v1403, 0.0
        %1486 = vadd.xlane.f32.xlu0 %v1485
        %v1487 = vpop.xlane.xlu0 %1486
        %v1488 = vsel %vm1235, %v1405, 0.0
        %1489 = vadd.xlane.f32.xlu0 %v1488
        %v1490 = vpop.xlane.xlu0 %1489
        %v1491 = vsel %vm1235, %v1407, 0.0
        %1492 = vadd.xlane.f32.xlu0 %v1491
        %v1493 = vpop.xlane.xlu0 %1492
        %v1494 = vsel %vm1235, %v1409, 0.0
        %1495 = vadd.xlane.f32.xlu0 %v1494
        %v1496 = vpop.xlane.xlu0 %1495
        %v1497 = vsel %vm1235, %v1411, 0.0
        %1498 = vadd.xlane.f32.xlu0 %v1497
        %v1499 = vpop.xlane.xlu0 %1498
        %v1500 = vsel %vm1235, %v1413, 0.0
        %1501 = vadd.xlane.f32.xlu0 %v1500
        %v1502 = vpop.xlane.xlu0 %1501
        %v1503 = vsel %vm1235, %v1415, 0.0
        %1504 = vadd.xlane.f32.xlu0 %v1503
        %v1505 = vpop.xlane.xlu0 %1504
        %v1506 = vsel %vm1235, %v1417, 0.0
        %1507 = vadd.xlane.f32.xlu0 %v1506
        %v1508 = vpop.xlane.xlu0 %1507
        %v1509 = vsel %vm1235, %v1419, 0.0
        %1510 = vadd.xlane.f32.xlu0 %v1509
        %v1511 = vpop.xlane.xlu0 %1510
        %v1512 = vsel %vm1235, %v1421, 0.0
        %1513 = vadd.xlane.f32.xlu0 %v1512
        %v1514 = vpop.xlane.xlu0 %1513
        %v1515 = vsel %vm1235, %v1423, 0.0
        %1516 = vadd.xlane.f32.xlu0 %v1515
        %v1517 = vpop.xlane.xlu0 %1516
        %v1518 = vsel %vm1235, %v1425, 0.0
        %1519 = vadd.xlane.f32.xlu0 %v1518
        %v1520 = vpop.xlane.xlu0 %1519
        %v1521 = vsel %vm1235, %v1427, 0.0
        %1522 = vadd.xlane.f32.xlu0 %v1521
        %v1523 = vpop.xlane.xlu0 %1522
        %v1524 = vrcp.pop %v1430
        %v1525 = vrcp.pop %v1433
        %v1526 = vrcp.pop %v1436
        %v1527 = vrcp.pop %v1439
        %v1528 = vrcp.pop %v1442
        %v1529 = vrcp.pop %v1445
        %v1530 = vrcp.pop %v1448
        %v1531 = vrcp.pop %v1451
        %v1532 = vrcp.pop %v1454
        %v1533 = vrcp.pop %v1457
        %v1534 = vrcp.pop %v1460
        %v1535 = vrcp.pop %v1463
        %v1536 = vrcp.pop %v1466
        %v1537 = vrcp.pop %v1469
        %v1538 = vrcp.pop %v1472
        %v1539 = vrcp.pop %v1475
        %v1540 = vrcp.pop %v1478
        %v1541 = vrcp.pop %v1481
        %v1542 = vrcp.pop %v1484
        %v1543 = vrcp.pop %v1487
        %v1544 = vrcp.pop %v1490
        %v1545 = vrcp.pop %v1493
        %v1546 = vrcp.pop %v1496
        %v1547 = vrcp.pop %v1499
        %v1548 = vrcp.pop %v1502
        %v1549 = vrcp.pop %v1505
        %v1550 = vrcp.pop %v1508
        %v1551 = vrcp.pop %v1511
        %v1552 = vrcp.pop %v1514
        %v1553 = vrcp.pop %v1517
        %v1554 = vrcp.pop %v1520
        %v1555 = vrcp.pop %v1523
        %v1556 = vmul.f32 %v1365, %v1524
        %v1557 = vmul.f32 %v1367, %v1525
        %v1558 = vmul.f32 %v1369, %v1526
        %v1559 = vmul.f32 %v1371, %v1527
        %v1560 = vmul.f32 %v1373, %v1528
        %v1561 = vmul.f32 %v1375, %v1529
        %v1562 = vmul.f32 %v1377, %v1530
        %v1563 = vmul.f32 %v1379, %v1531
        %v1564 = vmul.f32 %v1381, %v1532
        %v1565 = vmul.f32 %v1383, %v1533
        %v1566 = vmul.f32 %v1385, %v1534
        %v1567 = vmul.f32 %v1387, %v1535
        %v1568 = vmul.f32 %v1389, %v1536
        %v1569 = vmul.f32 %v1391, %v1537
        %v1570 = vmul.f32 %v1393, %v1538
        %v1571 = vmul.f32 %v1395, %v1539
        %v1572 = vmul.f32 %v1397, %v1540
        %v1573 = vmul.f32 %v1399, %v1541
        %v1574 = vmul.f32 %v1401, %v1542
        %v1575 = vmul.f32 %v1403, %v1543
        %v1576 = vmul.f32 %v1405, %v1544
        %v1577 = vmul.f32 %v1407, %v1545
        %v1578 = vmul.f32 %v1409, %v1546
        %v1579 = vmul.f32 %v1411, %v1547
        %v1580 = vmul.f32 %v1413, %v1548
        %v1581 = vmul.f32 %v1415, %v1549
        %v1582 = vmul.f32 %v1417, %v1550
        %v1583 = vmul.f32 %v1419, %v1551
        %v1584 = vmul.f32 %v1421, %v1552
        %v1585 = vmul.f32 %v1423, %v1553
        %v1586 = vmul.f32 %v1425, %v1554
        %v1587 = vmul.f32 %v1427, %v1555
        %v1588 = vpack.c.bf16 %v1557, %v1556
        %v1589 = vpack.c.bf16 %v1559, %v1558
        %v1590 = vpack.c.bf16 %v1561, %v1560
        %v1591 = vpack.c.bf16 %v1563, %v1562
        %v1592 = vpack.c.bf16 %v1565, %v1564
        %v1593 = vpack.c.bf16 %v1567, %v1566
        %v1594 = vpack.c.bf16 %v1569, %v1568
        %v1595 = vpack.c.bf16 %v1571, %v1570
        %v1596 = vpack.c.bf16 %v1573, %v1572
        %v1597 = vpack.c.bf16 %v1575, %v1574
        %v1598 = vpack.c.bf16 %v1577, %v1576
        %v1599 = vpack.c.bf16 %v1579, %v1578
        %v1600 = vpack.c.bf16 %v1581, %v1580
        %v1601 = vpack.c.bf16 %v1583, %v1582
        %v1602 = vpack.c.bf16 %v1585, %v1584
        %v1603 = vpack.c.bf16 %v1587, %v1586
        %v1604 = vld [vmem:[%s3] sm:$0xf]
        %v1605 = vlaneseq
        %v1606 = vshrl.u32 %v1605, 7
        %v1607 = vsub.s32 0, %v1606
        %v1608 = vrot.slane %v341, %v1607
        %v1610 = vsel %vm1235, %v1588, 0
        %v1613 = vsel %vm1235, %v1589, 0
        %v1616 = vsel %vm1235, %v1590, 0
        %v1619 = vsel %vm1235, %v1591, 0
        %v1622 = vsel %vm1235, %v1592, 0
        %v1625 = vsel %vm1235, %v1593, 0
        %v1628 = vsel %vm1235, %v1594, 0
        %v1631 = vsel %vm1235, %v1595, 0
        %v1634 = vsel %vm1235, %v1596, 0
        %v1637 = vsel %vm1235, %v1597, 0
        %v1640 = vsel %vm1235, %v1598, 0
        %v1643 = vsel %vm1235, %v1599, 0
        %v1646 = vsel %vm1235, %v1600, 0
        %v1649 = vsel %vm1235, %v1601, 0
        %v1652 = vsel %vm1235, %v1602, 0
        %v1655 = vsel %vm1235, %v1603, 0
        %vm1657 = vcmask 1043456
        %v1659 = vsel %vm1657, %v1604, 0
        %1661 = vmatprep.subr.bf16.mxu0 0
        %1662 = vmatpush1.bf16.msra.mxu0 0
        %1663 = vmatprep.subr.bf16.mxu0 0
        %1664 = vmatpush1.bf16.msra.mxu0 0
        %1665 = vmatprep.subr.bf16.mxu0 0
        %1666 = vmatpush1.bf16.msra.mxu0 0
        %1667 = vmatprep.subr.bf16.mxu0 0
        %1668 = vmatpush1.bf16.msra.mxu0 0
        %1669 = vmatprep.subr.bf16.mxu0 0
        %1670 = vmatpush1.bf16.msra.mxu0 0
        %1671 = vmatprep.subr.bf16.mxu0 0
        %1672 = vmatpush1.bf16.msra.mxu0 0
        %1673 = vmatprep.subr.bf16.mxu0 0
        %1674 = vmatpush1.bf16.msra.mxu0 0
        %1675 = vmatprep.subr.bf16.mxu0 0
        %1676 = vmatpush1.bf16.msra.mxu0 %v1659
        %1677 = vmatprep.subr.bf16.mxu0 0
        %1678 = vmatpush2.bf16.msra.mxu0 0
        %1679 = vmatprep.subr.bf16.mxu0 0
        %1680 = vmatpush2.bf16.msra.mxu0 0
        %1681 = vmatprep.subr.bf16.mxu0 0
        %1682 = vmatpush2.bf16.msra.mxu0 0
        %1683 = vmatprep.subr.bf16.mxu0 0
        %1684 = vmatpush2.bf16.msra.mxu0 0
        %1685 = vmatprep.subr.bf16.mxu0 0
        %1686 = vmatpush2.bf16.msra.mxu0 0
        %1687 = vmatprep.subr.bf16.mxu0 0
        %1688 = vmatpush2.bf16.msra.mxu0 0
        %1689 = vmatprep.subr.bf16.mxu0 0
        %1690 = vmatpush2.bf16.msra.mxu0 0
        %1691 = vmatprep.subr.bf16.mxu0 0
        %1692 = vmatpush2.bf16.msra.mxu0 0
        %1693 = vmatprep.mubr.bf16.mxu0 0
        %1694 = vmatmul.mubr.bf16.gmra.mxu0 %v1610
        %v1695 = vpop.f32.mrf.mxu0
        %v1696 = vadd.f32 %v1608, %v1695
        %v1697 = vpop.f32.mrf.mxu0
        %v1698 = vpop.f32.mrf.mxu0
        %v1699 = vadd.f32 %v1608, %v1698
        %v1700 = vpop.f32.mrf.mxu0
        %1701 = vmatprep.mubr.bf16.mxu0 0
        %1702 = vmatmul.mubr.bf16.gmra.mxu0 %v1613
        %v1703 = vpop.f32.mrf.mxu0
        %v1704 = vadd.f32 %v1608, %v1703
        %v1705 = vpop.f32.mrf.mxu0
        %v1706 = vpop.f32.mrf.mxu0
        %v1707 = vadd.f32 %v1608, %v1706
        %v1708 = vpop.f32.mrf.mxu0
        %1709 = vmatprep.mubr.bf16.mxu0 0
        %1710 = vmatmul.mubr.bf16.gmra.mxu0 %v1616
        %v1711 = vpop.f32.mrf.mxu0
        %v1712 = vadd.f32 %v1608, %v1711
        %v1713 = vpop.f32.mrf.mxu0
        %v1714 = vpop.f32.mrf.mxu0
        %v1715 = vadd.f32 %v1608, %v1714
        %v1716 = vpop.f32.mrf.mxu0
        %1717 = vmatprep.mubr.bf16.mxu0 0
        %1718 = vmatmul.mubr.bf16.gmra.mxu0 %v1619
        %v1719 = vpop.f32.mrf.mxu0
        %v1720 = vadd.f32 %v1608, %v1719
        %v1721 = vpop.f32.mrf.mxu0
        %v1722 = vpop.f32.mrf.mxu0
        %v1723 = vadd.f32 %v1608, %v1722
        %v1724 = vpop.f32.mrf.mxu0
        %1725 = vmatprep.mubr.bf16.mxu0 0
        %1726 = vmatmul.mubr.bf16.gmra.mxu0 %v1622
        %v1727 = vpop.f32.mrf.mxu0
        %v1728 = vadd.f32 %v1608, %v1727
        %v1729 = vpop.f32.mrf.mxu0
        %v1730 = vpop.f32.mrf.mxu0
        %v1731 = vadd.f32 %v1608, %v1730
        %v1732 = vpop.f32.mrf.mxu0
        %1733 = vmatprep.mubr.bf16.mxu0 0
        %1734 = vmatmul.mubr.bf16.gmra.mxu0 %v1625
        %v1735 = vpop.f32.mrf.mxu0
        %v1736 = vadd.f32 %v1608, %v1735
        %v1737 = vpop.f32.mrf.mxu0
        %v1738 = vpop.f32.mrf.mxu0
        %v1739 = vadd.f32 %v1608, %v1738
        %v1740 = vpop.f32.mrf.mxu0
        %1741 = vmatprep.mubr.bf16.mxu0 0
        %1742 = vmatmul.mubr.bf16.gmra.mxu0 %v1628
        %v1743 = vpop.f32.mrf.mxu0
        %v1744 = vadd.f32 %v1608, %v1743
        %v1745 = vpop.f32.mrf.mxu0
        %v1746 = vpop.f32.mrf.mxu0
        %v1747 = vadd.f32 %v1608, %v1746
        %v1748 = vpop.f32.mrf.mxu0
        %1749 = vmatprep.mubr.bf16.mxu0 0
        %1750 = vmatmul.mubr.bf16.gmra.mxu0 %v1631
        %v1751 = vpop.f32.mrf.mxu0
        %v1752 = vadd.f32 %v1608, %v1751
        %v1753 = vpop.f32.mrf.mxu0
        %v1754 = vpop.f32.mrf.mxu0
        %v1755 = vadd.f32 %v1608, %v1754
        %v1756 = vpop.f32.mrf.mxu0
        %1757 = vmatprep.mubr.bf16.mxu0 0
        %1758 = vmatmul.mubr.bf16.gmra.mxu0 %v1634
        %v1759 = vpop.f32.mrf.mxu0
        %v1760 = vadd.f32 %v1608, %v1759
        %v1761 = vpop.f32.mrf.mxu0
        %v1762 = vpop.f32.mrf.mxu0
        %v1763 = vadd.f32 %v1608, %v1762
        %v1764 = vpop.f32.mrf.mxu0
        %1765 = vmatprep.mubr.bf16.mxu0 0
        %1766 = vmatmul.mubr.bf16.gmra.mxu0 %v1637
        %v1767 = vpop.f32.mrf.mxu0
        %v1768 = vadd.f32 %v1608, %v1767
        %v1769 = vpop.f32.mrf.mxu0
        %v1770 = vpop.f32.mrf.mxu0
        %v1771 = vadd.f32 %v1608, %v1770
        %v1772 = vpop.f32.mrf.mxu0
        %1773 = vmatprep.mubr.bf16.mxu0 0
        %1774 = vmatmul.mubr.bf16.gmra.mxu0 %v1640
        %v1775 = vpop.f32.mrf.mxu0
        %v1776 = vadd.f32 %v1608, %v1775
        %v1777 = vpop.f32.mrf.mxu0
        %v1778 = vpop.f32.mrf.mxu0
        %v1779 = vadd.f32 %v1608, %v1778
        %v1780 = vpop.f32.mrf.mxu0
        %1781 = vmatprep.mubr.bf16.mxu0 0
        %1782 = vmatmul.mubr.bf16.gmra.mxu0 %v1643
        %v1783 = vpop.f32.mrf.mxu0
        %v1784 = vadd.f32 %v1608, %v1783
        %v1785 = vpop.f32.mrf.mxu0
        %v1786 = vpop.f32.mrf.mxu0
        %v1787 = vadd.f32 %v1608, %v1786
        %v1788 = vpop.f32.mrf.mxu0
        %1789 = vmatprep.mubr.bf16.mxu0 0
        %1790 = vmatmul.mubr.bf16.gmra.mxu0 %v1646
        %v1791 = vpop.f32.mrf.mxu0
        %v1792 = vadd.f32 %v1608, %v1791
        %v1793 = vpop.f32.mrf.mxu0
        %v1794 = vpop.f32.mrf.mxu0
        %v1795 = vadd.f32 %v1608, %v1794
        %v1796 = vpop.f32.mrf.mxu0
        %1797 = vmatprep.mubr.bf16.mxu0 0
        %1798 = vmatmul.mubr.bf16.gmra.mxu0 %v1649
        %v1799 = vpop.f32.mrf.mxu0
        %v1800 = vadd.f32 %v1608, %v1799
        %v1801 = vpop.f32.mrf.mxu0
        %v1802 = vpop.f32.mrf.mxu0
        %v1803 = vadd.f32 %v1608, %v1802
        %v1804 = vpop.f32.mrf.mxu0
        %1805 = vmatprep.mubr.bf16.mxu0 0
        %1806 = vmatmul.mubr.bf16.gmra.mxu0 %v1652
        %v1807 = vpop.f32.mrf.mxu0
        %v1808 = vadd.f32 %v1608, %v1807
        %v1809 = vpop.f32.mrf.mxu0
        %v1810 = vpop.f32.mrf.mxu0
        %v1811 = vadd.f32 %v1608, %v1810
        %v1812 = vpop.f32.mrf.mxu0
        %1813 = vmatprep.mubr.bf16.mxu0 0
        %1814 = vmatmul.mubr.bf16.gmra.mxu0 %v1655
        %v1815 = vpop.f32.mrf.mxu0
        %v1816 = vadd.f32 %v1608, %v1815
        %v1817 = vpop.f32.mrf.mxu0
        %v1818 = vpop.f32.mrf.mxu0
        %v1819 = vadd.f32 %v1608, %v1818
        %v1820 = vpop.f32.mrf.mxu0
        %1821 = vdwg.mxu0
        %v1822 = vmax.f32 %v1696, 0.0
        %v1823 = vmax.f32 %v1699, 0.0
        %v1824 = vmax.f32 %v1704, 0.0
        %v1825 = vmax.f32 %v1707, 0.0
        %v1826 = vmax.f32 %v1712, 0.0
        %v1827 = vmax.f32 %v1715, 0.0
        %v1828 = vmax.f32 %v1720, 0.0
        %v1829 = vmax.f32 %v1723, 0.0
        %v1830 = vmax.f32 %v1728, 0.0
        %v1831 = vmax.f32 %v1731, 0.0
        %v1832 = vmax.f32 %v1736, 0.0
        %v1833 = vmax.f32 %v1739, 0.0
        %v1834 = vmax.f32 %v1744, 0.0
        %v1835 = vmax.f32 %v1747, 0.0
        %v1836 = vmax.f32 %v1752, 0.0
        %v1837 = vmax.f32 %v1755, 0.0
        %v1838 = vmax.f32 %v1760, 0.0
        %v1839 = vmax.f32 %v1763, 0.0
        %v1840 = vmax.f32 %v1768, 0.0
        %v1841 = vmax.f32 %v1771, 0.0
        %v1842 = vmax.f32 %v1776, 0.0
        %v1843 = vmax.f32 %v1779, 0.0
        %v1844 = vmax.f32 %v1784, 0.0
        %v1845 = vmax.f32 %v1787, 0.0
        %v1846 = vmax.f32 %v1792, 0.0
        %v1847 = vmax.f32 %v1795, 0.0
        %v1848 = vmax.f32 %v1800, 0.0
        %v1849 = vmax.f32 %v1803, 0.0
        %v1850 = vmax.f32 %v1808, 0.0
        %v1851 = vmax.f32 %v1811, 0.0
        %v1852 = vmax.f32 %v1816, 0.0
        %v1853 = vmax.f32 %v1819, 0.0
        %vm1854 = vcmask 519168
        %1855 = vst.msk [vmem:[#allocation2] sm:$0xf] %vm1854, 0
        %1856 = vst.msk [vmem:[#allocation2 + $0x4] sm:$0xf] %vm1854, 0
        %1857 = vst.msk [vmem:[#allocation2 + $0x8] sm:$0xf] %vm1854, 0
        %1858 = vst.msk [vmem:[#allocation2 + $0xc] sm:$0xf] %vm1854, 0
        %1859 = vst.msk [vmem:[#allocation2 + $0x90] sm:$0xf] %vm1854, 0
        %1860 = vst.msk [vmem:[#allocation2 + $0x94] sm:$0xf] %vm1854, 0
        %1861 = vst.msk [vmem:[#allocation2 + $0x98] sm:$0xf] %vm1854, 0
        %1862 = vst.msk [vmem:[#allocation2 + $0x9c] sm:$0xf] %vm1854, 0
        %vm1863 = vcmask 257024
        %1864 = vst.msk [vmem:[#allocation2 + $0x10] sm:$0xf] %vm1863, %v307
        %1865 = vst.msk [vmem:[#allocation2 + $0x14] sm:$0xf] %vm1863, %v308
        %1866 = vst.msk [vmem:[#allocation2 + $0x18] sm:$0xf] %vm1863, %v309
        %1867 = vst.msk [vmem:[#allocation2 + $0x1c] sm:$0xf] %vm1863, %v310
        %1868 = vst.msk [vmem:[#allocation2 + $0x20] sm:$0xf] %vm1863, %v311
        %1869 = vst.msk [vmem:[#allocation2 + $0x24] sm:$0xf] %vm1863, %v312
        %1870 = vst.msk [vmem:[#allocation2 + $0x28] sm:$0xf] %vm1863, %v313
        %1871 = vst.msk [vmem:[#allocation2 + $0x2c] sm:$0xf] %vm1863, %v314
        %1872 = vst.msk [vmem:[#allocation2 + $0x30] sm:$0xf] %vm1863, %v315
        %1873 = vst.msk [vmem:[#allocation2 + $0x34] sm:$0xf] %vm1863, %v316
        %1874 = vst.msk [vmem:[#allocation2 + $0x38] sm:$0xf] %vm1863, %v317
        %1875 = vst.msk [vmem:[#allocation2 + $0x3c] sm:$0xf] %vm1863, %v318
        %1876 = vst.msk [vmem:[#allocation2 + $0x40] sm:$0xf] %vm1863, %v319
        %1877 = vst.msk [vmem:[#allocation2 + $0x44] sm:$0xf] %vm1863, %v320
        %1878 = vst.msk [vmem:[#allocation2 + $0x48] sm:$0xf] %vm1863, %v321
        %1879 = vst.msk [vmem:[#allocation2 + $0x4c] sm:$0xf] %vm1863, %v322
        %1880 = vst.msk [vmem:[#allocation2 + $0x50] sm:$0xf] %vm1863, %v323
        %1881 = vst.msk [vmem:[#allocation2 + $0x54] sm:$0xf] %vm1863, %v324
        %1882 = vst.msk [vmem:[#allocation2 + $0x58] sm:$0xf] %vm1863, %v325
        %1883 = vst.msk [vmem:[#allocation2 + $0x5c] sm:$0xf] %vm1863, %v326
        %1884 = vst.msk [vmem:[#allocation2 + $0x60] sm:$0xf] %vm1863, %v327
        %1885 = vst.msk [vmem:[#allocation2 + $0x64] sm:$0xf] %vm1863, %v328
        %1886 = vst.msk [vmem:[#allocation2 + $0x68] sm:$0xf] %vm1863, %v329
        %1887 = vst.msk [vmem:[#allocation2 + $0x6c] sm:$0xf] %vm1863, %v330
        %1888 = vst.msk [vmem:[#allocation2 + $0x70] sm:$0xf] %vm1863, %v331
        %1889 = vst.msk [vmem:[#allocation2 + $0x74] sm:$0xf] %vm1863, %v332
        %1890 = vst.msk [vmem:[#allocation2 + $0x78] sm:$0xf] %vm1863, %v333
        %1891 = vst.msk [vmem:[#allocation2 + $0x7c] sm:$0xf] %vm1863, %v334
        %1892 = vst.msk [vmem:[#allocation2 + $0x80] sm:$0xf] %vm1863, %v335
        %1893 = vst.msk [vmem:[#allocation2 + $0x84] sm:$0xf] %vm1863, %v336
        %1894 = vst.msk [vmem:[#allocation2 + $0x88] sm:$0xf] %vm1863, %v337
        %1895 = vst.msk [vmem:[#allocation2 + $0x8c] sm:$0xf] %vm1863, %v338
        %v1896 = vpack.c.bf16 %v1823, %v1822
        %v1897 = vpack.c.bf16 %v1825, %v1824
        %v1898 = vpack.c.bf16 %v1827, %v1826
        %v1899 = vpack.c.bf16 %v1829, %v1828
        %v1900 = vpack.c.bf16 %v1831, %v1830
        %v1901 = vpack.c.bf16 %v1833, %v1832
        %v1902 = vpack.c.bf16 %v1835, %v1834
        %v1903 = vpack.c.bf16 %v1837, %v1836
        %v1904 = vpack.c.bf16 %v1839, %v1838
        %v1905 = vpack.c.bf16 %v1841, %v1840
        %v1906 = vpack.c.bf16 %v1843, %v1842
        %v1907 = vpack.c.bf16 %v1845, %v1844
        %v1908 = vpack.c.bf16 %v1847, %v1846
        %v1909 = vpack.c.bf16 %v1849, %v1848
        %v1910 = vpack.c.bf16 %v1851, %v1850
        %v1911 = vpack.c.bf16 %v1853, %v1852
        %v1928 = vunpack.c.l.b16 %v1896
        %v1929 = vunpack.c.h.b16 %v1896
        %v1930 = vunpack.c.l.b16 %v1897
        %v1931 = vunpack.c.h.b16 %v1897
        %v1932 = vunpack.c.l.b16 %v1898
        %v1933 = vunpack.c.h.b16 %v1898
        %v1934 = vunpack.c.l.b16 %v1899
        %v1935 = vunpack.c.h.b16 %v1899
        %v1936 = vunpack.c.l.b16 %v1900
        %v1937 = vunpack.c.h.b16 %v1900
        %v1938 = vunpack.c.l.b16 %v1901
        %v1939 = vunpack.c.h.b16 %v1901
        %v1940 = vunpack.c.l.b16 %v1902
        %v1941 = vunpack.c.h.b16 %v1902
        %v1942 = vunpack.c.l.b16 %v1903
        %v1943 = vunpack.c.h.b16 %v1903
        %v1944 = vunpack.c.l.b16 %v1904
        %v1945 = vunpack.c.h.b16 %v1904
        %v1946 = vunpack.c.l.b16 %v1905
        %v1947 = vunpack.c.h.b16 %v1905
        %v1948 = vunpack.c.l.b16 %v1906
        %v1949 = vunpack.c.h.b16 %v1906
        %v1950 = vunpack.c.l.b16 %v1907
        %v1951 = vunpack.c.h.b16 %v1907
        %v1952 = vunpack.c.l.b16 %v1908
        %v1953 = vunpack.c.h.b16 %v1908
        %v1954 = vunpack.c.l.b16 %v1909
        %v1955 = vunpack.c.h.b16 %v1909
        %v1956 = vunpack.c.l.b16 %v1910
        %v1957 = vunpack.c.h.b16 %v1910
        %v1958 = vunpack.c.l.b16 %v1911
        %v1959 = vunpack.c.h.b16 %v1911
        %v1960 = vpack.c.b16 %v1928, %v1928
        %v1961 = vpack.c.b16 %v1929, %v1929
        %v1962 = vpack.c.b16 %v1930, %v1930
        %v1963 = vpack.c.b16 %v1931, %v1931
        %v1964 = vpack.c.b16 %v1932, %v1932
        %v1965 = vpack.c.b16 %v1933, %v1933
        %v1966 = vpack.c.b16 %v1934, %v1934
        %v1967 = vpack.c.b16 %v1935, %v1935
        %v1968 = vpack.c.b16 %v1936, %v1936
        %v1969 = vpack.c.b16 %v1937, %v1937
        %v1970 = vpack.c.b16 %v1938, %v1938
        %v1971 = vpack.c.b16 %v1939, %v1939
        %v1972 = vpack.c.b16 %v1940, %v1940
        %v1973 = vpack.c.b16 %v1941, %v1941
        %v1974 = vpack.c.b16 %v1942, %v1942
        %v1975 = vpack.c.b16 %v1943, %v1943
        %v1976 = vpack.c.b16 %v1944, %v1944
        %v1977 = vpack.c.b16 %v1945, %v1945
        %v1978 = vpack.c.b16 %v1946, %v1946
        %v1979 = vpack.c.b16 %v1947, %v1947
        %v1980 = vpack.c.b16 %v1948, %v1948
        %v1981 = vpack.c.b16 %v1949, %v1949
        %v1982 = vpack.c.b16 %v1950, %v1950
        %v1983 = vpack.c.b16 %v1951, %v1951
        %v1984 = vpack.c.b16 %v1952, %v1952
        %v1985 = vpack.c.b16 %v1953, %v1953
        %v1986 = vpack.c.b16 %v1954, %v1954
        %v1987 = vpack.c.b16 %v1955, %v1955
        %v1988 = vpack.c.b16 %v1956, %v1956
        %v1989 = vpack.c.b16 %v1957, %v1957
        %v1990 = vpack.c.b16 %v1958, %v1958
        %v1991 = vpack.c.b16 %v1959, %v1959
        %1992 = vrot.lane.b32.xlu0 %v1960, 32
        %v1993 = vpop.permute.xlu0 %1992
        %1994 = vrot.lane.b32.xlu0 %v1961, 32
        %v1995 = vpop.permute.xlu0 %1994
        %1996 = vrot.lane.b32.xlu0 %v1962, 32
        %v1997 = vpop.permute.xlu0 %1996
        %1998 = vrot.lane.b32.xlu0 %v1963, 32
        %v1999 = vpop.permute.xlu0 %1998
        %2000 = vrot.lane.b32.xlu0 %v1964, 32
        %v2001 = vpop.permute.xlu0 %2000
        %2002 = vrot.lane.b32.xlu0 %v1965, 32
        %v2003 = vpop.permute.xlu0 %2002
        %2004 = vrot.lane.b32.xlu0 %v1966, 32
        %v2005 = vpop.permute.xlu0 %2004
        %2006 = vrot.lane.b32.xlu0 %v1967, 32
        %v2007 = vpop.permute.xlu0 %2006
        %2008 = vrot.lane.b32.xlu0 %v1968, 32
        %v2009 = vpop.permute.xlu0 %2008
        %2010 = vrot.lane.b32.xlu0 %v1969, 32
        %v2011 = vpop.permute.xlu0 %2010
        %2012 = vrot.lane.b32.xlu0 %v1970, 32
        %v2013 = vpop.permute.xlu0 %2012
        %2014 = vrot.lane.b32.xlu0 %v1971, 32
        %v2015 = vpop.permute.xlu0 %2014
        %2016 = vrot.lane.b32.xlu0 %v1972, 32
        %v2017 = vpop.permute.xlu0 %2016
        %2018 = vrot.lane.b32.xlu0 %v1973, 32
        %v2019 = vpop.permute.xlu0 %2018
        %2020 = vrot.lane.b32.xlu0 %v1974, 32
        %v2021 = vpop.permute.xlu0 %2020
        %2022 = vrot.lane.b32.xlu0 %v1975, 32
        %v2023 = vpop.permute.xlu0 %2022
        %2024 = vrot.lane.b32.xlu0 %v1976, 32
        %v2025 = vpop.permute.xlu0 %2024
        %2026 = vrot.lane.b32.xlu0 %v1977, 32
        %v2027 = vpop.permute.xlu0 %2026
        %2028 = vrot.lane.b32.xlu0 %v1978, 32
        %v2029 = vpop.permute.xlu0 %2028
        %2030 = vrot.lane.b32.xlu0 %v1979, 32
        %v2031 = vpop.permute.xlu0 %2030
        %2032 = vrot.lane.b32.xlu0 %v1980, 32
        %v2033 = vpop.permute.xlu0 %2032
        %2034 = vrot.lane.b32.xlu0 %v1981, 32
        %v2035 = vpop.permute.xlu0 %2034
        %2036 = vrot.lane.b32.xlu0 %v1982, 32
        %v2037 = vpop.permute.xlu0 %2036
        %2038 = vrot.lane.b32.xlu0 %v1983, 32
        %v2039 = vpop.permute.xlu0 %2038
        %2040 = vrot.lane.b32.xlu0 %v1984, 32
        %v2041 = vpop.permute.xlu0 %2040
        %2042 = vrot.lane.b32.xlu0 %v1985, 32
        %v2043 = vpop.permute.xlu0 %2042
        %2044 = vrot.lane.b32.xlu0 %v1986, 32
        %v2045 = vpop.permute.xlu0 %2044
        %2046 = vrot.lane.b32.xlu0 %v1987, 32
        %v2047 = vpop.permute.xlu0 %2046
        %2048 = vrot.lane.b32.xlu0 %v1988, 32
        %v2049 = vpop.permute.xlu0 %2048
        %2050 = vrot.lane.b32.xlu0 %v1989, 32
        %v2051 = vpop.permute.xlu0 %2050
        %2052 = vrot.lane.b32.xlu0 %v1990, 32
        %v2053 = vpop.permute.xlu0 %2052
        %2054 = vrot.lane.b32.xlu0 %v1991, 32
        %v2055 = vpop.permute.xlu0 %2054
        %vm2088 = vcmask 519424
        %2089 = vst.msk [vmem:[#allocation2 + $0x10] sm:$0xf] %vm2088, %v1993
        %2090 = vst.msk [vmem:[#allocation2 + $0x14] sm:$0xf] %vm2088, %v1995
        %2091 = vst.msk [vmem:[#allocation2 + $0x18] sm:$0xf] %vm2088, %v1997
        %2092 = vst.msk [vmem:[#allocation2 + $0x1c] sm:$0xf] %vm2088, %v1999
        %2093 = vst.msk [vmem:[#allocation2 + $0x20] sm:$0xf] %vm2088, %v2001
        %2094 = vst.msk [vmem:[#allocation2 + $0x24] sm:$0xf] %vm2088, %v2003
        %2095 = vst.msk [vmem:[#allocation2 + $0x28] sm:$0xf] %vm2088, %v2005
        %2096 = vst.msk [vmem:[#allocation2 + $0x2c] sm:$0xf] %vm2088, %v2007
        %2097 = vst.msk [vmem:[#allocation2 + $0x30] sm:$0xf] %vm2088, %v2009
        %2098 = vst.msk [vmem:[#allocation2 + $0x34] sm:$0xf] %vm2088, %v2011
        %2099 = vst.msk [vmem:[#allocation2 + $0x38] sm:$0xf] %vm2088, %v2013
        %2100 = vst.msk [vmem:[#allocation2 + $0x3c] sm:$0xf] %vm2088, %v2015
        %2101 = vst.msk [vmem:[#allocation2 + $0x40] sm:$0xf] %vm2088, %v2017
        %2102 = vst.msk [vmem:[#allocation2 + $0x44] sm:$0xf] %vm2088, %v2019
        %2103 = vst.msk [vmem:[#allocation2 + $0x48] sm:$0xf] %vm2088, %v2021
        %2104 = vst.msk [vmem:[#allocation2 + $0x4c] sm:$0xf] %vm2088, %v2023
        %2105 = vst.msk [vmem:[#allocation2 + $0x50] sm:$0xf] %vm2088, %v2025
        %2106 = vst.msk [vmem:[#allocation2 + $0x54] sm:$0xf] %vm2088, %v2027
        %2107 = vst.msk [vmem:[#allocation2 + $0x58] sm:$0xf] %vm2088, %v2029
        %2108 = vst.msk [vmem:[#allocation2 + $0x5c] sm:$0xf] %vm2088, %v2031
        %2109 = vst.msk [vmem:[#allocation2 + $0x60] sm:$0xf] %vm2088, %v2033
        %2110 = vst.msk [vmem:[#allocation2 + $0x64] sm:$0xf] %vm2088, %v2035
        %2111 = vst.msk [vmem:[#allocation2 + $0x68] sm:$0xf] %vm2088, %v2037
        %2112 = vst.msk [vmem:[#allocation2 + $0x6c] sm:$0xf] %vm2088, %v2039
        %2113 = vst.msk [vmem:[#allocation2 + $0x70] sm:$0xf] %vm2088, %v2041
        %2114 = vst.msk [vmem:[#allocation2 + $0x74] sm:$0xf] %vm2088, %v2043
        %2115 = vst.msk [vmem:[#allocation2 + $0x78] sm:$0xf] %vm2088, %v2045
        %2116 = vst.msk [vmem:[#allocation2 + $0x7c] sm:$0xf] %vm2088, %v2047
        %2117 = vst.msk [vmem:[#allocation2 + $0x80] sm:$0xf] %vm2088, %v2049
        %2118 = vst.msk [vmem:[#allocation2 + $0x84] sm:$0xf] %vm2088, %v2051
        %2119 = vst.msk [vmem:[#allocation2 + $0x88] sm:$0xf] %vm2088, %v2053
        %2120 = vst.msk [vmem:[#allocation2 + $0x8c] sm:$0xf] %vm2088, %v2055
        %v2121 = vld [vmem:[%s1] sm:$0xff]
        %v2122 = vld [vmem:[%s1 + $0x8] sm:$0xff]
        %v2123 = vld [vmem:[%s1 + $0x10] sm:$0xff]
        %v2124 = vld [vmem:[%s1 + $0x18] sm:$0xff]
        %v2125 = vld [vmem:[%s1 + $0x20] sm:$0xff]
        %v2126 = vld [vmem:[%s1 + $0x28] sm:$0xff]
        %v2127 = vld [vmem:[%s1 + $0x30] sm:$0xff]
        %v2128 = vld [vmem:[%s1 + $0x38] sm:$0xff]
        %v2129 = vld [vmem:[%s1 + $0x40] sm:$0xff]
        %v2130 = vld [vmem:[%s1 + $0x48] sm:$0xff]
        %v2131 = vld [vmem:[%s1 + $0x50] sm:$0xff]
        %v2132 = vld [vmem:[%s1 + $0x58] sm:$0xff]
        %v2133 = vld [vmem:[%s1 + $0x60] sm:$0xff]
        %v2134 = vld [vmem:[%s1 + $0x68] sm:$0xff]
        %v2135 = vld [vmem:[%s1 + $0x70] sm:$0xff]
        %v2136 = vld [vmem:[%s1 + $0x78] sm:$0xff]
        %v2137 = vld [vmem:[%s1 + $0x80] sm:$0xff]
        %v2138 = vld [vmem:[%s1 + $0x88] sm:$0xff]
        %v2139 = vld [vmem:[%s1 + $0x90] sm:$0xff]
        %v2140 = vld [vmem:[%s1 + $0x98] sm:$0xff]
        %v2141 = vld [vmem:[%s1 + $0xa0] sm:$0xff]
        %v2142 = vld [vmem:[%s1 + $0xa8] sm:$0xff]
        %v2143 = vld [vmem:[%s1 + $0xb0] sm:$0xff]
        %v2144 = vld [vmem:[%s1 + $0xb8] sm:$0xff]
        %v2145 = vld [vmem:[%s1 + $0xc0] sm:$0xff]
        %v2146 = vld [vmem:[%s1 + $0xc8] sm:$0xff]
        %v2147 = vld [vmem:[%s1 + $0xd0] sm:$0xff]
        %v2148 = vld [vmem:[%s1 + $0xd8] sm:$0xff]
        %v2149 = vld [vmem:[%s1 + $0xe0] sm:$0xff]
        %v2150 = vld [vmem:[%s1 + $0xe8] sm:$0xff]
        %v2151 = vld [vmem:[%s1 + $0xf0] sm:$0xff]
        %v2152 = vld [vmem:[%s1 + $0xf8] sm:$0xff]
        %v2153 = vld [vmem:[#allocation2 + $0x4] sm:$0x8]
        %v2154 = vld [vmem:[#allocation2 + $0x8] sm:$0xf]
        %v2155 = vld [vmem:[#allocation2 + $0xc] sm:$0xf]
        %v2156 = vld [vmem:[#allocation2 + $0x10] sm:$0xf]
        %v2157 = vld [vmem:[#allocation2 + $0x14] sm:$0xf]
        %v2158 = vld [vmem:[#allocation2 + $0x18] sm:$0xf]
        %v2159 = vld [vmem:[#allocation2 + $0x1c] sm:$0xf]
        %v2160 = vld [vmem:[#allocation2 + $0x20] sm:$0xf]
        %v2161 = vld [vmem:[#allocation2 + $0x24] sm:$0xf]
        %v2162 = vld [vmem:[#allocation2 + $0x28] sm:$0xf]
        %v2163 = vld [vmem:[#allocation2 + $0x2c] sm:$0xf]
        %v2164 = vld [vmem:[#allocation2 + $0x30] sm:$0xf]
        %v2165 = vld [vmem:[#allocation2 + $0x34] sm:$0xf]
        %v2166 = vld [vmem:[#allocation2 + $0x38] sm:$0xf]
        %v2167 = vld [vmem:[#allocation2 + $0x3c] sm:$0xf]
        %v2168 = vld [vmem:[#allocation2 + $0x40] sm:$0xf]
        %v2169 = vld [vmem:[#allocation2 + $0x44] sm:$0xf]
        %v2170 = vld [vmem:[#allocation2 + $0x48] sm:$0xf]
        %v2171 = vld [vmem:[#allocation2 + $0x4c] sm:$0xf]
        %v2172 = vld [vmem:[#allocation2 + $0x50] sm:$0xf]
        %v2173 = vld [vmem:[#allocation2 + $0x54] sm:$0xf]
        %v2174 = vld [vmem:[#allocation2 + $0x58] sm:$0xf]
        %v2175 = vld [vmem:[#allocation2 + $0x5c] sm:$0xf]
        %v2176 = vld [vmem:[#allocation2 + $0x60] sm:$0xf]
        %v2177 = vld [vmem:[#allocation2 + $0x64] sm:$0xf]
        %v2178 = vld [vmem:[#allocation2 + $0x68] sm:$0xf]
        %v2179 = vld [vmem:[#allocation2 + $0x6c] sm:$0xf]
        %v2180 = vld [vmem:[#allocation2 + $0x70] sm:$0xf]
        %v2181 = vld [vmem:[#allocation2 + $0x74] sm:$0xf]
        %v2182 = vld [vmem:[#allocation2 + $0x78] sm:$0xf]
        %v2183 = vld [vmem:[#allocation2 + $0x7c] sm:$0xf]
        %v2184 = vld [vmem:[#allocation2 + $0x80] sm:$0xf]
        %v2185 = vld [vmem:[#allocation2 + $0x84] sm:$0xf]
        %vm2186 = vcmp.ge.s32.totalorder %v2121, 1
        %vm2187 = vcmp.ge.s32.totalorder %v2122, 1
        %vm2188 = vcmp.ge.s32.totalorder %v2123, 1
        %vm2189 = vcmp.ge.s32.totalorder %v2124, 1
        %vm2190 = vcmp.ge.s32.totalorder %v2125, 1
        %vm2191 = vcmp.ge.s32.totalorder %v2126, 1
        %vm2192 = vcmp.ge.s32.totalorder %v2127, 1
        %vm2193 = vcmp.ge.s32.totalorder %v2128, 1
        %vm2194 = vcmp.ge.s32.totalorder %v2129, 1
        %vm2195 = vcmp.ge.s32.totalorder %v2130, 1
        %vm2196 = vcmp.ge.s32.totalorder %v2131, 1
        %vm2197 = vcmp.ge.s32.totalorder %v2132, 1
        %vm2198 = vcmp.ge.s32.totalorder %v2133, 1
        %vm2199 = vcmp.ge.s32.totalorder %v2134, 1
        %vm2200 = vcmp.ge.s32.totalorder %v2135, 1
        %vm2201 = vcmp.ge.s32.totalorder %v2136, 1
        %vm2202 = vcmp.ge.s32.totalorder %v2137, 1
        %vm2203 = vcmp.ge.s32.totalorder %v2138, 1
        %vm2204 = vcmp.ge.s32.totalorder %v2139, 1
        %vm2205 = vcmp.ge.s32.totalorder %v2140, 1
        %vm2206 = vcmp.ge.s32.totalorder %v2141, 1
        %vm2207 = vcmp.ge.s32.totalorder %v2142, 1
        %vm2208 = vcmp.ge.s32.totalorder %v2143, 1
        %vm2209 = vcmp.ge.s32.totalorder %v2144, 1
        %vm2210 = vcmp.ge.s32.totalorder %v2145, 1
        %vm2211 = vcmp.ge.s32.totalorder %v2146, 1
        %vm2212 = vcmp.ge.s32.totalorder %v2147, 1
        %vm2213 = vcmp.ge.s32.totalorder %v2148, 1
        %vm2214 = vcmp.ge.s32.totalorder %v2149, 1
        %vm2215 = vcmp.ge.s32.totalorder %v2150, 1
        %vm2216 = vcmp.ge.s32.totalorder %v2151, 1
        %vm2217 = vcmp.ge.s32.totalorder %v2152, 1
        %v2218 = vsel %vm2186, 1, 0
        %v2219 = vsel %vm2187, 1, 0
        %v2220 = vsel %vm2188, 1, 0
        %v2221 = vsel %vm2189, 1, 0
        %v2222 = vsel %vm2190, 1, 0
        %v2223 = vsel %vm2191, 1, 0
        %v2224 = vsel %vm2192, 1, 0
        %v2225 = vsel %vm2193, 1, 0
        %v2226 = vsel %vm2194, 1, 0
        %v2227 = vsel %vm2195, 1, 0
        %v2228 = vsel %vm2196, 1, 0
        %v2229 = vsel %vm2197, 1, 0
        %v2230 = vsel %vm2198, 1, 0
        %v2231 = vsel %vm2199, 1, 0
        %v2232 = vsel %vm2200, 1, 0
        %v2233 = vsel %vm2201, 1, 0
        %v2234 = vsel %vm2202, 1, 0
        %v2235 = vsel %vm2203, 1, 0
        %v2236 = vsel %vm2204, 1, 0
        %v2237 = vsel %vm2205, 1, 0
        %v2238 = vsel %vm2206, 1, 0
        %v2239 = vsel %vm2207, 1, 0
        %v2240 = vsel %vm2208, 1, 0
        %v2241 = vsel %vm2209, 1, 0
        %v2242 = vsel %vm2210, 1, 0
        %v2243 = vsel %vm2211, 1, 0
        %v2244 = vsel %vm2212, 1, 0
        %v2245 = vsel %vm2213, 1, 0
        %v2246 = vsel %vm2214, 1, 0
        %v2247 = vsel %vm2215, 1, 0
        %v2248 = vsel %vm2216, 1, 0
        %v2249 = vsel %vm2217, 1, 0
        %2250 = vset.pattern.permute.xlu0 0
        %2251 = vperm.xlu0 %2250, %v2218
        %v2252 = vpop.permute.xlu0 %2251
        %2253 = vset.pattern.permute.xlu0 0
        %2254 = vperm.xlu0 %2253, %v2219
        %v2255 = vpop.permute.xlu0 %2254
        %2256 = vset.pattern.permute.xlu0 0
        %2257 = vperm.xlu0 %2256, %v2220
        %v2258 = vpop.permute.xlu0 %2257
        %2259 = vset.pattern.permute.xlu0 0
        %2260 = vperm.xlu0 %2259, %v2221
        %v2261 = vpop.permute.xlu0 %2260
        %2262 = vset.pattern.permute.xlu0 0
        %2263 = vperm.xlu0 %2262, %v2222
        %v2264 = vpop.permute.xlu0 %2263
        %2265 = vset.pattern.permute.xlu0 0
        %2266 = vperm.xlu0 %2265, %v2223
        %v2267 = vpop.permute.xlu0 %2266
        %2268 = vset.pattern.permute.xlu0 0
        %2269 = vperm.xlu0 %2268, %v2224
        %v2270 = vpop.permute.xlu0 %2269
        %2271 = vset.pattern.permute.xlu0 0
        %2272 = vperm.xlu0 %2271, %v2225
        %v2273 = vpop.permute.xlu0 %2272
        %2274 = vset.pattern.permute.xlu0 0
        %2275 = vperm.xlu0 %2274, %v2226
        %v2276 = vpop.permute.xlu0 %2275
        %2277 = vset.pattern.permute.xlu0 0
        %2278 = vperm.xlu0 %2277, %v2227
        %v2279 = vpop.permute.xlu0 %2278
        %2280 = vset.pattern.permute.xlu0 0
        %2281 = vperm.xlu0 %2280, %v2228
        %v2282 = vpop.permute.xlu0 %2281
        %2283 = vset.pattern.permute.xlu0 0
        %2284 = vperm.xlu0 %2283, %v2229
        %v2285 = vpop.permute.xlu0 %2284
        %2286 = vset.pattern.permute.xlu0 0
        %2287 = vperm.xlu0 %2286, %v2230
        %v2288 = vpop.permute.xlu0 %2287
        %2289 = vset.pattern.permute.xlu0 0
        %2290 = vperm.xlu0 %2289, %v2231
        %v2291 = vpop.permute.xlu0 %2290
        %2292 = vset.pattern.permute.xlu0 0
        %2293 = vperm.xlu0 %2292, %v2232
        %v2294 = vpop.permute.xlu0 %2293
        %2295 = vset.pattern.permute.xlu0 0
        %2296 = vperm.xlu0 %2295, %v2233
        %v2297 = vpop.permute.xlu0 %2296
        %2298 = vset.pattern.permute.xlu0 0
        %2299 = vperm.xlu0 %2298, %v2234
        %v2300 = vpop.permute.xlu0 %2299
        %2301 = vset.pattern.permute.xlu0 0
        %2302 = vperm.xlu0 %2301, %v2235
        %v2303 = vpop.permute.xlu0 %2302
        %2304 = vset.pattern.permute.xlu0 0
        %2305 = vperm.xlu0 %2304, %v2236
        %v2306 = vpop.permute.xlu0 %2305
        %2307 = vset.pattern.permute.xlu0 0
        %2308 = vperm.xlu0 %2307, %v2237
        %v2309 = vpop.permute.xlu0 %2308
        %2310 = vset.pattern.permute.xlu0 0
        %2311 = vperm.xlu0 %2310, %v2238
        %v2312 = vpop.permute.xlu0 %2311
        %2313 = vset.pattern.permute.xlu0 0
        %2314 = vperm.xlu0 %2313, %v2239
        %v2315 = vpop.permute.xlu0 %2314
        %2316 = vset.pattern.permute.xlu0 0
        %2317 = vperm.xlu0 %2316, %v2240
        %v2318 = vpop.permute.xlu0 %2317
        %2319 = vset.pattern.permute.xlu0 0
        %2320 = vperm.xlu0 %2319, %v2241
        %v2321 = vpop.permute.xlu0 %2320
        %2322 = vset.pattern.permute.xlu0 0
        %2323 = vperm.xlu0 %2322, %v2242
        %v2324 = vpop.permute.xlu0 %2323
        %2325 = vset.pattern.permute.xlu0 0
        %2326 = vperm.xlu0 %2325, %v2243
        %v2327 = vpop.permute.xlu0 %2326
        %2328 = vset.pattern.permute.xlu0 0
        %2329 = vperm.xlu0 %2328, %v2244
        %v2330 = vpop.permute.xlu0 %2329
        %2331 = vset.pattern.permute.xlu0 0
        %2332 = vperm.xlu0 %2331, %v2245
        %v2333 = vpop.permute.xlu0 %2332
        %2334 = vset.pattern.permute.xlu0 0
        %2335 = vperm.xlu0 %2334, %v2246
        %v2336 = vpop.permute.xlu0 %2335
        %2337 = vset.pattern.permute.xlu0 0
        %2338 = vperm.xlu0 %2337, %v2247
        %v2339 = vpop.permute.xlu0 %2338
        %2340 = vset.pattern.permute.xlu0 0
        %2341 = vperm.xlu0 %2340, %v2248
        %v2342 = vpop.permute.xlu0 %2341
        %2343 = vset.pattern.permute.xlu0 0
        %2344 = vperm.xlu0 %2343, %v2249
        %v2345 = vpop.permute.xlu0 %2344
        %vm2346 = vcmp.eq.s32.totalorder %v2252, 1
        %vm2347 = vcmp.eq.s32.totalorder %v2255, 1
        %vm2348 = vcmp.eq.s32.totalorder %v2258, 1
        %vm2349 = vcmp.eq.s32.totalorder %v2261, 1
        %vm2350 = vcmp.eq.s32.totalorder %v2264, 1
        %vm2351 = vcmp.eq.s32.totalorder %v2267, 1
        %vm2352 = vcmp.eq.s32.totalorder %v2270, 1
        %vm2353 = vcmp.eq.s32.totalorder %v2273, 1
        %vm2354 = vcmp.eq.s32.totalorder %v2276, 1
        %vm2355 = vcmp.eq.s32.totalorder %v2279, 1
        %vm2356 = vcmp.eq.s32.totalorder %v2282, 1
        %vm2357 = vcmp.eq.s32.totalorder %v2285, 1
        %vm2358 = vcmp.eq.s32.totalorder %v2288, 1
        %vm2359 = vcmp.eq.s32.totalorder %v2291, 1
        %vm2360 = vcmp.eq.s32.totalorder %v2294, 1
        %vm2361 = vcmp.eq.s32.totalorder %v2297, 1
        %vm2362 = vcmp.eq.s32.totalorder %v2300, 1
        %vm2363 = vcmp.eq.s32.totalorder %v2303, 1
        %vm2364 = vcmp.eq.s32.totalorder %v2306, 1
        %vm2365 = vcmp.eq.s32.totalorder %v2309, 1
        %vm2366 = vcmp.eq.s32.totalorder %v2312, 1
        %vm2367 = vcmp.eq.s32.totalorder %v2315, 1
        %vm2368 = vcmp.eq.s32.totalorder %v2318, 1
        %vm2369 = vcmp.eq.s32.totalorder %v2321, 1
        %vm2370 = vcmp.eq.s32.totalorder %v2324, 1
        %vm2371 = vcmp.eq.s32.totalorder %v2327, 1
        %vm2372 = vcmp.eq.s32.totalorder %v2330, 1
        %vm2373 = vcmp.eq.s32.totalorder %v2333, 1
        %vm2374 = vcmp.eq.s32.totalorder %v2336, 1
        %vm2375 = vcmp.eq.s32.totalorder %v2339, 1
        %vm2376 = vcmp.eq.s32.totalorder %v2342, 1
        %vm2377 = vcmp.eq.s32.totalorder %v2345, 1
        %vm2378 = vmpackc.low %vm2346, %vm2346
        %vm2379 = vmpackc.low %vm2347, %vm2347
        %vm2380 = vmpackc.low %vm2348, %vm2348
        %vm2381 = vmpackc.low %vm2349, %vm2349
        %vm2382 = vmpackc.low %vm2350, %vm2350
        %vm2383 = vmpackc.low %vm2351, %vm2351
        %vm2384 = vmpackc.low %vm2352, %vm2352
        %vm2385 = vmpackc.low %vm2353, %vm2353
        %vm2386 = vmpackc.low %vm2354, %vm2354
        %vm2387 = vmpackc.low %vm2355, %vm2355
        %vm2388 = vmpackc.low %vm2356, %vm2356
        %vm2389 = vmpackc.low %vm2357, %vm2357
        %vm2390 = vmpackc.low %vm2358, %vm2358
        %vm2391 = vmpackc.low %vm2359, %vm2359
        %vm2392 = vmpackc.low %vm2360, %vm2360
        %vm2393 = vmpackc.low %vm2361, %vm2361
        %vm2394 = vmpackc.low %vm2362, %vm2362
        %vm2395 = vmpackc.low %vm2363, %vm2363
        %vm2396 = vmpackc.low %vm2364, %vm2364
        %vm2397 = vmpackc.low %vm2365, %vm2365
        %vm2398 = vmpackc.low %vm2366, %vm2366
        %vm2399 = vmpackc.low %vm2367, %vm2367
        %vm2400 = vmpackc.low %vm2368, %vm2368
        %vm2401 = vmpackc.low %vm2369, %vm2369
        %vm2402 = vmpackc.low %vm2370, %vm2370
        %vm2403 = vmpackc.low %vm2371, %vm2371
        %vm2404 = vmpackc.low %vm2372, %vm2372
        %vm2405 = vmpackc.low %vm2373, %vm2373
        %vm2406 = vmpackc.low %vm2374, %vm2374
        %vm2407 = vmpackc.low %vm2375, %vm2375
        %vm2408 = vmpackc.low %vm2376, %vm2376
        %vm2409 = vmpackc.low %vm2377, %vm2377
        %v2410 = vsel %vm2378, 65537, 0
        %v2411 = vsel %vm2379, 65537, 0
        %v2412 = vsel %vm2380, 65537, 0
        %v2413 = vsel %vm2381, 65537, 0
        %v2414 = vsel %vm2382, 65537, 0
        %v2415 = vsel %vm2383, 65537, 0
        %v2416 = vsel %vm2384, 65537, 0
        %v2417 = vsel %vm2385, 65537, 0
        %v2418 = vsel %vm2386, 65537, 0
        %v2419 = vsel %vm2387, 65537, 0
        %v2420 = vsel %vm2388, 65537, 0
        %v2421 = vsel %vm2389, 65537, 0
        %v2422 = vsel %vm2390, 65537, 0
        %v2423 = vsel %vm2391, 65537, 0
        %v2424 = vsel %vm2392, 65537, 0
        %v2425 = vsel %vm2393, 65537, 0
        %v2426 = vsel %vm2394, 65537, 0
        %v2427 = vsel %vm2395, 65537, 0
        %v2428 = vsel %vm2396, 65537, 0
        %v2429 = vsel %vm2397, 65537, 0
        %v2430 = vsel %vm2398, 65537, 0
        %v2431 = vsel %vm2399, 65537, 0
        %v2432 = vsel %vm2400, 65537, 0
        %v2433 = vsel %vm2401, 65537, 0
        %v2434 = vsel %vm2402, 65537, 0
        %v2435 = vsel %vm2403, 65537, 0
        %v2436 = vsel %vm2404, 65537, 0
        %v2437 = vsel %vm2405, 65537, 0
        %v2438 = vsel %vm2406, 65537, 0
        %v2439 = vsel %vm2407, 65537, 0
        %v2440 = vsel %vm2408, 65537, 0
        %v2441 = vsel %vm2409, 65537, 0
        %vm2442 = vsmask.f32 3328
        %vm2443 = vsmask.f32 7440
        %vm2444 = vmor %vm2442, %vm2443
        %v2446 = vshll.u32 %v2410, 16
        %v2448 = vrot.slane %v2446, 5
        %v2449 = vshrl.u32 %v2410, 16
        %v2451 = vrot.slane %v2449, 4
        %v2452 = vor.u32 %v2451, %v2448
        %v2453 = vrot.slane %v2452, 4
        %v2455 = vshll.u32 %v2411, 16
        %v2457 = vrot.slane %v2455, 5
        %v2458 = vsel %vm2444, %v2453, %v2457
        %v2459 = vshrl.u32 %v2411, 16
        %v2461 = vrot.slane %v2459, 4
        %v2462 = vor.u32 %v2461, %v2457
        %v2463 = vrot.slane %v2462, 4
        %v2465 = vshll.u32 %v2412, 16
        %v2467 = vrot.slane %v2465, 5
        %v2468 = vsel %vm2444, %v2463, %v2467
        %v2469 = vshrl.u32 %v2412, 16
        %v2471 = vrot.slane %v2469, 4
        %v2472 = vor.u32 %v2471, %v2467
        %v2473 = vrot.slane %v2472, 4
        %v2475 = vshll.u32 %v2413, 16
        %v2477 = vrot.slane %v2475, 5
        %v2478 = vsel %vm2444, %v2473, %v2477
        %v2479 = vshrl.u32 %v2413, 16
        %v2481 = vrot.slane %v2479, 4
        %v2482 = vor.u32 %v2481, %v2477
        %v2483 = vrot.slane %v2482, 4
        %v2485 = vshll.u32 %v2414, 16
        %v2487 = vrot.slane %v2485, 5
        %v2488 = vsel %vm2444, %v2483, %v2487
        %v2489 = vshrl.u32 %v2414, 16
        %v2491 = vrot.slane %v2489, 4
        %v2492 = vor.u32 %v2491, %v2487
        %v2493 = vrot.slane %v2492, 4
        %v2495 = vshll.u32 %v2415, 16
        %v2497 = vrot.slane %v2495, 5
        %v2498 = vsel %vm2444, %v2493, %v2497
        %v2499 = vshrl.u32 %v2415, 16
        %v2501 = vrot.slane %v2499, 4
        %v2502 = vor.u32 %v2501, %v2497
        %v2503 = vrot.slane %v2502, 4
        %v2505 = vshll.u32 %v2416, 16
        %v2507 = vrot.slane %v2505, 5
        %v2508 = vsel %vm2444, %v2503, %v2507
        %v2509 = vshrl.u32 %v2416, 16
        %v2511 = vrot.slane %v2509, 4
        %v2512 = vor.u32 %v2511, %v2507
        %v2513 = vrot.slane %v2512, 4
        %v2515 = vshll.u32 %v2417, 16
        %v2517 = vrot.slane %v2515, 5
        %v2518 = vsel %vm2444, %v2513, %v2517
        %v2519 = vshrl.u32 %v2417, 16
        %v2521 = vrot.slane %v2519, 4
        %v2522 = vor.u32 %v2521, %v2517
        %v2523 = vrot.slane %v2522, 4
        %v2525 = vshll.u32 %v2418, 16
        %v2527 = vrot.slane %v2525, 5
        %v2528 = vsel %vm2444, %v2523, %v2527
        %v2529 = vshrl.u32 %v2418, 16
        %v2531 = vrot.slane %v2529, 4
        %v2532 = vor.u32 %v2531, %v2527
        %v2533 = vrot.slane %v2532, 4
        %v2535 = vshll.u32 %v2419, 16
        %v2537 = vrot.slane %v2535, 5
        %v2538 = vsel %vm2444, %v2533, %v2537
        %v2539 = vshrl.u32 %v2419, 16
        %v2541 = vrot.slane %v2539, 4
        %v2542 = vor.u32 %v2541, %v2537
        %v2543 = vrot.slane %v2542, 4
        %v2545 = vshll.u32 %v2420, 16
        %v2547 = vrot.slane %v2545, 5
        %v2548 = vsel %vm2444, %v2543, %v2547
        %v2549 = vshrl.u32 %v2420, 16
        %v2551 = vrot.slane %v2549, 4
        %v2552 = vor.u32 %v2551, %v2547
        %v2553 = vrot.slane %v2552, 4
        %v2555 = vshll.u32 %v2421, 16
        %v2557 = vrot.slane %v2555, 5
        %v2558 = vsel %vm2444, %v2553, %v2557
        %v2559 = vshrl.u32 %v2421, 16
        %v2561 = vrot.slane %v2559, 4
        %v2562 = vor.u32 %v2561, %v2557
        %v2563 = vrot.slane %v2562, 4
        %v2565 = vshll.u32 %v2422, 16
        %v2567 = vrot.slane %v2565, 5
        %v2568 = vsel %vm2444, %v2563, %v2567
        %v2569 = vshrl.u32 %v2422, 16
        %v2571 = vrot.slane %v2569, 4
        %v2572 = vor.u32 %v2571, %v2567
        %v2573 = vrot.slane %v2572, 4
        %v2575 = vshll.u32 %v2423, 16
        %v2577 = vrot.slane %v2575, 5
        %v2578 = vsel %vm2444, %v2573, %v2577
        %v2579 = vshrl.u32 %v2423, 16
        %v2581 = vrot.slane %v2579, 4
        %v2582 = vor.u32 %v2581, %v2577
        %v2583 = vrot.slane %v2582, 4
        %v2585 = vshll.u32 %v2424, 16
        %v2587 = vrot.slane %v2585, 5
        %v2588 = vsel %vm2444, %v2583, %v2587
        %v2589 = vshrl.u32 %v2424, 16
        %v2591 = vrot.slane %v2589, 4
        %v2592 = vor.u32 %v2591, %v2587
        %v2593 = vrot.slane %v2592, 4
        %v2595 = vshll.u32 %v2425, 16
        %v2597 = vrot.slane %v2595, 5
        %v2598 = vsel %vm2444, %v2593, %v2597
        %v2599 = vshrl.u32 %v2425, 16
        %v2601 = vrot.slane %v2599, 4
        %v2602 = vor.u32 %v2601, %v2597
        %v2603 = vrot.slane %v2602, 4
        %v2605 = vshll.u32 %v2426, 16
        %v2607 = vrot.slane %v2605, 5
        %v2608 = vsel %vm2444, %v2603, %v2607
        %v2609 = vshrl.u32 %v2426, 16
        %v2611 = vrot.slane %v2609, 4
        %v2612 = vor.u32 %v2611, %v2607
        %v2613 = vrot.slane %v2612, 4
        %v2615 = vshll.u32 %v2427, 16
        %v2617 = vrot.slane %v2615, 5
        %v2618 = vsel %vm2444, %v2613, %v2617
        %v2619 = vshrl.u32 %v2427, 16
        %v2621 = vrot.slane %v2619, 4
        %v2622 = vor.u32 %v2621, %v2617
        %v2623 = vrot.slane %v2622, 4
        %v2625 = vshll.u32 %v2428, 16
        %v2627 = vrot.slane %v2625, 5
        %v2628 = vsel %vm2444, %v2623, %v2627
        %v2629 = vshrl.u32 %v2428, 16
        %v2631 = vrot.slane %v2629, 4
        %v2632 = vor.u32 %v2631, %v2627
        %v2633 = vrot.slane %v2632, 4
        %v2635 = vshll.u32 %v2429, 16
        %v2637 = vrot.slane %v2635, 5
        %v2638 = vsel %vm2444, %v2633, %v2637
        %v2639 = vshrl.u32 %v2429, 16
        %v2641 = vrot.slane %v2639, 4
        %v2642 = vor.u32 %v2641, %v2637
        %v2643 = vrot.slane %v2642, 4
        %v2645 = vshll.u32 %v2430, 16
        %v2647 = vrot.slane %v2645, 5
        %v2648 = vsel %vm2444, %v2643, %v2647
        %v2649 = vshrl.u32 %v2430, 16
        %v2651 = vrot.slane %v2649, 4
        %v2652 = vor.u32 %v2651, %v2647
        %v2653 = vrot.slane %v2652, 4
        %v2655 = vshll.u32 %v2431, 16
        %v2657 = vrot.slane %v2655, 5
        %v2658 = vsel %vm2444, %v2653, %v2657
        %v2659 = vshrl.u32 %v2431, 16
        %v2661 = vrot.slane %v2659, 4
        %v2662 = vor.u32 %v2661, %v2657
        %v2663 = vrot.slane %v2662, 4
        %v2665 = vshll.u32 %v2432, 16
        %v2667 = vrot.slane %v2665, 5
        %v2668 = vsel %vm2444, %v2663, %v2667
        %v2669 = vshrl.u32 %v2432, 16
        %v2671 = vrot.slane %v2669, 4
        %v2672 = vor.u32 %v2671, %v2667
        %v2673 = vrot.slane %v2672, 4
        %v2675 = vshll.u32 %v2433, 16
        %v2677 = vrot.slane %v2675, 5
        %v2678 = vsel %vm2444, %v2673, %v2677
        %v2679 = vshrl.u32 %v2433, 16
        %v2681 = vrot.slane %v2679, 4
        %v2682 = vor.u32 %v2681, %v2677
        %v2683 = vrot.slane %v2682, 4
        %v2685 = vshll.u32 %v2434, 16
        %v2687 = vrot.slane %v2685, 5
        %v2688 = vsel %vm2444, %v2683, %v2687
        %v2689 = vshrl.u32 %v2434, 16
        %v2691 = vrot.slane %v2689, 4
        %v2692 = vor.u32 %v2691, %v2687
        %v2693 = vrot.slane %v2692, 4
        %v2695 = vshll.u32 %v2435, 16
        %v2697 = vrot.slane %v2695, 5
        %v2698 = vsel %vm2444, %v2693, %v2697
        %v2699 = vshrl.u32 %v2435, 16
        %v2701 = vrot.slane %v2699, 4
        %v2702 = vor.u32 %v2701, %v2697
        %v2703 = vrot.slane %v2702, 4
        %v2705 = vshll.u32 %v2436, 16
        %v2707 = vrot.slane %v2705, 5
        %v2708 = vsel %vm2444, %v2703, %v2707
        %v2709 = vshrl.u32 %v2436, 16
        %v2711 = vrot.slane %v2709, 4
        %v2712 = vor.u32 %v2711, %v2707
        %v2713 = vrot.slane %v2712, 4
        %v2715 = vshll.u32 %v2437, 16
        %v2717 = vrot.slane %v2715, 5
        %v2718 = vsel %vm2444, %v2713, %v2717
        %v2719 = vshrl.u32 %v2437, 16
        %v2721 = vrot.slane %v2719, 4
        %v2722 = vor.u32 %v2721, %v2717
        %v2723 = vrot.slane %v2722, 4
        %v2725 = vshll.u32 %v2438, 16
        %v2727 = vrot.slane %v2725, 5
        %v2728 = vsel %vm2444, %v2723, %v2727
        %v2729 = vshrl.u32 %v2438, 16
        %v2731 = vrot.slane %v2729, 4
        %v2732 = vor.u32 %v2731, %v2727
        %v2733 = vrot.slane %v2732, 4
        %v2735 = vshll.u32 %v2439, 16
        %v2737 = vrot.slane %v2735, 5
        %v2738 = vsel %vm2444, %v2733, %v2737
        %v2739 = vshrl.u32 %v2439, 16
        %v2741 = vrot.slane %v2739, 4
        %v2742 = vor.u32 %v2741, %v2737
        %v2743 = vrot.slane %v2742, 4
        %v2745 = vshll.u32 %v2440, 16
        %v2747 = vrot.slane %v2745, 5
        %v2748 = vsel %vm2444, %v2743, %v2747
        %v2749 = vshrl.u32 %v2440, 16
        %v2751 = vrot.slane %v2749, 4
        %v2752 = vor.u32 %v2751, %v2747
        %v2753 = vrot.slane %v2752, 4
        %v2755 = vshll.u32 %v2441, 16
        %v2757 = vrot.slane %v2755, 5
        %v2758 = vsel %vm2444, %v2753, %v2757
        %v2759 = vshrl.u32 %v2441, 16
        %v2761 = vrot.slane %v2759, 4
        %v2762 = vor.u32 %v2761, %v2757
        %v2763 = vrot.slane %v2762, 4
        %vm2764 = vcmp.ne.s16.totalorder %v2448, 0
        %vm2765 = vcmp.ne.s16.totalorder %v2458, 0
        %vm2766 = vcmp.ne.s16.totalorder %v2468, 0
        %vm2767 = vcmp.ne.s16.totalorder %v2478, 0
        %vm2768 = vcmp.ne.s16.totalorder %v2488, 0
        %vm2769 = vcmp.ne.s16.totalorder %v2498, 0
        %vm2770 = vcmp.ne.s16.totalorder %v2508, 0
        %vm2771 = vcmp.ne.s16.totalorder %v2518, 0
        %vm2772 = vcmp.ne.s16.totalorder %v2528, 0
        %vm2773 = vcmp.ne.s16.totalorder %v2538, 0
        %vm2774 = vcmp.ne.s16.totalorder %v2548, 0
        %vm2775 = vcmp.ne.s16.totalorder %v2558, 0
        %vm2776 = vcmp.ne.s16.totalorder %v2568, 0
        %vm2777 = vcmp.ne.s16.totalorder %v2578, 0
        %vm2778 = vcmp.ne.s16.totalorder %v2588, 0
        %vm2779 = vcmp.ne.s16.totalorder %v2598, 0
        %vm2780 = vcmp.ne.s16.totalorder %v2608, 0
        %vm2781 = vcmp.ne.s16.totalorder %v2618, 0
        %vm2782 = vcmp.ne.s16.totalorder %v2628, 0
        %vm2783 = vcmp.ne.s16.totalorder %v2638, 0
        %vm2784 = vcmp.ne.s16.totalorder %v2648, 0
        %vm2785 = vcmp.ne.s16.totalorder %v2658, 0
        %vm2786 = vcmp.ne.s16.totalorder %v2668, 0
        %vm2787 = vcmp.ne.s16.totalorder %v2678, 0
        %vm2788 = vcmp.ne.s16.totalorder %v2688, 0
        %vm2789 = vcmp.ne.s16.totalorder %v2698, 0
        %vm2790 = vcmp.ne.s16.totalorder %v2708, 0
        %vm2791 = vcmp.ne.s16.totalorder %v2718, 0
        %vm2792 = vcmp.ne.s16.totalorder %v2728, 0
        %vm2793 = vcmp.ne.s16.totalorder %v2738, 0
        %vm2794 = vcmp.ne.s16.totalorder %v2748, 0
        %vm2795 = vcmp.ne.s16.totalorder %v2758, 0
        %vm2796 = vcmp.ne.s16.totalorder %v2763, 0
        %v2797 = vsel %vm2764, %v2153, 0
        %v2798 = vsel %vm2765, %v2154, 0
        %v2799 = vsel %vm2766, %v2155, 0
        %v2800 = vsel %vm2767, %v2156, 0
        %v2801 = vsel %vm2768, %v2157, 0
        %v2802 = vsel %vm2769, %v2158, 0
        %v2803 = vsel %vm2770, %v2159, 0
        %v2804 = vsel %vm2771, %v2160, 0
        %v2805 = vsel %vm2772, %v2161, 0
        %v2806 = vsel %vm2773, %v2162, 0
        %v2807 = vsel %vm2774, %v2163, 0
        %v2808 = vsel %vm2775, %v2164, 0
        %v2809 = vsel %vm2776, %v2165, 0
        %v2810 = vsel %vm2777, %v2166, 0
        %v2811 = vsel %vm2778, %v2167, 0
        %v2812 = vsel %vm2779, %v2168, 0
        %v2813 = vsel %vm2780, %v2169, 0
        %v2814 = vsel %vm2781, %v2170, 0
        %v2815 = vsel %vm2782, %v2171, 0
        %v2816 = vsel %vm2783, %v2172, 0
        %v2817 = vsel %vm2784, %v2173, 0
        %v2818 = vsel %vm2785, %v2174, 0
        %v2819 = vsel %vm2786, %v2175, 0
        %v2820 = vsel %vm2787, %v2176, 0
        %v2821 = vsel %vm2788, %v2177, 0
        %v2822 = vsel %vm2789, %v2178, 0
        %v2823 = vsel %vm2790, %v2179, 0
        %v2824 = vsel %vm2791, %v2180, 0
        %v2825 = vsel %vm2792, %v2181, 0
        %v2826 = vsel %vm2793, %v2182, 0
        %v2827 = vsel %vm2794, %v2183, 0
        %v2828 = vsel %vm2795, %v2184, 0
        %v2829 = vsel %vm2796, %v2185, 0
        %v2830 = vld [vmem:[%s6] sm:$0xf]
        %v2831 = vld [vmem:[%s6 + $0x4] sm:$0xf]
        %v2832 = vld [vmem:[%s6 + $0x8] sm:$0xf]
        %v2833 = vld [vmem:[%s6 + $0xc] sm:$0xf]
        %v2834 = vld [vmem:[%s6 + $0x10] sm:$0xf]
        %v2835 = vld [vmem:[%s6 + $0x14] sm:$0xf]
        %v2836 = vld [vmem:[%s6 + $0x18] sm:$0xf]
        %v2837 = vld [vmem:[%s6 + $0x1c] sm:$0xf]
        %s2838 = scalar_lea.vmem %s6, 32
        %v2839 = vld [vmem:[%s2838] sm:$0xf]
        %v2840 = vld [vmem:[%s2838 + $0x4] sm:$0xf]
        %v2841 = vld [vmem:[%s2838 + $0x8] sm:$0xf]
        %v2842 = vld [vmem:[%s2838 + $0xc] sm:$0xf]
        %v2843 = vld [vmem:[%s2838 + $0x10] sm:$0xf]
        %v2844 = vld [vmem:[%s2838 + $0x14] sm:$0xf]
        %v2845 = vld [vmem:[%s2838 + $0x18] sm:$0xf]
        %v2846 = vld [vmem:[%s2838 + $0x1c] sm:$0xf]
        %v2879 = vunpack.c.l.b16 %v2154
        %v2880 = vunpack.c.l.b16 %v2155
        %v2881 = vunpack.c.l.b16 %v2156
        %v2882 = vunpack.c.l.b16 %v2157
        %v2883 = vunpack.c.l.b16 %v2158
        %v2884 = vunpack.c.l.b16 %v2159
        %v2885 = vunpack.c.l.b16 %v2160
        %v2886 = vunpack.c.l.b16 %v2161
        %v2887 = vunpack.c.l.b16 %v2162
        %v2888 = vunpack.c.l.b16 %v2163
        %v2889 = vunpack.c.l.b16 %v2164
        %v2890 = vunpack.c.l.b16 %v2165
        %v2891 = vunpack.c.l.b16 %v2166
        %v2892 = vunpack.c.l.b16 %v2167
        %v2893 = vunpack.c.l.b16 %v2168
        %v2894 = vunpack.c.l.b16 %v2169
        %v2895 = vunpack.c.l.b16 %v2170
        %v2896 = vunpack.c.l.b16 %v2171
        %v2897 = vunpack.c.l.b16 %v2172
        %v2898 = vunpack.c.l.b16 %v2173
        %v2899 = vunpack.c.l.b16 %v2174
        %v2900 = vunpack.c.l.b16 %v2175
        %v2901 = vunpack.c.l.b16 %v2176
        %v2902 = vunpack.c.l.b16 %v2177
        %v2903 = vunpack.c.l.b16 %v2178
        %v2904 = vunpack.c.l.b16 %v2179
        %v2905 = vunpack.c.l.b16 %v2180
        %v2906 = vunpack.c.l.b16 %v2181
        %v2907 = vunpack.c.l.b16 %v2182
        %v2908 = vunpack.c.l.b16 %v2183
        %v2909 = vunpack.c.l.b16 %v2184
        %v2910 = vunpack.c.l.b16 %v2185
        %v2911 = vpack.c.b16 %v2880, %v2879
        %v2912 = vpack.c.b16 %v2882, %v2881
        %v2913 = vpack.c.b16 %v2884, %v2883
        %v2914 = vpack.c.b16 %v2886, %v2885
        %v2915 = vpack.c.b16 %v2888, %v2887
        %v2916 = vpack.c.b16 %v2890, %v2889
        %v2917 = vpack.c.b16 %v2892, %v2891
        %v2918 = vpack.c.b16 %v2894, %v2893
        %v2919 = vpack.c.b16 %v2896, %v2895
        %v2920 = vpack.c.b16 %v2898, %v2897
        %v2921 = vpack.c.b16 %v2900, %v2899
        %v2922 = vpack.c.b16 %v2902, %v2901
        %v2923 = vpack.c.b16 %v2904, %v2903
        %v2924 = vpack.c.b16 %v2906, %v2905
        %v2925 = vpack.c.b16 %v2908, %v2907
        %v2926 = vpack.c.b16 %v2910, %v2909
        %v2935 = vunpack.c.l.b16 %v2839
        %v2936 = vunpack.c.l.b16 %v2840
        %v2937 = vunpack.c.l.b16 %v2841
        %v2938 = vunpack.c.l.b16 %v2842
        %v2939 = vunpack.c.l.b16 %v2843
        %v2940 = vunpack.c.l.b16 %v2844
        %v2941 = vunpack.c.l.b16 %v2845
        %v2942 = vunpack.c.l.b16 %v2846
        %v2943 = vpack.c.b16 %v2936, %v2935
        %v2944 = vpack.c.b16 %v2938, %v2937
        %v2945 = vpack.c.b16 %v2940, %v2939
        %v2946 = vpack.c.b16 %v2942, %v2941
        %vm2951 = vcmask 523264
        %v2953 = vsel %vm2951, %v2911, 0
        %v2956 = vsel %vm2951, %v2912, 0
        %v2959 = vsel %vm2951, %v2913, 0
        %v2962 = vsel %vm2951, %v2914, 0
        %v2965 = vsel %vm2951, %v2915, 0
        %v2968 = vsel %vm2951, %v2916, 0
        %v2971 = vsel %vm2951, %v2917, 0
        %v2974 = vsel %vm2951, %v2918, 0
        %v2977 = vsel %vm2951, %v2919, 0
        %v2980 = vsel %vm2951, %v2920, 0
        %v2983 = vsel %vm2951, %v2921, 0
        %v2986 = vsel %vm2951, %v2922, 0
        %v2989 = vsel %vm2951, %v2923, 0
        %v2992 = vsel %vm2951, %v2924, 0
        %v2995 = vsel %vm2951, %v2925, 0
        %v2998 = vsel %vm2951, %v2926, 0
        %3000 = vmatprep.subr.bf16.mxu0 0
        %3001 = vmatpush1.bf16.msra.mxu0 0
        %3002 = vmatprep.subr.bf16.mxu0 0
        %3003 = vmatpush1.bf16.msra.mxu0 0
        %3004 = vmatprep.subr.bf16.mxu0 0
        %3005 = vmatpush1.bf16.msra.mxu0 0
        %3006 = vmatprep.subr.bf16.mxu0 0
        %3007 = vmatpush1.bf16.msra.mxu0 0
        %3008 = vmatprep.subr.bf16.mxu0 0
        %3009 = vmatpush1.bf16.msra.mxu0 %v2946
        %3010 = vmatprep.subr.bf16.mxu0 0
        %3011 = vmatpush1.bf16.msra.mxu0 %v2945
        %3012 = vmatprep.subr.bf16.mxu0 0
        %3013 = vmatpush1.bf16.msra.mxu0 %v2944
        %3014 = vmatprep.subr.bf16.mxu0 0
        %3015 = vmatpush1.bf16.msra.mxu0 %v2943
        %3016 = vmatprep.subr.bf16.mxu0 0
        %3017 = vmatpush2.bf16.msra.mxu0 0
        %3018 = vmatprep.subr.bf16.mxu0 0
        %3019 = vmatpush2.bf16.msra.mxu0 0
        %3020 = vmatprep.subr.bf16.mxu0 0
        %3021 = vmatpush2.bf16.msra.mxu0 0
        %3022 = vmatprep.subr.bf16.mxu0 0
        %3023 = vmatpush2.bf16.msra.mxu0 0
        %3024 = vmatprep.subr.bf16.mxu0 0
        %3025 = vmatpush2.bf16.msra.mxu0 0
        %3026 = vmatprep.subr.bf16.mxu0 0
        %3027 = vmatpush2.bf16.msra.mxu0 0
        %3028 = vmatprep.subr.bf16.mxu0 0
        %3029 = vmatpush2.bf16.msra.mxu0 0
        %3030 = vmatprep.subr.bf16.mxu0 0
        %3031 = vmatpush2.bf16.msra.mxu0 0
        %3032 = vmatprep.mubr.bf16.mxu0 0
        %3033 = vmatmul.mubr.bf16.gmra.mxu0 %v2953
        %v3034 = vpop.f32.mrf.mxu0
        %v3035 = vadd.f32 0.0, %v3034
        %v3036 = vpop.f32.mrf.mxu0
        %v3037 = vpop.f32.mrf.mxu0
        %v3038 = vadd.f32 0.0, %v3037
        %v3039 = vpop.f32.mrf.mxu0
        %3040 = vmatprep.mubr.bf16.mxu0 0
        %3041 = vmatmul.mubr.bf16.gmra.mxu0 %v2956
        %v3042 = vpop.f32.mrf.mxu0
        %v3043 = vadd.f32 0.0, %v3042
        %v3044 = vpop.f32.mrf.mxu0
        %v3045 = vpop.f32.mrf.mxu0
        %v3046 = vadd.f32 0.0, %v3045
        %v3047 = vpop.f32.mrf.mxu0
        %3048 = vmatprep.mubr.bf16.mxu0 0
        %3049 = vmatmul.mubr.bf16.gmra.mxu0 %v2959
        %v3050 = vpop.f32.mrf.mxu0
        %v3051 = vadd.f32 0.0, %v3050
        %v3052 = vpop.f32.mrf.mxu0
        %v3053 = vpop.f32.mrf.mxu0
        %v3054 = vadd.f32 0.0, %v3053
        %v3055 = vpop.f32.mrf.mxu0
        %3056 = vmatprep.mubr.bf16.mxu0 0
        %3057 = vmatmul.mubr.bf16.gmra.mxu0 %v2962
        %v3058 = vpop.f32.mrf.mxu0
        %v3059 = vadd.f32 0.0, %v3058
        %v3060 = vpop.f32.mrf.mxu0
        %v3061 = vpop.f32.mrf.mxu0
        %v3062 = vadd.f32 0.0, %v3061
        %v3063 = vpop.f32.mrf.mxu0
        %3064 = vmatprep.mubr.bf16.mxu0 0
        %3065 = vmatmul.mubr.bf16.gmra.mxu0 %v2965
        %v3066 = vpop.f32.mrf.mxu0
        %v3067 = vadd.f32 0.0, %v3066
        %v3068 = vpop.f32.mrf.mxu0
        %v3069 = vpop.f32.mrf.mxu0
        %v3070 = vadd.f32 0.0, %v3069
        %v3071 = vpop.f32.mrf.mxu0
        %3072 = vmatprep.mubr.bf16.mxu0 0
        %3073 = vmatmul.mubr.bf16.gmra.mxu0 %v2968
        %v3074 = vpop.f32.mrf.mxu0
        %v3075 = vadd.f32 0.0, %v3074
        %v3076 = vpop.f32.mrf.mxu0
        %v3077 = vpop.f32.mrf.mxu0
        %v3078 = vadd.f32 0.0, %v3077
        %v3079 = vpop.f32.mrf.mxu0
        %3080 = vmatprep.mubr.bf16.mxu0 0
        %3081 = vmatmul.mubr.bf16.gmra.mxu0 %v2971
        %v3082 = vpop.f32.mrf.mxu0
        %v3083 = vadd.f32 0.0, %v3082
        %v3084 = vpop.f32.mrf.mxu0
        %v3085 = vpop.f32.mrf.mxu0
        %v3086 = vadd.f32 0.0, %v3085
        %v3087 = vpop.f32.mrf.mxu0
        %3088 = vmatprep.mubr.bf16.mxu0 0
        %3089 = vmatmul.mubr.bf16.gmra.mxu0 %v2974
        %v3090 = vpop.f32.mrf.mxu0
        %v3091 = vadd.f32 0.0, %v3090
        %v3092 = vpop.f32.mrf.mxu0
        %v3093 = vpop.f32.mrf.mxu0
        %v3094 = vadd.f32 0.0, %v3093
        %v3095 = vpop.f32.mrf.mxu0
        %3096 = vmatprep.mubr.bf16.mxu0 0
        %3097 = vmatmul.mubr.bf16.gmra.mxu0 %v2977
        %v3098 = vpop.f32.mrf.mxu0
        %v3099 = vadd.f32 0.0, %v3098
        %v3100 = vpop.f32.mrf.mxu0
        %v3101 = vpop.f32.mrf.mxu0
        %v3102 = vadd.f32 0.0, %v3101
        %v3103 = vpop.f32.mrf.mxu0
        %3104 = vmatprep.mubr.bf16.mxu0 0
        %3105 = vmatmul.mubr.bf16.gmra.mxu0 %v2980
        %v3106 = vpop.f32.mrf.mxu0
        %v3107 = vadd.f32 0.0, %v3106
        %v3108 = vpop.f32.mrf.mxu0
        %v3109 = vpop.f32.mrf.mxu0
        %v3110 = vadd.f32 0.0, %v3109
        %v3111 = vpop.f32.mrf.mxu0
        %3112 = vmatprep.mubr.bf16.mxu0 0
        %3113 = vmatmul.mubr.bf16.gmra.mxu0 %v2983
        %v3114 = vpop.f32.mrf.mxu0
        %v3115 = vadd.f32 0.0, %v3114
        %v3116 = vpop.f32.mrf.mxu0
        %v3117 = vpop.f32.mrf.mxu0
        %v3118 = vadd.f32 0.0, %v3117
        %v3119 = vpop.f32.mrf.mxu0
        %3120 = vmatprep.mubr.bf16.mxu0 0
        %3121 = vmatmul.mubr.bf16.gmra.mxu0 %v2986
        %v3122 = vpop.f32.mrf.mxu0
        %v3123 = vadd.f32 0.0, %v3122
        %v3124 = vpop.f32.mrf.mxu0
        %v3125 = vpop.f32.mrf.mxu0
        %v3126 = vadd.f32 0.0, %v3125
        %v3127 = vpop.f32.mrf.mxu0
        %3128 = vmatprep.mubr.bf16.mxu0 0
        %3129 = vmatmul.mubr.bf16.gmra.mxu0 %v2989
        %v3130 = vpop.f32.mrf.mxu0
        %v3131 = vadd.f32 0.0, %v3130
        %v3132 = vpop.f32.mrf.mxu0
        %v3133 = vpop.f32.mrf.mxu0
        %v3134 = vadd.f32 0.0, %v3133
        %v3135 = vpop.f32.mrf.mxu0
        %3136 = vmatprep.mubr.bf16.mxu0 0
        %3137 = vmatmul.mubr.bf16.gmra.mxu0 %v2992
        %v3138 = vpop.f32.mrf.mxu0
        %v3139 = vadd.f32 0.0, %v3138
        %v3140 = vpop.f32.mrf.mxu0
        %v3141 = vpop.f32.mrf.mxu0
        %v3142 = vadd.f32 0.0, %v3141
        %v3143 = vpop.f32.mrf.mxu0
        %3144 = vmatprep.mubr.bf16.mxu0 0
        %3145 = vmatmul.mubr.bf16.gmra.mxu0 %v2995
        %v3146 = vpop.f32.mrf.mxu0
        %v3147 = vadd.f32 0.0, %v3146
        %v3148 = vpop.f32.mrf.mxu0
        %v3149 = vpop.f32.mrf.mxu0
        %v3150 = vadd.f32 0.0, %v3149
        %v3151 = vpop.f32.mrf.mxu0
        %3152 = vmatprep.mubr.bf16.mxu0 0
        %3153 = vmatmul.mubr.bf16.gmra.mxu0 %v2998
        %v3154 = vpop.f32.mrf.mxu0
        %v3155 = vadd.f32 0.0, %v3154
        %v3156 = vpop.f32.mrf.mxu0
        %v3157 = vpop.f32.mrf.mxu0
        %v3158 = vadd.f32 0.0, %v3157
        %v3159 = vpop.f32.mrf.mxu0
        %3160 = vdwg.mxu0
        %v3194 = vunpack.c.l.b16 %v2797
        %v3195 = vunpack.c.l.b16 %v2798
        %v3196 = vunpack.c.l.b16 %v2799
        %v3197 = vunpack.c.l.b16 %v2800
        %v3198 = vunpack.c.l.b16 %v2801
        %v3199 = vunpack.c.l.b16 %v2802
        %v3200 = vunpack.c.l.b16 %v2803
        %v3201 = vunpack.c.l.b16 %v2804
        %v3202 = vunpack.c.l.b16 %v2805
        %v3203 = vunpack.c.l.b16 %v2806
        %v3204 = vunpack.c.l.b16 %v2807
        %v3205 = vunpack.c.l.b16 %v2808
        %v3206 = vunpack.c.l.b16 %v2809
        %v3207 = vunpack.c.l.b16 %v2810
        %v3208 = vunpack.c.l.b16 %v2811
        %v3209 = vunpack.c.l.b16 %v2812
        %v3210 = vunpack.c.l.b16 %v2813
        %v3211 = vunpack.c.l.b16 %v2814
        %v3212 = vunpack.c.l.b16 %v2815
        %v3213 = vunpack.c.l.b16 %v2816
        %v3214 = vunpack.c.l.b16 %v2817
        %v3215 = vunpack.c.l.b16 %v2818
        %v3216 = vunpack.c.l.b16 %v2819
        %v3217 = vunpack.c.l.b16 %v2820
        %v3218 = vunpack.c.l.b16 %v2821
        %v3219 = vunpack.c.l.b16 %v2822
        %v3220 = vunpack.c.l.b16 %v2823
        %v3221 = vunpack.c.l.b16 %v2824
        %v3222 = vunpack.c.l.b16 %v2825
        %v3223 = vunpack.c.l.b16 %v2826
        %v3224 = vunpack.c.l.b16 %v2827
        %v3225 = vunpack.c.l.b16 %v2828
        %v3226 = vunpack.c.l.b16 %v2829
        %v3227 = vpack.c.b16 %v3195, %v3194
        %v3228 = vpack.c.b16 %v3197, %v3196
        %v3229 = vpack.c.b16 %v3199, %v3198
        %v3230 = vpack.c.b16 %v3201, %v3200
        %v3231 = vpack.c.b16 %v3203, %v3202
        %v3232 = vpack.c.b16 %v3205, %v3204
        %v3233 = vpack.c.b16 %v3207, %v3206
        %v3234 = vpack.c.b16 %v3209, %v3208
        %v3235 = vpack.c.b16 %v3211, %v3210
        %v3236 = vpack.c.b16 %v3213, %v3212
        %v3237 = vpack.c.b16 %v3215, %v3214
        %v3238 = vpack.c.b16 %v3217, %v3216
        %v3239 = vpack.c.b16 %v3219, %v3218
        %v3240 = vpack.c.b16 %v3221, %v3220
        %v3241 = vpack.c.b16 %v3223, %v3222
        %v3242 = vpack.c.b16 %v3225, %v3224
        %v3243 = vpack.c.b16 %v3226, %v3226
        %vm3244 = vsmask.f32 4352
        %v3246 = vshrl.u32 %v3227, 16
        %v3248 = vrot.slane %v3246, 3
        %v3249 = vshll.u32 %v3227, 16
        %v3251 = vrot.slane %v3249, 4
        %v3252 = vor.u32 %v3248, %v3251
        %v3254 = vshrl.u32 %v3228, 16
        %v3256 = vrot.slane %v3254, 3
        %v3257 = vshll.u32 %v3228, 16
        %v3259 = vrot.slane %v3257, 4
        %v3260 = vor.u32 %v3256, %v3259
        %v3261 = vsel %vm3244, %v3252, %v3260
        %v3263 = vshrl.u32 %v3229, 16
        %v3265 = vrot.slane %v3263, 3
        %v3266 = vshll.u32 %v3229, 16
        %v3268 = vrot.slane %v3266, 4
        %v3269 = vor.u32 %v3265, %v3268
        %v3270 = vsel %vm3244, %v3260, %v3269
        %v3272 = vshrl.u32 %v3230, 16
        %v3274 = vrot.slane %v3272, 3
        %v3275 = vshll.u32 %v3230, 16
        %v3277 = vrot.slane %v3275, 4
        %v3278 = vor.u32 %v3274, %v3277
        %v3279 = vsel %vm3244, %v3269, %v3278
        %v3281 = vshrl.u32 %v3231, 16
        %v3283 = vrot.slane %v3281, 3
        %v3284 = vshll.u32 %v3231, 16
        %v3286 = vrot.slane %v3284, 4
        %v3287 = vor.u32 %v3283, %v3286
        %v3288 = vsel %vm3244, %v3278, %v3287
        %v3290 = vshrl.u32 %v3232, 16
        %v3292 = vrot.slane %v3290, 3
        %v3293 = vshll.u32 %v3232, 16
        %v3295 = vrot.slane %v3293, 4
        %v3296 = vor.u32 %v3292, %v3295
        %v3297 = vsel %vm3244, %v3287, %v3296
        %v3299 = vshrl.u32 %v3233, 16
        %v3301 = vrot.slane %v3299, 3
        %v3302 = vshll.u32 %v3233, 16
        %v3304 = vrot.slane %v3302, 4
        %v3305 = vor.u32 %v3301, %v3304
        %v3306 = vsel %vm3244, %v3296, %v3305
        %v3308 = vshrl.u32 %v3234, 16
        %v3310 = vrot.slane %v3308, 3
        %v3311 = vshll.u32 %v3234, 16
        %v3313 = vrot.slane %v3311, 4
        %v3314 = vor.u32 %v3310, %v3313
        %v3315 = vsel %vm3244, %v3305, %v3314
        %v3317 = vshrl.u32 %v3235, 16
        %v3319 = vrot.slane %v3317, 3
        %v3320 = vshll.u32 %v3235, 16
        %v3322 = vrot.slane %v3320, 4
        %v3323 = vor.u32 %v3319, %v3322
        %v3324 = vsel %vm3244, %v3314, %v3323
        %v3326 = vshrl.u32 %v3236, 16
        %v3328 = vrot.slane %v3326, 3
        %v3329 = vshll.u32 %v3236, 16
        %v3331 = vrot.slane %v3329, 4
        %v3332 = vor.u32 %v3328, %v3331
        %v3333 = vsel %vm3244, %v3323, %v3332
        %v3335 = vshrl.u32 %v3237, 16
        %v3337 = vrot.slane %v3335, 3
        %v3338 = vshll.u32 %v3237, 16
        %v3340 = vrot.slane %v3338, 4
        %v3341 = vor.u32 %v3337, %v3340
        %v3342 = vsel %vm3244, %v3332, %v3341
        %v3344 = vshrl.u32 %v3238, 16
        %v3346 = vrot.slane %v3344, 3
        %v3347 = vshll.u32 %v3238, 16
        %v3349 = vrot.slane %v3347, 4
        %v3350 = vor.u32 %v3346, %v3349
        %v3351 = vsel %vm3244, %v3341, %v3350
        %v3353 = vshrl.u32 %v3239, 16
        %v3355 = vrot.slane %v3353, 3
        %v3356 = vshll.u32 %v3239, 16
        %v3358 = vrot.slane %v3356, 4
        %v3359 = vor.u32 %v3355, %v3358
        %v3360 = vsel %vm3244, %v3350, %v3359
        %v3362 = vshrl.u32 %v3240, 16
        %v3364 = vrot.slane %v3362, 3
        %v3365 = vshll.u32 %v3240, 16
        %v3367 = vrot.slane %v3365, 4
        %v3368 = vor.u32 %v3364, %v3367
        %v3369 = vsel %vm3244, %v3359, %v3368
        %v3371 = vshrl.u32 %v3241, 16
        %v3373 = vrot.slane %v3371, 3
        %v3374 = vshll.u32 %v3241, 16
        %v3376 = vrot.slane %v3374, 4
        %v3377 = vor.u32 %v3373, %v3376
        %v3378 = vsel %vm3244, %v3368, %v3377
        %v3380 = vshrl.u32 %v3242, 16
        %v3382 = vrot.slane %v3380, 3
        %v3383 = vshll.u32 %v3242, 16
        %v3385 = vrot.slane %v3383, 4
        %v3386 = vor.u32 %v3382, %v3385
        %v3387 = vsel %vm3244, %v3377, %v3386
        %v3389 = vshrl.u32 %v3243, 16
        %v3391 = vrot.slane %v3389, 3
        %v3392 = vshll.u32 %v3243, 16
        %v3394 = vrot.slane %v3392, 4
        %v3395 = vor.u32 %v3391, %v3394
        %v3396 = vsel %vm3244, %v3386, %v3395
        %v3405 = vunpack.c.l.b16 %v2830
        %v3406 = vunpack.c.l.b16 %v2831
        %v3407 = vunpack.c.l.b16 %v2832
        %v3408 = vunpack.c.l.b16 %v2833
        %v3409 = vunpack.c.l.b16 %v2834
        %v3410 = vunpack.c.l.b16 %v2835
        %v3411 = vunpack.c.l.b16 %v2836
        %v3412 = vunpack.c.l.b16 %v2837
        %v3413 = vpack.c.b16 %v3406, %v3405
        %v3414 = vpack.c.b16 %v3408, %v3407
        %v3415 = vpack.c.b16 %v3410, %v3409
        %v3416 = vpack.c.b16 %v3412, %v3411
        %v3422 = vsel %vm2951, %v3261, 0
        %v3425 = vsel %vm2951, %v3270, 0
        %v3428 = vsel %vm2951, %v3279, 0
        %v3431 = vsel %vm2951, %v3288, 0
        %v3434 = vsel %vm2951, %v3297, 0
        %v3437 = vsel %vm2951, %v3306, 0
        %v3440 = vsel %vm2951, %v3315, 0
        %v3443 = vsel %vm2951, %v3324, 0
        %v3446 = vsel %vm2951, %v3333, 0
        %v3449 = vsel %vm2951, %v3342, 0
        %v3452 = vsel %vm2951, %v3351, 0
        %v3455 = vsel %vm2951, %v3360, 0
        %v3458 = vsel %vm2951, %v3369, 0
        %v3461 = vsel %vm2951, %v3378, 0
        %v3464 = vsel %vm2951, %v3387, 0
        %v3467 = vsel %vm2951, %v3396, 0
        %3469 = vmatprep.subr.bf16.mxu0 0
        %3470 = vmatpush1.bf16.msra.mxu0 0
        %3471 = vmatprep.subr.bf16.mxu0 0
        %3472 = vmatpush1.bf16.msra.mxu0 0
        %3473 = vmatprep.subr.bf16.mxu0 0
        %3474 = vmatpush1.bf16.msra.mxu0 0
        %3475 = vmatprep.subr.bf16.mxu0 0
        %3476 = vmatpush1.bf16.msra.mxu0 0
        %3477 = vmatprep.subr.bf16.mxu0 0
        %3478 = vmatpush1.bf16.msra.mxu0 %v3416
        %3479 = vmatprep.subr.bf16.mxu0 0
        %3480 = vmatpush1.bf16.msra.mxu0 %v3415
        %3481 = vmatprep.subr.bf16.mxu0 0
        %3482 = vmatpush1.bf16.msra.mxu0 %v3414
        %3483 = vmatprep.subr.bf16.mxu0 0
        %3484 = vmatpush1.bf16.msra.mxu0 %v3413
        %3485 = vmatprep.subr.bf16.mxu0 0
        %3486 = vmatpush2.bf16.msra.mxu0 0
        %3487 = vmatprep.subr.bf16.mxu0 0
        %3488 = vmatpush2.bf16.msra.mxu0 0
        %3489 = vmatprep.subr.bf16.mxu0 0
        %3490 = vmatpush2.bf16.msra.mxu0 0
        %3491 = vmatprep.subr.bf16.mxu0 0
        %3492 = vmatpush2.bf16.msra.mxu0 0
        %3493 = vmatprep.subr.bf16.mxu0 0
        %3494 = vmatpush2.bf16.msra.mxu0 0
        %3495 = vmatprep.subr.bf16.mxu0 0
        %3496 = vmatpush2.bf16.msra.mxu0 0
        %3497 = vmatprep.subr.bf16.mxu0 0
        %3498 = vmatpush2.bf16.msra.mxu0 0
        %3499 = vmatprep.subr.bf16.mxu0 0
        %3500 = vmatpush2.bf16.msra.mxu0 0
        %3501 = vmatprep.mubr.bf16.mxu0 0
        %3502 = vmatmul.mubr.bf16.gmra.mxu0 %v3422
        %v3503 = vpop.f32.mrf.mxu0
        %v3504 = vadd.f32 %v3035, %v3503
        %v3505 = vpop.f32.mrf.mxu0
        %v3506 = vpop.f32.mrf.mxu0
        %v3507 = vadd.f32 %v3038, %v3506
        %v3508 = vpop.f32.mrf.mxu0
        %3509 = vmatprep.mubr.bf16.mxu0 0
        %3510 = vmatmul.mubr.bf16.gmra.mxu0 %v3425
        %v3511 = vpop.f32.mrf.mxu0
        %v3512 = vadd.f32 %v3043, %v3511
        %v3513 = vpop.f32.mrf.mxu0
        %v3514 = vpop.f32.mrf.mxu0
        %v3515 = vadd.f32 %v3046, %v3514
        %v3516 = vpop.f32.mrf.mxu0
        %3517 = vmatprep.mubr.bf16.mxu0 0
        %3518 = vmatmul.mubr.bf16.gmra.mxu0 %v3428
        %v3519 = vpop.f32.mrf.mxu0
        %v3520 = vadd.f32 %v3051, %v3519
        %v3521 = vpop.f32.mrf.mxu0
        %v3522 = vpop.f32.mrf.mxu0
        %v3523 = vadd.f32 %v3054, %v3522
        %v3524 = vpop.f32.mrf.mxu0
        %3525 = vmatprep.mubr.bf16.mxu0 0
        %3526 = vmatmul.mubr.bf16.gmra.mxu0 %v3431
        %v3527 = vpop.f32.mrf.mxu0
        %v3528 = vadd.f32 %v3059, %v3527
        %v3529 = vpop.f32.mrf.mxu0
        %v3530 = vpop.f32.mrf.mxu0
        %v3531 = vadd.f32 %v3062, %v3530
        %v3532 = vpop.f32.mrf.mxu0
        %3533 = vmatprep.mubr.bf16.mxu0 0
        %3534 = vmatmul.mubr.bf16.gmra.mxu0 %v3434
        %v3535 = vpop.f32.mrf.mxu0
        %v3536 = vadd.f32 %v3067, %v3535
        %v3537 = vpop.f32.mrf.mxu0
        %v3538 = vpop.f32.mrf.mxu0
        %v3539 = vadd.f32 %v3070, %v3538
        %v3540 = vpop.f32.mrf.mxu0
        %3541 = vmatprep.mubr.bf16.mxu0 0
        %3542 = vmatmul.mubr.bf16.gmra.mxu0 %v3437
        %v3543 = vpop.f32.mrf.mxu0
        %v3544 = vadd.f32 %v3075, %v3543
        %v3545 = vpop.f32.mrf.mxu0
        %v3546 = vpop.f32.mrf.mxu0
        %v3547 = vadd.f32 %v3078, %v3546
        %v3548 = vpop.f32.mrf.mxu0
        %3549 = vmatprep.mubr.bf16.mxu0 0
        %3550 = vmatmul.mubr.bf16.gmra.mxu0 %v3440
        %v3551 = vpop.f32.mrf.mxu0
        %v3552 = vadd.f32 %v3083, %v3551
        %v3553 = vpop.f32.mrf.mxu0
        %v3554 = vpop.f32.mrf.mxu0
        %v3555 = vadd.f32 %v3086, %v3554
        %v3556 = vpop.f32.mrf.mxu0
        %3557 = vmatprep.mubr.bf16.mxu0 0
        %3558 = vmatmul.mubr.bf16.gmra.mxu0 %v3443
        %v3559 = vpop.f32.mrf.mxu0
        %v3560 = vadd.f32 %v3091, %v3559
        %v3561 = vpop.f32.mrf.mxu0
        %v3562 = vpop.f32.mrf.mxu0
        %v3563 = vadd.f32 %v3094, %v3562
        %v3564 = vpop.f32.mrf.mxu0
        %3565 = vmatprep.mubr.bf16.mxu0 0
        %3566 = vmatmul.mubr.bf16.gmra.mxu0 %v3446
        %v3567 = vpop.f32.mrf.mxu0
        %v3568 = vadd.f32 %v3099, %v3567
        %v3569 = vpop.f32.mrf.mxu0
        %v3570 = vpop.f32.mrf.mxu0
        %v3571 = vadd.f32 %v3102, %v3570
        %v3572 = vpop.f32.mrf.mxu0
        %3573 = vmatprep.mubr.bf16.mxu0 0
        %3574 = vmatmul.mubr.bf16.gmra.mxu0 %v3449
        %v3575 = vpop.f32.mrf.mxu0
        %v3576 = vadd.f32 %v3107, %v3575
        %v3577 = vpop.f32.mrf.mxu0
        %v3578 = vpop.f32.mrf.mxu0
        %v3579 = vadd.f32 %v3110, %v3578
        %v3580 = vpop.f32.mrf.mxu0
        %3581 = vmatprep.mubr.bf16.mxu0 0
        %3582 = vmatmul.mubr.bf16.gmra.mxu0 %v3452
        %v3583 = vpop.f32.mrf.mxu0
        %v3584 = vadd.f32 %v3115, %v3583
        %v3585 = vpop.f32.mrf.mxu0
        %v3586 = vpop.f32.mrf.mxu0
        %v3587 = vadd.f32 %v3118, %v3586
        %v3588 = vpop.f32.mrf.mxu0
        %3589 = vmatprep.mubr.bf16.mxu0 0
        %3590 = vmatmul.mubr.bf16.gmra.mxu0 %v3455
        %v3591 = vpop.f32.mrf.mxu0
        %v3592 = vadd.f32 %v3123, %v3591
        %v3593 = vpop.f32.mrf.mxu0
        %v3594 = vpop.f32.mrf.mxu0
        %v3595 = vadd.f32 %v3126, %v3594
        %v3596 = vpop.f32.mrf.mxu0
        %3597 = vmatprep.mubr.bf16.mxu0 0
        %3598 = vmatmul.mubr.bf16.gmra.mxu0 %v3458
        %v3599 = vpop.f32.mrf.mxu0
        %v3600 = vadd.f32 %v3131, %v3599
        %v3601 = vpop.f32.mrf.mxu0
        %v3602 = vpop.f32.mrf.mxu0
        %v3603 = vadd.f32 %v3134, %v3602
        %v3604 = vpop.f32.mrf.mxu0
        %3605 = vmatprep.mubr.bf16.mxu0 0
        %3606 = vmatmul.mubr.bf16.gmra.mxu0 %v3461
        %v3607 = vpop.f32.mrf.mxu0
        %v3608 = vadd.f32 %v3139, %v3607
        %v3609 = vpop.f32.mrf.mxu0
        %v3610 = vpop.f32.mrf.mxu0
        %v3611 = vadd.f32 %v3142, %v3610
        %v3612 = vpop.f32.mrf.mxu0
        %3613 = vmatprep.mubr.bf16.mxu0 0
        %3614 = vmatmul.mubr.bf16.gmra.mxu0 %v3464
        %v3615 = vpop.f32.mrf.mxu0
        %v3616 = vadd.f32 %v3147, %v3615
        %v3617 = vpop.f32.mrf.mxu0
        %v3618 = vpop.f32.mrf.mxu0
        %v3619 = vadd.f32 %v3150, %v3618
        %v3620 = vpop.f32.mrf.mxu0
        %3621 = vmatprep.mubr.bf16.mxu0 0
        %3622 = vmatmul.mubr.bf16.gmra.mxu0 %v3467
        %v3623 = vpop.f32.mrf.mxu0
        %v3624 = vadd.f32 %v3155, %v3623
        %v3625 = vpop.f32.mrf.mxu0
        %v3626 = vpop.f32.mrf.mxu0
        %v3627 = vadd.f32 %v3158, %v3626
        %v3628 = vpop.f32.mrf.mxu0
        %3629 = vdwg.mxu0
        %v3630 = vld [vmem:[#allocation2 + $0x8] sm:$0xf]
        %v3631 = vld [vmem:[#allocation2 + $0xc] sm:$0xf]
        %v3632 = vld [vmem:[#allocation2 + $0x10] sm:$0xf]
        %v3633 = vld [vmem:[#allocation2 + $0x14] sm:$0xf]
        %v3634 = vld [vmem:[#allocation2 + $0x18] sm:$0xf]
        %v3635 = vld [vmem:[#allocation2 + $0x1c] sm:$0xf]
        %v3636 = vld [vmem:[#allocation2 + $0x20] sm:$0xf]
        %v3637 = vld [vmem:[#allocation2 + $0x24] sm:$0xf]
        %v3638 = vld [vmem:[#allocation2 + $0x28] sm:$0xf]
        %v3639 = vld [vmem:[#allocation2 + $0x2c] sm:$0xf]
        %v3640 = vld [vmem:[#allocation2 + $0x30] sm:$0xf]
        %v3641 = vld [vmem:[#allocation2 + $0x34] sm:$0xf]
        %v3642 = vld [vmem:[#allocation2 + $0x38] sm:$0xf]
        %v3643 = vld [vmem:[#allocation2 + $0x3c] sm:$0xf]
        %v3644 = vld [vmem:[#allocation2 + $0x40] sm:$0xf]
        %v3645 = vld [vmem:[#allocation2 + $0x44] sm:$0xf]
        %v3646 = vld [vmem:[#allocation2 + $0x48] sm:$0xf]
        %v3647 = vld [vmem:[#allocation2 + $0x4c] sm:$0xf]
        %v3648 = vld [vmem:[#allocation2 + $0x50] sm:$0xf]
        %v3649 = vld [vmem:[#allocation2 + $0x54] sm:$0xf]
        %v3650 = vld [vmem:[#allocation2 + $0x58] sm:$0xf]
        %v3651 = vld [vmem:[#allocation2 + $0x5c] sm:$0xf]
        %v3652 = vld [vmem:[#allocation2 + $0x60] sm:$0xf]
        %v3653 = vld [vmem:[#allocation2 + $0x64] sm:$0xf]
        %v3654 = vld [vmem:[#allocation2 + $0x68] sm:$0xf]
        %v3655 = vld [vmem:[#allocation2 + $0x6c] sm:$0xf]
        %v3656 = vld [vmem:[#allocation2 + $0x70] sm:$0xf]
        %v3657 = vld [vmem:[#allocation2 + $0x74] sm:$0xf]
        %v3658 = vld [vmem:[#allocation2 + $0x78] sm:$0xf]
        %v3659 = vld [vmem:[#allocation2 + $0x7c] sm:$0xf]
        %v3660 = vld [vmem:[#allocation2 + $0x80] sm:$0xf]
        %v3661 = vld [vmem:[#allocation2 + $0x84] sm:$0xf]
        %v3662 = vld [vmem:[#allocation2 + $0x88] sm:$0x1]
        %vm3663 = vcmp.le.s32.totalorder %v2121, 14
        %vm3664 = vcmp.le.s32.totalorder %v2122, 14
        %vm3665 = vcmp.le.s32.totalorder %v2123, 14
        %vm3666 = vcmp.le.s32.totalorder %v2124, 14
        %vm3667 = vcmp.le.s32.totalorder %v2125, 14
        %vm3668 = vcmp.le.s32.totalorder %v2126, 14
        %vm3669 = vcmp.le.s32.totalorder %v2127, 14
        %vm3670 = vcmp.le.s32.totalorder %v2128, 14
        %vm3671 = vcmp.le.s32.totalorder %v2129, 14
        %vm3672 = vcmp.le.s32.totalorder %v2130, 14
        %vm3673 = vcmp.le.s32.totalorder %v2131, 14
        %vm3674 = vcmp.le.s32.totalorder %v2132, 14
        %vm3675 = vcmp.le.s32.totalorder %v2133, 14
        %vm3676 = vcmp.le.s32.totalorder %v2134, 14
        %vm3677 = vcmp.le.s32.totalorder %v2135, 14
        %vm3678 = vcmp.le.s32.totalorder %v2136, 14
        %vm3679 = vcmp.le.s32.totalorder %v2137, 14
        %vm3680 = vcmp.le.s32.totalorder %v2138, 14
        %vm3681 = vcmp.le.s32.totalorder %v2139, 14
        %vm3682 = vcmp.le.s32.totalorder %v2140, 14
        %vm3683 = vcmp.le.s32.totalorder %v2141, 14
        %vm3684 = vcmp.le.s32.totalorder %v2142, 14
        %vm3685 = vcmp.le.s32.totalorder %v2143, 14
        %vm3686 = vcmp.le.s32.totalorder %v2144, 14
        %vm3687 = vcmp.le.s32.totalorder %v2145, 14
        %vm3688 = vcmp.le.s32.totalorder %v2146, 14
        %vm3689 = vcmp.le.s32.totalorder %v2147, 14
        %vm3690 = vcmp.le.s32.totalorder %v2148, 14
        %vm3691 = vcmp.le.s32.totalorder %v2149, 14
        %vm3692 = vcmp.le.s32.totalorder %v2150, 14
        %vm3693 = vcmp.le.s32.totalorder %v2151, 14
        %vm3694 = vcmp.le.s32.totalorder %v2152, 14
        %v3695 = vsel %vm3663, 1, 0
        %v3696 = vsel %vm3664, 1, 0
        %v3697 = vsel %vm3665, 1, 0
        %v3698 = vsel %vm3666, 1, 0
        %v3699 = vsel %vm3667, 1, 0
        %v3700 = vsel %vm3668, 1, 0
        %v3701 = vsel %vm3669, 1, 0
        %v3702 = vsel %vm3670, 1, 0
        %v3703 = vsel %vm3671, 1, 0
        %v3704 = vsel %vm3672, 1, 0
        %v3705 = vsel %vm3673, 1, 0
        %v3706 = vsel %vm3674, 1, 0
        %v3707 = vsel %vm3675, 1, 0
        %v3708 = vsel %vm3676, 1, 0
        %v3709 = vsel %vm3677, 1, 0
        %v3710 = vsel %vm3678, 1, 0
        %v3711 = vsel %vm3679, 1, 0
        %v3712 = vsel %vm3680, 1, 0
        %v3713 = vsel %vm3681, 1, 0
        %v3714 = vsel %vm3682, 1, 0
        %v3715 = vsel %vm3683, 1, 0
        %v3716 = vsel %vm3684, 1, 0
        %v3717 = vsel %vm3685, 1, 0
        %v3718 = vsel %vm3686, 1, 0
        %v3719 = vsel %vm3687, 1, 0
        %v3720 = vsel %vm3688, 1, 0
        %v3721 = vsel %vm3689, 1, 0
        %v3722 = vsel %vm3690, 1, 0
        %v3723 = vsel %vm3691, 1, 0
        %v3724 = vsel %vm3692, 1, 0
        %v3725 = vsel %vm3693, 1, 0
        %v3726 = vsel %vm3694, 1, 0
        %3727 = vset.pattern.permute.xlu0 0
        %3728 = vperm.xlu0 %3727, %v3695
        %v3729 = vpop.permute.xlu0 %3728
        %3730 = vset.pattern.permute.xlu0 0
        %3731 = vperm.xlu0 %3730, %v3696
        %v3732 = vpop.permute.xlu0 %3731
        %3733 = vset.pattern.permute.xlu0 0
        %3734 = vperm.xlu0 %3733, %v3697
        %v3735 = vpop.permute.xlu0 %3734
        %3736 = vset.pattern.permute.xlu0 0
        %3737 = vperm.xlu0 %3736, %v3698
        %v3738 = vpop.permute.xlu0 %3737
        %3739 = vset.pattern.permute.xlu0 0
        %3740 = vperm.xlu0 %3739, %v3699
        %v3741 = vpop.permute.xlu0 %3740
        %3742 = vset.pattern.permute.xlu0 0
        %3743 = vperm.xlu0 %3742, %v3700
        %v3744 = vpop.permute.xlu0 %3743
        %3745 = vset.pattern.permute.xlu0 0
        %3746 = vperm.xlu0 %3745, %v3701
        %v3747 = vpop.permute.xlu0 %3746
        %3748 = vset.pattern.permute.xlu0 0
        %3749 = vperm.xlu0 %3748, %v3702
        %v3750 = vpop.permute.xlu0 %3749
        %3751 = vset.pattern.permute.xlu0 0
        %3752 = vperm.xlu0 %3751, %v3703
        %v3753 = vpop.permute.xlu0 %3752
        %3754 = vset.pattern.permute.xlu0 0
        %3755 = vperm.xlu0 %3754, %v3704
        %v3756 = vpop.permute.xlu0 %3755
        %3757 = vset.pattern.permute.xlu0 0
        %3758 = vperm.xlu0 %3757, %v3705
        %v3759 = vpop.permute.xlu0 %3758
        %3760 = vset.pattern.permute.xlu0 0
        %3761 = vperm.xlu0 %3760, %v3706
        %v3762 = vpop.permute.xlu0 %3761
        %3763 = vset.pattern.permute.xlu0 0
        %3764 = vperm.xlu0 %3763, %v3707
        %v3765 = vpop.permute.xlu0 %3764
        %3766 = vset.pattern.permute.xlu0 0
        %3767 = vperm.xlu0 %3766, %v3708
        %v3768 = vpop.permute.xlu0 %3767
        %3769 = vset.pattern.permute.xlu0 0
        %3770 = vperm.xlu0 %3769, %v3709
        %v3771 = vpop.permute.xlu0 %3770
        %3772 = vset.pattern.permute.xlu0 0
        %3773 = vperm.xlu0 %3772, %v3710
        %v3774 = vpop.permute.xlu0 %3773
        %3775 = vset.pattern.permute.xlu0 0
        %3776 = vperm.xlu0 %3775, %v3711
        %v3777 = vpop.permute.xlu0 %3776
        %3778 = vset.pattern.permute.xlu0 0
        %3779 = vperm.xlu0 %3778, %v3712
        %v3780 = vpop.permute.xlu0 %3779
        %3781 = vset.pattern.permute.xlu0 0
        %3782 = vperm.xlu0 %3781, %v3713
        %v3783 = vpop.permute.xlu0 %3782
        %3784 = vset.pattern.permute.xlu0 0
        %3785 = vperm.xlu0 %3784, %v3714
        %v3786 = vpop.permute.xlu0 %3785
        %3787 = vset.pattern.permute.xlu0 0
        %3788 = vperm.xlu0 %3787, %v3715
        %v3789 = vpop.permute.xlu0 %3788
        %3790 = vset.pattern.permute.xlu0 0
        %3791 = vperm.xlu0 %3790, %v3716
        %v3792 = vpop.permute.xlu0 %3791
        %3793 = vset.pattern.permute.xlu0 0
        %3794 = vperm.xlu0 %3793, %v3717
        %v3795 = vpop.permute.xlu0 %3794
        %3796 = vset.pattern.permute.xlu0 0
        %3797 = vperm.xlu0 %3796, %v3718
        %v3798 = vpop.permute.xlu0 %3797
        %3799 = vset.pattern.permute.xlu0 0
        %3800 = vperm.xlu0 %3799, %v3719
        %v3801 = vpop.permute.xlu0 %3800
        %3802 = vset.pattern.permute.xlu0 0
        %3803 = vperm.xlu0 %3802, %v3720
        %v3804 = vpop.permute.xlu0 %3803
        %3805 = vset.pattern.permute.xlu0 0
        %3806 = vperm.xlu0 %3805, %v3721
        %v3807 = vpop.permute.xlu0 %3806
        %3808 = vset.pattern.permute.xlu0 0
        %3809 = vperm.xlu0 %3808, %v3722
        %v3810 = vpop.permute.xlu0 %3809
        %3811 = vset.pattern.permute.xlu0 0
        %3812 = vperm.xlu0 %3811, %v3723
        %v3813 = vpop.permute.xlu0 %3812
        %3814 = vset.pattern.permute.xlu0 0
        %3815 = vperm.xlu0 %3814, %v3724
        %v3816 = vpop.permute.xlu0 %3815
        %3817 = vset.pattern.permute.xlu0 0
        %3818 = vperm.xlu0 %3817, %v3725
        %v3819 = vpop.permute.xlu0 %3818
        %3820 = vset.pattern.permute.xlu0 0
        %3821 = vperm.xlu0 %3820, %v3726
        %v3822 = vpop.permute.xlu0 %3821
        %vm3823 = vcmp.eq.s32.totalorder %v3729, 1
        %vm3824 = vcmp.eq.s32.totalorder %v3732, 1
        %vm3825 = vcmp.eq.s32.totalorder %v3735, 1
        %vm3826 = vcmp.eq.s32.totalorder %v3738, 1
        %vm3827 = vcmp.eq.s32.totalorder %v3741, 1
        %vm3828 = vcmp.eq.s32.totalorder %v3744, 1
        %vm3829 = vcmp.eq.s32.totalorder %v3747, 1
        %vm3830 = vcmp.eq.s32.totalorder %v3750, 1
        %vm3831 = vcmp.eq.s32.totalorder %v3753, 1
        %vm3832 = vcmp.eq.s32.totalorder %v3756, 1
        %vm3833 = vcmp.eq.s32.totalorder %v3759, 1
        %vm3834 = vcmp.eq.s32.totalorder %v3762, 1
        %vm3835 = vcmp.eq.s32.totalorder %v3765, 1
        %vm3836 = vcmp.eq.s32.totalorder %v3768, 1
        %vm3837 = vcmp.eq.s32.totalorder %v3771, 1
        %vm3838 = vcmp.eq.s32.totalorder %v3774, 1
        %vm3839 = vcmp.eq.s32.totalorder %v3777, 1
        %vm3840 = vcmp.eq.s32.totalorder %v3780, 1
        %vm3841 = vcmp.eq.s32.totalorder %v3783, 1
        %vm3842 = vcmp.eq.s32.totalorder %v3786, 1
        %vm3843 = vcmp.eq.s32.totalorder %v3789, 1
        %vm3844 = vcmp.eq.s32.totalorder %v3792, 1
        %vm3845 = vcmp.eq.s32.totalorder %v3795, 1
        %vm3846 = vcmp.eq.s32.totalorder %v3798, 1
        %vm3847 = vcmp.eq.s32.totalorder %v3801, 1
        %vm3848 = vcmp.eq.s32.totalorder %v3804, 1
        %vm3849 = vcmp.eq.s32.totalorder %v3807, 1
        %vm3850 = vcmp.eq.s32.totalorder %v3810, 1
        %vm3851 = vcmp.eq.s32.totalorder %v3813, 1
        %vm3852 = vcmp.eq.s32.totalorder %v3816, 1
        %vm3853 = vcmp.eq.s32.totalorder %v3819, 1
        %vm3854 = vcmp.eq.s32.totalorder %v3822, 1
        %vm3855 = vmpackc.low %vm3823, %vm3823
        %vm3856 = vmpackc.low %vm3824, %vm3824
        %vm3857 = vmpackc.low %vm3825, %vm3825
        %vm3858 = vmpackc.low %vm3826, %vm3826
        %vm3859 = vmpackc.low %vm3827, %vm3827
        %vm3860 = vmpackc.low %vm3828, %vm3828
        %vm3861 = vmpackc.low %vm3829, %vm3829
        %vm3862 = vmpackc.low %vm3830, %vm3830
        %vm3863 = vmpackc.low %vm3831, %vm3831
        %vm3864 = vmpackc.low %vm3832, %vm3832
        %vm3865 = vmpackc.low %vm3833, %vm3833
        %vm3866 = vmpackc.low %vm3834, %vm3834
        %vm3867 = vmpackc.low %vm3835, %vm3835
        %vm3868 = vmpackc.low %vm3836, %vm3836
        %vm3869 = vmpackc.low %vm3837, %vm3837
        %vm3870 = vmpackc.low %vm3838, %vm3838
        %vm3871 = vmpackc.low %vm3839, %vm3839
        %vm3872 = vmpackc.low %vm3840, %vm3840
        %vm3873 = vmpackc.low %vm3841, %vm3841
        %vm3874 = vmpackc.low %vm3842, %vm3842
        %vm3875 = vmpackc.low %vm3843, %vm3843
        %vm3876 = vmpackc.low %vm3844, %vm3844
        %vm3877 = vmpackc.low %vm3845, %vm3845
        %vm3878 = vmpackc.low %vm3846, %vm3846
        %vm3879 = vmpackc.low %vm3847, %vm3847
        %vm3880 = vmpackc.low %vm3848, %vm3848
        %vm3881 = vmpackc.low %vm3849, %vm3849
        %vm3882 = vmpackc.low %vm3850, %vm3850
        %vm3883 = vmpackc.low %vm3851, %vm3851
        %vm3884 = vmpackc.low %vm3852, %vm3852
        %vm3885 = vmpackc.low %vm3853, %vm3853
        %vm3886 = vmpackc.low %vm3854, %vm3854
        %v3887 = vsel %vm3855, 65537, 0
        %v3888 = vsel %vm3856, 65537, 0
        %v3889 = vsel %vm3857, 65537, 0
        %v3890 = vsel %vm3858, 65537, 0
        %v3891 = vsel %vm3859, 65537, 0
        %v3892 = vsel %vm3860, 65537, 0
        %v3893 = vsel %vm3861, 65537, 0
        %v3894 = vsel %vm3862, 65537, 0
        %v3895 = vsel %vm3863, 65537, 0
        %v3896 = vsel %vm3864, 65537, 0
        %v3897 = vsel %vm3865, 65537, 0
        %v3898 = vsel %vm3866, 65537, 0
        %v3899 = vsel %vm3867, 65537, 0
        %v3900 = vsel %vm3868, 65537, 0
        %v3901 = vsel %vm3869, 65537, 0
        %v3902 = vsel %vm3870, 65537, 0
        %v3903 = vsel %vm3871, 65537, 0
        %v3904 = vsel %vm3872, 65537, 0
        %v3905 = vsel %vm3873, 65537, 0
        %v3906 = vsel %vm3874, 65537, 0
        %v3907 = vsel %vm3875, 65537, 0
        %v3908 = vsel %vm3876, 65537, 0
        %v3909 = vsel %vm3877, 65537, 0
        %v3910 = vsel %vm3878, 65537, 0
        %v3911 = vsel %vm3879, 65537, 0
        %v3912 = vsel %vm3880, 65537, 0
        %v3913 = vsel %vm3881, 65537, 0
        %v3914 = vsel %vm3882, 65537, 0
        %v3915 = vsel %vm3883, 65537, 0
        %v3916 = vsel %vm3884, 65537, 0
        %v3917 = vsel %vm3885, 65537, 0
        %v3918 = vsel %vm3886, 65537, 0
        %vm3919 = vsmask.f32 256
        %vm3920 = vsmask.f32 4368
        %vm3921 = vmor %vm3919, %vm3920
        %v3923 = vshrl.u32 %v3887, 16
        %v3925 = vrot.slane %v3923, 7
        %v3926 = vshll.u32 %v3887, 16
        %v3928 = vor.u32 %v3925, %v3926
        %v3929 = vrot.slane %v3925, 4
        %v3931 = vshrl.u32 %v3888, 16
        %v3933 = vrot.slane %v3931, 7
        %v3934 = vshll.u32 %v3888, 16
        %v3936 = vor.u32 %v3933, %v3934
        %v3937 = vsel %vm3921, %v3929, %v3936
        %v3938 = vrot.slane %v3933, 4
        %v3940 = vshrl.u32 %v3889, 16
        %v3942 = vrot.slane %v3940, 7
        %v3943 = vshll.u32 %v3889, 16
        %v3945 = vor.u32 %v3942, %v3943
        %v3946 = vsel %vm3921, %v3938, %v3945
        %v3947 = vrot.slane %v3942, 4
        %v3949 = vshrl.u32 %v3890, 16
        %v3951 = vrot.slane %v3949, 7
        %v3952 = vshll.u32 %v3890, 16
        %v3954 = vor.u32 %v3951, %v3952
        %v3955 = vsel %vm3921, %v3947, %v3954
        %v3956 = vrot.slane %v3951, 4
        %v3958 = vshrl.u32 %v3891, 16
        %v3960 = vrot.slane %v3958, 7
        %v3961 = vshll.u32 %v3891, 16
        %v3963 = vor.u32 %v3960, %v3961
        %v3964 = vsel %vm3921, %v3956, %v3963
        %v3965 = vrot.slane %v3960, 4
        %v3967 = vshrl.u32 %v3892, 16
        %v3969 = vrot.slane %v3967, 7
        %v3970 = vshll.u32 %v3892, 16
        %v3972 = vor.u32 %v3969, %v3970
        %v3973 = vsel %vm3921, %v3965, %v3972
        %v3974 = vrot.slane %v3969, 4
        %v3976 = vshrl.u32 %v3893, 16
        %v3978 = vrot.slane %v3976, 7
        %v3979 = vshll.u32 %v3893, 16
        %v3981 = vor.u32 %v3978, %v3979
        %v3982 = vsel %vm3921, %v3974, %v3981
        %v3983 = vrot.slane %v3978, 4
        %v3985 = vshrl.u32 %v3894, 16
        %v3987 = vrot.slane %v3985, 7
        %v3988 = vshll.u32 %v3894, 16
        %v3990 = vor.u32 %v3987, %v3988
        %v3991 = vsel %vm3921, %v3983, %v3990
        %v3992 = vrot.slane %v3987, 4
        %v3994 = vshrl.u32 %v3895, 16
        %v3996 = vrot.slane %v3994, 7
        %v3997 = vshll.u32 %v3895, 16
        %v3999 = vor.u32 %v3996, %v3997
        %v4000 = vsel %vm3921, %v3992, %v3999
        %v4001 = vrot.slane %v3996, 4
        %v4003 = vshrl.u32 %v3896, 16
        %v4005 = vrot.slane %v4003, 7
        %v4006 = vshll.u32 %v3896, 16
        %v4008 = vor.u32 %v4005, %v4006
        %v4009 = vsel %vm3921, %v4001, %v4008
        %v4010 = vrot.slane %v4005, 4
        %v4012 = vshrl.u32 %v3897, 16
        %v4014 = vrot.slane %v4012, 7
        %v4015 = vshll.u32 %v3897, 16
        %v4017 = vor.u32 %v4014, %v4015
        %v4018 = vsel %vm3921, %v4010, %v4017
        %v4019 = vrot.slane %v4014, 4
        %v4021 = vshrl.u32 %v3898, 16
        %v4023 = vrot.slane %v4021, 7
        %v4024 = vshll.u32 %v3898, 16
        %v4026 = vor.u32 %v4023, %v4024
        %v4027 = vsel %vm3921, %v4019, %v4026
        %v4028 = vrot.slane %v4023, 4
        %v4030 = vshrl.u32 %v3899, 16
        %v4032 = vrot.slane %v4030, 7
        %v4033 = vshll.u32 %v3899, 16
        %v4035 = vor.u32 %v4032, %v4033
        %v4036 = vsel %vm3921, %v4028, %v4035
        %v4037 = vrot.slane %v4032, 4
        %v4039 = vshrl.u32 %v3900, 16
        %v4041 = vrot.slane %v4039, 7
        %v4042 = vshll.u32 %v3900, 16
        %v4044 = vor.u32 %v4041, %v4042
        %v4045 = vsel %vm3921, %v4037, %v4044
        %v4046 = vrot.slane %v4041, 4
        %v4048 = vshrl.u32 %v3901, 16
        %v4050 = vrot.slane %v4048, 7
        %v4051 = vshll.u32 %v3901, 16
        %v4053 = vor.u32 %v4050, %v4051
        %v4054 = vsel %vm3921, %v4046, %v4053
        %v4055 = vrot.slane %v4050, 4
        %v4057 = vshrl.u32 %v3902, 16
        %v4059 = vrot.slane %v4057, 7
        %v4060 = vshll.u32 %v3902, 16
        %v4062 = vor.u32 %v4059, %v4060
        %v4063 = vsel %vm3921, %v4055, %v4062
        %v4064 = vrot.slane %v4059, 4
        %v4066 = vshrl.u32 %v3903, 16
        %v4068 = vrot.slane %v4066, 7
        %v4069 = vshll.u32 %v3903, 16
        %v4071 = vor.u32 %v4068, %v4069
        %v4072 = vsel %vm3921, %v4064, %v4071
        %v4073 = vrot.slane %v4068, 4
        %v4075 = vshrl.u32 %v3904, 16
        %v4077 = vrot.slane %v4075, 7
        %v4078 = vshll.u32 %v3904, 16
        %v4080 = vor.u32 %v4077, %v4078
        %v4081 = vsel %vm3921, %v4073, %v4080
        %v4082 = vrot.slane %v4077, 4
        %v4084 = vshrl.u32 %v3905, 16
        %v4086 = vrot.slane %v4084, 7
        %v4087 = vshll.u32 %v3905, 16
        %v4089 = vor.u32 %v4086, %v4087
        %v4090 = vsel %vm3921, %v4082, %v4089
        %v4091 = vrot.slane %v4086, 4
        %v4093 = vshrl.u32 %v3906, 16
        %v4095 = vrot.slane %v4093, 7
        %v4096 = vshll.u32 %v3906, 16
        %v4098 = vor.u32 %v4095, %v4096
        %v4099 = vsel %vm3921, %v4091, %v4098
        %v4100 = vrot.slane %v4095, 4
        %v4102 = vshrl.u32 %v3907, 16
        %v4104 = vrot.slane %v4102, 7
        %v4105 = vshll.u32 %v3907, 16
        %v4107 = vor.u32 %v4104, %v4105
        %v4108 = vsel %vm3921, %v4100, %v4107
        %v4109 = vrot.slane %v4104, 4
        %v4111 = vshrl.u32 %v3908, 16
        %v4113 = vrot.slane %v4111, 7
        %v4114 = vshll.u32 %v3908, 16
        %v4116 = vor.u32 %v4113, %v4114
        %v4117 = vsel %vm3921, %v4109, %v4116
        %v4118 = vrot.slane %v4113, 4
        %v4120 = vshrl.u32 %v3909, 16
        %v4122 = vrot.slane %v4120, 7
        %v4123 = vshll.u32 %v3909, 16
        %v4125 = vor.u32 %v4122, %v4123
        %v4126 = vsel %vm3921, %v4118, %v4125
        %v4127 = vrot.slane %v4122, 4
        %v4129 = vshrl.u32 %v3910, 16
        %v4131 = vrot.slane %v4129, 7
        %v4132 = vshll.u32 %v3910, 16
        %v4134 = vor.u32 %v4131, %v4132
        %v4135 = vsel %vm3921, %v4127, %v4134
        %v4136 = vrot.slane %v4131, 4
        %v4138 = vshrl.u32 %v3911, 16
        %v4140 = vrot.slane %v4138, 7
        %v4141 = vshll.u32 %v3911, 16
        %v4143 = vor.u32 %v4140, %v4141
        %v4144 = vsel %vm3921, %v4136, %v4143
        %v4145 = vrot.slane %v4140, 4
        %v4147 = vshrl.u32 %v3912, 16
        %v4149 = vrot.slane %v4147, 7
        %v4150 = vshll.u32 %v3912, 16
        %v4152 = vor.u32 %v4149, %v4150
        %v4153 = vsel %vm3921, %v4145, %v4152
        %v4154 = vrot.slane %v4149, 4
        %v4156 = vshrl.u32 %v3913, 16
        %v4158 = vrot.slane %v4156, 7
        %v4159 = vshll.u32 %v3913, 16
        %v4161 = vor.u32 %v4158, %v4159
        %v4162 = vsel %vm3921, %v4154, %v4161
        %v4163 = vrot.slane %v4158, 4
        %v4165 = vshrl.u32 %v3914, 16
        %v4167 = vrot.slane %v4165, 7
        %v4168 = vshll.u32 %v3914, 16
        %v4170 = vor.u32 %v4167, %v4168
        %v4171 = vsel %vm3921, %v4163, %v4170
        %v4172 = vrot.slane %v4167, 4
        %v4174 = vshrl.u32 %v3915, 16
        %v4176 = vrot.slane %v4174, 7
        %v4177 = vshll.u32 %v3915, 16
        %v4179 = vor.u32 %v4176, %v4177
        %v4180 = vsel %vm3921, %v4172, %v4179
        %v4181 = vrot.slane %v4176, 4
        %v4183 = vshrl.u32 %v3916, 16
        %v4185 = vrot.slane %v4183, 7
        %v4186 = vshll.u32 %v3916, 16
        %v4188 = vor.u32 %v4185, %v4186
        %v4189 = vsel %vm3921, %v4181, %v4188
        %v4190 = vrot.slane %v4185, 4
        %v4192 = vshrl.u32 %v3917, 16
        %v4194 = vrot.slane %v4192, 7
        %v4195 = vshll.u32 %v3917, 16
        %v4197 = vor.u32 %v4194, %v4195
        %v4198 = vsel %vm3921, %v4190, %v4197
        %v4199 = vrot.slane %v4194, 4
        %v4201 = vshrl.u32 %v3918, 16
        %v4203 = vrot.slane %v4201, 7
        %v4204 = vshll.u32 %v3918, 16
        %v4206 = vor.u32 %v4203, %v4204
        %v4207 = vsel %vm3921, %v4199, %v4206
        %v4208 = vrot.slane %v4203, 4
        %vm4209 = vcmp.ne.s16.totalorder %v3928, 0
        %vm4210 = vcmp.ne.s16.totalorder %v3937, 0
        %vm4211 = vcmp.ne.s16.totalorder %v3946, 0
        %vm4212 = vcmp.ne.s16.totalorder %v3955, 0
        %vm4213 = vcmp.ne.s16.totalorder %v3964, 0
        %vm4214 = vcmp.ne.s16.totalorder %v3973, 0
        %vm4215 = vcmp.ne.s16.totalorder %v3982, 0
        %vm4216 = vcmp.ne.s16.totalorder %v3991, 0
        %vm4217 = vcmp.ne.s16.totalorder %v4000, 0
        %vm4218 = vcmp.ne.s16.totalorder %v4009, 0
        %vm4219 = vcmp.ne.s16.totalorder %v4018, 0
        %vm4220 = vcmp.ne.s16.totalorder %v4027, 0
        %vm4221 = vcmp.ne.s16.totalorder %v4036, 0
        %vm4222 = vcmp.ne.s16.totalorder %v4045, 0
        %vm4223 = vcmp.ne.s16.totalorder %v4054, 0
        %vm4224 = vcmp.ne.s16.totalorder %v4063, 0
        %vm4225 = vcmp.ne.s16.totalorder %v4072, 0
        %vm4226 = vcmp.ne.s16.totalorder %v4081, 0
        %vm4227 = vcmp.ne.s16.totalorder %v4090, 0
        %vm4228 = vcmp.ne.s16.totalorder %v4099, 0
        %vm4229 = vcmp.ne.s16.totalorder %v4108, 0
        %vm4230 = vcmp.ne.s16.totalorder %v4117, 0
        %vm4231 = vcmp.ne.s16.totalorder %v4126, 0
        %vm4232 = vcmp.ne.s16.totalorder %v4135, 0
        %vm4233 = vcmp.ne.s16.totalorder %v4144, 0
        %vm4234 = vcmp.ne.s16.totalorder %v4153, 0
        %vm4235 = vcmp.ne.s16.totalorder %v4162, 0
        %vm4236 = vcmp.ne.s16.totalorder %v4171, 0
        %vm4237 = vcmp.ne.s16.totalorder %v4180, 0
        %vm4238 = vcmp.ne.s16.totalorder %v4189, 0
        %vm4239 = vcmp.ne.s16.totalorder %v4198, 0
        %vm4240 = vcmp.ne.s16.totalorder %v4207, 0
        %vm4241 = vcmp.ne.s16.totalorder %v4208, 0
        %v4242 = vsel %vm4209, %v3630, 0
        %v4243 = vsel %vm4210, %v3631, 0
        %v4244 = vsel %vm4211, %v3632, 0
        %v4245 = vsel %vm4212, %v3633, 0
        %v4246 = vsel %vm4213, %v3634, 0
        %v4247 = vsel %vm4214, %v3635, 0
        %v4248 = vsel %vm4215, %v3636, 0
        %v4249 = vsel %vm4216, %v3637, 0
        %v4250 = vsel %vm4217, %v3638, 0
        %v4251 = vsel %vm4218, %v3639, 0
        %v4252 = vsel %vm4219, %v3640, 0
        %v4253 = vsel %vm4220, %v3641, 0
        %v4254 = vsel %vm4221, %v3642, 0
        %v4255 = vsel %vm4222, %v3643, 0
        %v4256 = vsel %vm4223, %v3644, 0
        %v4257 = vsel %vm4224, %v3645, 0
        %v4258 = vsel %vm4225, %v3646, 0
        %v4259 = vsel %vm4226, %v3647, 0
        %v4260 = vsel %vm4227, %v3648, 0
        %v4261 = vsel %vm4228, %v3649, 0
        %v4262 = vsel %vm4229, %v3650, 0
        %v4263 = vsel %vm4230, %v3651, 0
        %v4264 = vsel %vm4231, %v3652, 0
        %v4265 = vsel %vm4232, %v3653, 0
        %v4266 = vsel %vm4233, %v3654, 0
        %v4267 = vsel %vm4234, %v3655, 0
        %v4268 = vsel %vm4235, %v3656, 0
        %v4269 = vsel %vm4236, %v3657, 0
        %v4270 = vsel %vm4237, %v3658, 0
        %v4271 = vsel %vm4238, %v3659, 0
        %v4272 = vsel %vm4239, %v3660, 0
        %v4273 = vsel %vm4240, %v3661, 0
        %v4274 = vsel %vm4241, %v3662, 0
        %s4275 = scalar_lea.vmem %s6, 64
        %v4276 = vld [vmem:[%s4275] sm:$0xf]
        %v4277 = vld [vmem:[%s4275 + $0x4] sm:$0xf]
        %v4278 = vld [vmem:[%s4275 + $0x8] sm:$0xf]
        %v4279 = vld [vmem:[%s4275 + $0xc] sm:$0xf]
        %v4280 = vld [vmem:[%s4275 + $0x10] sm:$0xf]
        %v4281 = vld [vmem:[%s4275 + $0x14] sm:$0xf]
        %v4282 = vld [vmem:[%s4275 + $0x18] sm:$0xf]
        %v4283 = vld [vmem:[%s4275 + $0x1c] sm:$0xf]
        %v4317 = vunpack.c.l.b16 %v4242
        %v4318 = vunpack.c.l.b16 %v4243
        %v4319 = vunpack.c.l.b16 %v4244
        %v4320 = vunpack.c.l.b16 %v4245
        %v4321 = vunpack.c.l.b16 %v4246
        %v4322 = vunpack.c.l.b16 %v4247
        %v4323 = vunpack.c.l.b16 %v4248
        %v4324 = vunpack.c.l.b16 %v4249
        %v4325 = vunpack.c.l.b16 %v4250
        %v4326 = vunpack.c.l.b16 %v4251
        %v4327 = vunpack.c.l.b16 %v4252
        %v4328 = vunpack.c.l.b16 %v4253
        %v4329 = vunpack.c.l.b16 %v4254
        %v4330 = vunpack.c.l.b16 %v4255
        %v4331 = vunpack.c.l.b16 %v4256
        %v4332 = vunpack.c.l.b16 %v4257
        %v4333 = vunpack.c.l.b16 %v4258
        %v4334 = vunpack.c.l.b16 %v4259
        %v4335 = vunpack.c.l.b16 %v4260
        %v4336 = vunpack.c.l.b16 %v4261
        %v4337 = vunpack.c.l.b16 %v4262
        %v4338 = vunpack.c.l.b16 %v4263
        %v4339 = vunpack.c.l.b16 %v4264
        %v4340 = vunpack.c.l.b16 %v4265
        %v4341 = vunpack.c.l.b16 %v4266
        %v4342 = vunpack.c.l.b16 %v4267
        %v4343 = vunpack.c.l.b16 %v4268
        %v4344 = vunpack.c.l.b16 %v4269
        %v4345 = vunpack.c.l.b16 %v4270
        %v4346 = vunpack.c.l.b16 %v4271
        %v4347 = vunpack.c.l.b16 %v4272
        %v4348 = vunpack.c.l.b16 %v4273
        %v4349 = vunpack.c.l.b16 %v4274
        %v4350 = vpack.c.b16 %v4318, %v4317
        %v4351 = vpack.c.b16 %v4320, %v4319
        %v4352 = vpack.c.b16 %v4322, %v4321
        %v4353 = vpack.c.b16 %v4324, %v4323
        %v4354 = vpack.c.b16 %v4326, %v4325
        %v4355 = vpack.c.b16 %v4328, %v4327
        %v4356 = vpack.c.b16 %v4330, %v4329
        %v4357 = vpack.c.b16 %v4332, %v4331
        %v4358 = vpack.c.b16 %v4334, %v4333
        %v4359 = vpack.c.b16 %v4336, %v4335
        %v4360 = vpack.c.b16 %v4338, %v4337
        %v4361 = vpack.c.b16 %v4340, %v4339
        %v4362 = vpack.c.b16 %v4342, %v4341
        %v4363 = vpack.c.b16 %v4344, %v4343
        %v4364 = vpack.c.b16 %v4346, %v4345
        %v4365 = vpack.c.b16 %v4348, %v4347
        %v4366 = vpack.c.b16 %v4349, %v4349
        %vm4367 = vsmask.f32 7424
        %v4369 = vshrl.u32 %v4350, 16
        %v4371 = vshll.u32 %v4350, 16
        %v4373 = vrot.slane %v4371, 1
        %v4374 = vor.u32 %v4369, %v4373
        %v4376 = vshll.u32 %v4351, 16
        %v4378 = vrot.slane %v4376, 1
        %v4379 = vsel %vm4367, %v4374, %v4378
        %v4380 = vshrl.u32 %v4351, 16
        %v4382 = vor.u32 %v4380, %v4378
        %v4384 = vshll.u32 %v4352, 16
        %v4386 = vrot.slane %v4384, 1
        %v4387 = vsel %vm4367, %v4382, %v4386
        %v4388 = vshrl.u32 %v4352, 16
        %v4390 = vor.u32 %v4388, %v4386
        %v4392 = vshll.u32 %v4353, 16
        %v4394 = vrot.slane %v4392, 1
        %v4395 = vsel %vm4367, %v4390, %v4394
        %v4396 = vshrl.u32 %v4353, 16
        %v4398 = vor.u32 %v4396, %v4394
        %v4400 = vshll.u32 %v4354, 16
        %v4402 = vrot.slane %v4400, 1
        %v4403 = vsel %vm4367, %v4398, %v4402
        %v4404 = vshrl.u32 %v4354, 16
        %v4406 = vor.u32 %v4404, %v4402
        %v4408 = vshll.u32 %v4355, 16
        %v4410 = vrot.slane %v4408, 1
        %v4411 = vsel %vm4367, %v4406, %v4410
        %v4412 = vshrl.u32 %v4355, 16
        %v4414 = vor.u32 %v4412, %v4410
        %v4416 = vshll.u32 %v4356, 16
        %v4418 = vrot.slane %v4416, 1
        %v4419 = vsel %vm4367, %v4414, %v4418
        %v4420 = vshrl.u32 %v4356, 16
        %v4422 = vor.u32 %v4420, %v4418
        %v4424 = vshll.u32 %v4357, 16
        %v4426 = vrot.slane %v4424, 1
        %v4427 = vsel %vm4367, %v4422, %v4426
        %v4428 = vshrl.u32 %v4357, 16
        %v4430 = vor.u32 %v4428, %v4426
        %v4432 = vshll.u32 %v4358, 16
        %v4434 = vrot.slane %v4432, 1
        %v4435 = vsel %vm4367, %v4430, %v4434
        %v4436 = vshrl.u32 %v4358, 16
        %v4438 = vor.u32 %v4436, %v4434
        %v4440 = vshll.u32 %v4359, 16
        %v4442 = vrot.slane %v4440, 1
        %v4443 = vsel %vm4367, %v4438, %v4442
        %v4444 = vshrl.u32 %v4359, 16
        %v4446 = vor.u32 %v4444, %v4442
        %v4448 = vshll.u32 %v4360, 16
        %v4450 = vrot.slane %v4448, 1
        %v4451 = vsel %vm4367, %v4446, %v4450
        %v4452 = vshrl.u32 %v4360, 16
        %v4454 = vor.u32 %v4452, %v4450
        %v4456 = vshll.u32 %v4361, 16
        %v4458 = vrot.slane %v4456, 1
        %v4459 = vsel %vm4367, %v4454, %v4458
        %v4460 = vshrl.u32 %v4361, 16
        %v4462 = vor.u32 %v4460, %v4458
        %v4464 = vshll.u32 %v4362, 16
        %v4466 = vrot.slane %v4464, 1
        %v4467 = vsel %vm4367, %v4462, %v4466
        %v4468 = vshrl.u32 %v4362, 16
        %v4470 = vor.u32 %v4468, %v4466
        %v4472 = vshll.u32 %v4363, 16
        %v4474 = vrot.slane %v4472, 1
        %v4475 = vsel %vm4367, %v4470, %v4474
        %v4476 = vshrl.u32 %v4363, 16
        %v4478 = vor.u32 %v4476, %v4474
        %v4480 = vshll.u32 %v4364, 16
        %v4482 = vrot.slane %v4480, 1
        %v4483 = vsel %vm4367, %v4478, %v4482
        %v4484 = vshrl.u32 %v4364, 16
        %v4486 = vor.u32 %v4484, %v4482
        %v4488 = vshll.u32 %v4365, 16
        %v4490 = vrot.slane %v4488, 1
        %v4491 = vsel %vm4367, %v4486, %v4490
        %v4492 = vshrl.u32 %v4365, 16
        %v4494 = vor.u32 %v4492, %v4490
        %v4496 = vshll.u32 %v4366, 16
        %v4498 = vrot.slane %v4496, 1
        %v4499 = vsel %vm4367, %v4494, %v4498
        %v4508 = vunpack.c.l.b16 %v4276
        %v4509 = vunpack.c.l.b16 %v4277
        %v4510 = vunpack.c.l.b16 %v4278
        %v4511 = vunpack.c.l.b16 %v4279
        %v4512 = vunpack.c.l.b16 %v4280
        %v4513 = vunpack.c.l.b16 %v4281
        %v4514 = vunpack.c.l.b16 %v4282
        %v4515 = vunpack.c.l.b16 %v4283
        %v4516 = vpack.c.b16 %v4509, %v4508
        %v4517 = vpack.c.b16 %v4511, %v4510
        %v4518 = vpack.c.b16 %v4513, %v4512
        %v4519 = vpack.c.b16 %v4515, %v4514
        %v4525 = vsel %vm2951, %v4379, 0
        %v4528 = vsel %vm2951, %v4387, 0
        %v4531 = vsel %vm2951, %v4395, 0
        %v4534 = vsel %vm2951, %v4403, 0
        %v4537 = vsel %vm2951, %v4411, 0
        %v4540 = vsel %vm2951, %v4419, 0
        %v4543 = vsel %vm2951, %v4427, 0
        %v4546 = vsel %vm2951, %v4435, 0
        %v4549 = vsel %vm2951, %v4443, 0
        %v4552 = vsel %vm2951, %v4451, 0
        %v4555 = vsel %vm2951, %v4459, 0
        %v4558 = vsel %vm2951, %v4467, 0
        %v4561 = vsel %vm2951, %v4475, 0
        %v4564 = vsel %vm2951, %v4483, 0
        %v4567 = vsel %vm2951, %v4491, 0
        %v4570 = vsel %vm2951, %v4499, 0
        %4572 = vmatprep.subr.bf16.mxu0 0
        %4573 = vmatpush1.bf16.msra.mxu0 0
        %4574 = vmatprep.subr.bf16.mxu0 0
        %4575 = vmatpush1.bf16.msra.mxu0 0
        %4576 = vmatprep.subr.bf16.mxu0 0
        %4577 = vmatpush1.bf16.msra.mxu0 0
        %4578 = vmatprep.subr.bf16.mxu0 0
        %4579 = vmatpush1.bf16.msra.mxu0 0
        %4580 = vmatprep.subr.bf16.mxu0 0
        %4581 = vmatpush1.bf16.msra.mxu0 %v4519
        %4582 = vmatprep.subr.bf16.mxu0 0
        %4583 = vmatpush1.bf16.msra.mxu0 %v4518
        %4584 = vmatprep.subr.bf16.mxu0 0
        %4585 = vmatpush1.bf16.msra.mxu0 %v4517
        %4586 = vmatprep.subr.bf16.mxu0 0
        %4587 = vmatpush1.bf16.msra.mxu0 %v4516
        %4588 = vmatprep.subr.bf16.mxu0 0
        %4589 = vmatpush2.bf16.msra.mxu0 0
        %4590 = vmatprep.subr.bf16.mxu0 0
        %4591 = vmatpush2.bf16.msra.mxu0 0
        %4592 = vmatprep.subr.bf16.mxu0 0
        %4593 = vmatpush2.bf16.msra.mxu0 0
        %4594 = vmatprep.subr.bf16.mxu0 0
        %4595 = vmatpush2.bf16.msra.mxu0 0
        %4596 = vmatprep.subr.bf16.mxu0 0
        %4597 = vmatpush2.bf16.msra.mxu0 0
        %4598 = vmatprep.subr.bf16.mxu0 0
        %4599 = vmatpush2.bf16.msra.mxu0 0
        %4600 = vmatprep.subr.bf16.mxu0 0
        %4601 = vmatpush2.bf16.msra.mxu0 0
        %4602 = vmatprep.subr.bf16.mxu0 0
        %4603 = vmatpush2.bf16.msra.mxu0 0
        %4604 = vmatprep.mubr.bf16.mxu0 0
        %4605 = vmatmul.mubr.bf16.gmra.mxu0 %v4525
        %v4606 = vpop.f32.mrf.mxu0
        %v4607 = vadd.f32 0.0, %v4606
        %v4608 = vpop.f32.mrf.mxu0
        %v4609 = vpop.f32.mrf.mxu0
        %v4610 = vadd.f32 0.0, %v4609
        %v4611 = vpop.f32.mrf.mxu0
        %4612 = vmatprep.mubr.bf16.mxu0 0
        %4613 = vmatmul.mubr.bf16.gmra.mxu0 %v4528
        %v4614 = vpop.f32.mrf.mxu0
        %v4615 = vadd.f32 0.0, %v4614
        %v4616 = vpop.f32.mrf.mxu0
        %v4617 = vpop.f32.mrf.mxu0
        %v4618 = vadd.f32 0.0, %v4617
        %v4619 = vpop.f32.mrf.mxu0
        %4620 = vmatprep.mubr.bf16.mxu0 0
        %4621 = vmatmul.mubr.bf16.gmra.mxu0 %v4531
        %v4622 = vpop.f32.mrf.mxu0
        %v4623 = vadd.f32 0.0, %v4622
        %v4624 = vpop.f32.mrf.mxu0
        %v4625 = vpop.f32.mrf.mxu0
        %v4626 = vadd.f32 0.0, %v4625
        %v4627 = vpop.f32.mrf.mxu0
        %4628 = vmatprep.mubr.bf16.mxu0 0
        %4629 = vmatmul.mubr.bf16.gmra.mxu0 %v4534
        %v4630 = vpop.f32.mrf.mxu0
        %v4631 = vadd.f32 0.0, %v4630
        %v4632 = vpop.f32.mrf.mxu0
        %v4633 = vpop.f32.mrf.mxu0
        %v4634 = vadd.f32 0.0, %v4633
        %v4635 = vpop.f32.mrf.mxu0
        %4636 = vmatprep.mubr.bf16.mxu0 0
        %4637 = vmatmul.mubr.bf16.gmra.mxu0 %v4537
        %v4638 = vpop.f32.mrf.mxu0
        %v4639 = vadd.f32 0.0, %v4638
        %v4640 = vpop.f32.mrf.mxu0
        %v4641 = vpop.f32.mrf.mxu0
        %v4642 = vadd.f32 0.0, %v4641
        %v4643 = vpop.f32.mrf.mxu0
        %4644 = vmatprep.mubr.bf16.mxu0 0
        %4645 = vmatmul.mubr.bf16.gmra.mxu0 %v4540
        %v4646 = vpop.f32.mrf.mxu0
        %v4647 = vadd.f32 0.0, %v4646
        %v4648 = vpop.f32.mrf.mxu0
        %v4649 = vpop.f32.mrf.mxu0
        %v4650 = vadd.f32 0.0, %v4649
        %v4651 = vpop.f32.mrf.mxu0
        %4652 = vmatprep.mubr.bf16.mxu0 0
        %4653 = vmatmul.mubr.bf16.gmra.mxu0 %v4543
        %v4654 = vpop.f32.mrf.mxu0
        %v4655 = vadd.f32 0.0, %v4654
        %v4656 = vpop.f32.mrf.mxu0
        %v4657 = vpop.f32.mrf.mxu0
        %v4658 = vadd.f32 0.0, %v4657
        %v4659 = vpop.f32.mrf.mxu0
        %4660 = vmatprep.mubr.bf16.mxu0 0
        %4661 = vmatmul.mubr.bf16.gmra.mxu0 %v4546
        %v4662 = vpop.f32.mrf.mxu0
        %v4663 = vadd.f32 0.0, %v4662
        %v4664 = vpop.f32.mrf.mxu0
        %v4665 = vpop.f32.mrf.mxu0
        %v4666 = vadd.f32 0.0, %v4665
        %v4667 = vpop.f32.mrf.mxu0
        %4668 = vmatprep.mubr.bf16.mxu0 0
        %4669 = vmatmul.mubr.bf16.gmra.mxu0 %v4549
        %v4670 = vpop.f32.mrf.mxu0
        %v4671 = vadd.f32 0.0, %v4670
        %v4672 = vpop.f32.mrf.mxu0
        %v4673 = vpop.f32.mrf.mxu0
        %v4674 = vadd.f32 0.0, %v4673
        %v4675 = vpop.f32.mrf.mxu0
        %4676 = vmatprep.mubr.bf16.mxu0 0
        %4677 = vmatmul.mubr.bf16.gmra.mxu0 %v4552
        %v4678 = vpop.f32.mrf.mxu0
        %v4679 = vadd.f32 0.0, %v4678
        %v4680 = vpop.f32.mrf.mxu0
        %v4681 = vpop.f32.mrf.mxu0
        %v4682 = vadd.f32 0.0, %v4681
        %v4683 = vpop.f32.mrf.mxu0
        %4684 = vmatprep.mubr.bf16.mxu0 0
        %4685 = vmatmul.mubr.bf16.gmra.mxu0 %v4555
        %v4686 = vpop.f32.mrf.mxu0
        %v4687 = vadd.f32 0.0, %v4686
        %v4688 = vpop.f32.mrf.mxu0
        %v4689 = vpop.f32.mrf.mxu0
        %v4690 = vadd.f32 0.0, %v4689
        %v4691 = vpop.f32.mrf.mxu0
        %4692 = vmatprep.mubr.bf16.mxu0 0
        %4693 = vmatmul.mubr.bf16.gmra.mxu0 %v4558
        %v4694 = vpop.f32.mrf.mxu0
        %v4695 = vadd.f32 0.0, %v4694
        %v4696 = vpop.f32.mrf.mxu0
        %v4697 = vpop.f32.mrf.mxu0
        %v4698 = vadd.f32 0.0, %v4697
        %v4699 = vpop.f32.mrf.mxu0
        %4700 = vmatprep.mubr.bf16.mxu0 0
        %4701 = vmatmul.mubr.bf16.gmra.mxu0 %v4561
        %v4702 = vpop.f32.mrf.mxu0
        %v4703 = vadd.f32 0.0, %v4702
        %v4704 = vpop.f32.mrf.mxu0
        %v4705 = vpop.f32.mrf.mxu0
        %v4706 = vadd.f32 0.0, %v4705
        %v4707 = vpop.f32.mrf.mxu0
        %4708 = vmatprep.mubr.bf16.mxu0 0
        %4709 = vmatmul.mubr.bf16.gmra.mxu0 %v4564
        %v4710 = vpop.f32.mrf.mxu0
        %v4711 = vadd.f32 0.0, %v4710
        %v4712 = vpop.f32.mrf.mxu0
        %v4713 = vpop.f32.mrf.mxu0
        %v4714 = vadd.f32 0.0, %v4713
        %v4715 = vpop.f32.mrf.mxu0
        %4716 = vmatprep.mubr.bf16.mxu0 0
        %4717 = vmatmul.mubr.bf16.gmra.mxu0 %v4567
        %v4718 = vpop.f32.mrf.mxu0
        %v4719 = vadd.f32 0.0, %v4718
        %v4720 = vpop.f32.mrf.mxu0
        %v4721 = vpop.f32.mrf.mxu0
        %v4722 = vadd.f32 0.0, %v4721
        %v4723 = vpop.f32.mrf.mxu0
        %4724 = vmatprep.mubr.bf16.mxu0 0
        %4725 = vmatmul.mubr.bf16.gmra.mxu0 %v4570
        %v4726 = vpop.f32.mrf.mxu0
        %v4727 = vadd.f32 0.0, %v4726
        %v4728 = vpop.f32.mrf.mxu0
        %v4729 = vpop.f32.mrf.mxu0
        %v4730 = vadd.f32 0.0, %v4729
        %v4731 = vpop.f32.mrf.mxu0
        %4732 = vdwg.mxu0
        %v4733 = vadd.f32 %v3504, %v4607
        %v4734 = vadd.f32 %v3507, %v4610
        %v4735 = vadd.f32 %v3512, %v4615
        %v4736 = vadd.f32 %v3515, %v4618
        %v4737 = vadd.f32 %v3520, %v4623
        %v4738 = vadd.f32 %v3523, %v4626
        %v4739 = vadd.f32 %v3528, %v4631
        %v4740 = vadd.f32 %v3531, %v4634
        %v4741 = vadd.f32 %v3536, %v4639
        %v4742 = vadd.f32 %v3539, %v4642
        %v4743 = vadd.f32 %v3544, %v4647
        %v4744 = vadd.f32 %v3547, %v4650
        %v4745 = vadd.f32 %v3552, %v4655
        %v4746 = vadd.f32 %v3555, %v4658
        %v4747 = vadd.f32 %v3560, %v4663
        %v4748 = vadd.f32 %v3563, %v4666
        %v4749 = vadd.f32 %v3568, %v4671
        %v4750 = vadd.f32 %v3571, %v4674
        %v4751 = vadd.f32 %v3576, %v4679
        %v4752 = vadd.f32 %v3579, %v4682
        %v4753 = vadd.f32 %v3584, %v4687
        %v4754 = vadd.f32 %v3587, %v4690
        %v4755 = vadd.f32 %v3592, %v4695
        %v4756 = vadd.f32 %v3595, %v4698
        %v4757 = vadd.f32 %v3600, %v4703
        %v4758 = vadd.f32 %v3603, %v4706
        %v4759 = vadd.f32 %v3608, %v4711
        %v4760 = vadd.f32 %v3611, %v4714
        %v4761 = vadd.f32 %v3616, %v4719
        %v4762 = vadd.f32 %v3619, %v4722
        %v4763 = vadd.f32 %v3624, %v4727
        %v4764 = vadd.f32 %v3627, %v4730
        %v4765 = vld [vmem:[#allocation2 + $0xc] sm:$0x8]
        %v4766 = vld [vmem:[#allocation2 + $0x10] sm:$0xf]
        %v4767 = vld [vmem:[#allocation2 + $0x14] sm:$0xf]
        %v4768 = vld [vmem:[#allocation2 + $0x18] sm:$0xf]
        %v4769 = vld [vmem:[#allocation2 + $0x1c] sm:$0xf]
        %v4770 = vld [vmem:[#allocation2 + $0x20] sm:$0xf]
        %v4771 = vld [vmem:[#allocation2 + $0x24] sm:$0xf]
        %v4772 = vld [vmem:[#allocation2 + $0x28] sm:$0xf]
        %v4773 = vld [vmem:[#allocation2 + $0x2c] sm:$0xf]
        %v4774 = vld [vmem:[#allocation2 + $0x30] sm:$0xf]
        %v4775 = vld [vmem:[#allocation2 + $0x34] sm:$0xf]
        %v4776 = vld [vmem:[#allocation2 + $0x38] sm:$0xf]
        %v4777 = vld [vmem:[#allocation2 + $0x3c] sm:$0xf]
        %v4778 = vld [vmem:[#allocation2 + $0x40] sm:$0xf]
        %v4779 = vld [vmem:[#allocation2 + $0x44] sm:$0xf]
        %v4780 = vld [vmem:[#allocation2 + $0x48] sm:$0xf]
        %v4781 = vld [vmem:[#allocation2 + $0x4c] sm:$0xf]
        %v4782 = vld [vmem:[#allocation2 + $0x50] sm:$0xf]
        %v4783 = vld [vmem:[#allocation2 + $0x54] sm:$0xf]
        %v4784 = vld [vmem:[#allocation2 + $0x58] sm:$0xf]
        %v4785 = vld [vmem:[#allocation2 + $0x5c] sm:$0xf]
        %v4786 = vld [vmem:[#allocation2 + $0x60] sm:$0xf]
        %v4787 = vld [vmem:[#allocation2 + $0x64] sm:$0xf]
        %v4788 = vld [vmem:[#allocation2 + $0x68] sm:$0xf]
        %v4789 = vld [vmem:[#allocation2 + $0x6c] sm:$0xf]
        %v4790 = vld [vmem:[#allocation2 + $0x70] sm:$0xf]
        %v4791 = vld [vmem:[#allocation2 + $0x74] sm:$0xf]
        %v4792 = vld [vmem:[#allocation2 + $0x78] sm:$0xf]
        %v4793 = vld [vmem:[#allocation2 + $0x7c] sm:$0xf]
        %v4794 = vld [vmem:[#allocation2 + $0x80] sm:$0xf]
        %v4795 = vld [vmem:[#allocation2 + $0x84] sm:$0xf]
        %v4796 = vld [vmem:[#allocation2 + $0x88] sm:$0xf]
        %v4797 = vld [vmem:[#allocation2 + $0x8c] sm:$0xf]
        %v4798 = vsel %vm2764, %v4765, 0
        %v4799 = vsel %vm2765, %v4766, 0
        %v4800 = vsel %vm2766, %v4767, 0
        %v4801 = vsel %vm2767, %v4768, 0
        %v4802 = vsel %vm2768, %v4769, 0
        %v4803 = vsel %vm2769, %v4770, 0
        %v4804 = vsel %vm2770, %v4771, 0
        %v4805 = vsel %vm2771, %v4772, 0
        %v4806 = vsel %vm2772, %v4773, 0
        %v4807 = vsel %vm2773, %v4774, 0
        %v4808 = vsel %vm2774, %v4775, 0
        %v4809 = vsel %vm2775, %v4776, 0
        %v4810 = vsel %vm2776, %v4777, 0
        %v4811 = vsel %vm2777, %v4778, 0
        %v4812 = vsel %vm2778, %v4779, 0
        %v4813 = vsel %vm2779, %v4780, 0
        %v4814 = vsel %vm2780, %v4781, 0
        %v4815 = vsel %vm2781, %v4782, 0
        %v4816 = vsel %vm2782, %v4783, 0
        %v4817 = vsel %vm2783, %v4784, 0
        %v4818 = vsel %vm2784, %v4785, 0
        %v4819 = vsel %vm2785, %v4786, 0
        %v4820 = vsel %vm2786, %v4787, 0
        %v4821 = vsel %vm2787, %v4788, 0
        %v4822 = vsel %vm2788, %v4789, 0
        %v4823 = vsel %vm2789, %v4790, 0
        %v4824 = vsel %vm2790, %v4791, 0
        %v4825 = vsel %vm2791, %v4792, 0
        %v4826 = vsel %vm2792, %v4793, 0
        %v4827 = vsel %vm2793, %v4794, 0
        %v4828 = vsel %vm2794, %v4795, 0
        %v4829 = vsel %vm2795, %v4796, 0
        %v4830 = vsel %vm2796, %v4797, 0
        %s4831 = scalar_lea.vmem %s6, 96
        %v4832 = vld [vmem:[%s4831] sm:$0xf]
        %v4833 = vld [vmem:[%s4831 + $0x4] sm:$0xf]
        %v4834 = vld [vmem:[%s4831 + $0x8] sm:$0xf]
        %v4835 = vld [vmem:[%s4831 + $0xc] sm:$0xf]
        %v4836 = vld [vmem:[%s4831 + $0x10] sm:$0xf]
        %v4837 = vld [vmem:[%s4831 + $0x14] sm:$0xf]
        %v4838 = vld [vmem:[%s4831 + $0x18] sm:$0xf]
        %v4839 = vld [vmem:[%s4831 + $0x1c] sm:$0xf]
        %v4873 = vunpack.c.l.b16 %v4798
        %v4874 = vunpack.c.l.b16 %v4799
        %v4875 = vunpack.c.l.b16 %v4800
        %v4876 = vunpack.c.l.b16 %v4801
        %v4877 = vunpack.c.l.b16 %v4802
        %v4878 = vunpack.c.l.b16 %v4803
        %v4879 = vunpack.c.l.b16 %v4804
        %v4880 = vunpack.c.l.b16 %v4805
        %v4881 = vunpack.c.l.b16 %v4806
        %v4882 = vunpack.c.l.b16 %v4807
        %v4883 = vunpack.c.l.b16 %v4808
        %v4884 = vunpack.c.l.b16 %v4809
        %v4885 = vunpack.c.l.b16 %v4810
        %v4886 = vunpack.c.l.b16 %v4811
        %v4887 = vunpack.c.l.b16 %v4812
        %v4888 = vunpack.c.l.b16 %v4813
        %v4889 = vunpack.c.l.b16 %v4814
        %v4890 = vunpack.c.l.b16 %v4815
        %v4891 = vunpack.c.l.b16 %v4816
        %v4892 = vunpack.c.l.b16 %v4817
        %v4893 = vunpack.c.l.b16 %v4818
        %v4894 = vunpack.c.l.b16 %v4819
        %v4895 = vunpack.c.l.b16 %v4820
        %v4896 = vunpack.c.l.b16 %v4821
        %v4897 = vunpack.c.l.b16 %v4822
        %v4898 = vunpack.c.l.b16 %v4823
        %v4899 = vunpack.c.l.b16 %v4824
        %v4900 = vunpack.c.l.b16 %v4825
        %v4901 = vunpack.c.l.b16 %v4826
        %v4902 = vunpack.c.l.b16 %v4827
        %v4903 = vunpack.c.l.b16 %v4828
        %v4904 = vunpack.c.l.b16 %v4829
        %v4905 = vunpack.c.l.b16 %v4830
        %v4906 = vpack.c.b16 %v4874, %v4873
        %v4907 = vpack.c.b16 %v4876, %v4875
        %v4908 = vpack.c.b16 %v4878, %v4877
        %v4909 = vpack.c.b16 %v4880, %v4879
        %v4910 = vpack.c.b16 %v4882, %v4881
        %v4911 = vpack.c.b16 %v4884, %v4883
        %v4912 = vpack.c.b16 %v4886, %v4885
        %v4913 = vpack.c.b16 %v4888, %v4887
        %v4914 = vpack.c.b16 %v4890, %v4889
        %v4915 = vpack.c.b16 %v4892, %v4891
        %v4916 = vpack.c.b16 %v4894, %v4893
        %v4917 = vpack.c.b16 %v4896, %v4895
        %v4918 = vpack.c.b16 %v4898, %v4897
        %v4919 = vpack.c.b16 %v4900, %v4899
        %v4920 = vpack.c.b16 %v4902, %v4901
        %v4921 = vpack.c.b16 %v4904, %v4903
        %v4922 = vpack.c.b16 %v4905, %v4905
        %v4924 = vshrl.u32 %v4906, 16
        %v4926 = vrot.slane %v4924, 3
        %v4927 = vshll.u32 %v4906, 16
        %v4929 = vrot.slane %v4927, 4
        %v4930 = vor.u32 %v4926, %v4929
        %v4932 = vshrl.u32 %v4907, 16
        %v4934 = vrot.slane %v4932, 3
        %v4935 = vshll.u32 %v4907, 16
        %v4937 = vrot.slane %v4935, 4
        %v4938 = vor.u32 %v4934, %v4937
        %v4939 = vsel %vm3244, %v4930, %v4938
        %v4941 = vshrl.u32 %v4908, 16
        %v4943 = vrot.slane %v4941, 3
        %v4944 = vshll.u32 %v4908, 16
        %v4946 = vrot.slane %v4944, 4
        %v4947 = vor.u32 %v4943, %v4946
        %v4948 = vsel %vm3244, %v4938, %v4947
        %v4950 = vshrl.u32 %v4909, 16
        %v4952 = vrot.slane %v4950, 3
        %v4953 = vshll.u32 %v4909, 16
        %v4955 = vrot.slane %v4953, 4
        %v4956 = vor.u32 %v4952, %v4955
        %v4957 = vsel %vm3244, %v4947, %v4956
        %v4959 = vshrl.u32 %v4910, 16
        %v4961 = vrot.slane %v4959, 3
        %v4962 = vshll.u32 %v4910, 16
        %v4964 = vrot.slane %v4962, 4
        %v4965 = vor.u32 %v4961, %v4964
        %v4966 = vsel %vm3244, %v4956, %v4965
        %v4968 = vshrl.u32 %v4911, 16
        %v4970 = vrot.slane %v4968, 3
        %v4971 = vshll.u32 %v4911, 16
        %v4973 = vrot.slane %v4971, 4
        %v4974 = vor.u32 %v4970, %v4973
        %v4975 = vsel %vm3244, %v4965, %v4974
        %v4977 = vshrl.u32 %v4912, 16
        %v4979 = vrot.slane %v4977, 3
        %v4980 = vshll.u32 %v4912, 16
        %v4982 = vrot.slane %v4980, 4
        %v4983 = vor.u32 %v4979, %v4982
        %v4984 = vsel %vm3244, %v4974, %v4983
        %v4986 = vshrl.u32 %v4913, 16
        %v4988 = vrot.slane %v4986, 3
        %v4989 = vshll.u32 %v4913, 16
        %v4991 = vrot.slane %v4989, 4
        %v4992 = vor.u32 %v4988, %v4991
        %v4993 = vsel %vm3244, %v4983, %v4992
        %v4995 = vshrl.u32 %v4914, 16
        %v4997 = vrot.slane %v4995, 3
        %v4998 = vshll.u32 %v4914, 16
        %v5000 = vrot.slane %v4998, 4
        %v5001 = vor.u32 %v4997, %v5000
        %v5002 = vsel %vm3244, %v4992, %v5001
        %v5004 = vshrl.u32 %v4915, 16
        %v5006 = vrot.slane %v5004, 3
        %v5007 = vshll.u32 %v4915, 16
        %v5009 = vrot.slane %v5007, 4
        %v5010 = vor.u32 %v5006, %v5009
        %v5011 = vsel %vm3244, %v5001, %v5010
        %v5013 = vshrl.u32 %v4916, 16
        %v5015 = vrot.slane %v5013, 3
        %v5016 = vshll.u32 %v4916, 16
        %v5018 = vrot.slane %v5016, 4
        %v5019 = vor.u32 %v5015, %v5018
        %v5020 = vsel %vm3244, %v5010, %v5019
        %v5022 = vshrl.u32 %v4917, 16
        %v5024 = vrot.slane %v5022, 3
        %v5025 = vshll.u32 %v4917, 16
        %v5027 = vrot.slane %v5025, 4
        %v5028 = vor.u32 %v5024, %v5027
        %v5029 = vsel %vm3244, %v5019, %v5028
        %v5031 = vshrl.u32 %v4918, 16
        %v5033 = vrot.slane %v5031, 3
        %v5034 = vshll.u32 %v4918, 16
        %v5036 = vrot.slane %v5034, 4
        %v5037 = vor.u32 %v5033, %v5036
        %v5038 = vsel %vm3244, %v5028, %v5037
        %v5040 = vshrl.u32 %v4919, 16
        %v5042 = vrot.slane %v5040, 3
        %v5043 = vshll.u32 %v4919, 16
        %v5045 = vrot.slane %v5043, 4
        %v5046 = vor.u32 %v5042, %v5045
        %v5047 = vsel %vm3244, %v5037, %v5046
        %v5049 = vshrl.u32 %v4920, 16
        %v5051 = vrot.slane %v5049, 3
        %v5052 = vshll.u32 %v4920, 16
        %v5054 = vrot.slane %v5052, 4
        %v5055 = vor.u32 %v5051, %v5054
        %v5056 = vsel %vm3244, %v5046, %v5055
        %v5058 = vshrl.u32 %v4921, 16
        %v5060 = vrot.slane %v5058, 3
        %v5061 = vshll.u32 %v4921, 16
        %v5063 = vrot.slane %v5061, 4
        %v5064 = vor.u32 %v5060, %v5063
        %v5065 = vsel %vm3244, %v5055, %v5064
        %v5067 = vshrl.u32 %v4922, 16
        %v5069 = vrot.slane %v5067, 3
        %v5070 = vshll.u32 %v4922, 16
        %v5072 = vrot.slane %v5070, 4
        %v5073 = vor.u32 %v5069, %v5072
        %v5074 = vsel %vm3244, %v5064, %v5073
        %v5083 = vunpack.c.l.b16 %v4832
        %v5084 = vunpack.c.l.b16 %v4833
        %v5085 = vunpack.c.l.b16 %v4834
        %v5086 = vunpack.c.l.b16 %v4835
        %v5087 = vunpack.c.l.b16 %v4836
        %v5088 = vunpack.c.l.b16 %v4837
        %v5089 = vunpack.c.l.b16 %v4838
        %v5090 = vunpack.c.l.b16 %v4839
        %v5091 = vpack.c.b16 %v5084, %v5083
        %v5092 = vpack.c.b16 %v5086, %v5085
        %v5093 = vpack.c.b16 %v5088, %v5087
        %v5094 = vpack.c.b16 %v5090, %v5089
        %v5100 = vsel %vm2951, %v4939, 0
        %v5103 = vsel %vm2951, %v4948, 0
        %v5106 = vsel %vm2951, %v4957, 0
        %v5109 = vsel %vm2951, %v4966, 0
        %v5112 = vsel %vm2951, %v4975, 0
        %v5115 = vsel %vm2951, %v4984, 0
        %v5118 = vsel %vm2951, %v4993, 0
        %v5121 = vsel %vm2951, %v5002, 0
        %v5124 = vsel %vm2951, %v5011, 0
        %v5127 = vsel %vm2951, %v5020, 0
        %v5130 = vsel %vm2951, %v5029, 0
        %v5133 = vsel %vm2951, %v5038, 0
        %v5136 = vsel %vm2951, %v5047, 0
        %v5139 = vsel %vm2951, %v5056, 0
        %v5142 = vsel %vm2951, %v5065, 0
        %v5145 = vsel %vm2951, %v5074, 0
        %5147 = vmatprep.subr.bf16.mxu0 0
        %5148 = vmatpush1.bf16.msra.mxu0 0
        %5149 = vmatprep.subr.bf16.mxu0 0
        %5150 = vmatpush1.bf16.msra.mxu0 0
        %5151 = vmatprep.subr.bf16.mxu0 0
        %5152 = vmatpush1.bf16.msra.mxu0 0
        %5153 = vmatprep.subr.bf16.mxu0 0
        %5154 = vmatpush1.bf16.msra.mxu0 0
        %5155 = vmatprep.subr.bf16.mxu0 0
        %5156 = vmatpush1.bf16.msra.mxu0 %v5094
        %5157 = vmatprep.subr.bf16.mxu0 0
        %5158 = vmatpush1.bf16.msra.mxu0 %v5093
        %5159 = vmatprep.subr.bf16.mxu0 0
        %5160 = vmatpush1.bf16.msra.mxu0 %v5092
        %5161 = vmatprep.subr.bf16.mxu0 0
        %5162 = vmatpush1.bf16.msra.mxu0 %v5091
        %5163 = vmatprep.subr.bf16.mxu0 0
        %5164 = vmatpush2.bf16.msra.mxu0 0
        %5165 = vmatprep.subr.bf16.mxu0 0
        %5166 = vmatpush2.bf16.msra.mxu0 0
        %5167 = vmatprep.subr.bf16.mxu0 0
        %5168 = vmatpush2.bf16.msra.mxu0 0
        %5169 = vmatprep.subr.bf16.mxu0 0
        %5170 = vmatpush2.bf16.msra.mxu0 0
        %5171 = vmatprep.subr.bf16.mxu0 0
        %5172 = vmatpush2.bf16.msra.mxu0 0
        %5173 = vmatprep.subr.bf16.mxu0 0
        %5174 = vmatpush2.bf16.msra.mxu0 0
        %5175 = vmatprep.subr.bf16.mxu0 0
        %5176 = vmatpush2.bf16.msra.mxu0 0
        %5177 = vmatprep.subr.bf16.mxu0 0
        %5178 = vmatpush2.bf16.msra.mxu0 0
        %5179 = vmatprep.mubr.bf16.mxu0 0
        %5180 = vmatmul.mubr.bf16.gmra.mxu0 %v5100
        %v5181 = vpop.f32.mrf.mxu0
        %v5182 = vadd.f32 0.0, %v5181
        %v5183 = vpop.f32.mrf.mxu0
        %v5184 = vpop.f32.mrf.mxu0
        %v5185 = vadd.f32 0.0, %v5184
        %v5186 = vpop.f32.mrf.mxu0
        %5187 = vmatprep.mubr.bf16.mxu0 0
        %5188 = vmatmul.mubr.bf16.gmra.mxu0 %v5103
        %v5189 = vpop.f32.mrf.mxu0
        %v5190 = vadd.f32 0.0, %v5189
        %v5191 = vpop.f32.mrf.mxu0
        %v5192 = vpop.f32.mrf.mxu0
        %v5193 = vadd.f32 0.0, %v5192
        %v5194 = vpop.f32.mrf.mxu0
        %5195 = vmatprep.mubr.bf16.mxu0 0
        %5196 = vmatmul.mubr.bf16.gmra.mxu0 %v5106
        %v5197 = vpop.f32.mrf.mxu0
        %v5198 = vadd.f32 0.0, %v5197
        %v5199 = vpop.f32.mrf.mxu0
        %v5200 = vpop.f32.mrf.mxu0
        %v5201 = vadd.f32 0.0, %v5200
        %v5202 = vpop.f32.mrf.mxu0
        %5203 = vmatprep.mubr.bf16.mxu0 0
        %5204 = vmatmul.mubr.bf16.gmra.mxu0 %v5109
        %v5205 = vpop.f32.mrf.mxu0
        %v5206 = vadd.f32 0.0, %v5205
        %v5207 = vpop.f32.mrf.mxu0
        %v5208 = vpop.f32.mrf.mxu0
        %v5209 = vadd.f32 0.0, %v5208
        %v5210 = vpop.f32.mrf.mxu0
        %5211 = vmatprep.mubr.bf16.mxu0 0
        %5212 = vmatmul.mubr.bf16.gmra.mxu0 %v5112
        %v5213 = vpop.f32.mrf.mxu0
        %v5214 = vadd.f32 0.0, %v5213
        %v5215 = vpop.f32.mrf.mxu0
        %v5216 = vpop.f32.mrf.mxu0
        %v5217 = vadd.f32 0.0, %v5216
        %v5218 = vpop.f32.mrf.mxu0
        %5219 = vmatprep.mubr.bf16.mxu0 0
        %5220 = vmatmul.mubr.bf16.gmra.mxu0 %v5115
        %v5221 = vpop.f32.mrf.mxu0
        %v5222 = vadd.f32 0.0, %v5221
        %v5223 = vpop.f32.mrf.mxu0
        %v5224 = vpop.f32.mrf.mxu0
        %v5225 = vadd.f32 0.0, %v5224
        %v5226 = vpop.f32.mrf.mxu0
        %5227 = vmatprep.mubr.bf16.mxu0 0
        %5228 = vmatmul.mubr.bf16.gmra.mxu0 %v5118
        %v5229 = vpop.f32.mrf.mxu0
        %v5230 = vadd.f32 0.0, %v5229
        %v5231 = vpop.f32.mrf.mxu0
        %v5232 = vpop.f32.mrf.mxu0
        %v5233 = vadd.f32 0.0, %v5232
        %v5234 = vpop.f32.mrf.mxu0
        %5235 = vmatprep.mubr.bf16.mxu0 0
        %5236 = vmatmul.mubr.bf16.gmra.mxu0 %v5121
        %v5237 = vpop.f32.mrf.mxu0
        %v5238 = vadd.f32 0.0, %v5237
        %v5239 = vpop.f32.mrf.mxu0
        %v5240 = vpop.f32.mrf.mxu0
        %v5241 = vadd.f32 0.0, %v5240
        %v5242 = vpop.f32.mrf.mxu0
        %5243 = vmatprep.mubr.bf16.mxu0 0
        %5244 = vmatmul.mubr.bf16.gmra.mxu0 %v5124
        %v5245 = vpop.f32.mrf.mxu0
        %v5246 = vadd.f32 0.0, %v5245
        %v5247 = vpop.f32.mrf.mxu0
        %v5248 = vpop.f32.mrf.mxu0
        %v5249 = vadd.f32 0.0, %v5248
        %v5250 = vpop.f32.mrf.mxu0
        %5251 = vmatprep.mubr.bf16.mxu0 0
        %5252 = vmatmul.mubr.bf16.gmra.mxu0 %v5127
        %v5253 = vpop.f32.mrf.mxu0
        %v5254 = vadd.f32 0.0, %v5253
        %v5255 = vpop.f32.mrf.mxu0
        %v5256 = vpop.f32.mrf.mxu0
        %v5257 = vadd.f32 0.0, %v5256
        %v5258 = vpop.f32.mrf.mxu0
        %5259 = vmatprep.mubr.bf16.mxu0 0
        %5260 = vmatmul.mubr.bf16.gmra.mxu0 %v5130
        %v5261 = vpop.f32.mrf.mxu0
        %v5262 = vadd.f32 0.0, %v5261
        %v5263 = vpop.f32.mrf.mxu0
        %v5264 = vpop.f32.mrf.mxu0
        %v5265 = vadd.f32 0.0, %v5264
        %v5266 = vpop.f32.mrf.mxu0
        %5267 = vmatprep.mubr.bf16.mxu0 0
        %5268 = vmatmul.mubr.bf16.gmra.mxu0 %v5133
        %v5269 = vpop.f32.mrf.mxu0
        %v5270 = vadd.f32 0.0, %v5269
        %v5271 = vpop.f32.mrf.mxu0
        %v5272 = vpop.f32.mrf.mxu0
        %v5273 = vadd.f32 0.0, %v5272
        %v5274 = vpop.f32.mrf.mxu0
        %5275 = vmatprep.mubr.bf16.mxu0 0
        %5276 = vmatmul.mubr.bf16.gmra.mxu0 %v5136
        %v5277 = vpop.f32.mrf.mxu0
        %v5278 = vadd.f32 0.0, %v5277
        %v5279 = vpop.f32.mrf.mxu0
        %v5280 = vpop.f32.mrf.mxu0
        %v5281 = vadd.f32 0.0, %v5280
        %v5282 = vpop.f32.mrf.mxu0
        %5283 = vmatprep.mubr.bf16.mxu0 0
        %5284 = vmatmul.mubr.bf16.gmra.mxu0 %v5139
        %v5285 = vpop.f32.mrf.mxu0
        %v5286 = vadd.f32 0.0, %v5285
        %v5287 = vpop.f32.mrf.mxu0
        %v5288 = vpop.f32.mrf.mxu0
        %v5289 = vadd.f32 0.0, %v5288
        %v5290 = vpop.f32.mrf.mxu0
        %5291 = vmatprep.mubr.bf16.mxu0 0
        %5292 = vmatmul.mubr.bf16.gmra.mxu0 %v5142
        %v5293 = vpop.f32.mrf.mxu0
        %v5294 = vadd.f32 0.0, %v5293
        %v5295 = vpop.f32.mrf.mxu0
        %v5296 = vpop.f32.mrf.mxu0
        %v5297 = vadd.f32 0.0, %v5296
        %v5298 = vpop.f32.mrf.mxu0
        %5299 = vmatprep.mubr.bf16.mxu0 0
        %5300 = vmatmul.mubr.bf16.gmra.mxu0 %v5145
        %v5301 = vpop.f32.mrf.mxu0
        %v5302 = vadd.f32 0.0, %v5301
        %v5303 = vpop.f32.mrf.mxu0
        %v5304 = vpop.f32.mrf.mxu0
        %v5305 = vadd.f32 0.0, %v5304
        %v5306 = vpop.f32.mrf.mxu0
        %5307 = vdwg.mxu0
        %v5308 = vadd.f32 %v4733, %v5182
        %v5309 = vadd.f32 %v4734, %v5185
        %v5310 = vadd.f32 %v4735, %v5190
        %v5311 = vadd.f32 %v4736, %v5193
        %v5312 = vadd.f32 %v4737, %v5198
        %v5313 = vadd.f32 %v4738, %v5201
        %v5314 = vadd.f32 %v4739, %v5206
        %v5315 = vadd.f32 %v4740, %v5209
        %v5316 = vadd.f32 %v4741, %v5214
        %v5317 = vadd.f32 %v4742, %v5217
        %v5318 = vadd.f32 %v4743, %v5222
        %v5319 = vadd.f32 %v4744, %v5225
        %v5320 = vadd.f32 %v4745, %v5230
        %v5321 = vadd.f32 %v4746, %v5233
        %v5322 = vadd.f32 %v4747, %v5238
        %v5323 = vadd.f32 %v4748, %v5241
        %v5324 = vadd.f32 %v4749, %v5246
        %v5325 = vadd.f32 %v4750, %v5249
        %v5326 = vadd.f32 %v4751, %v5254
        %v5327 = vadd.f32 %v4752, %v5257
        %v5328 = vadd.f32 %v4753, %v5262
        %v5329 = vadd.f32 %v4754, %v5265
        %v5330 = vadd.f32 %v4755, %v5270
        %v5331 = vadd.f32 %v4756, %v5273
        %v5332 = vadd.f32 %v4757, %v5278
        %v5333 = vadd.f32 %v4758, %v5281
        %v5334 = vadd.f32 %v4759, %v5286
        %v5335 = vadd.f32 %v4760, %v5289
        %v5336 = vadd.f32 %v4761, %v5294
        %v5337 = vadd.f32 %v4762, %v5297
        %v5338 = vadd.f32 %v4763, %v5302
        %v5339 = vadd.f32 %v4764, %v5305
        %s5340 = scalar_lea.vmem %s6, 128
        %v5341 = vld [vmem:[%s5340] sm:$0xf]
        %v5342 = vld [vmem:[%s5340 + $0x4] sm:$0xf]
        %v5343 = vld [vmem:[%s5340 + $0x8] sm:$0xf]
        %v5344 = vld [vmem:[%s5340 + $0xc] sm:$0xf]
        %v5345 = vld [vmem:[%s5340 + $0x10] sm:$0xf]
        %v5346 = vld [vmem:[%s5340 + $0x14] sm:$0xf]
        %v5347 = vld [vmem:[%s5340 + $0x18] sm:$0xf]
        %v5348 = vld [vmem:[%s5340 + $0x1c] sm:$0xf]
        %v5381 = vunpack.c.l.b16 %v4766
        %v5382 = vunpack.c.l.b16 %v4767
        %v5383 = vunpack.c.l.b16 %v4768
        %v5384 = vunpack.c.l.b16 %v4769
        %v5385 = vunpack.c.l.b16 %v4770
        %v5386 = vunpack.c.l.b16 %v4771
        %v5387 = vunpack.c.l.b16 %v4772
        %v5388 = vunpack.c.l.b16 %v4773
        %v5389 = vunpack.c.l.b16 %v4774
        %v5390 = vunpack.c.l.b16 %v4775
        %v5391 = vunpack.c.l.b16 %v4776
        %v5392 = vunpack.c.l.b16 %v4777
        %v5393 = vunpack.c.l.b16 %v4778
        %v5394 = vunpack.c.l.b16 %v4779
        %v5395 = vunpack.c.l.b16 %v4780
        %v5396 = vunpack.c.l.b16 %v4781
        %v5397 = vunpack.c.l.b16 %v4782
        %v5398 = vunpack.c.l.b16 %v4783
        %v5399 = vunpack.c.l.b16 %v4784
        %v5400 = vunpack.c.l.b16 %v4785
        %v5401 = vunpack.c.l.b16 %v4786
        %v5402 = vunpack.c.l.b16 %v4787
        %v5403 = vunpack.c.l.b16 %v4788
        %v5404 = vunpack.c.l.b16 %v4789
        %v5405 = vunpack.c.l.b16 %v4790
        %v5406 = vunpack.c.l.b16 %v4791
        %v5407 = vunpack.c.l.b16 %v4792
        %v5408 = vunpack.c.l.b16 %v4793
        %v5409 = vunpack.c.l.b16 %v4794
        %v5410 = vunpack.c.l.b16 %v4795
        %v5411 = vunpack.c.l.b16 %v4796
        %v5412 = vunpack.c.l.b16 %v4797
        %v5413 = vpack.c.b16 %v5382, %v5381
        %v5414 = vpack.c.b16 %v5384, %v5383
        %v5415 = vpack.c.b16 %v5386, %v5385
        %v5416 = vpack.c.b16 %v5388, %v5387
        %v5417 = vpack.c.b16 %v5390, %v5389
        %v5418 = vpack.c.b16 %v5392, %v5391
        %v5419 = vpack.c.b16 %v5394, %v5393
        %v5420 = vpack.c.b16 %v5396, %v5395
        %v5421 = vpack.c.b16 %v5398, %v5397
        %v5422 = vpack.c.b16 %v5400, %v5399
        %v5423 = vpack.c.b16 %v5402, %v5401
        %v5424 = vpack.c.b16 %v5404, %v5403
        %v5425 = vpack.c.b16 %v5406, %v5405
        %v5426 = vpack.c.b16 %v5408, %v5407
        %v5427 = vpack.c.b16 %v5410, %v5409
        %v5428 = vpack.c.b16 %v5412, %v5411
        %v5437 = vunpack.c.l.b16 %v5341
        %v5438 = vunpack.c.l.b16 %v5342
        %v5439 = vunpack.c.l.b16 %v5343
        %v5440 = vunpack.c.l.b16 %v5344
        %v5441 = vunpack.c.l.b16 %v5345
        %v5442 = vunpack.c.l.b16 %v5346
        %v5443 = vunpack.c.l.b16 %v5347
        %v5444 = vunpack.c.l.b16 %v5348
        %v5445 = vpack.c.b16 %v5438, %v5437
        %v5446 = vpack.c.b16 %v5440, %v5439
        %v5447 = vpack.c.b16 %v5442, %v5441
        %v5448 = vpack.c.b16 %v5444, %v5443
        %v5454 = vsel %vm2951, %v5413, 0
        %v5457 = vsel %vm2951, %v5414, 0
        %v5460 = vsel %vm2951, %v5415, 0
        %v5463 = vsel %vm2951, %v5416, 0
        %v5466 = vsel %vm2951, %v5417, 0
        %v5469 = vsel %vm2951, %v5418, 0
        %v5472 = vsel %vm2951, %v5419, 0
        %v5475 = vsel %vm2951, %v5420, 0
        %v5478 = vsel %vm2951, %v5421, 0
        %v5481 = vsel %vm2951, %v5422, 0
        %v5484 = vsel %vm2951, %v5423, 0
        %v5487 = vsel %vm2951, %v5424, 0
        %v5490 = vsel %vm2951, %v5425, 0
        %v5493 = vsel %vm2951, %v5426, 0
        %v5496 = vsel %vm2951, %v5427, 0
        %v5499 = vsel %vm2951, %v5428, 0
        %5501 = vmatprep.subr.bf16.mxu0 0
        %5502 = vmatpush1.bf16.msra.mxu0 0
        %5503 = vmatprep.subr.bf16.mxu0 0
        %5504 = vmatpush1.bf16.msra.mxu0 0
        %5505 = vmatprep.subr.bf16.mxu0 0
        %5506 = vmatpush1.bf16.msra.mxu0 0
        %5507 = vmatprep.subr.bf16.mxu0 0
        %5508 = vmatpush1.bf16.msra.mxu0 0
        %5509 = vmatprep.subr.bf16.mxu0 0
        %5510 = vmatpush1.bf16.msra.mxu0 %v5448
        %5511 = vmatprep.subr.bf16.mxu0 0
        %5512 = vmatpush1.bf16.msra.mxu0 %v5447
        %5513 = vmatprep.subr.bf16.mxu0 0
        %5514 = vmatpush1.bf16.msra.mxu0 %v5446
        %5515 = vmatprep.subr.bf16.mxu0 0
        %5516 = vmatpush1.bf16.msra.mxu0 %v5445
        %5517 = vmatprep.subr.bf16.mxu0 0
        %5518 = vmatpush2.bf16.msra.mxu0 0
        %5519 = vmatprep.subr.bf16.mxu0 0
        %5520 = vmatpush2.bf16.msra.mxu0 0
        %5521 = vmatprep.subr.bf16.mxu0 0
        %5522 = vmatpush2.bf16.msra.mxu0 0
        %5523 = vmatprep.subr.bf16.mxu0 0
        %5524 = vmatpush2.bf16.msra.mxu0 0
        %5525 = vmatprep.subr.bf16.mxu0 0
        %5526 = vmatpush2.bf16.msra.mxu0 0
        %5527 = vmatprep.subr.bf16.mxu0 0
        %5528 = vmatpush2.bf16.msra.mxu0 0
        %5529 = vmatprep.subr.bf16.mxu0 0
        %5530 = vmatpush2.bf16.msra.mxu0 0
        %5531 = vmatprep.subr.bf16.mxu0 0
        %5532 = vmatpush2.bf16.msra.mxu0 0
        %5533 = vmatprep.mubr.bf16.mxu0 0
        %5534 = vmatmul.mubr.bf16.gmra.mxu0 %v5454
        %v5535 = vpop.f32.mrf.mxu0
        %v5536 = vadd.f32 0.0, %v5535
        %v5537 = vpop.f32.mrf.mxu0
        %v5538 = vpop.f32.mrf.mxu0
        %v5539 = vadd.f32 0.0, %v5538
        %v5540 = vpop.f32.mrf.mxu0
        %5541 = vmatprep.mubr.bf16.mxu0 0
        %5542 = vmatmul.mubr.bf16.gmra.mxu0 %v5457
        %v5543 = vpop.f32.mrf.mxu0
        %v5544 = vadd.f32 0.0, %v5543
        %v5545 = vpop.f32.mrf.mxu0
        %v5546 = vpop.f32.mrf.mxu0
        %v5547 = vadd.f32 0.0, %v5546
        %v5548 = vpop.f32.mrf.mxu0
        %5549 = vmatprep.mubr.bf16.mxu0 0
        %5550 = vmatmul.mubr.bf16.gmra.mxu0 %v5460
        %v5551 = vpop.f32.mrf.mxu0
        %v5552 = vadd.f32 0.0, %v5551
        %v5553 = vpop.f32.mrf.mxu0
        %v5554 = vpop.f32.mrf.mxu0
        %v5555 = vadd.f32 0.0, %v5554
        %v5556 = vpop.f32.mrf.mxu0
        %5557 = vmatprep.mubr.bf16.mxu0 0
        %5558 = vmatmul.mubr.bf16.gmra.mxu0 %v5463
        %v5559 = vpop.f32.mrf.mxu0
        %v5560 = vadd.f32 0.0, %v5559
        %v5561 = vpop.f32.mrf.mxu0
        %v5562 = vpop.f32.mrf.mxu0
        %v5563 = vadd.f32 0.0, %v5562
        %v5564 = vpop.f32.mrf.mxu0
        %5565 = vmatprep.mubr.bf16.mxu0 0
        %5566 = vmatmul.mubr.bf16.gmra.mxu0 %v5466
        %v5567 = vpop.f32.mrf.mxu0
        %v5568 = vadd.f32 0.0, %v5567
        %v5569 = vpop.f32.mrf.mxu0
        %v5570 = vpop.f32.mrf.mxu0
        %v5571 = vadd.f32 0.0, %v5570
        %v5572 = vpop.f32.mrf.mxu0
        %5573 = vmatprep.mubr.bf16.mxu0 0
        %5574 = vmatmul.mubr.bf16.gmra.mxu0 %v5469
        %v5575 = vpop.f32.mrf.mxu0
        %v5576 = vadd.f32 0.0, %v5575
        %v5577 = vpop.f32.mrf.mxu0
        %v5578 = vpop.f32.mrf.mxu0
        %v5579 = vadd.f32 0.0, %v5578
        %v5580 = vpop.f32.mrf.mxu0
        %5581 = vmatprep.mubr.bf16.mxu0 0
        %5582 = vmatmul.mubr.bf16.gmra.mxu0 %v5472
        %v5583 = vpop.f32.mrf.mxu0
        %v5584 = vadd.f32 0.0, %v5583
        %v5585 = vpop.f32.mrf.mxu0
        %v5586 = vpop.f32.mrf.mxu0
        %v5587 = vadd.f32 0.0, %v5586
        %v5588 = vpop.f32.mrf.mxu0
        %5589 = vmatprep.mubr.bf16.mxu0 0
        %5590 = vmatmul.mubr.bf16.gmra.mxu0 %v5475
        %v5591 = vpop.f32.mrf.mxu0
        %v5592 = vadd.f32 0.0, %v5591
        %v5593 = vpop.f32.mrf.mxu0
        %v5594 = vpop.f32.mrf.mxu0
        %v5595 = vadd.f32 0.0, %v5594
        %v5596 = vpop.f32.mrf.mxu0
        %5597 = vmatprep.mubr.bf16.mxu0 0
        %5598 = vmatmul.mubr.bf16.gmra.mxu0 %v5478
        %v5599 = vpop.f32.mrf.mxu0
        %v5600 = vadd.f32 0.0, %v5599
        %v5601 = vpop.f32.mrf.mxu0
        %v5602 = vpop.f32.mrf.mxu0
        %v5603 = vadd.f32 0.0, %v5602
        %v5604 = vpop.f32.mrf.mxu0
        %5605 = vmatprep.mubr.bf16.mxu0 0
        %5606 = vmatmul.mubr.bf16.gmra.mxu0 %v5481
        %v5607 = vpop.f32.mrf.mxu0
        %v5608 = vadd.f32 0.0, %v5607
        %v5609 = vpop.f32.mrf.mxu0
        %v5610 = vpop.f32.mrf.mxu0
        %v5611 = vadd.f32 0.0, %v5610
        %v5612 = vpop.f32.mrf.mxu0
        %5613 = vmatprep.mubr.bf16.mxu0 0
        %5614 = vmatmul.mubr.bf16.gmra.mxu0 %v5484
        %v5615 = vpop.f32.mrf.mxu0
        %v5616 = vadd.f32 0.0, %v5615
        %v5617 = vpop.f32.mrf.mxu0
        %v5618 = vpop.f32.mrf.mxu0
        %v5619 = vadd.f32 0.0, %v5618
        %v5620 = vpop.f32.mrf.mxu0
        %5621 = vmatprep.mubr.bf16.mxu0 0
        %5622 = vmatmul.mubr.bf16.gmra.mxu0 %v5487
        %v5623 = vpop.f32.mrf.mxu0
        %v5624 = vadd.f32 0.0, %v5623
        %v5625 = vpop.f32.mrf.mxu0
        %v5626 = vpop.f32.mrf.mxu0
        %v5627 = vadd.f32 0.0, %v5626
        %v5628 = vpop.f32.mrf.mxu0
        %5629 = vmatprep.mubr.bf16.mxu0 0
        %5630 = vmatmul.mubr.bf16.gmra.mxu0 %v5490
        %v5631 = vpop.f32.mrf.mxu0
        %v5632 = vadd.f32 0.0, %v5631
        %v5633 = vpop.f32.mrf.mxu0
        %v5634 = vpop.f32.mrf.mxu0
        %v5635 = vadd.f32 0.0, %v5634
        %v5636 = vpop.f32.mrf.mxu0
        %5637 = vmatprep.mubr.bf16.mxu0 0
        %5638 = vmatmul.mubr.bf16.gmra.mxu0 %v5493
        %v5639 = vpop.f32.mrf.mxu0
        %v5640 = vadd.f32 0.0, %v5639
        %v5641 = vpop.f32.mrf.mxu0
        %v5642 = vpop.f32.mrf.mxu0
        %v5643 = vadd.f32 0.0, %v5642
        %v5644 = vpop.f32.mrf.mxu0
        %5645 = vmatprep.mubr.bf16.mxu0 0
        %5646 = vmatmul.mubr.bf16.gmra.mxu0 %v5496
        %v5647 = vpop.f32.mrf.mxu0
        %v5648 = vadd.f32 0.0, %v5647
        %v5649 = vpop.f32.mrf.mxu0
        %v5650 = vpop.f32.mrf.mxu0
        %v5651 = vadd.f32 0.0, %v5650
        %v5652 = vpop.f32.mrf.mxu0
        %5653 = vmatprep.mubr.bf16.mxu0 0
        %5654 = vmatmul.mubr.bf16.gmra.mxu0 %v5499
        %v5655 = vpop.f32.mrf.mxu0
        %v5656 = vadd.f32 0.0, %v5655
        %v5657 = vpop.f32.mrf.mxu0
        %v5658 = vpop.f32.mrf.mxu0
        %v5659 = vadd.f32 0.0, %v5658
        %v5660 = vpop.f32.mrf.mxu0
        %5661 = vdwg.mxu0
        %v5662 = vadd.f32 %v5308, %v5536
        %v5663 = vadd.f32 %v5309, %v5539
        %v5664 = vadd.f32 %v5310, %v5544
        %v5665 = vadd.f32 %v5311, %v5547
        %v5666 = vadd.f32 %v5312, %v5552
        %v5667 = vadd.f32 %v5313, %v5555
        %v5668 = vadd.f32 %v5314, %v5560
        %v5669 = vadd.f32 %v5315, %v5563
        %v5670 = vadd.f32 %v5316, %v5568
        %v5671 = vadd.f32 %v5317, %v5571
        %v5672 = vadd.f32 %v5318, %v5576
        %v5673 = vadd.f32 %v5319, %v5579
        %v5674 = vadd.f32 %v5320, %v5584
        %v5675 = vadd.f32 %v5321, %v5587
        %v5676 = vadd.f32 %v5322, %v5592
        %v5677 = vadd.f32 %v5323, %v5595
        %v5678 = vadd.f32 %v5324, %v5600
        %v5679 = vadd.f32 %v5325, %v5603
        %v5680 = vadd.f32 %v5326, %v5608
        %v5681 = vadd.f32 %v5327, %v5611
        %v5682 = vadd.f32 %v5328, %v5616
        %v5683 = vadd.f32 %v5329, %v5619
        %v5684 = vadd.f32 %v5330, %v5624
        %v5685 = vadd.f32 %v5331, %v5627
        %v5686 = vadd.f32 %v5332, %v5632
        %v5687 = vadd.f32 %v5333, %v5635
        %v5688 = vadd.f32 %v5334, %v5640
        %v5689 = vadd.f32 %v5335, %v5643
        %v5690 = vadd.f32 %v5336, %v5648
        %v5691 = vadd.f32 %v5337, %v5651
        %v5692 = vadd.f32 %v5338, %v5656
        %v5693 = vadd.f32 %v5339, %v5659
        %v5694 = vld [vmem:[#allocation2 + $0x10] sm:$0xf]
        %v5695 = vld [vmem:[#allocation2 + $0x14] sm:$0xf]
        %v5696 = vld [vmem:[#allocation2 + $0x18] sm:$0xf]
        %v5697 = vld [vmem:[#allocation2 + $0x1c] sm:$0xf]
        %v5698 = vld [vmem:[#allocation2 + $0x20] sm:$0xf]
        %v5699 = vld [vmem:[#allocation2 + $0x24] sm:$0xf]
        %v5700 = vld [vmem:[#allocation2 + $0x28] sm:$0xf]
        %v5701 = vld [vmem:[#allocation2 + $0x2c] sm:$0xf]
        %v5702 = vld [vmem:[#allocation2 + $0x30] sm:$0xf]
        %v5703 = vld [vmem:[#allocation2 + $0x34] sm:$0xf]
        %v5704 = vld [vmem:[#allocation2 + $0x38] sm:$0xf]
        %v5705 = vld [vmem:[#allocation2 + $0x3c] sm:$0xf]
        %v5706 = vld [vmem:[#allocation2 + $0x40] sm:$0xf]
        %v5707 = vld [vmem:[#allocation2 + $0x44] sm:$0xf]
        %v5708 = vld [vmem:[#allocation2 + $0x48] sm:$0xf]
        %v5709 = vld [vmem:[#allocation2 + $0x4c] sm:$0xf]
        %v5710 = vld [vmem:[#allocation2 + $0x50] sm:$0xf]
        %v5711 = vld [vmem:[#allocation2 + $0x54] sm:$0xf]
        %v5712 = vld [vmem:[#allocation2 + $0x58] sm:$0xf]
        %v5713 = vld [vmem:[#allocation2 + $0x5c] sm:$0xf]
        %v5714 = vld [vmem:[#allocation2 + $0x60] sm:$0xf]
        %v5715 = vld [vmem:[#allocation2 + $0x64] sm:$0xf]
        %v5716 = vld [vmem:[#allocation2 + $0x68] sm:$0xf]
        %v5717 = vld [vmem:[#allocation2 + $0x6c] sm:$0xf]
        %v5718 = vld [vmem:[#allocation2 + $0x70] sm:$0xf]
        %v5719 = vld [vmem:[#allocation2 + $0x74] sm:$0xf]
        %v5720 = vld [vmem:[#allocation2 + $0x78] sm:$0xf]
        %v5721 = vld [vmem:[#allocation2 + $0x7c] sm:$0xf]
        %v5722 = vld [vmem:[#allocation2 + $0x80] sm:$0xf]
        %v5723 = vld [vmem:[#allocation2 + $0x84] sm:$0xf]
        %v5724 = vld [vmem:[#allocation2 + $0x88] sm:$0xf]
        %v5725 = vld [vmem:[#allocation2 + $0x8c] sm:$0xf]
        %v5726 = vld [vmem:[#allocation2 + $0x90] sm:$0x1]
        %v5727 = vsel %vm4209, %v5694, 0
        %v5728 = vsel %vm4210, %v5695, 0
        %v5729 = vsel %vm4211, %v5696, 0
        %v5730 = vsel %vm4212, %v5697, 0
        %v5731 = vsel %vm4213, %v5698, 0
        %v5732 = vsel %vm4214, %v5699, 0
        %v5733 = vsel %vm4215, %v5700, 0
        %v5734 = vsel %vm4216, %v5701, 0
        %v5735 = vsel %vm4217, %v5702, 0
        %v5736 = vsel %vm4218, %v5703, 0
        %v5737 = vsel %vm4219, %v5704, 0
        %v5738 = vsel %vm4220, %v5705, 0
        %v5739 = vsel %vm4221, %v5706, 0
        %v5740 = vsel %vm4222, %v5707, 0
        %v5741 = vsel %vm4223, %v5708, 0
        %v5742 = vsel %vm4224, %v5709, 0
        %v5743 = vsel %vm4225, %v5710, 0
        %v5744 = vsel %vm4226, %v5711, 0
        %v5745 = vsel %vm4227, %v5712, 0
        %v5746 = vsel %vm4228, %v5713, 0
        %v5747 = vsel %vm4229, %v5714, 0
        %v5748 = vsel %vm4230, %v5715, 0
        %v5749 = vsel %vm4231, %v5716, 0
        %v5750 = vsel %vm4232, %v5717, 0
        %v5751 = vsel %vm4233, %v5718, 0
        %v5752 = vsel %vm4234, %v5719, 0
        %v5753 = vsel %vm4235, %v5720, 0
        %v5754 = vsel %vm4236, %v5721, 0
        %v5755 = vsel %vm4237, %v5722, 0
        %v5756 = vsel %vm4238, %v5723, 0
        %v5757 = vsel %vm4239, %v5724, 0
        %v5758 = vsel %vm4240, %v5725, 0
        %v5759 = vsel %vm4241, %v5726, 0
        %s5760 = scalar_lea.vmem %s6, 160
        %v5761 = vld [vmem:[%s5760] sm:$0xf]
        %v5762 = vld [vmem:[%s5760 + $0x4] sm:$0xf]
        %v5763 = vld [vmem:[%s5760 + $0x8] sm:$0xf]
        %v5764 = vld [vmem:[%s5760 + $0xc] sm:$0xf]
        %v5765 = vld [vmem:[%s5760 + $0x10] sm:$0xf]
        %v5766 = vld [vmem:[%s5760 + $0x14] sm:$0xf]
        %v5767 = vld [vmem:[%s5760 + $0x18] sm:$0xf]
        %v5768 = vld [vmem:[%s5760 + $0x1c] sm:$0xf]
        %v5802 = vunpack.c.l.b16 %v5727
        %v5803 = vunpack.c.l.b16 %v5728
        %v5804 = vunpack.c.l.b16 %v5729
        %v5805 = vunpack.c.l.b16 %v5730
        %v5806 = vunpack.c.l.b16 %v5731
        %v5807 = vunpack.c.l.b16 %v5732
        %v5808 = vunpack.c.l.b16 %v5733
        %v5809 = vunpack.c.l.b16 %v5734
        %v5810 = vunpack.c.l.b16 %v5735
        %v5811 = vunpack.c.l.b16 %v5736
        %v5812 = vunpack.c.l.b16 %v5737
        %v5813 = vunpack.c.l.b16 %v5738
        %v5814 = vunpack.c.l.b16 %v5739
        %v5815 = vunpack.c.l.b16 %v5740
        %v5816 = vunpack.c.l.b16 %v5741
        %v5817 = vunpack.c.l.b16 %v5742
        %v5818 = vunpack.c.l.b16 %v5743
        %v5819 = vunpack.c.l.b16 %v5744
        %v5820 = vunpack.c.l.b16 %v5745
        %v5821 = vunpack.c.l.b16 %v5746
        %v5822 = vunpack.c.l.b16 %v5747
        %v5823 = vunpack.c.l.b16 %v5748
        %v5824 = vunpack.c.l.b16 %v5749
        %v5825 = vunpack.c.l.b16 %v5750
        %v5826 = vunpack.c.l.b16 %v5751
        %v5827 = vunpack.c.l.b16 %v5752
        %v5828 = vunpack.c.l.b16 %v5753
        %v5829 = vunpack.c.l.b16 %v5754
        %v5830 = vunpack.c.l.b16 %v5755
        %v5831 = vunpack.c.l.b16 %v5756
        %v5832 = vunpack.c.l.b16 %v5757
        %v5833 = vunpack.c.l.b16 %v5758
        %v5834 = vunpack.c.l.b16 %v5759
        %v5835 = vpack.c.b16 %v5803, %v5802
        %v5836 = vpack.c.b16 %v5805, %v5804
        %v5837 = vpack.c.b16 %v5807, %v5806
        %v5838 = vpack.c.b16 %v5809, %v5808
        %v5839 = vpack.c.b16 %v5811, %v5810
        %v5840 = vpack.c.b16 %v5813, %v5812
        %v5841 = vpack.c.b16 %v5815, %v5814
        %v5842 = vpack.c.b16 %v5817, %v5816
        %v5843 = vpack.c.b16 %v5819, %v5818
        %v5844 = vpack.c.b16 %v5821, %v5820
        %v5845 = vpack.c.b16 %v5823, %v5822
        %v5846 = vpack.c.b16 %v5825, %v5824
        %v5847 = vpack.c.b16 %v5827, %v5826
        %v5848 = vpack.c.b16 %v5829, %v5828
        %v5849 = vpack.c.b16 %v5831, %v5830
        %v5850 = vpack.c.b16 %v5833, %v5832
        %v5851 = vpack.c.b16 %v5834, %v5834
        %v5853 = vshrl.u32 %v5835, 16
        %v5855 = vshll.u32 %v5835, 16
        %v5857 = vrot.slane %v5855, 1
        %v5858 = vor.u32 %v5853, %v5857
        %v5860 = vshll.u32 %v5836, 16
        %v5862 = vrot.slane %v5860, 1
        %v5863 = vsel %vm4367, %v5858, %v5862
        %v5864 = vshrl.u32 %v5836, 16
        %v5866 = vor.u32 %v5864, %v5862
        %v5868 = vshll.u32 %v5837, 16
        %v5870 = vrot.slane %v5868, 1
        %v5871 = vsel %vm4367, %v5866, %v5870
        %v5872 = vshrl.u32 %v5837, 16
        %v5874 = vor.u32 %v5872, %v5870
        %v5876 = vshll.u32 %v5838, 16
        %v5878 = vrot.slane %v5876, 1
        %v5879 = vsel %vm4367, %v5874, %v5878
        %v5880 = vshrl.u32 %v5838, 16
        %v5882 = vor.u32 %v5880, %v5878
        %v5884 = vshll.u32 %v5839, 16
        %v5886 = vrot.slane %v5884, 1
        %v5887 = vsel %vm4367, %v5882, %v5886
        %v5888 = vshrl.u32 %v5839, 16
        %v5890 = vor.u32 %v5888, %v5886
        %v5892 = vshll.u32 %v5840, 16
        %v5894 = vrot.slane %v5892, 1
        %v5895 = vsel %vm4367, %v5890, %v5894
        %v5896 = vshrl.u32 %v5840, 16
        %v5898 = vor.u32 %v5896, %v5894
        %v5900 = vshll.u32 %v5841, 16
        %v5902 = vrot.slane %v5900, 1
        %v5903 = vsel %vm4367, %v5898, %v5902
        %v5904 = vshrl.u32 %v5841, 16
        %v5906 = vor.u32 %v5904, %v5902
        %v5908 = vshll.u32 %v5842, 16
        %v5910 = vrot.slane %v5908, 1
        %v5911 = vsel %vm4367, %v5906, %v5910
        %v5912 = vshrl.u32 %v5842, 16
        %v5914 = vor.u32 %v5912, %v5910
        %v5916 = vshll.u32 %v5843, 16
        %v5918 = vrot.slane %v5916, 1
        %v5919 = vsel %vm4367, %v5914, %v5918
        %v5920 = vshrl.u32 %v5843, 16
        %v5922 = vor.u32 %v5920, %v5918
        %v5924 = vshll.u32 %v5844, 16
        %v5926 = vrot.slane %v5924, 1
        %v5927 = vsel %vm4367, %v5922, %v5926
        %v5928 = vshrl.u32 %v5844, 16
        %v5930 = vor.u32 %v5928, %v5926
        %v5932 = vshll.u32 %v5845, 16
        %v5934 = vrot.slane %v5932, 1
        %v5935 = vsel %vm4367, %v5930, %v5934
        %v5936 = vshrl.u32 %v5845, 16
        %v5938 = vor.u32 %v5936, %v5934
        %v5940 = vshll.u32 %v5846, 16
        %v5942 = vrot.slane %v5940, 1
        %v5943 = vsel %vm4367, %v5938, %v5942
        %v5944 = vshrl.u32 %v5846, 16
        %v5946 = vor.u32 %v5944, %v5942
        %v5948 = vshll.u32 %v5847, 16
        %v5950 = vrot.slane %v5948, 1
        %v5951 = vsel %vm4367, %v5946, %v5950
        %v5952 = vshrl.u32 %v5847, 16
        %v5954 = vor.u32 %v5952, %v5950
        %v5956 = vshll.u32 %v5848, 16
        %v5958 = vrot.slane %v5956, 1
        %v5959 = vsel %vm4367, %v5954, %v5958
        %v5960 = vshrl.u32 %v5848, 16
        %v5962 = vor.u32 %v5960, %v5958
        %v5964 = vshll.u32 %v5849, 16
        %v5966 = vrot.slane %v5964, 1
        %v5967 = vsel %vm4367, %v5962, %v5966
        %v5968 = vshrl.u32 %v5849, 16
        %v5970 = vor.u32 %v5968, %v5966
        %v5972 = vshll.u32 %v5850, 16
        %v5974 = vrot.slane %v5972, 1
        %v5975 = vsel %vm4367, %v5970, %v5974
        %v5976 = vshrl.u32 %v5850, 16
        %v5978 = vor.u32 %v5976, %v5974
        %v5980 = vshll.u32 %v5851, 16
        %v5982 = vrot.slane %v5980, 1
        %v5983 = vsel %vm4367, %v5978, %v5982
        %v5992 = vunpack.c.l.b16 %v5761
        %v5993 = vunpack.c.l.b16 %v5762
        %v5994 = vunpack.c.l.b16 %v5763
        %v5995 = vunpack.c.l.b16 %v5764
        %v5996 = vunpack.c.l.b16 %v5765
        %v5997 = vunpack.c.l.b16 %v5766
        %v5998 = vunpack.c.l.b16 %v5767
        %v5999 = vunpack.c.l.b16 %v5768
        %v6000 = vpack.c.b16 %v5993, %v5992
        %v6001 = vpack.c.b16 %v5995, %v5994
        %v6002 = vpack.c.b16 %v5997, %v5996
        %v6003 = vpack.c.b16 %v5999, %v5998
        %v6009 = vsel %vm2951, %v5863, 0
        %v6012 = vsel %vm2951, %v5871, 0
        %v6015 = vsel %vm2951, %v5879, 0
        %v6018 = vsel %vm2951, %v5887, 0
        %v6021 = vsel %vm2951, %v5895, 0
        %v6024 = vsel %vm2951, %v5903, 0
        %v6027 = vsel %vm2951, %v5911, 0
        %v6030 = vsel %vm2951, %v5919, 0
        %v6033 = vsel %vm2951, %v5927, 0
        %v6036 = vsel %vm2951, %v5935, 0
        %v6039 = vsel %vm2951, %v5943, 0
        %v6042 = vsel %vm2951, %v5951, 0
        %v6045 = vsel %vm2951, %v5959, 0
        %v6048 = vsel %vm2951, %v5967, 0
        %v6051 = vsel %vm2951, %v5975, 0
        %v6054 = vsel %vm2951, %v5983, 0
        %6056 = vmatprep.subr.bf16.mxu0 0
        %6057 = vmatpush1.bf16.msra.mxu0 0
        %6058 = vmatprep.subr.bf16.mxu0 0
        %6059 = vmatpush1.bf16.msra.mxu0 0
        %6060 = vmatprep.subr.bf16.mxu0 0
        %6061 = vmatpush1.bf16.msra.mxu0 0
        %6062 = vmatprep.subr.bf16.mxu0 0
        %6063 = vmatpush1.bf16.msra.mxu0 0
        %6064 = vmatprep.subr.bf16.mxu0 0
        %6065 = vmatpush1.bf16.msra.mxu0 %v6003
        %6066 = vmatprep.subr.bf16.mxu0 0
        %6067 = vmatpush1.bf16.msra.mxu0 %v6002
        %6068 = vmatprep.subr.bf16.mxu0 0
        %6069 = vmatpush1.bf16.msra.mxu0 %v6001
        %6070 = vmatprep.subr.bf16.mxu0 0
        %6071 = vmatpush1.bf16.msra.mxu0 %v6000
        %6072 = vmatprep.subr.bf16.mxu0 0
        %6073 = vmatpush2.bf16.msra.mxu0 0
        %6074 = vmatprep.subr.bf16.mxu0 0
        %6075 = vmatpush2.bf16.msra.mxu0 0
        %6076 = vmatprep.subr.bf16.mxu0 0
        %6077 = vmatpush2.bf16.msra.mxu0 0
        %6078 = vmatprep.subr.bf16.mxu0 0
        %6079 = vmatpush2.bf16.msra.mxu0 0
        %6080 = vmatprep.subr.bf16.mxu0 0
        %6081 = vmatpush2.bf16.msra.mxu0 0
        %6082 = vmatprep.subr.bf16.mxu0 0
        %6083 = vmatpush2.bf16.msra.mxu0 0
        %6084 = vmatprep.subr.bf16.mxu0 0
        %6085 = vmatpush2.bf16.msra.mxu0 0
        %6086 = vmatprep.subr.bf16.mxu0 0
        %6087 = vmatpush2.bf16.msra.mxu0 0
        %6088 = vmatprep.mubr.bf16.mxu0 0
        %6089 = vmatmul.mubr.bf16.gmra.mxu0 %v6009
        %v6090 = vpop.f32.mrf.mxu0
        %v6091 = vadd.f32 0.0, %v6090
        %v6092 = vpop.f32.mrf.mxu0
        %v6093 = vpop.f32.mrf.mxu0
        %v6094 = vadd.f32 0.0, %v6093
        %v6095 = vpop.f32.mrf.mxu0
        %6096 = vmatprep.mubr.bf16.mxu0 0
        %6097 = vmatmul.mubr.bf16.gmra.mxu0 %v6012
        %v6098 = vpop.f32.mrf.mxu0
        %v6099 = vadd.f32 0.0, %v6098
        %v6100 = vpop.f32.mrf.mxu0
        %v6101 = vpop.f32.mrf.mxu0
        %v6102 = vadd.f32 0.0, %v6101
        %v6103 = vpop.f32.mrf.mxu0
        %6104 = vmatprep.mubr.bf16.mxu0 0
        %6105 = vmatmul.mubr.bf16.gmra.mxu0 %v6015
        %v6106 = vpop.f32.mrf.mxu0
        %v6107 = vadd.f32 0.0, %v6106
        %v6108 = vpop.f32.mrf.mxu0
        %v6109 = vpop.f32.mrf.mxu0
        %v6110 = vadd.f32 0.0, %v6109
        %v6111 = vpop.f32.mrf.mxu0
        %6112 = vmatprep.mubr.bf16.mxu0 0
        %6113 = vmatmul.mubr.bf16.gmra.mxu0 %v6018
        %v6114 = vpop.f32.mrf.mxu0
        %v6115 = vadd.f32 0.0, %v6114
        %v6116 = vpop.f32.mrf.mxu0
        %v6117 = vpop.f32.mrf.mxu0
        %v6118 = vadd.f32 0.0, %v6117
        %v6119 = vpop.f32.mrf.mxu0
        %6120 = vmatprep.mubr.bf16.mxu0 0
        %6121 = vmatmul.mubr.bf16.gmra.mxu0 %v6021
        %v6122 = vpop.f32.mrf.mxu0
        %v6123 = vadd.f32 0.0, %v6122
        %v6124 = vpop.f32.mrf.mxu0
        %v6125 = vpop.f32.mrf.mxu0
        %v6126 = vadd.f32 0.0, %v6125
        %v6127 = vpop.f32.mrf.mxu0
        %6128 = vmatprep.mubr.bf16.mxu0 0
        %6129 = vmatmul.mubr.bf16.gmra.mxu0 %v6024
        %v6130 = vpop.f32.mrf.mxu0
        %v6131 = vadd.f32 0.0, %v6130
        %v6132 = vpop.f32.mrf.mxu0
        %v6133 = vpop.f32.mrf.mxu0
        %v6134 = vadd.f32 0.0, %v6133
        %v6135 = vpop.f32.mrf.mxu0
        %6136 = vmatprep.mubr.bf16.mxu0 0
        %6137 = vmatmul.mubr.bf16.gmra.mxu0 %v6027
        %v6138 = vpop.f32.mrf.mxu0
        %v6139 = vadd.f32 0.0, %v6138
        %v6140 = vpop.f32.mrf.mxu0
        %v6141 = vpop.f32.mrf.mxu0
        %v6142 = vadd.f32 0.0, %v6141
        %v6143 = vpop.f32.mrf.mxu0
        %6144 = vmatprep.mubr.bf16.mxu0 0
        %6145 = vmatmul.mubr.bf16.gmra.mxu0 %v6030
        %v6146 = vpop.f32.mrf.mxu0
        %v6147 = vadd.f32 0.0, %v6146
        %v6148 = vpop.f32.mrf.mxu0
        %v6149 = vpop.f32.mrf.mxu0
        %v6150 = vadd.f32 0.0, %v6149
        %v6151 = vpop.f32.mrf.mxu0
        %6152 = vmatprep.mubr.bf16.mxu0 0
        %6153 = vmatmul.mubr.bf16.gmra.mxu0 %v6033
        %v6154 = vpop.f32.mrf.mxu0
        %v6155 = vadd.f32 0.0, %v6154
        %v6156 = vpop.f32.mrf.mxu0
        %v6157 = vpop.f32.mrf.mxu0
        %v6158 = vadd.f32 0.0, %v6157
        %v6159 = vpop.f32.mrf.mxu0
        %6160 = vmatprep.mubr.bf16.mxu0 0
        %6161 = vmatmul.mubr.bf16.gmra.mxu0 %v6036
        %v6162 = vpop.f32.mrf.mxu0
        %v6163 = vadd.f32 0.0, %v6162
        %v6164 = vpop.f32.mrf.mxu0
        %v6165 = vpop.f32.mrf.mxu0
        %v6166 = vadd.f32 0.0, %v6165
        %v6167 = vpop.f32.mrf.mxu0
        %6168 = vmatprep.mubr.bf16.mxu0 0
        %6169 = vmatmul.mubr.bf16.gmra.mxu0 %v6039
        %v6170 = vpop.f32.mrf.mxu0
        %v6171 = vadd.f32 0.0, %v6170
        %v6172 = vpop.f32.mrf.mxu0
        %v6173 = vpop.f32.mrf.mxu0
        %v6174 = vadd.f32 0.0, %v6173
        %v6175 = vpop.f32.mrf.mxu0
        %6176 = vmatprep.mubr.bf16.mxu0 0
        %6177 = vmatmul.mubr.bf16.gmra.mxu0 %v6042
        %v6178 = vpop.f32.mrf.mxu0
        %v6179 = vadd.f32 0.0, %v6178
        %v6180 = vpop.f32.mrf.mxu0
        %v6181 = vpop.f32.mrf.mxu0
        %v6182 = vadd.f32 0.0, %v6181
        %v6183 = vpop.f32.mrf.mxu0
        %6184 = vmatprep.mubr.bf16.mxu0 0
        %6185 = vmatmul.mubr.bf16.gmra.mxu0 %v6045
        %v6186 = vpop.f32.mrf.mxu0
        %v6187 = vadd.f32 0.0, %v6186
        %v6188 = vpop.f32.mrf.mxu0
        %v6189 = vpop.f32.mrf.mxu0
        %v6190 = vadd.f32 0.0, %v6189
        %v6191 = vpop.f32.mrf.mxu0
        %6192 = vmatprep.mubr.bf16.mxu0 0
        %6193 = vmatmul.mubr.bf16.gmra.mxu0 %v6048
        %v6194 = vpop.f32.mrf.mxu0
        %v6195 = vadd.f32 0.0, %v6194
        %v6196 = vpop.f32.mrf.mxu0
        %v6197 = vpop.f32.mrf.mxu0
        %v6198 = vadd.f32 0.0, %v6197
        %v6199 = vpop.f32.mrf.mxu0
        %6200 = vmatprep.mubr.bf16.mxu0 0
        %6201 = vmatmul.mubr.bf16.gmra.mxu0 %v6051
        %v6202 = vpop.f32.mrf.mxu0
        %v6203 = vadd.f32 0.0, %v6202
        %v6204 = vpop.f32.mrf.mxu0
        %v6205 = vpop.f32.mrf.mxu0
        %v6206 = vadd.f32 0.0, %v6205
        %v6207 = vpop.f32.mrf.mxu0
        %6208 = vmatprep.mubr.bf16.mxu0 0
        %6209 = vmatmul.mubr.bf16.gmra.mxu0 %v6054
        %v6210 = vpop.f32.mrf.mxu0
        %v6211 = vadd.f32 0.0, %v6210
        %v6212 = vpop.f32.mrf.mxu0
        %v6213 = vpop.f32.mrf.mxu0
        %v6214 = vadd.f32 0.0, %v6213
        %v6215 = vpop.f32.mrf.mxu0
        %6216 = vdwg.mxu0
        %v6217 = vadd.f32 %v5662, %v6091
        %v6218 = vadd.f32 %v5663, %v6094
        %v6219 = vadd.f32 %v5664, %v6099
        %v6220 = vadd.f32 %v5665, %v6102
        %v6221 = vadd.f32 %v5666, %v6107
        %v6222 = vadd.f32 %v5667, %v6110
        %v6223 = vadd.f32 %v5668, %v6115
        %v6224 = vadd.f32 %v5669, %v6118
        %v6225 = vadd.f32 %v5670, %v6123
        %v6226 = vadd.f32 %v5671, %v6126
        %v6227 = vadd.f32 %v5672, %v6131
        %v6228 = vadd.f32 %v5673, %v6134
        %v6229 = vadd.f32 %v5674, %v6139
        %v6230 = vadd.f32 %v5675, %v6142
        %v6231 = vadd.f32 %v5676, %v6147
        %v6232 = vadd.f32 %v5677, %v6150
        %v6233 = vadd.f32 %v5678, %v6155
        %v6234 = vadd.f32 %v5679, %v6158
        %v6235 = vadd.f32 %v5680, %v6163
        %v6236 = vadd.f32 %v5681, %v6166
        %v6237 = vadd.f32 %v5682, %v6171
        %v6238 = vadd.f32 %v5683, %v6174
        %v6239 = vadd.f32 %v5684, %v6179
        %v6240 = vadd.f32 %v5685, %v6182
        %v6241 = vadd.f32 %v5686, %v6187
        %v6242 = vadd.f32 %v5687, %v6190
        %v6243 = vadd.f32 %v5688, %v6195
        %v6244 = vadd.f32 %v5689, %v6198
        %v6245 = vadd.f32 %v5690, %v6203
        %v6246 = vadd.f32 %v5691, %v6206
        %v6247 = vadd.f32 %v5692, %v6211
        %v6248 = vadd.f32 %v5693, %v6214
        %v6249 = vld [vmem:[#allocation2 + $0x14] sm:$0x8]
        %v6250 = vld [vmem:[#allocation2 + $0x18] sm:$0xf]
        %v6251 = vld [vmem:[#allocation2 + $0x1c] sm:$0xf]
        %v6252 = vld [vmem:[#allocation2 + $0x20] sm:$0xf]
        %v6253 = vld [vmem:[#allocation2 + $0x24] sm:$0xf]
        %v6254 = vld [vmem:[#allocation2 + $0x28] sm:$0xf]
        %v6255 = vld [vmem:[#allocation2 + $0x2c] sm:$0xf]
        %v6256 = vld [vmem:[#allocation2 + $0x30] sm:$0xf]
        %v6257 = vld [vmem:[#allocation2 + $0x34] sm:$0xf]
        %v6258 = vld [vmem:[#allocation2 + $0x38] sm:$0xf]
        %v6259 = vld [vmem:[#allocation2 + $0x3c] sm:$0xf]
        %v6260 = vld [vmem:[#allocation2 + $0x40] sm:$0xf]
        %v6261 = vld [vmem:[#allocation2 + $0x44] sm:$0xf]
        %v6262 = vld [vmem:[#allocation2 + $0x48] sm:$0xf]
        %v6263 = vld [vmem:[#allocation2 + $0x4c] sm:$0xf]
        %v6264 = vld [vmem:[#allocation2 + $0x50] sm:$0xf]
        %v6265 = vld [vmem:[#allocation2 + $0x54] sm:$0xf]
        %v6266 = vld [vmem:[#allocation2 + $0x58] sm:$0xf]
        %v6267 = vld [vmem:[#allocation2 + $0x5c] sm:$0xf]
        %v6268 = vld [vmem:[#allocation2 + $0x60] sm:$0xf]
        %v6269 = vld [vmem:[#allocation2 + $0x64] sm:$0xf]
        %v6270 = vld [vmem:[#allocation2 + $0x68] sm:$0xf]
        %v6271 = vld [vmem:[#allocation2 + $0x6c] sm:$0xf]
        %v6272 = vld [vmem:[#allocation2 + $0x70] sm:$0xf]
        %v6273 = vld [vmem:[#allocation2 + $0x74] sm:$0xf]
        %v6274 = vld [vmem:[#allocation2 + $0x78] sm:$0xf]
        %v6275 = vld [vmem:[#allocation2 + $0x7c] sm:$0xf]
        %v6276 = vld [vmem:[#allocation2 + $0x80] sm:$0xf]
        %v6277 = vld [vmem:[#allocation2 + $0x84] sm:$0xf]
        %v6278 = vld [vmem:[#allocation2 + $0x88] sm:$0xf]
        %v6279 = vld [vmem:[#allocation2 + $0x8c] sm:$0xf]
        %v6280 = vld [vmem:[#allocation2 + $0x90] sm:$0xf]
        %v6281 = vld [vmem:[#allocation2 + $0x94] sm:$0xf]
        %v6282 = vsel %vm2764, %v6249, 0
        %v6283 = vsel %vm2765, %v6250, 0
        %v6284 = vsel %vm2766, %v6251, 0
        %v6285 = vsel %vm2767, %v6252, 0
        %v6286 = vsel %vm2768, %v6253, 0
        %v6287 = vsel %vm2769, %v6254, 0
        %v6288 = vsel %vm2770, %v6255, 0
        %v6289 = vsel %vm2771, %v6256, 0
        %v6290 = vsel %vm2772, %v6257, 0
        %v6291 = vsel %vm2773, %v6258, 0
        %v6292 = vsel %vm2774, %v6259, 0
        %v6293 = vsel %vm2775, %v6260, 0
        %v6294 = vsel %vm2776, %v6261, 0
        %v6295 = vsel %vm2777, %v6262, 0
        %v6296 = vsel %vm2778, %v6263, 0
        %v6297 = vsel %vm2779, %v6264, 0
        %v6298 = vsel %vm2780, %v6265, 0
        %v6299 = vsel %vm2781, %v6266, 0
        %v6300 = vsel %vm2782, %v6267, 0
        %v6301 = vsel %vm2783, %v6268, 0
        %v6302 = vsel %vm2784, %v6269, 0
        %v6303 = vsel %vm2785, %v6270, 0
        %v6304 = vsel %vm2786, %v6271, 0
        %v6305 = vsel %vm2787, %v6272, 0
        %v6306 = vsel %vm2788, %v6273, 0
        %v6307 = vsel %vm2789, %v6274, 0
        %v6308 = vsel %vm2790, %v6275, 0
        %v6309 = vsel %vm2791, %v6276, 0
        %v6310 = vsel %vm2792, %v6277, 0
        %v6311 = vsel %vm2793, %v6278, 0
        %v6312 = vsel %vm2794, %v6279, 0
        %v6313 = vsel %vm2795, %v6280, 0
        %v6314 = vsel %vm2796, %v6281, 0
        %s6315 = scalar_lea.vmem %s6, 192
        %v6316 = vld [vmem:[%s6315] sm:$0xf]
        %v6317 = vld [vmem:[%s6315 + $0x4] sm:$0xf]
        %v6318 = vld [vmem:[%s6315 + $0x8] sm:$0xf]
        %v6319 = vld [vmem:[%s6315 + $0xc] sm:$0xf]
        %v6320 = vld [vmem:[%s6315 + $0x10] sm:$0xf]
        %v6321 = vld [vmem:[%s6315 + $0x14] sm:$0xf]
        %v6322 = vld [vmem:[%s6315 + $0x18] sm:$0xf]
        %v6323 = vld [vmem:[%s6315 + $0x1c] sm:$0xf]
        %v6357 = vunpack.c.l.b16 %v6282
        %v6358 = vunpack.c.l.b16 %v6283
        %v6359 = vunpack.c.l.b16 %v6284
        %v6360 = vunpack.c.l.b16 %v6285
        %v6361 = vunpack.c.l.b16 %v6286
        %v6362 = vunpack.c.l.b16 %v6287
        %v6363 = vunpack.c.l.b16 %v6288
        %v6364 = vunpack.c.l.b16 %v6289
        %v6365 = vunpack.c.l.b16 %v6290
        %v6366 = vunpack.c.l.b16 %v6291
        %v6367 = vunpack.c.l.b16 %v6292
        %v6368 = vunpack.c.l.b16 %v6293
        %v6369 = vunpack.c.l.b16 %v6294
        %v6370 = vunpack.c.l.b16 %v6295
        %v6371 = vunpack.c.l.b16 %v6296
        %v6372 = vunpack.c.l.b16 %v6297
        %v6373 = vunpack.c.l.b16 %v6298
        %v6374 = vunpack.c.l.b16 %v6299
        %v6375 = vunpack.c.l.b16 %v6300
        %v6376 = vunpack.c.l.b16 %v6301
        %v6377 = vunpack.c.l.b16 %v6302
        %v6378 = vunpack.c.l.b16 %v6303
        %v6379 = vunpack.c.l.b16 %v6304
        %v6380 = vunpack.c.l.b16 %v6305
        %v6381 = vunpack.c.l.b16 %v6306
        %v6382 = vunpack.c.l.b16 %v6307
        %v6383 = vunpack.c.l.b16 %v6308
        %v6384 = vunpack.c.l.b16 %v6309
        %v6385 = vunpack.c.l.b16 %v6310
        %v6386 = vunpack.c.l.b16 %v6311
        %v6387 = vunpack.c.l.b16 %v6312
        %v6388 = vunpack.c.l.b16 %v6313
        %v6389 = vunpack.c.l.b16 %v6314
        %v6390 = vpack.c.b16 %v6358, %v6357
        %v6391 = vpack.c.b16 %v6360, %v6359
        %v6392 = vpack.c.b16 %v6362, %v6361
        %v6393 = vpack.c.b16 %v6364, %v6363
        %v6394 = vpack.c.b16 %v6366, %v6365
        %v6395 = vpack.c.b16 %v6368, %v6367
        %v6396 = vpack.c.b16 %v6370, %v6369
        %v6397 = vpack.c.b16 %v6372, %v6371
        %v6398 = vpack.c.b16 %v6374, %v6373
        %v6399 = vpack.c.b16 %v6376, %v6375
        %v6400 = vpack.c.b16 %v6378, %v6377
        %v6401 = vpack.c.b16 %v6380, %v6379
        %v6402 = vpack.c.b16 %v6382, %v6381
        %v6403 = vpack.c.b16 %v6384, %v6383
        %v6404 = vpack.c.b16 %v6386, %v6385
        %v6405 = vpack.c.b16 %v6388, %v6387
        %v6406 = vpack.c.b16 %v6389, %v6389
        %v6408 = vshrl.u32 %v6390, 16
        %v6410 = vrot.slane %v6408, 3
        %v6411 = vshll.u32 %v6390, 16
        %v6413 = vrot.slane %v6411, 4
        %v6414 = vor.u32 %v6410, %v6413
        %v6416 = vshrl.u32 %v6391, 16
        %v6418 = vrot.slane %v6416, 3
        %v6419 = vshll.u32 %v6391, 16
        %v6421 = vrot.slane %v6419, 4
        %v6422 = vor.u32 %v6418, %v6421
        %v6423 = vsel %vm3244, %v6414, %v6422
        %v6425 = vshrl.u32 %v6392, 16
        %v6427 = vrot.slane %v6425, 3
        %v6428 = vshll.u32 %v6392, 16
        %v6430 = vrot.slane %v6428, 4
        %v6431 = vor.u32 %v6427, %v6430
        %v6432 = vsel %vm3244, %v6422, %v6431
        %v6434 = vshrl.u32 %v6393, 16
        %v6436 = vrot.slane %v6434, 3
        %v6437 = vshll.u32 %v6393, 16
        %v6439 = vrot.slane %v6437, 4
        %v6440 = vor.u32 %v6436, %v6439
        %v6441 = vsel %vm3244, %v6431, %v6440
        %v6443 = vshrl.u32 %v6394, 16
        %v6445 = vrot.slane %v6443, 3
        %v6446 = vshll.u32 %v6394, 16
        %v6448 = vrot.slane %v6446, 4
        %v6449 = vor.u32 %v6445, %v6448
        %v6450 = vsel %vm3244, %v6440, %v6449
        %v6452 = vshrl.u32 %v6395, 16
        %v6454 = vrot.slane %v6452, 3
        %v6455 = vshll.u32 %v6395, 16
        %v6457 = vrot.slane %v6455, 4
        %v6458 = vor.u32 %v6454, %v6457
        %v6459 = vsel %vm3244, %v6449, %v6458
        %v6461 = vshrl.u32 %v6396, 16
        %v6463 = vrot.slane %v6461, 3
        %v6464 = vshll.u32 %v6396, 16
        %v6466 = vrot.slane %v6464, 4
        %v6467 = vor.u32 %v6463, %v6466
        %v6468 = vsel %vm3244, %v6458, %v6467
        %v6470 = vshrl.u32 %v6397, 16
        %v6472 = vrot.slane %v6470, 3
        %v6473 = vshll.u32 %v6397, 16
        %v6475 = vrot.slane %v6473, 4
        %v6476 = vor.u32 %v6472, %v6475
        %v6477 = vsel %vm3244, %v6467, %v6476
        %v6479 = vshrl.u32 %v6398, 16
        %v6481 = vrot.slane %v6479, 3
        %v6482 = vshll.u32 %v6398, 16
        %v6484 = vrot.slane %v6482, 4
        %v6485 = vor.u32 %v6481, %v6484
        %v6486 = vsel %vm3244, %v6476, %v6485
        %v6488 = vshrl.u32 %v6399, 16
        %v6490 = vrot.slane %v6488, 3
        %v6491 = vshll.u32 %v6399, 16
        %v6493 = vrot.slane %v6491, 4
        %v6494 = vor.u32 %v6490, %v6493
        %v6495 = vsel %vm3244, %v6485, %v6494
        %v6497 = vshrl.u32 %v6400, 16
        %v6499 = vrot.slane %v6497, 3
        %v6500 = vshll.u32 %v6400, 16
        %v6502 = vrot.slane %v6500, 4
        %v6503 = vor.u32 %v6499, %v6502
        %v6504 = vsel %vm3244, %v6494, %v6503
        %v6506 = vshrl.u32 %v6401, 16
        %v6508 = vrot.slane %v6506, 3
        %v6509 = vshll.u32 %v6401, 16
        %v6511 = vrot.slane %v6509, 4
        %v6512 = vor.u32 %v6508, %v6511
        %v6513 = vsel %vm3244, %v6503, %v6512
        %v6515 = vshrl.u32 %v6402, 16
        %v6517 = vrot.slane %v6515, 3
        %v6518 = vshll.u32 %v6402, 16
        %v6520 = vrot.slane %v6518, 4
        %v6521 = vor.u32 %v6517, %v6520
        %v6522 = vsel %vm3244, %v6512, %v6521
        %v6524 = vshrl.u32 %v6403, 16
        %v6526 = vrot.slane %v6524, 3
        %v6527 = vshll.u32 %v6403, 16
        %v6529 = vrot.slane %v6527, 4
        %v6530 = vor.u32 %v6526, %v6529
        %v6531 = vsel %vm3244, %v6521, %v6530
        %v6533 = vshrl.u32 %v6404, 16
        %v6535 = vrot.slane %v6533, 3
        %v6536 = vshll.u32 %v6404, 16
        %v6538 = vrot.slane %v6536, 4
        %v6539 = vor.u32 %v6535, %v6538
        %v6540 = vsel %vm3244, %v6530, %v6539
        %v6542 = vshrl.u32 %v6405, 16
        %v6544 = vrot.slane %v6542, 3
        %v6545 = vshll.u32 %v6405, 16
        %v6547 = vrot.slane %v6545, 4
        %v6548 = vor.u32 %v6544, %v6547
        %v6549 = vsel %vm3244, %v6539, %v6548
        %v6551 = vshrl.u32 %v6406, 16
        %v6553 = vrot.slane %v6551, 3
        %v6554 = vshll.u32 %v6406, 16
        %v6556 = vrot.slane %v6554, 4
        %v6557 = vor.u32 %v6553, %v6556
        %v6558 = vsel %vm3244, %v6548, %v6557
        %v6567 = vunpack.c.l.b16 %v6316
        %v6568 = vunpack.c.l.b16 %v6317
        %v6569 = vunpack.c.l.b16 %v6318
        %v6570 = vunpack.c.l.b16 %v6319
        %v6571 = vunpack.c.l.b16 %v6320
        %v6572 = vunpack.c.l.b16 %v6321
        %v6573 = vunpack.c.l.b16 %v6322
        %v6574 = vunpack.c.l.b16 %v6323
        %v6575 = vpack.c.b16 %v6568, %v6567
        %v6576 = vpack.c.b16 %v6570, %v6569
        %v6577 = vpack.c.b16 %v6572, %v6571
        %v6578 = vpack.c.b16 %v6574, %v6573
        %v6584 = vsel %vm2951, %v6423, 0
        %v6587 = vsel %vm2951, %v6432, 0
        %v6590 = vsel %vm2951, %v6441, 0
        %v6593 = vsel %vm2951, %v6450, 0
        %v6596 = vsel %vm2951, %v6459, 0
        %v6599 = vsel %vm2951, %v6468, 0
        %v6602 = vsel %vm2951, %v6477, 0
        %v6605 = vsel %vm2951, %v6486, 0
        %v6608 = vsel %vm2951, %v6495, 0
        %v6611 = vsel %vm2951, %v6504, 0
        %v6614 = vsel %vm2951, %v6513, 0
        %v6617 = vsel %vm2951, %v6522, 0
        %v6620 = vsel %vm2951, %v6531, 0
        %v6623 = vsel %vm2951, %v6540, 0
        %v6626 = vsel %vm2951, %v6549, 0
        %v6629 = vsel %vm2951, %v6558, 0
        %6631 = vmatprep.subr.bf16.mxu0 0
        %6632 = vmatpush1.bf16.msra.mxu0 0
        %6633 = vmatprep.subr.bf16.mxu0 0
        %6634 = vmatpush1.bf16.msra.mxu0 0
        %6635 = vmatprep.subr.bf16.mxu0 0
        %6636 = vmatpush1.bf16.msra.mxu0 0
        %6637 = vmatprep.subr.bf16.mxu0 0
        %6638 = vmatpush1.bf16.msra.mxu0 0
        %6639 = vmatprep.subr.bf16.mxu0 0
        %6640 = vmatpush1.bf16.msra.mxu0 %v6578
        %6641 = vmatprep.subr.bf16.mxu0 0
        %6642 = vmatpush1.bf16.msra.mxu0 %v6577
        %6643 = vmatprep.subr.bf16.mxu0 0
        %6644 = vmatpush1.bf16.msra.mxu0 %v6576
        %6645 = vmatprep.subr.bf16.mxu0 0
        %6646 = vmatpush1.bf16.msra.mxu0 %v6575
        %6647 = vmatprep.subr.bf16.mxu0 0
        %6648 = vmatpush2.bf16.msra.mxu0 0
        %6649 = vmatprep.subr.bf16.mxu0 0
        %6650 = vmatpush2.bf16.msra.mxu0 0
        %6651 = vmatprep.subr.bf16.mxu0 0
        %6652 = vmatpush2.bf16.msra.mxu0 0
        %6653 = vmatprep.subr.bf16.mxu0 0
        %6654 = vmatpush2.bf16.msra.mxu0 0
        %6655 = vmatprep.subr.bf16.mxu0 0
        %6656 = vmatpush2.bf16.msra.mxu0 0
        %6657 = vmatprep.subr.bf16.mxu0 0
        %6658 = vmatpush2.bf16.msra.mxu0 0
        %6659 = vmatprep.subr.bf16.mxu0 0
        %6660 = vmatpush2.bf16.msra.mxu0 0
        %6661 = vmatprep.subr.bf16.mxu0 0
        %6662 = vmatpush2.bf16.msra.mxu0 0
        %6663 = vmatprep.mubr.bf16.mxu0 0
        %6664 = vmatmul.mubr.bf16.gmra.mxu0 %v6584
        %v6665 = vpop.f32.mrf.mxu0
        %v6666 = vadd.f32 0.0, %v6665
        %v6667 = vpop.f32.mrf.mxu0
        %v6668 = vpop.f32.mrf.mxu0
        %v6669 = vadd.f32 0.0, %v6668
        %v6670 = vpop.f32.mrf.mxu0
        %6671 = vmatprep.mubr.bf16.mxu0 0
        %6672 = vmatmul.mubr.bf16.gmra.mxu0 %v6587
        %v6673 = vpop.f32.mrf.mxu0
        %v6674 = vadd.f32 0.0, %v6673
        %v6675 = vpop.f32.mrf.mxu0
        %v6676 = vpop.f32.mrf.mxu0
        %v6677 = vadd.f32 0.0, %v6676
        %v6678 = vpop.f32.mrf.mxu0
        %6679 = vmatprep.mubr.bf16.mxu0 0
        %6680 = vmatmul.mubr.bf16.gmra.mxu0 %v6590
        %v6681 = vpop.f32.mrf.mxu0
        %v6682 = vadd.f32 0.0, %v6681
        %v6683 = vpop.f32.mrf.mxu0
        %v6684 = vpop.f32.mrf.mxu0
        %v6685 = vadd.f32 0.0, %v6684
        %v6686 = vpop.f32.mrf.mxu0
        %6687 = vmatprep.mubr.bf16.mxu0 0
        %6688 = vmatmul.mubr.bf16.gmra.mxu0 %v6593
        %v6689 = vpop.f32.mrf.mxu0
        %v6690 = vadd.f32 0.0, %v6689
        %v6691 = vpop.f32.mrf.mxu0
        %v6692 = vpop.f32.mrf.mxu0
        %v6693 = vadd.f32 0.0, %v6692
        %v6694 = vpop.f32.mrf.mxu0
        %6695 = vmatprep.mubr.bf16.mxu0 0
        %6696 = vmatmul.mubr.bf16.gmra.mxu0 %v6596
        %v6697 = vpop.f32.mrf.mxu0
        %v6698 = vadd.f32 0.0, %v6697
        %v6699 = vpop.f32.mrf.mxu0
        %v6700 = vpop.f32.mrf.mxu0
        %v6701 = vadd.f32 0.0, %v6700
        %v6702 = vpop.f32.mrf.mxu0
        %6703 = vmatprep.mubr.bf16.mxu0 0
        %6704 = vmatmul.mubr.bf16.gmra.mxu0 %v6599
        %v6705 = vpop.f32.mrf.mxu0
        %v6706 = vadd.f32 0.0, %v6705
        %v6707 = vpop.f32.mrf.mxu0
        %v6708 = vpop.f32.mrf.mxu0
        %v6709 = vadd.f32 0.0, %v6708
        %v6710 = vpop.f32.mrf.mxu0
        %6711 = vmatprep.mubr.bf16.mxu0 0
        %6712 = vmatmul.mubr.bf16.gmra.mxu0 %v6602
        %v6713 = vpop.f32.mrf.mxu0
        %v6714 = vadd.f32 0.0, %v6713
        %v6715 = vpop.f32.mrf.mxu0
        %v6716 = vpop.f32.mrf.mxu0
        %v6717 = vadd.f32 0.0, %v6716
        %v6718 = vpop.f32.mrf.mxu0
        %6719 = vmatprep.mubr.bf16.mxu0 0
        %6720 = vmatmul.mubr.bf16.gmra.mxu0 %v6605
        %v6721 = vpop.f32.mrf.mxu0
        %v6722 = vadd.f32 0.0, %v6721
        %v6723 = vpop.f32.mrf.mxu0
        %v6724 = vpop.f32.mrf.mxu0
        %v6725 = vadd.f32 0.0, %v6724
        %v6726 = vpop.f32.mrf.mxu0
        %6727 = vmatprep.mubr.bf16.mxu0 0
        %6728 = vmatmul.mubr.bf16.gmra.mxu0 %v6608
        %v6729 = vpop.f32.mrf.mxu0
        %v6730 = vadd.f32 0.0, %v6729
        %v6731 = vpop.f32.mrf.mxu0
        %v6732 = vpop.f32.mrf.mxu0
        %v6733 = vadd.f32 0.0, %v6732
        %v6734 = vpop.f32.mrf.mxu0
        %6735 = vmatprep.mubr.bf16.mxu0 0
        %6736 = vmatmul.mubr.bf16.gmra.mxu0 %v6611
        %v6737 = vpop.f32.mrf.mxu0
        %v6738 = vadd.f32 0.0, %v6737
        %v6739 = vpop.f32.mrf.mxu0
        %v6740 = vpop.f32.mrf.mxu0
        %v6741 = vadd.f32 0.0, %v6740
        %v6742 = vpop.f32.mrf.mxu0
        %6743 = vmatprep.mubr.bf16.mxu0 0
        %6744 = vmatmul.mubr.bf16.gmra.mxu0 %v6614
        %v6745 = vpop.f32.mrf.mxu0
        %v6746 = vadd.f32 0.0, %v6745
        %v6747 = vpop.f32.mrf.mxu0
        %v6748 = vpop.f32.mrf.mxu0
        %v6749 = vadd.f32 0.0, %v6748
        %v6750 = vpop.f32.mrf.mxu0
        %6751 = vmatprep.mubr.bf16.mxu0 0
        %6752 = vmatmul.mubr.bf16.gmra.mxu0 %v6617
        %v6753 = vpop.f32.mrf.mxu0
        %v6754 = vadd.f32 0.0, %v6753
        %v6755 = vpop.f32.mrf.mxu0
        %v6756 = vpop.f32.mrf.mxu0
        %v6757 = vadd.f32 0.0, %v6756
        %v6758 = vpop.f32.mrf.mxu0
        %6759 = vmatprep.mubr.bf16.mxu0 0
        %6760 = vmatmul.mubr.bf16.gmra.mxu0 %v6620
        %v6761 = vpop.f32.mrf.mxu0
        %v6762 = vadd.f32 0.0, %v6761
        %v6763 = vpop.f32.mrf.mxu0
        %v6764 = vpop.f32.mrf.mxu0
        %v6765 = vadd.f32 0.0, %v6764
        %v6766 = vpop.f32.mrf.mxu0
        %6767 = vmatprep.mubr.bf16.mxu0 0
        %6768 = vmatmul.mubr.bf16.gmra.mxu0 %v6623
        %v6769 = vpop.f32.mrf.mxu0
        %v6770 = vadd.f32 0.0, %v6769
        %v6771 = vpop.f32.mrf.mxu0
        %v6772 = vpop.f32.mrf.mxu0
        %v6773 = vadd.f32 0.0, %v6772
        %v6774 = vpop.f32.mrf.mxu0
        %6775 = vmatprep.mubr.bf16.mxu0 0
        %6776 = vmatmul.mubr.bf16.gmra.mxu0 %v6626
        %v6777 = vpop.f32.mrf.mxu0
        %v6778 = vadd.f32 0.0, %v6777
        %v6779 = vpop.f32.mrf.mxu0
        %v6780 = vpop.f32.mrf.mxu0
        %v6781 = vadd.f32 0.0, %v6780
        %v6782 = vpop.f32.mrf.mxu0
        %6783 = vmatprep.mubr.bf16.mxu0 0
        %6784 = vmatmul.mubr.bf16.gmra.mxu0 %v6629
        %v6785 = vpop.f32.mrf.mxu0
        %v6786 = vadd.f32 0.0, %v6785
        %v6787 = vpop.f32.mrf.mxu0
        %v6788 = vpop.f32.mrf.mxu0
        %v6789 = vadd.f32 0.0, %v6788
        %v6790 = vpop.f32.mrf.mxu0
        %6791 = vdwg.mxu0
        %v6792 = vadd.f32 %v6217, %v6666
        %v6793 = vadd.f32 %v6218, %v6669
        %v6794 = vadd.f32 %v6219, %v6674
        %v6795 = vadd.f32 %v6220, %v6677
        %v6796 = vadd.f32 %v6221, %v6682
        %v6797 = vadd.f32 %v6222, %v6685
        %v6798 = vadd.f32 %v6223, %v6690
        %v6799 = vadd.f32 %v6224, %v6693
        %v6800 = vadd.f32 %v6225, %v6698
        %v6801 = vadd.f32 %v6226, %v6701
        %v6802 = vadd.f32 %v6227, %v6706
        %v6803 = vadd.f32 %v6228, %v6709
        %v6804 = vadd.f32 %v6229, %v6714
        %v6805 = vadd.f32 %v6230, %v6717
        %v6806 = vadd.f32 %v6231, %v6722
        %v6807 = vadd.f32 %v6232, %v6725
        %v6808 = vadd.f32 %v6233, %v6730
        %v6809 = vadd.f32 %v6234, %v6733
        %v6810 = vadd.f32 %v6235, %v6738
        %v6811 = vadd.f32 %v6236, %v6741
        %v6812 = vadd.f32 %v6237, %v6746
        %v6813 = vadd.f32 %v6238, %v6749
        %v6814 = vadd.f32 %v6239, %v6754
        %v6815 = vadd.f32 %v6240, %v6757
        %v6816 = vadd.f32 %v6241, %v6762
        %v6817 = vadd.f32 %v6242, %v6765
        %v6818 = vadd.f32 %v6243, %v6770
        %v6819 = vadd.f32 %v6244, %v6773
        %v6820 = vadd.f32 %v6245, %v6778
        %v6821 = vadd.f32 %v6246, %v6781
        %v6822 = vadd.f32 %v6247, %v6786
        %v6823 = vadd.f32 %v6248, %v6789
        %s6824 = scalar_lea.vmem %s6, 224
        %v6825 = vld [vmem:[%s6824] sm:$0xf]
        %v6826 = vld [vmem:[%s6824 + $0x4] sm:$0xf]
        %v6827 = vld [vmem:[%s6824 + $0x8] sm:$0xf]
        %v6828 = vld [vmem:[%s6824 + $0xc] sm:$0xf]
        %v6829 = vld [vmem:[%s6824 + $0x10] sm:$0xf]
        %v6830 = vld [vmem:[%s6824 + $0x14] sm:$0xf]
        %v6831 = vld [vmem:[%s6824 + $0x18] sm:$0xf]
        %v6832 = vld [vmem:[%s6824 + $0x1c] sm:$0xf]
        %v6865 = vunpack.c.l.b16 %v6250
        %v6866 = vunpack.c.l.b16 %v6251
        %v6867 = vunpack.c.l.b16 %v6252
        %v6868 = vunpack.c.l.b16 %v6253
        %v6869 = vunpack.c.l.b16 %v6254
        %v6870 = vunpack.c.l.b16 %v6255
        %v6871 = vunpack.c.l.b16 %v6256
        %v6872 = vunpack.c.l.b16 %v6257
        %v6873 = vunpack.c.l.b16 %v6258
        %v6874 = vunpack.c.l.b16 %v6259
        %v6875 = vunpack.c.l.b16 %v6260
        %v6876 = vunpack.c.l.b16 %v6261
        %v6877 = vunpack.c.l.b16 %v6262
        %v6878 = vunpack.c.l.b16 %v6263
        %v6879 = vunpack.c.l.b16 %v6264
        %v6880 = vunpack.c.l.b16 %v6265
        %v6881 = vunpack.c.l.b16 %v6266
        %v6882 = vunpack.c.l.b16 %v6267
        %v6883 = vunpack.c.l.b16 %v6268
        %v6884 = vunpack.c.l.b16 %v6269
        %v6885 = vunpack.c.l.b16 %v6270
        %v6886 = vunpack.c.l.b16 %v6271
        %v6887 = vunpack.c.l.b16 %v6272
        %v6888 = vunpack.c.l.b16 %v6273
        %v6889 = vunpack.c.l.b16 %v6274
        %v6890 = vunpack.c.l.b16 %v6275
        %v6891 = vunpack.c.l.b16 %v6276
        %v6892 = vunpack.c.l.b16 %v6277
        %v6893 = vunpack.c.l.b16 %v6278
        %v6894 = vunpack.c.l.b16 %v6279
        %v6895 = vunpack.c.l.b16 %v6280
        %v6896 = vunpack.c.l.b16 %v6281
        %v6897 = vpack.c.b16 %v6866, %v6865
        %v6898 = vpack.c.b16 %v6868, %v6867
        %v6899 = vpack.c.b16 %v6870, %v6869
        %v6900 = vpack.c.b16 %v6872, %v6871
        %v6901 = vpack.c.b16 %v6874, %v6873
        %v6902 = vpack.c.b16 %v6876, %v6875
        %v6903 = vpack.c.b16 %v6878, %v6877
        %v6904 = vpack.c.b16 %v6880, %v6879
        %v6905 = vpack.c.b16 %v6882, %v6881
        %v6906 = vpack.c.b16 %v6884, %v6883
        %v6907 = vpack.c.b16 %v6886, %v6885
        %v6908 = vpack.c.b16 %v6888, %v6887
        %v6909 = vpack.c.b16 %v6890, %v6889
        %v6910 = vpack.c.b16 %v6892, %v6891
        %v6911 = vpack.c.b16 %v6894, %v6893
        %v6912 = vpack.c.b16 %v6896, %v6895
        %v6921 = vunpack.c.l.b16 %v6825
        %v6922 = vunpack.c.l.b16 %v6826
        %v6923 = vunpack.c.l.b16 %v6827
        %v6924 = vunpack.c.l.b16 %v6828
        %v6925 = vunpack.c.l.b16 %v6829
        %v6926 = vunpack.c.l.b16 %v6830
        %v6927 = vunpack.c.l.b16 %v6831
        %v6928 = vunpack.c.l.b16 %v6832
        %v6929 = vpack.c.b16 %v6922, %v6921
        %v6930 = vpack.c.b16 %v6924, %v6923
        %v6931 = vpack.c.b16 %v6926, %v6925
        %v6932 = vpack.c.b16 %v6928, %v6927
        %v6938 = vsel %vm2951, %v6897, 0
        %v6941 = vsel %vm2951, %v6898, 0
        %v6944 = vsel %vm2951, %v6899, 0
        %v6947 = vsel %vm2951, %v6900, 0
        %v6950 = vsel %vm2951, %v6901, 0
        %v6953 = vsel %vm2951, %v6902, 0
        %v6956 = vsel %vm2951, %v6903, 0
        %v6959 = vsel %vm2951, %v6904, 0
        %v6962 = vsel %vm2951, %v6905, 0
        %v6965 = vsel %vm2951, %v6906, 0
        %v6968 = vsel %vm2951, %v6907, 0
        %v6971 = vsel %vm2951, %v6908, 0
        %v6974 = vsel %vm2951, %v6909, 0
        %v6977 = vsel %vm2951, %v6910, 0
        %v6980 = vsel %vm2951, %v6911, 0
        %v6983 = vsel %vm2951, %v6912, 0
        %6985 = vmatprep.subr.bf16.mxu0 0
        %6986 = vmatpush1.bf16.msra.mxu0 0
        %6987 = vmatprep.subr.bf16.mxu0 0
        %6988 = vmatpush1.bf16.msra.mxu0 0
        %6989 = vmatprep.subr.bf16.mxu0 0
        %6990 = vmatpush1.bf16.msra.mxu0 0
        %6991 = vmatprep.subr.bf16.mxu0 0
        %6992 = vmatpush1.bf16.msra.mxu0 0
        %6993 = vmatprep.subr.bf16.mxu0 0
        %6994 = vmatpush1.bf16.msra.mxu0 %v6932
        %6995 = vmatprep.subr.bf16.mxu0 0
        %6996 = vmatpush1.bf16.msra.mxu0 %v6931
        %6997 = vmatprep.subr.bf16.mxu0 0
        %6998 = vmatpush1.bf16.msra.mxu0 %v6930
        %6999 = vmatprep.subr.bf16.mxu0 0
        %7000 = vmatpush1.bf16.msra.mxu0 %v6929
        %7001 = vmatprep.subr.bf16.mxu0 0
        %7002 = vmatpush2.bf16.msra.mxu0 0
        %7003 = vmatprep.subr.bf16.mxu0 0
        %7004 = vmatpush2.bf16.msra.mxu0 0
        %7005 = vmatprep.subr.bf16.mxu0 0
        %7006 = vmatpush2.bf16.msra.mxu0 0
        %7007 = vmatprep.subr.bf16.mxu0 0
        %7008 = vmatpush2.bf16.msra.mxu0 0
        %7009 = vmatprep.subr.bf16.mxu0 0
        %7010 = vmatpush2.bf16.msra.mxu0 0
        %7011 = vmatprep.subr.bf16.mxu0 0
        %7012 = vmatpush2.bf16.msra.mxu0 0
        %7013 = vmatprep.subr.bf16.mxu0 0
        %7014 = vmatpush2.bf16.msra.mxu0 0
        %7015 = vmatprep.subr.bf16.mxu0 0
        %7016 = vmatpush2.bf16.msra.mxu0 0
        %7017 = vmatprep.mubr.bf16.mxu0 0
        %7018 = vmatmul.mubr.bf16.gmra.mxu0 %v6938
        %v7019 = vpop.f32.mrf.mxu0
        %v7020 = vadd.f32 0.0, %v7019
        %v7021 = vpop.f32.mrf.mxu0
        %v7022 = vpop.f32.mrf.mxu0
        %v7023 = vadd.f32 0.0, %v7022
        %v7024 = vpop.f32.mrf.mxu0
        %7025 = vmatprep.mubr.bf16.mxu0 0
        %7026 = vmatmul.mubr.bf16.gmra.mxu0 %v6941
        %v7027 = vpop.f32.mrf.mxu0
        %v7028 = vadd.f32 0.0, %v7027
        %v7029 = vpop.f32.mrf.mxu0
        %v7030 = vpop.f32.mrf.mxu0
        %v7031 = vadd.f32 0.0, %v7030
        %v7032 = vpop.f32.mrf.mxu0
        %7033 = vmatprep.mubr.bf16.mxu0 0
        %7034 = vmatmul.mubr.bf16.gmra.mxu0 %v6944
        %v7035 = vpop.f32.mrf.mxu0
        %v7036 = vadd.f32 0.0, %v7035
        %v7037 = vpop.f32.mrf.mxu0
        %v7038 = vpop.f32.mrf.mxu0
        %v7039 = vadd.f32 0.0, %v7038
        %v7040 = vpop.f32.mrf.mxu0
        %7041 = vmatprep.mubr.bf16.mxu0 0
        %7042 = vmatmul.mubr.bf16.gmra.mxu0 %v6947
        %v7043 = vpop.f32.mrf.mxu0
        %v7044 = vadd.f32 0.0, %v7043
        %v7045 = vpop.f32.mrf.mxu0
        %v7046 = vpop.f32.mrf.mxu0
        %v7047 = vadd.f32 0.0, %v7046
        %v7048 = vpop.f32.mrf.mxu0
        %7049 = vmatprep.mubr.bf16.mxu0 0
        %7050 = vmatmul.mubr.bf16.gmra.mxu0 %v6950
        %v7051 = vpop.f32.mrf.mxu0
        %v7052 = vadd.f32 0.0, %v7051
        %v7053 = vpop.f32.mrf.mxu0
        %v7054 = vpop.f32.mrf.mxu0
        %v7055 = vadd.f32 0.0, %v7054
        %v7056 = vpop.f32.mrf.mxu0
        %7057 = vmatprep.mubr.bf16.mxu0 0
        %7058 = vmatmul.mubr.bf16.gmra.mxu0 %v6953
        %v7059 = vpop.f32.mrf.mxu0
        %v7060 = vadd.f32 0.0, %v7059
        %v7061 = vpop.f32.mrf.mxu0
        %v7062 = vpop.f32.mrf.mxu0
        %v7063 = vadd.f32 0.0, %v7062
        %v7064 = vpop.f32.mrf.mxu0
        %7065 = vmatprep.mubr.bf16.mxu0 0
        %7066 = vmatmul.mubr.bf16.gmra.mxu0 %v6956
        %v7067 = vpop.f32.mrf.mxu0
        %v7068 = vadd.f32 0.0, %v7067
        %v7069 = vpop.f32.mrf.mxu0
        %v7070 = vpop.f32.mrf.mxu0
        %v7071 = vadd.f32 0.0, %v7070
        %v7072 = vpop.f32.mrf.mxu0
        %7073 = vmatprep.mubr.bf16.mxu0 0
        %7074 = vmatmul.mubr.bf16.gmra.mxu0 %v6959
        %v7075 = vpop.f32.mrf.mxu0
        %v7076 = vadd.f32 0.0, %v7075
        %v7077 = vpop.f32.mrf.mxu0
        %v7078 = vpop.f32.mrf.mxu0
        %v7079 = vadd.f32 0.0, %v7078
        %v7080 = vpop.f32.mrf.mxu0
        %7081 = vmatprep.mubr.bf16.mxu0 0
        %7082 = vmatmul.mubr.bf16.gmra.mxu0 %v6962
        %v7083 = vpop.f32.mrf.mxu0
        %v7084 = vadd.f32 0.0, %v7083
        %v7085 = vpop.f32.mrf.mxu0
        %v7086 = vpop.f32.mrf.mxu0
        %v7087 = vadd.f32 0.0, %v7086
        %v7088 = vpop.f32.mrf.mxu0
        %7089 = vmatprep.mubr.bf16.mxu0 0
        %7090 = vmatmul.mubr.bf16.gmra.mxu0 %v6965
        %v7091 = vpop.f32.mrf.mxu0
        %v7092 = vadd.f32 0.0, %v7091
        %v7093 = vpop.f32.mrf.mxu0
        %v7094 = vpop.f32.mrf.mxu0
        %v7095 = vadd.f32 0.0, %v7094
        %v7096 = vpop.f32.mrf.mxu0
        %7097 = vmatprep.mubr.bf16.mxu0 0
        %7098 = vmatmul.mubr.bf16.gmra.mxu0 %v6968
        %v7099 = vpop.f32.mrf.mxu0
        %v7100 = vadd.f32 0.0, %v7099
        %v7101 = vpop.f32.mrf.mxu0
        %v7102 = vpop.f32.mrf.mxu0
        %v7103 = vadd.f32 0.0, %v7102
        %v7104 = vpop.f32.mrf.mxu0
        %7105 = vmatprep.mubr.bf16.mxu0 0
        %7106 = vmatmul.mubr.bf16.gmra.mxu0 %v6971
        %v7107 = vpop.f32.mrf.mxu0
        %v7108 = vadd.f32 0.0, %v7107
        %v7109 = vpop.f32.mrf.mxu0
        %v7110 = vpop.f32.mrf.mxu0
        %v7111 = vadd.f32 0.0, %v7110
        %v7112 = vpop.f32.mrf.mxu0
        %7113 = vmatprep.mubr.bf16.mxu0 0
        %7114 = vmatmul.mubr.bf16.gmra.mxu0 %v6974
        %v7115 = vpop.f32.mrf.mxu0
        %v7116 = vadd.f32 0.0, %v7115
        %v7117 = vpop.f32.mrf.mxu0
        %v7118 = vpop.f32.mrf.mxu0
        %v7119 = vadd.f32 0.0, %v7118
        %v7120 = vpop.f32.mrf.mxu0
        %7121 = vmatprep.mubr.bf16.mxu0 0
        %7122 = vmatmul.mubr.bf16.gmra.mxu0 %v6977
        %v7123 = vpop.f32.mrf.mxu0
        %v7124 = vadd.f32 0.0, %v7123
        %v7125 = vpop.f32.mrf.mxu0
        %v7126 = vpop.f32.mrf.mxu0
        %v7127 = vadd.f32 0.0, %v7126
        %v7128 = vpop.f32.mrf.mxu0
        %7129 = vmatprep.mubr.bf16.mxu0 0
        %7130 = vmatmul.mubr.bf16.gmra.mxu0 %v6980
        %v7131 = vpop.f32.mrf.mxu0
        %v7132 = vadd.f32 0.0, %v7131
        %v7133 = vpop.f32.mrf.mxu0
        %v7134 = vpop.f32.mrf.mxu0
        %v7135 = vadd.f32 0.0, %v7134
        %v7136 = vpop.f32.mrf.mxu0
        %7137 = vmatprep.mubr.bf16.mxu0 0
        %7138 = vmatmul.mubr.bf16.gmra.mxu0 %v6983
        %v7139 = vpop.f32.mrf.mxu0
        %v7140 = vadd.f32 0.0, %v7139
        %v7141 = vpop.f32.mrf.mxu0
        %v7142 = vpop.f32.mrf.mxu0
        %v7143 = vadd.f32 0.0, %v7142
        %v7144 = vpop.f32.mrf.mxu0
        %7145 = vdwg.mxu0
        %v7146 = vadd.f32 %v6792, %v7020
        %v7147 = vadd.f32 %v6793, %v7023
        %v7148 = vadd.f32 %v6794, %v7028
        %v7149 = vadd.f32 %v6795, %v7031
        %v7150 = vadd.f32 %v6796, %v7036
        %v7151 = vadd.f32 %v6797, %v7039
        %v7152 = vadd.f32 %v6798, %v7044
        %v7153 = vadd.f32 %v6799, %v7047
        %v7154 = vadd.f32 %v6800, %v7052
        %v7155 = vadd.f32 %v6801, %v7055
        %v7156 = vadd.f32 %v6802, %v7060
        %v7157 = vadd.f32 %v6803, %v7063
        %v7158 = vadd.f32 %v6804, %v7068
        %v7159 = vadd.f32 %v6805, %v7071
        %v7160 = vadd.f32 %v6806, %v7076
        %v7161 = vadd.f32 %v6807, %v7079
        %v7162 = vadd.f32 %v6808, %v7084
        %v7163 = vadd.f32 %v6809, %v7087
        %v7164 = vadd.f32 %v6810, %v7092
        %v7165 = vadd.f32 %v6811, %v7095
        %v7166 = vadd.f32 %v6812, %v7100
        %v7167 = vadd.f32 %v6813, %v7103
        %v7168 = vadd.f32 %v6814, %v7108
        %v7169 = vadd.f32 %v6815, %v7111
        %v7170 = vadd.f32 %v6816, %v7116
        %v7171 = vadd.f32 %v6817, %v7119
        %v7172 = vadd.f32 %v6818, %v7124
        %v7173 = vadd.f32 %v6819, %v7127
        %v7174 = vadd.f32 %v6820, %v7132
        %v7175 = vadd.f32 %v6821, %v7135
        %v7176 = vadd.f32 %v6822, %v7140
        %v7177 = vadd.f32 %v6823, %v7143
        %v7178 = vld [vmem:[#allocation2 + $0x18] sm:$0xf]
        %v7179 = vld [vmem:[#allocation2 + $0x1c] sm:$0xf]
        %v7180 = vld [vmem:[#allocation2 + $0x20] sm:$0xf]
        %v7181 = vld [vmem:[#allocation2 + $0x24] sm:$0xf]
        %v7182 = vld [vmem:[#allocation2 + $0x28] sm:$0xf]
        %v7183 = vld [vmem:[#allocation2 + $0x2c] sm:$0xf]
        %v7184 = vld [vmem:[#allocation2 + $0x30] sm:$0xf]
        %v7185 = vld [vmem:[#allocation2 + $0x34] sm:$0xf]
        %v7186 = vld [vmem:[#allocation2 + $0x38] sm:$0xf]
        %v7187 = vld [vmem:[#allocation2 + $0x3c] sm:$0xf]
        %v7188 = vld [vmem:[#allocation2 + $0x40] sm:$0xf]
        %v7189 = vld [vmem:[#allocation2 + $0x44] sm:$0xf]
        %v7190 = vld [vmem:[#allocation2 + $0x48] sm:$0xf]
        %v7191 = vld [vmem:[#allocation2 + $0x4c] sm:$0xf]
        %v7192 = vld [vmem:[#allocation2 + $0x50] sm:$0xf]
        %v7193 = vld [vmem:[#allocation2 + $0x54] sm:$0xf]
        %v7194 = vld [vmem:[#allocation2 + $0x58] sm:$0xf]
        %v7195 = vld [vmem:[#allocation2 + $0x5c] sm:$0xf]
        %v7196 = vld [vmem:[#allocation2 + $0x60] sm:$0xf]
        %v7197 = vld [vmem:[#allocation2 + $0x64] sm:$0xf]
        %v7198 = vld [vmem:[#allocation2 + $0x68] sm:$0xf]
        %v7199 = vld [vmem:[#allocation2 + $0x6c] sm:$0xf]
        %v7200 = vld [vmem:[#allocation2 + $0x70] sm:$0xf]
        %v7201 = vld [vmem:[#allocation2 + $0x74] sm:$0xf]
        %v7202 = vld [vmem:[#allocation2 + $0x78] sm:$0xf]
        %v7203 = vld [vmem:[#allocation2 + $0x7c] sm:$0xf]
        %v7204 = vld [vmem:[#allocation2 + $0x80] sm:$0xf]
        %v7205 = vld [vmem:[#allocation2 + $0x84] sm:$0xf]
        %v7206 = vld [vmem:[#allocation2 + $0x88] sm:$0xf]
        %v7207 = vld [vmem:[#allocation2 + $0x8c] sm:$0xf]
        %v7208 = vld [vmem:[#allocation2 + $0x90] sm:$0xf]
        %v7209 = vld [vmem:[#allocation2 + $0x94] sm:$0xf]
        %v7210 = vld [vmem:[#allocation2 + $0x98] sm:$0x1]
        %v7211 = vsel %vm4209, %v7178, 0
        %v7212 = vsel %vm4210, %v7179, 0
        %v7213 = vsel %vm4211, %v7180, 0
        %v7214 = vsel %vm4212, %v7181, 0
        %v7215 = vsel %vm4213, %v7182, 0
        %v7216 = vsel %vm4214, %v7183, 0
        %v7217 = vsel %vm4215, %v7184, 0
        %v7218 = vsel %vm4216, %v7185, 0
        %v7219 = vsel %vm4217, %v7186, 0
        %v7220 = vsel %vm4218, %v7187, 0
        %v7221 = vsel %vm4219, %v7188, 0
        %v7222 = vsel %vm4220, %v7189, 0
        %v7223 = vsel %vm4221, %v7190, 0
        %v7224 = vsel %vm4222, %v7191, 0
        %v7225 = vsel %vm4223, %v7192, 0
        %v7226 = vsel %vm4224, %v7193, 0
        %v7227 = vsel %vm4225, %v7194, 0
        %v7228 = vsel %vm4226, %v7195, 0
        %v7229 = vsel %vm4227, %v7196, 0
        %v7230 = vsel %vm4228, %v7197, 0
        %v7231 = vsel %vm4229, %v7198, 0
        %v7232 = vsel %vm4230, %v7199, 0
        %v7233 = vsel %vm4231, %v7200, 0
        %v7234 = vsel %vm4232, %v7201, 0
        %v7235 = vsel %vm4233, %v7202, 0
        %v7236 = vsel %vm4234, %v7203, 0
        %v7237 = vsel %vm4235, %v7204, 0
        %v7238 = vsel %vm4236, %v7205, 0
        %v7239 = vsel %vm4237, %v7206, 0
        %v7240 = vsel %vm4238, %v7207, 0
        %v7241 = vsel %vm4239, %v7208, 0
        %v7242 = vsel %vm4240, %v7209, 0
        %v7243 = vsel %vm4241, %v7210, 0
        %s7244 = scalar_lea.vmem %s6, 256
        %v7245 = vld [vmem:[%s7244] sm:$0xf]
        %v7246 = vld [vmem:[%s7244 + $0x4] sm:$0xf]
        %v7247 = vld [vmem:[%s7244 + $0x8] sm:$0xf]
        %v7248 = vld [vmem:[%s7244 + $0xc] sm:$0xf]
        %v7249 = vld [vmem:[%s7244 + $0x10] sm:$0xf]
        %v7250 = vld [vmem:[%s7244 + $0x14] sm:$0xf]
        %v7251 = vld [vmem:[%s7244 + $0x18] sm:$0xf]
        %v7252 = vld [vmem:[%s7244 + $0x1c] sm:$0xf]
        %v7286 = vunpack.c.l.b16 %v7211
        %v7287 = vunpack.c.l.b16 %v7212
        %v7288 = vunpack.c.l.b16 %v7213
        %v7289 = vunpack.c.l.b16 %v7214
        %v7290 = vunpack.c.l.b16 %v7215
        %v7291 = vunpack.c.l.b16 %v7216
        %v7292 = vunpack.c.l.b16 %v7217
        %v7293 = vunpack.c.l.b16 %v7218
        %v7294 = vunpack.c.l.b16 %v7219
        %v7295 = vunpack.c.l.b16 %v7220
        %v7296 = vunpack.c.l.b16 %v7221
        %v7297 = vunpack.c.l.b16 %v7222
        %v7298 = vunpack.c.l.b16 %v7223
        %v7299 = vunpack.c.l.b16 %v7224
        %v7300 = vunpack.c.l.b16 %v7225
        %v7301 = vunpack.c.l.b16 %v7226
        %v7302 = vunpack.c.l.b16 %v7227
        %v7303 = vunpack.c.l.b16 %v7228
        %v7304 = vunpack.c.l.b16 %v7229
        %v7305 = vunpack.c.l.b16 %v7230
        %v7306 = vunpack.c.l.b16 %v7231
        %v7307 = vunpack.c.l.b16 %v7232
        %v7308 = vunpack.c.l.b16 %v7233
        %v7309 = vunpack.c.l.b16 %v7234
        %v7310 = vunpack.c.l.b16 %v7235
        %v7311 = vunpack.c.l.b16 %v7236
        %v7312 = vunpack.c.l.b16 %v7237
        %v7313 = vunpack.c.l.b16 %v7238
        %v7314 = vunpack.c.l.b16 %v7239
        %v7315 = vunpack.c.l.b16 %v7240
        %v7316 = vunpack.c.l.b16 %v7241
        %v7317 = vunpack.c.l.b16 %v7242
        %v7318 = vunpack.c.l.b16 %v7243
        %v7319 = vpack.c.b16 %v7287, %v7286
        %v7320 = vpack.c.b16 %v7289, %v7288
        %v7321 = vpack.c.b16 %v7291, %v7290
        %v7322 = vpack.c.b16 %v7293, %v7292
        %v7323 = vpack.c.b16 %v7295, %v7294
        %v7324 = vpack.c.b16 %v7297, %v7296
        %v7325 = vpack.c.b16 %v7299, %v7298
        %v7326 = vpack.c.b16 %v7301, %v7300
        %v7327 = vpack.c.b16 %v7303, %v7302
        %v7328 = vpack.c.b16 %v7305, %v7304
        %v7329 = vpack.c.b16 %v7307, %v7306
        %v7330 = vpack.c.b16 %v7309, %v7308
        %v7331 = vpack.c.b16 %v7311, %v7310
        %v7332 = vpack.c.b16 %v7313, %v7312
        %v7333 = vpack.c.b16 %v7315, %v7314
        %v7334 = vpack.c.b16 %v7317, %v7316
        %v7335 = vpack.c.b16 %v7318, %v7318
        %v7337 = vshrl.u32 %v7319, 16
        %v7339 = vshll.u32 %v7319, 16
        %v7341 = vrot.slane %v7339, 1
        %v7342 = vor.u32 %v7337, %v7341
        %v7344 = vshll.u32 %v7320, 16
        %v7346 = vrot.slane %v7344, 1
        %v7347 = vsel %vm4367, %v7342, %v7346
        %v7348 = vshrl.u32 %v7320, 16
        %v7350 = vor.u32 %v7348, %v7346
        %v7352 = vshll.u32 %v7321, 16
        %v7354 = vrot.slane %v7352, 1
        %v7355 = vsel %vm4367, %v7350, %v7354
        %v7356 = vshrl.u32 %v7321, 16
        %v7358 = vor.u32 %v7356, %v7354
        %v7360 = vshll.u32 %v7322, 16
        %v7362 = vrot.slane %v7360, 1
        %v7363 = vsel %vm4367, %v7358, %v7362
        %v7364 = vshrl.u32 %v7322, 16
        %v7366 = vor.u32 %v7364, %v7362
        %v7368 = vshll.u32 %v7323, 16
        %v7370 = vrot.slane %v7368, 1
        %v7371 = vsel %vm4367, %v7366, %v7370
        %v7372 = vshrl.u32 %v7323, 16
        %v7374 = vor.u32 %v7372, %v7370
        %v7376 = vshll.u32 %v7324, 16
        %v7378 = vrot.slane %v7376, 1
        %v7379 = vsel %vm4367, %v7374, %v7378
        %v7380 = vshrl.u32 %v7324, 16
        %v7382 = vor.u32 %v7380, %v7378
        %v7384 = vshll.u32 %v7325, 16
        %v7386 = vrot.slane %v7384, 1
        %v7387 = vsel %vm4367, %v7382, %v7386
        %v7388 = vshrl.u32 %v7325, 16
        %v7390 = vor.u32 %v7388, %v7386
        %v7392 = vshll.u32 %v7326, 16
        %v7394 = vrot.slane %v7392, 1
        %v7395 = vsel %vm4367, %v7390, %v7394
        %v7396 = vshrl.u32 %v7326, 16
        %v7398 = vor.u32 %v7396, %v7394
        %v7400 = vshll.u32 %v7327, 16
        %v7402 = vrot.slane %v7400, 1
        %v7403 = vsel %vm4367, %v7398, %v7402
        %v7404 = vshrl.u32 %v7327, 16
        %v7406 = vor.u32 %v7404, %v7402
        %v7408 = vshll.u32 %v7328, 16
        %v7410 = vrot.slane %v7408, 1
        %v7411 = vsel %vm4367, %v7406, %v7410
        %v7412 = vshrl.u32 %v7328, 16
        %v7414 = vor.u32 %v7412, %v7410
        %v7416 = vshll.u32 %v7329, 16
        %v7418 = vrot.slane %v7416, 1
        %v7419 = vsel %vm4367, %v7414, %v7418
        %v7420 = vshrl.u32 %v7329, 16
        %v7422 = vor.u32 %v7420, %v7418
        %v7424 = vshll.u32 %v7330, 16
        %v7426 = vrot.slane %v7424, 1
        %v7427 = vsel %vm4367, %v7422, %v7426
        %v7428 = vshrl.u32 %v7330, 16
        %v7430 = vor.u32 %v7428, %v7426
        %v7432 = vshll.u32 %v7331, 16
        %v7434 = vrot.slane %v7432, 1
        %v7435 = vsel %vm4367, %v7430, %v7434
        %v7436 = vshrl.u32 %v7331, 16
        %v7438 = vor.u32 %v7436, %v7434
        %v7440 = vshll.u32 %v7332, 16
        %v7442 = vrot.slane %v7440, 1
        %v7443 = vsel %vm4367, %v7438, %v7442
        %v7444 = vshrl.u32 %v7332, 16
        %v7446 = vor.u32 %v7444, %v7442
        %v7448 = vshll.u32 %v7333, 16
        %v7450 = vrot.slane %v7448, 1
        %v7451 = vsel %vm4367, %v7446, %v7450
        %v7452 = vshrl.u32 %v7333, 16
        %v7454 = vor.u32 %v7452, %v7450
        %v7456 = vshll.u32 %v7334, 16
        %v7458 = vrot.slane %v7456, 1
        %v7459 = vsel %vm4367, %v7454, %v7458
        %v7460 = vshrl.u32 %v7334, 16
        %v7462 = vor.u32 %v7460, %v7458
        %v7464 = vshll.u32 %v7335, 16
        %v7466 = vrot.slane %v7464, 1
        %v7467 = vsel %vm4367, %v7462, %v7466
        %v7476 = vunpack.c.l.b16 %v7245
        %v7477 = vunpack.c.l.b16 %v7246
        %v7478 = vunpack.c.l.b16 %v7247
        %v7479 = vunpack.c.l.b16 %v7248
        %v7480 = vunpack.c.l.b16 %v7249
        %v7481 = vunpack.c.l.b16 %v7250
        %v7482 = vunpack.c.l.b16 %v7251
        %v7483 = vunpack.c.l.b16 %v7252
        %v7484 = vpack.c.b16 %v7477, %v7476
        %v7485 = vpack.c.b16 %v7479, %v7478
        %v7486 = vpack.c.b16 %v7481, %v7480
        %v7487 = vpack.c.b16 %v7483, %v7482
        %v7493 = vsel %vm2951, %v7347, 0
        %v7496 = vsel %vm2951, %v7355, 0
        %v7499 = vsel %vm2951, %v7363, 0
        %v7502 = vsel %vm2951, %v7371, 0
        %v7505 = vsel %vm2951, %v7379, 0
        %v7508 = vsel %vm2951, %v7387, 0
        %v7511 = vsel %vm2951, %v7395, 0
        %v7514 = vsel %vm2951, %v7403, 0
        %v7517 = vsel %vm2951, %v7411, 0
        %v7520 = vsel %vm2951, %v7419, 0
        %v7523 = vsel %vm2951, %v7427, 0
        %v7526 = vsel %vm2951, %v7435, 0
        %v7529 = vsel %vm2951, %v7443, 0
        %v7532 = vsel %vm2951, %v7451, 0
        %v7535 = vsel %vm2951, %v7459, 0
        %v7538 = vsel %vm2951, %v7467, 0
        %7540 = vmatprep.subr.bf16.mxu0 0
        %7541 = vmatpush1.bf16.msra.mxu0 0
        %7542 = vmatprep.subr.bf16.mxu0 0
        %7543 = vmatpush1.bf16.msra.mxu0 0
        %7544 = vmatprep.subr.bf16.mxu0 0
        %7545 = vmatpush1.bf16.msra.mxu0 0
        %7546 = vmatprep.subr.bf16.mxu0 0
        %7547 = vmatpush1.bf16.msra.mxu0 0
        %7548 = vmatprep.subr.bf16.mxu0 0
        %7549 = vmatpush1.bf16.msra.mxu0 %v7487
        %7550 = vmatprep.subr.bf16.mxu0 0
        %7551 = vmatpush1.bf16.msra.mxu0 %v7486
        %7552 = vmatprep.subr.bf16.mxu0 0
        %7553 = vmatpush1.bf16.msra.mxu0 %v7485
        %7554 = vmatprep.subr.bf16.mxu0 0
        %7555 = vmatpush1.bf16.msra.mxu0 %v7484
        %7556 = vmatprep.subr.bf16.mxu0 0
        %7557 = vmatpush2.bf16.msra.mxu0 0
        %7558 = vmatprep.subr.bf16.mxu0 0
        %7559 = vmatpush2.bf16.msra.mxu0 0
        %7560 = vmatprep.subr.bf16.mxu0 0
        %7561 = vmatpush2.bf16.msra.mxu0 0
        %7562 = vmatprep.subr.bf16.mxu0 0
        %7563 = vmatpush2.bf16.msra.mxu0 0
        %7564 = vmatprep.subr.bf16.mxu0 0
        %7565 = vmatpush2.bf16.msra.mxu0 0
        %7566 = vmatprep.subr.bf16.mxu0 0
        %7567 = vmatpush2.bf16.msra.mxu0 0
        %7568 = vmatprep.subr.bf16.mxu0 0
        %7569 = vmatpush2.bf16.msra.mxu0 0
        %7570 = vmatprep.subr.bf16.mxu0 0
        %7571 = vmatpush2.bf16.msra.mxu0 0
        %7572 = vmatprep.mubr.bf16.mxu0 0
        %7573 = vmatmul.mubr.bf16.gmra.mxu0 %v7493
        %v7574 = vpop.f32.mrf.mxu0
        %v7575 = vadd.f32 0.0, %v7574
        %v7576 = vpop.f32.mrf.mxu0
        %v7577 = vpop.f32.mrf.mxu0
        %v7578 = vadd.f32 0.0, %v7577
        %v7579 = vpop.f32.mrf.mxu0
        %7580 = vmatprep.mubr.bf16.mxu0 0
        %7581 = vmatmul.mubr.bf16.gmra.mxu0 %v7496
        %v7582 = vpop.f32.mrf.mxu0
        %v7583 = vadd.f32 0.0, %v7582
        %v7584 = vpop.f32.mrf.mxu0
        %v7585 = vpop.f32.mrf.mxu0
        %v7586 = vadd.f32 0.0, %v7585
        %v7587 = vpop.f32.mrf.mxu0
        %7588 = vmatprep.mubr.bf16.mxu0 0
        %7589 = vmatmul.mubr.bf16.gmra.mxu0 %v7499
        %v7590 = vpop.f32.mrf.mxu0
        %v7591 = vadd.f32 0.0, %v7590
        %v7592 = vpop.f32.mrf.mxu0
        %v7593 = vpop.f32.mrf.mxu0
        %v7594 = vadd.f32 0.0, %v7593
        %v7595 = vpop.f32.mrf.mxu0
        %7596 = vmatprep.mubr.bf16.mxu0 0
        %7597 = vmatmul.mubr.bf16.gmra.mxu0 %v7502
        %v7598 = vpop.f32.mrf.mxu0
        %v7599 = vadd.f32 0.0, %v7598
        %v7600 = vpop.f32.mrf.mxu0
        %v7601 = vpop.f32.mrf.mxu0
        %v7602 = vadd.f32 0.0, %v7601
        %v7603 = vpop.f32.mrf.mxu0
        %7604 = vmatprep.mubr.bf16.mxu0 0
        %7605 = vmatmul.mubr.bf16.gmra.mxu0 %v7505
        %v7606 = vpop.f32.mrf.mxu0
        %v7607 = vadd.f32 0.0, %v7606
        %v7608 = vpop.f32.mrf.mxu0
        %v7609 = vpop.f32.mrf.mxu0
        %v7610 = vadd.f32 0.0, %v7609
        %v7611 = vpop.f32.mrf.mxu0
        %7612 = vmatprep.mubr.bf16.mxu0 0
        %7613 = vmatmul.mubr.bf16.gmra.mxu0 %v7508
        %v7614 = vpop.f32.mrf.mxu0
        %v7615 = vadd.f32 0.0, %v7614
        %v7616 = vpop.f32.mrf.mxu0
        %v7617 = vpop.f32.mrf.mxu0
        %v7618 = vadd.f32 0.0, %v7617
        %v7619 = vpop.f32.mrf.mxu0
        %7620 = vmatprep.mubr.bf16.mxu0 0
        %7621 = vmatmul.mubr.bf16.gmra.mxu0 %v7511
        %v7622 = vpop.f32.mrf.mxu0
        %v7623 = vadd.f32 0.0, %v7622
        %v7624 = vpop.f32.mrf.mxu0
        %v7625 = vpop.f32.mrf.mxu0
        %v7626 = vadd.f32 0.0, %v7625
        %v7627 = vpop.f32.mrf.mxu0
        %7628 = vmatprep.mubr.bf16.mxu0 0
        %7629 = vmatmul.mubr.bf16.gmra.mxu0 %v7514
        %v7630 = vpop.f32.mrf.mxu0
        %v7631 = vadd.f32 0.0, %v7630
        %v7632 = vpop.f32.mrf.mxu0
        %v7633 = vpop.f32.mrf.mxu0
        %v7634 = vadd.f32 0.0, %v7633
        %v7635 = vpop.f32.mrf.mxu0
        %7636 = vmatprep.mubr.bf16.mxu0 0
        %7637 = vmatmul.mubr.bf16.gmra.mxu0 %v7517
        %v7638 = vpop.f32.mrf.mxu0
        %v7639 = vadd.f32 0.0, %v7638
        %v7640 = vpop.f32.mrf.mxu0
        %v7641 = vpop.f32.mrf.mxu0
        %v7642 = vadd.f32 0.0, %v7641
        %v7643 = vpop.f32.mrf.mxu0
        %7644 = vmatprep.mubr.bf16.mxu0 0
        %7645 = vmatmul.mubr.bf16.gmra.mxu0 %v7520
        %v7646 = vpop.f32.mrf.mxu0
        %v7647 = vadd.f32 0.0, %v7646
        %v7648 = vpop.f32.mrf.mxu0
        %v7649 = vpop.f32.mrf.mxu0
        %v7650 = vadd.f32 0.0, %v7649
        %v7651 = vpop.f32.mrf.mxu0
        %7652 = vmatprep.mubr.bf16.mxu0 0
        %7653 = vmatmul.mubr.bf16.gmra.mxu0 %v7523
        %v7654 = vpop.f32.mrf.mxu0
        %v7655 = vadd.f32 0.0, %v7654
        %v7656 = vpop.f32.mrf.mxu0
        %v7657 = vpop.f32.mrf.mxu0
        %v7658 = vadd.f32 0.0, %v7657
        %v7659 = vpop.f32.mrf.mxu0
        %7660 = vmatprep.mubr.bf16.mxu0 0
        %7661 = vmatmul.mubr.bf16.gmra.mxu0 %v7526
        %v7662 = vpop.f32.mrf.mxu0
        %v7663 = vadd.f32 0.0, %v7662
        %v7664 = vpop.f32.mrf.mxu0
        %v7665 = vpop.f32.mrf.mxu0
        %v7666 = vadd.f32 0.0, %v7665
        %v7667 = vpop.f32.mrf.mxu0
        %7668 = vmatprep.mubr.bf16.mxu0 0
        %7669 = vmatmul.mubr.bf16.gmra.mxu0 %v7529
        %v7670 = vpop.f32.mrf.mxu0
        %v7671 = vadd.f32 0.0, %v7670
        %v7672 = vpop.f32.mrf.mxu0
        %v7673 = vpop.f32.mrf.mxu0
        %v7674 = vadd.f32 0.0, %v7673
        %v7675 = vpop.f32.mrf.mxu0
        %7676 = vmatprep.mubr.bf16.mxu0 0
        %7677 = vmatmul.mubr.bf16.gmra.mxu0 %v7532
        %v7678 = vpop.f32.mrf.mxu0
        %v7679 = vadd.f32 0.0, %v7678
        %v7680 = vpop.f32.mrf.mxu0
        %v7681 = vpop.f32.mrf.mxu0
        %v7682 = vadd.f32 0.0, %v7681
        %v7683 = vpop.f32.mrf.mxu0
        %7684 = vmatprep.mubr.bf16.mxu0 0
        %7685 = vmatmul.mubr.bf16.gmra.mxu0 %v7535
        %v7686 = vpop.f32.mrf.mxu0
        %v7687 = vadd.f32 0.0, %v7686
        %v7688 = vpop.f32.mrf.mxu0
        %v7689 = vpop.f32.mrf.mxu0
        %v7690 = vadd.f32 0.0, %v7689
        %v7691 = vpop.f32.mrf.mxu0
        %7692 = vmatprep.mubr.bf16.mxu0 0
        %7693 = vmatmul.mubr.bf16.gmra.mxu0 %v7538
        %v7694 = vpop.f32.mrf.mxu0
        %v7695 = vadd.f32 0.0, %v7694
        %v7696 = vpop.f32.mrf.mxu0
        %v7697 = vpop.f32.mrf.mxu0
        %v7698 = vadd.f32 0.0, %v7697
        %v7699 = vpop.f32.mrf.mxu0
        %7700 = vdwg.mxu0
        %v7701 = vadd.f32 %v7146, %v7575
        %v7702 = vadd.f32 %v7147, %v7578
        %v7703 = vadd.f32 %v7148, %v7583
        %v7704 = vadd.f32 %v7149, %v7586
        %v7705 = vadd.f32 %v7150, %v7591
        %v7706 = vadd.f32 %v7151, %v7594
        %v7707 = vadd.f32 %v7152, %v7599
        %v7708 = vadd.f32 %v7153, %v7602
        %v7709 = vadd.f32 %v7154, %v7607
        %v7710 = vadd.f32 %v7155, %v7610
        %v7711 = vadd.f32 %v7156, %v7615
        %v7712 = vadd.f32 %v7157, %v7618
        %v7713 = vadd.f32 %v7158, %v7623
        %v7714 = vadd.f32 %v7159, %v7626
        %v7715 = vadd.f32 %v7160, %v7631
        %v7716 = vadd.f32 %v7161, %v7634
        %v7717 = vadd.f32 %v7162, %v7639
        %v7718 = vadd.f32 %v7163, %v7642
        %v7719 = vadd.f32 %v7164, %v7647
        %v7720 = vadd.f32 %v7165, %v7650
        %v7721 = vadd.f32 %v7166, %v7655
        %v7722 = vadd.f32 %v7167, %v7658
        %v7723 = vadd.f32 %v7168, %v7663
        %v7724 = vadd.f32 %v7169, %v7666
        %v7725 = vadd.f32 %v7170, %v7671
        %v7726 = vadd.f32 %v7171, %v7674
        %v7727 = vadd.f32 %v7172, %v7679
        %v7728 = vadd.f32 %v7173, %v7682
        %v7729 = vadd.f32 %v7174, %v7687
        %v7730 = vadd.f32 %v7175, %v7690
        %v7731 = vadd.f32 %v7176, %v7695
        %v7732 = vadd.f32 %v7177, %v7698
        %v7733 = vlaneseq
        %v7734 = vshrl.u32 %v7733, 7
        %v7735 = vsub.s32 0, %v7734
        %v7736 = vrot.slane %v342, %v7735
        %v7737 = vadd.f32 %v7701, %v7736
        %v7738 = vadd.f32 %v7702, %v7736
        %v7739 = vadd.f32 %v7703, %v7736
        %v7740 = vadd.f32 %v7704, %v7736
        %v7741 = vadd.f32 %v7705, %v7736
        %v7742 = vadd.f32 %v7706, %v7736
        %v7743 = vadd.f32 %v7707, %v7736
        %v7744 = vadd.f32 %v7708, %v7736
        %v7745 = vadd.f32 %v7709, %v7736
        %v7746 = vadd.f32 %v7710, %v7736
        %v7747 = vadd.f32 %v7711, %v7736
        %v7748 = vadd.f32 %v7712, %v7736
        %v7749 = vadd.f32 %v7713, %v7736
        %v7750 = vadd.f32 %v7714, %v7736
        %v7751 = vadd.f32 %v7715, %v7736
        %v7752 = vadd.f32 %v7716, %v7736
        %v7753 = vadd.f32 %v7717, %v7736
        %v7754 = vadd.f32 %v7718, %v7736
        %v7755 = vadd.f32 %v7719, %v7736
        %v7756 = vadd.f32 %v7720, %v7736
        %v7757 = vadd.f32 %v7721, %v7736
        %v7758 = vadd.f32 %v7722, %v7736
        %v7759 = vadd.f32 %v7723, %v7736
        %v7760 = vadd.f32 %v7724, %v7736
        %v7761 = vadd.f32 %v7725, %v7736
        %v7762 = vadd.f32 %v7726, %v7736
        %v7763 = vadd.f32 %v7727, %v7736
        %v7764 = vadd.f32 %v7728, %v7736
        %v7765 = vadd.f32 %v7729, %v7736
        %v7766 = vadd.f32 %v7730, %v7736
        %v7767 = vadd.f32 %v7731, %v7736
        %v7768 = vadd.f32 %v7732, %v7736
        %v7769 = vmax.f32 %v7737, 0.0
        %v7770 = vmax.f32 %v7738, 0.0
        %v7771 = vmax.f32 %v7739, 0.0
        %v7772 = vmax.f32 %v7740, 0.0
        %v7773 = vmax.f32 %v7741, 0.0
        %v7774 = vmax.f32 %v7742, 0.0
        %v7775 = vmax.f32 %v7743, 0.0
        %v7776 = vmax.f32 %v7744, 0.0
        %v7777 = vmax.f32 %v7745, 0.0
        %v7778 = vmax.f32 %v7746, 0.0
        %v7779 = vmax.f32 %v7747, 0.0
        %v7780 = vmax.f32 %v7748, 0.0
        %v7781 = vmax.f32 %v7749, 0.0
        %v7782 = vmax.f32 %v7750, 0.0
        %v7783 = vmax.f32 %v7751, 0.0
        %v7784 = vmax.f32 %v7752, 0.0
        %v7785 = vmax.f32 %v7753, 0.0
        %v7786 = vmax.f32 %v7754, 0.0
        %v7787 = vmax.f32 %v7755, 0.0
        %v7788 = vmax.f32 %v7756, 0.0
        %v7789 = vmax.f32 %v7757, 0.0
        %v7790 = vmax.f32 %v7758, 0.0
        %v7791 = vmax.f32 %v7759, 0.0
        %v7792 = vmax.f32 %v7760, 0.0
        %v7793 = vmax.f32 %v7761, 0.0
        %v7794 = vmax.f32 %v7762, 0.0
        %v7795 = vmax.f32 %v7763, 0.0
        %v7796 = vmax.f32 %v7764, 0.0
        %v7797 = vmax.f32 %v7765, 0.0
        %v7798 = vmax.f32 %v7766, 0.0
        %v7799 = vmax.f32 %v7767, 0.0
        %v7800 = vmax.f32 %v7768, 0.0
        %7801 = vst.msk [vmem:[%s298] sm:$0xff] %vm443, %v7769
        %7802 = vst.msk [vmem:[%s298 + $0x8] sm:$0xff] %vm443, %v7770
        %7803 = vst.msk [vmem:[%s298 + $0x10] sm:$0xff] %vm443, %v7771
        %7804 = vst.msk [vmem:[%s298 + $0x18] sm:$0xff] %vm443, %v7772
        %7805 = vst.msk [vmem:[%s298 + $0x20] sm:$0xff] %vm443, %v7773
        %7806 = vst.msk [vmem:[%s298 + $0x28] sm:$0xff] %vm443, %v7774
        %7807 = vst.msk [vmem:[%s298 + $0x30] sm:$0xff] %vm443, %v7775
        %7808 = vst.msk [vmem:[%s298 + $0x38] sm:$0xff] %vm443, %v7776
        %7809 = vst.msk [vmem:[%s298 + $0x40] sm:$0xff] %vm443, %v7777
        %7810 = vst.msk [vmem:[%s298 + $0x48] sm:$0xff] %vm443, %v7778
        %7811 = vst.msk [vmem:[%s298 + $0x50] sm:$0xff] %vm443, %v7779
        %7812 = vst.msk [vmem:[%s298 + $0x58] sm:$0xff] %vm443, %v7780
        %7813 = vst.msk [vmem:[%s298 + $0x60] sm:$0xff] %vm443, %v7781
        %7814 = vst.msk [vmem:[%s298 + $0x68] sm:$0xff] %vm443, %v7782
        %7815 = vst.msk [vmem:[%s298 + $0x70] sm:$0xff] %vm443, %v7783
        %7816 = vst.msk [vmem:[%s298 + $0x78] sm:$0xff] %vm443, %v7784
        %7817 = vst.msk [vmem:[%s298 + $0x80] sm:$0xff] %vm443, %v7785
        %7818 = vst.msk [vmem:[%s298 + $0x88] sm:$0xff] %vm443, %v7786
        %7819 = vst.msk [vmem:[%s298 + $0x90] sm:$0xff] %vm443, %v7787
        %7820 = vst.msk [vmem:[%s298 + $0x98] sm:$0xff] %vm443, %v7788
        %7821 = vst.msk [vmem:[%s298 + $0xa0] sm:$0xff] %vm443, %v7789
        %7822 = vst.msk [vmem:[%s298 + $0xa8] sm:$0xff] %vm443, %v7790
        %7823 = vst.msk [vmem:[%s298 + $0xb0] sm:$0xff] %vm443, %v7791
        %7824 = vst.msk [vmem:[%s298 + $0xb8] sm:$0xff] %vm443, %v7792
        %7825 = vst.msk [vmem:[%s298 + $0xc0] sm:$0xff] %vm443, %v7793
        %7826 = vst.msk [vmem:[%s298 + $0xc8] sm:$0xff] %vm443, %v7794
        %7827 = vst.msk [vmem:[%s298 + $0xd0] sm:$0xff] %vm443, %v7795
        %7828 = vst.msk [vmem:[%s298 + $0xd8] sm:$0xff] %vm443, %v7796
        %7829 = vst.msk [vmem:[%s298 + $0xe0] sm:$0xff] %vm443, %v7797
        %7830 = vst.msk [vmem:[%s298 + $0xe8] sm:$0xff] %vm443, %v7798
        %7831 = vst.msk [vmem:[%s298 + $0xf0] sm:$0xff] %vm443, %v7799
        %7832 = vst.msk [vmem:[%s298 + $0xf8] sm:$0xff] %vm443, %v7800
        %s7833 = sand.u32 %s203, 1
        %s7834 = scalar_lea.sflag [#allocation4], %s7833
        %s7835 = sand.u32 %s203, 1
        %s7836 = smul.addr %s7835, 256
        %s7837 = scalar_lea.vmem [#allocation3], %s7836
        // Predicated region
        $region53: #{features_memory_forward.1} parent=51 // pred_check
          %p7838 = pneg %p213
        $region54: #{features_memory_forward.1} parent=51 // pred_check_branch
          %7840 = sbr.rel (%p7838) target = $region56
        $region55: #{features_memory_forward.1} parent=51 // pred_region
          %s7842 = ssub.s32 4096, 4096
          %7843 = vsyncadd %s7834, %s7842
          %s7844 = smul.addr %s22, 32
          %s7845 = smul.addr %s7844, 128
          %s7846 = scalar_lea.hbm %s8, %s7845
          %s7847 = sshll.u32 %s7837, 4
          %s7848 = int_to_ptr.vmem [resolvable:$true] %s7847
          %7853 = dma.vmem_to_hbm [thread:$0]  %s7848, 4096, %s7846, %s7834, 128, 128, 8
        $region56: #{features_memory_forward.1} parent=51 // pred_fallthru
          _
      $region52: #{features_memory_forward.1} parent=5 // pred_fallthru
        _
      %p7854 = scmp.le.s32.totalorder 2, %s17
      // Predicated region
      $region57: #{features_memory_forward.1} parent=5 // pred_check
        %p7855 = pneg %p7854
      $region58: #{features_memory_forward.1} parent=5 // pred_check_branch
        %7857 = sbr.rel (%p7855) target = $region60
      $region59: #{features_memory_forward.1} parent=5 // pred_region
        %s7858 = ssub.s32 %s17, 2
        // Predicated region
        $region61: #{features_memory_forward.1} parent=59 // pred_check
          %p7859 = pneg %p219
        $region62: #{features_memory_forward.1} parent=59 // pred_check_branch
          %7861 = sbr.rel (%p7859) target = $region64
        $region63: #{features_memory_forward.1} parent=59 // pred_region
          %s7862 = sand.u32 %s204, 1
          %s7863 = scalar_lea.sflag [#allocation4], %s7862
          %s7864 = sand.u32 %s204, 1
          %s7865 = smul.addr %s7864, 256
          %s7866 = scalar_lea.vmem [#allocation3], %s7865
          %7867 = dma.done %s7863, 4096
        $region64: #{features_memory_forward.1} parent=59 // pred_fallthru
          _
      $region60: #{features_memory_forward.1} parent=5 // pred_fallthru
        _
    $region6: #{features_memory_forward.1} parent=1 // loop_footer
      %s21 = sadd.s32 1, %s17
    $region7: #{features_memory_forward.1} parent=1 // loop_footer_branch
      %16 = sbr.rel target = $region3
    $region8: #{features_memory_forward.1} parent=1 // loop_exit
      _
    %7868 = vsyncpa [#allocation4], 1
    %s7869 = scalar_lea.sflag [#allocation4], 1
    %7870 = vsyncpa %s7869, 1

</llo_original>
